<compile_context>
chip_gen: v5e
topology: v5e:2x2
jax: 0.10.0
libtpu: 0.0.40
codegen_flags: <defaults>
</compile_context>

<pallas_src>
import functools

import numpy as np
import jax
import jax.numpy as jnp
from jax import lax
from jax.experimental import pallas as pl
from jax.experimental.pallas import tpu as pltpu


def _round_up(x, m):
    return ((x + m - 1) // m) * m


def _viterbi_vq_kernel(x_ref, emb_ref, esq_ref, out_ref, *, cross_dtype):
    # x_ref:   (TN, C)    TN flattened (batch*time) samples, channel-last
    # emb_ref: (L, CS, C) all L codebooks, resident in VMEM
    # esq_ref: (1, CS)    0.5 * ||e_{L-1}[j]||^2 (precomputed wrapper-side)
    # out_ref: (TN, C)    final residual per sample
    L, CS, C = emb_ref.shape
    cs_f = float(CS)

    x = x_ref[...]                                             # (TN, C)

    # ---- layer 0: residual path m = x - e0[m] ----
    r = x[:, None, :] - emb_ref[0][None, :, :]                 # (TN, CS, C)

    # hoisted (1, CS, CS) index helpers; broadcast against TN inside the loop
    m_iota_i = lax.broadcasted_iota(jnp.int32, (1, CS, CS), 1)   # path index (sublane)
    j_iota_i = lax.broadcasted_iota(jnp.int32, (1, CS, CS), 2)   # codeword index (lane)
    m_iota = m_iota_i.astype(jnp.float32)
    mj_key = (j_iota_i * CS + m_iota_i).astype(jnp.float32)      # torch-order tie key

    def half_dist(r_cur, e):
        # 0.5*||r_m||^2 - <r_m, e_j>:  argmin_m-equivalent to the torch
        # distance (||e_j||^2 is constant along m; 0.5 scale is argmin-safe).
        cross = lax.dot_general(
            r_cur.astype(cross_dtype), e.astype(cross_dtype),
            (((2,), (1,)), ((), ())),
            preferred_element_type=jnp.float32)                  # (TN, CS_m, CS_j)
        r_sq = jnp.sum(r_cur * r_cur, axis=2, keepdims=True)     # (TN, CS_m, 1)
        return 0.5 * r_sq - cross

    # ---- layers 1..L-2: per-codeword best previous path + residual update ----
    for l in range(1, L - 1):
        e = emb_ref[l]                                           # (CS_j, C)
        dist = half_dist(r, e)                                   # (TN, CS_m, CS_j)
        dmin = jnp.min(dist, axis=1, keepdims=True)              # (TN, 1, CS_j)
        # first argmin over m (matches torch tie-break)
        best_m = jnp.min(jnp.where(dist <= dmin, m_iota, cs_f),
                         axis=1, keepdims=True)                  # (TN, 1, CS_j)
        onehot = (m_iota == best_m).astype(jnp.float32)          # (TN, CS_m, CS_j)
        # gathered[t, j, :] = r[t, m*(t, j), :]   (one-hot gather on the MXU)
        gathered = lax.dot_general(onehot, r, (((1,), (1,)), ((0,), (0,))),
                                   preferred_element_type=jnp.float32)  # (TN, CS_j, C)
        r = gathered - e[None, :, :]

    # ---- last layer: joint (m, j) argmin; no per-j gather needed ----
    e_last = emb_ref[L - 1]                                      # (CS, C)
    full = half_dist(r, e_last) + esq_ref[...][None, :, :]       # (TN, CS_m, CS_j)
    vmin = jnp.min(jnp.min(full, axis=2, keepdims=True),
                   axis=1, keepdims=True)                        # (TN, 1, 1)
    # among global minima pick smallest j then smallest m == torch's
    # (argmin_m per j, then argmin_j of the column minima) tie-breaking
    key_masked = jnp.where(full <= vmin, mj_key, cs_f * cs_f)
    sel_key = jnp.min(jnp.min(key_masked, axis=2, keepdims=True),
                      axis=1, keepdims=True)                     # (TN, 1, 1)
    onehot_mj = (mj_key == sel_key).astype(jnp.float32)          # (TN, CS_m, CS_j)
    wm = jnp.sum(onehot_mj, axis=2, keepdims=True)               # (TN, CS_m, 1)
    wj = jnp.sum(onehot_mj, axis=1)                              # (TN, CS_j)
    picked_r = jnp.sum(wm * r, axis=1)                           # (TN, C) = r[t, m*]
    picked_e = lax.dot_general(wj, e_last, (((1,), (0,)), ((), ())),
                               preferred_element_type=jnp.float32)  # (TN, C) = e[j*]
    out_ref[...] = (picked_r - picked_e).astype(out_ref.dtype)


def viterbi_vq_residual(x_flat, embeds, *, tn=64,
                        vmem_limit_bytes=48 * 1024 * 1024,
                        cross_dtype=jnp.float32):
    """x_flat: (N, C) f32; embeds: (L, CS, C) f32 -> final residual (N, C) f32.

    tn = samples per grid step.  Defaults (tn=64, 48 MiB) fit v7x's 64 MiB
    per-core VMEM; on v5e/v6e raise tn to 128-256 and vmem_limit_bytes to
    ~96 MiB for higher throughput.  cross_dtype=jnp.bfloat16 speeds up the
    distance matmul ~3x but may flip near-tie argmins vs. the f32 reference.
    """
    N, C = x_flat.shape
    L, CS, _ = embeds.shape
    assert L >= 2, "num_quantizers must be >= 2"

    tn = max(8, min(_round_up(int(tn), 8), _round_up(N, 8)))
    if _round_up(N, tn) // tn < 2 and N > 8:
        # keep >= 2 grid steps so both v7x TensorCores get work
        tn = max(8, _round_up((N + 1) // 2, 8))
    n_pad = _round_up(N, tn)

    x2 = jnp.pad(x_flat.astype(jnp.float32), ((0, n_pad - N), (0, 0)))
    embeds_f = embeds.astype(jnp.float32)
    # hoisted, data-independent: half squared norms of the last codebook
    esq_half = 0.5 * jnp.sum(embeds_f[L - 1] * embeds_f[L - 1],
                             axis=-1).reshape(1, CS)

    kernel = functools.partial(_viterbi_vq_kernel, cross_dtype=cross_dtype)
    out = pl.pallas_call(
        kernel,
        out_shape=jax.ShapeDtypeStruct((n_pad, C), jnp.float32),
        grid_spec=pltpu.PrefetchScalarGridSpec(
            num_scalar_prefetch=0,
            grid=(n_pad // tn,),
            in_specs=[
                pl.BlockSpec((tn, C), lambda n: (n, 0)),
                # grid-invariant codebooks / norms (constant index_map => not
                # re-fetched across grid steps)
                pl.BlockSpec((L, CS, C), lambda n: (0, 0, 0)),
                pl.BlockSpec((1, CS), lambda n: (0, 0)),
            ],
            out_specs=pl.BlockSpec((tn, C), lambda n: (n, 0)),
        ),
        compiler_params=pltpu.CompilerParams(
            dimension_semantics=("parallel",),
            vmem_limit_bytes=vmem_limit_bytes,
        ),
    )(x2, embeds_f, esq_half)
    return out[:N]


viterbi_vq_residual_jit = jax.jit(
    viterbi_vq_residual,
    static_argnames=("tn", "vmem_limit_bytes", "cross_dtype"))


def viterbi_vq_forward(x, embeds, commitment=1.0):
    """ViterbiVQLegacy.forward (eval mode, channel_last=False). x: (B, C, T)."""
    B, C, T = x.shape
    L = embeds.shape[0]
    x_flat = jnp.transpose(x, (0, 2, 1)).reshape(B * T, C).astype(jnp.float32)
    residual = viterbi_vq_residual_jit(x_flat, embeds)
    residual_out = jnp.transpose(residual.reshape(B, T, C), (0, 2, 1))
    quantize = x - residual_out
    # mse(quantize, x) == mean(residual**2)
    loss = jnp.mean(residual_out.astype(jnp.float32) ** 2) * commitment
    num_replaces = np.zeros(L, dtype=np.int64)   # eval mode: no code replacement
    return quantize, num_replaces, loss


def viterbi_vq_reference(x_flat, embeds):
    """Plain-JAX reference mirroring the PyTorch EuclideanCodebook chain."""
    L, CS, C = embeds.shape
    N = x_flat.shape[0]
    res = x_flat[:, None, :] - embeds[0][None, :, :]                # (N, CS, C)
    for l in range(1, L):
        e = embeds[l]
        flatten = res.reshape(-1, C)
        dist = (jnp.sum(flatten ** 2, axis=1, keepdims=True)
                - 2.0 * flatten @ e.T
                + jnp.sum(e ** 2, axis=1)[None, :]).reshape(N, CS, CS)
        best_m = jnp.argmin(dist, axis=1)                            # (N, CS)
        dmin = jnp.min(dist, axis=1)                                 # (N, CS)
        gathered = jnp.take_along_axis(
            res, jnp.broadcast_to(best_m[:, :, None], (N, CS, C)), axis=1)
        if l < L - 1:
            res = gathered - e[None, :, :]
        else:
            jstar = jnp.argmin(dmin, axis=1)                         # (N,)
            gfin = jnp.take_along_axis(
                gathered, jnp.broadcast_to(jstar[:, None, None], (N, 1, C)),
                axis=1)[:, 0, :]
            res = gfin - e[jstar]                                    # (N, C)
    return res


if __name__ == "__main__":
    key = jax.random.PRNGKey(0)
    B, C, T = 2, 32, 8        # batch, dim (channels), time
    L = 3                     # num_quantizers
    CS = 128                  # codebook_size

    k_x, k_e = jax.random.split(key)
    x = jax.random.normal(k_x, (B, C, T), dtype=jnp.float32)
    # EuclideanCodebook init: torch.randn(codebook_size, dim) per layer
    embeds = jax.random.normal(k_e, (L, CS, C), dtype=jnp.float32)

    quantize, num_replaces, loss = viterbi_vq_forward(x, embeds, commitment=1.0)
    quantize = jax.block_until_ready(quantize)
    loss = jax.block_until_ready(loss)

    # correctness check vs. plain-JAX reference of the PyTorch semantics
    x_flat = jnp.transpose(x, (0, 2, 1)).reshape(B * T, C)
    res_ref = viterbi_vq_reference(x_flat, embeds)
    res_ker = x_flat - jnp.transpose(quantize, (0, 2, 1)).reshape(B * T, C)
    assert np.allclose(np.asarray(res_ker), np.asarray(res_ref),
                       atol=1e-4, rtol=1e-4), \
        "Pallas ViterbiVQ kernel does not match reference"
    assert np.isfinite(float(loss))

    print("KERNEL_OK")
</pallas_src>

<mosaic_0001>
module attributes {stable_mosaic.version = 11 : i64} {
  func.func @_viterbi_vq_kernel(%arg0: i32, %arg1: memref<8x32xf32, #tpu.memory_space<vmem>>, %arg2: memref<3x128x32xf32, #tpu.memory_space<vmem>>, %arg3: memref<1x128xf32, #tpu.memory_space<vmem>>, %arg4: memref<8x32xf32, #tpu.memory_space<vmem>>) attributes {dimension_semantics = [#tpu.dimension_semantics<parallel>], iteration_bounds = array<i64: 2>, scalar_prefetch = 0 : i64, scratch_operands = 0 : i64, tpu.core_type = #tpu.core_type<tc>, window_params = [{transform_indices = @transform_0, window_bounds = array<i64: 8, 32>}, {pipeline_mode = #tpu.pipeline_mode<synchronous>, transform_indices = @transform_1, window_bounds = array<i64: 3, 128, 32>}, {pipeline_mode = #tpu.pipeline_mode<synchronous>, transform_indices = @transform_2, window_bounds = array<i64: 1, 128>}, {transform_indices = @transform_3, window_bounds = array<i64: 8, 32>}]} {
    %c0 = arith.constant 0 : index
    %c0_0 = arith.constant 0 : index
    %0 = vector.load %arg1[%c0, %c0_0] : memref<8x32xf32, #tpu.memory_space<vmem>>, vector<8x32xf32>
    %1 = vector.shape_cast %0 : vector<8x32xf32> to vector<8x1x32xf32>
    %c0_1 = arith.constant 0 : index
    %c0_2 = arith.constant 0 : index
    %c0_3 = arith.constant 0 : index
    %2 = vector.load %arg2[%c0_1, %c0_2, %c0_3] : memref<3x128x32xf32, #tpu.memory_space<vmem>>, vector<1x128x32xf32>
    %3 = vector.shape_cast %2 : vector<1x128x32xf32> to vector<128x32xf32>
    %4 = vector.shape_cast %3 : vector<128x32xf32> to vector<1x128x32xf32>
    %5 = vector.broadcast %1 : vector<8x1x32xf32> to vector<8x128x32xf32>
    %6 = vector.broadcast %4 : vector<1x128x32xf32> to vector<8x128x32xf32>
    %7 = arith.subf %5, %6 : vector<8x128x32xf32>
    %8 = tpu.iota {dimensions = array<i32: 1>} : vector<1x128x128xi32>
    %9 = tpu.iota {dimensions = array<i32: 2>} : vector<1x128x128xi32>
    %10 = arith.sitofp %8 : vector<1x128x128xi32> to vector<1x128x128xf32>
    %c128_i32 = arith.constant 128 : i32
    %11 = vector.broadcast %c128_i32 : i32 to vector<1x128x128xi32>
    %12 = arith.muli %9, %11 : vector<1x128x128xi32>
    %13 = arith.addi %12, %8 : vector<1x128x128xi32>
    %14 = arith.sitofp %13 : vector<1x128x128xi32> to vector<1x128x128xf32>
    %c1 = arith.constant 1 : index
    %c0_4 = arith.constant 0 : index
    %c0_5 = arith.constant 0 : index
    %15 = vector.load %arg2[%c1, %c0_4, %c0_5] : memref<3x128x32xf32, #tpu.memory_space<vmem>>, vector<1x128x32xf32>
    %16 = vector.shape_cast %15 : vector<1x128x32xf32> to vector<128x32xf32>
    %cst = arith.constant dense<0.000000e+00> : vector<8x128x128xf32>
    %17 = tpu.matmul %7, %16, %cst {dimension_numbers = #tpu.dot_dimension_numbers<[2], [1], [0, 1], [0], [0, 0, 0, 1, 1, 0], [], []>} : vector<8x128x32xf32>, vector<128x32xf32>, vector<8x128x128xf32> -> vector<8x128x128xf32>
    %18 = arith.mulf %7, %7 : vector<8x128x32xf32>
    %cst_6 = arith.constant dense<0.000000e+00> : vector<8x128xf32>
    %19 = vector.multi_reduction <add>, %18, %cst_6 [2] : vector<8x128x32xf32> to vector<8x128xf32>
    %20 = vector.shape_cast %19 : vector<8x128xf32> to vector<8x128x1xf32>
    %cst_7 = arith.constant 5.000000e-01 : f32
    %21 = vector.broadcast %cst_7 : f32 to vector<8x128x1xf32>
    %22 = arith.mulf %21, %20 : vector<8x128x1xf32>
    %23 = vector.broadcast %22 : vector<8x128x1xf32> to vector<8x128x128xf32>
    %24 = arith.subf %23, %17 : vector<8x128x128xf32>
    %cst_8 = arith.constant dense<0x7F800000> : vector<8x128xf32>
    %25 = vector.multi_reduction <minimumf>, %24, %cst_8 [1] : vector<8x128x128xf32> to vector<8x128xf32>
    %26 = vector.shape_cast %25 : vector<8x128xf32> to vector<8x1x128xf32>
    %27 = vector.broadcast %26 : vector<8x1x128xf32> to vector<8x128x128xf32>
    %28 = arith.cmpf ole, %24, %27 : vector<8x128x128xf32>
    %cst_9 = arith.constant 1.280000e+02 : f32
    %29 = vector.shape_cast %10 : vector<1x128x128xf32> to vector<1x128x128xf32>
    %30 = vector.broadcast %29 : vector<1x128x128xf32> to vector<8x128x128xf32>
    %31 = vector.broadcast %cst_9 : f32 to vector<8x128x128xf32>
    %32 = arith.select %28, %30, %31 : vector<8x128x128xi1>, vector<8x128x128xf32>
    %cst_10 = arith.constant dense<0x7F800000> : vector<8x128xf32>
    %33 = vector.multi_reduction <minimumf>, %32, %cst_10 [1] : vector<8x128x128xf32> to vector<8x128xf32>
    %34 = vector.shape_cast %33 : vector<8x128xf32> to vector<8x1x128xf32>
    %35 = vector.broadcast %10 : vector<1x128x128xf32> to vector<8x128x128xf32>
    %36 = vector.broadcast %34 : vector<8x1x128xf32> to vector<8x128x128xf32>
    %37 = arith.cmpf oeq, %35, %36 : vector<8x128x128xf32>
    %38 = arith.extui %37 : vector<8x128x128xi1> to vector<8x128x128xi32>
    %39 = arith.sitofp %38 : vector<8x128x128xi32> to vector<8x128x128xf32>
    %cst_11 = arith.constant dense<0.000000e+00> : vector<8x128x32xf32>
    %40 = tpu.matmul %39, %7, %cst_11 {dimension_numbers = #tpu.dot_dimension_numbers<[1], [1], [2], [2], [0, 0, 0, 2, 1, 2], [0], [0]>} : vector<8x128x128xf32>, vector<8x128x32xf32>, vector<8x128x32xf32> -> vector<8x128x32xf32>
    %41 = vector.shape_cast %16 : vector<128x32xf32> to vector<1x128x32xf32>
    %42 = vector.broadcast %41 : vector<1x128x32xf32> to vector<8x128x32xf32>
    %43 = arith.subf %40, %42 : vector<8x128x32xf32>
    %c2 = arith.constant 2 : index
    %c0_12 = arith.constant 0 : index
    %c0_13 = arith.constant 0 : index
    %44 = vector.load %arg2[%c2, %c0_12, %c0_13] : memref<3x128x32xf32, #tpu.memory_space<vmem>>, vector<1x128x32xf32>
    %45 = vector.shape_cast %44 : vector<1x128x32xf32> to vector<128x32xf32>
    %cst_14 = arith.constant dense<0.000000e+00> : vector<8x128x128xf32>
    %46 = tpu.matmul %43, %45, %cst_14 {dimension_numbers = #tpu.dot_dimension_numbers<[2], [1], [0, 1], [0], [0, 0, 0, 1, 1, 0], [], []>} : vector<8x128x32xf32>, vector<128x32xf32>, vector<8x128x128xf32> -> vector<8x128x128xf32>
    %47 = arith.mulf %43, %43 : vector<8x128x32xf32>
    %cst_15 = arith.constant dense<0.000000e+00> : vector<8x128xf32>
    %48 = vector.multi_reduction <add>, %47, %cst_15 [2] : vector<8x128x32xf32> to vector<8x128xf32>
    %49 = vector.shape_cast %48 : vector<8x128xf32> to vector<8x128x1xf32>
    %cst_16 = arith.constant 5.000000e-01 : f32
    %50 = vector.broadcast %cst_16 : f32 to vector<8x128x1xf32>
    %51 = arith.mulf %50, %49 : vector<8x128x1xf32>
    %52 = vector.broadcast %51 : vector<8x128x1xf32> to vector<8x128x128xf32>
    %53 = arith.subf %52, %46 : vector<8x128x128xf32>
    %c0_17 = arith.constant 0 : index
    %c0_18 = arith.constant 0 : index
    %54 = vector.load %arg3[%c0_17, %c0_18] : memref<1x128xf32, #tpu.memory_space<vmem>>, vector<1x128xf32>
    %55 = vector.shape_cast %54 : vector<1x128xf32> to vector<1x1x128xf32>
    %56 = vector.broadcast %55 : vector<1x1x128xf32> to vector<8x128x128xf32>
    %57 = arith.addf %53, %56 : vector<8x128x128xf32>
    %cst_19 = arith.constant dense<0x7F800000> : vector<8x128xf32>
    %58 = vector.multi_reduction <minimumf>, %57, %cst_19 [2] : vector<8x128x128xf32> to vector<8x128xf32>
    %59 = vector.shape_cast %58 : vector<8x128xf32> to vector<8x128x1xf32>
    %cst_20 = arith.constant dense<0x7F800000> : vector<8x1xf32>
    %60 = vector.multi_reduction <minimumf>, %59, %cst_20 [1] : vector<8x128x1xf32> to vector<8x1xf32>
    %61 = vector.shape_cast %60 : vector<8x1xf32> to vector<8x1x1xf32>
    %62 = vector.broadcast %61 : vector<8x1x1xf32> to vector<8x128x128xf32>
    %63 = arith.cmpf ole, %57, %62 : vector<8x128x128xf32>
    %cst_21 = arith.constant 1.638400e+04 : f32
    %64 = vector.shape_cast %14 : vector<1x128x128xf32> to vector<1x128x128xf32>
    %65 = vector.broadcast %64 : vector<1x128x128xf32> to vector<8x128x128xf32>
    %66 = vector.broadcast %cst_21 : f32 to vector<8x128x128xf32>
    %67 = arith.select %63, %65, %66 : vector<8x128x128xi1>, vector<8x128x128xf32>
    %cst_22 = arith.constant dense<0x7F800000> : vector<8x128xf32>
    %68 = vector.multi_reduction <minimumf>, %67, %cst_22 [2] : vector<8x128x128xf32> to vector<8x128xf32>
    %69 = vector.shape_cast %68 : vector<8x128xf32> to vector<8x128x1xf32>
    %cst_23 = arith.constant dense<0x7F800000> : vector<8x1xf32>
    %70 = vector.multi_reduction <minimumf>, %69, %cst_23 [1] : vector<8x128x1xf32> to vector<8x1xf32>
    %71 = vector.shape_cast %70 : vector<8x1xf32> to vector<8x1x1xf32>
    %72 = vector.broadcast %14 : vector<1x128x128xf32> to vector<8x128x128xf32>
    %73 = vector.broadcast %71 : vector<8x1x1xf32> to vector<8x128x128xf32>
    %74 = arith.cmpf oeq, %72, %73 : vector<8x128x128xf32>
    %75 = arith.extui %74 : vector<8x128x128xi1> to vector<8x128x128xi32>
    %76 = arith.sitofp %75 : vector<8x128x128xi32> to vector<8x128x128xf32>
    %cst_24 = arith.constant dense<0.000000e+00> : vector<8x128xf32>
    %77 = vector.multi_reduction <add>, %76, %cst_24 [2] : vector<8x128x128xf32> to vector<8x128xf32>
    %78 = vector.shape_cast %77 : vector<8x128xf32> to vector<8x128x1xf32>
    %cst_25 = arith.constant dense<0.000000e+00> : vector<8x128xf32>
    %79 = vector.multi_reduction <add>, %76, %cst_25 [1] : vector<8x128x128xf32> to vector<8x128xf32>
    %80 = vector.broadcast %78 : vector<8x128x1xf32> to vector<8x128x32xf32>
    %81 = arith.mulf %80, %43 : vector<8x128x32xf32>
    %cst_26 = arith.constant dense<0.000000e+00> : vector<8x32xf32>
    %82 = vector.multi_reduction <add>, %81, %cst_26 [1] : vector<8x128x32xf32> to vector<8x32xf32>
    %cst_27 = arith.constant dense<0.000000e+00> : vector<8x32xf32>
    %83 = tpu.matmul %79, %45, %cst_27 {dimension_numbers = #tpu.dot_dimension_numbers<[1], [0], [0], [1], [0, 0, 1, 1], [], []>} : vector<8x128xf32>, vector<128x32xf32>, vector<8x32xf32> -> vector<8x32xf32>
    %84 = arith.subf %82, %83 : vector<8x32xf32>
    %c0_28 = arith.constant 0 : index
    %c0_29 = arith.constant 0 : index
    %85 = vector.load %arg4[%c0_28, %c0_29] : memref<8x32xf32, #tpu.memory_space<vmem>>, vector<8x32xf32>
    tpu.vector_store %arg4[%c0_28, %c0_29], %84 {strides = array<i32>} : memref<8x32xf32, #tpu.memory_space<vmem>>, vector<8x32xf32>,
    return
  }
  func.func @transform_0(%arg0: i32) -> (i32, i32) {
    %c0_i32 = arith.constant 0 : i32
    %c0_i32_0 = arith.constant 0 : i32
    return %arg0, %c0_i32 : i32, i32
  }
  func.func @transform_1(%arg0: i32) -> (i32, i32, i32) {
    %c0_i32 = arith.constant 0 : i32
    %c0_i32_0 = arith.constant 0 : i32
    %c0_i32_1 = arith.constant 0 : i32
    %c0_i32_2 = arith.constant 0 : i32
    return %c0_i32, %c0_i32_0, %c0_i32_1 : i32, i32, i32
  }
  func.func @transform_2(%arg0: i32) -> (i32, i32) {
    %c0_i32 = arith.constant 0 : i32
    %c0_i32_0 = arith.constant 0 : i32
    %c0_i32_1 = arith.constant 0 : i32
    return %c0_i32, %c0_i32_0 : i32, i32
  }
  func.func @transform_3(%arg0: i32) -> (i32, i32) {
    %c0_i32 = arith.constant 0 : i32
    %c0_i32_0 = arith.constant 0 : i32
    return %arg0, %c0_i32 : i32, i32
  }
}

</mosaic_0001>

<llo_original>
// kernel: viterbi_vq_residual.1
$region0: #{viterbi_vq_residual.1}
  #allocation0 [shape = 'u32[]', space=smem, size = 0x4, offset = 0x4, fixed_abs, tag = 'smem constant byte address 0x4 - core index']
  #allocation1 [shape = 'u32[72,128]{1,0:T(1,128)}', space=vmem, size = 0x9000, scoped, tag = 'internal scratch']
  %s0 = inlined_call_operand.vmem [shape: f32[16,32], index: 0, kind: input, shape index: {}]
  %s1 = inlined_call_operand.vmem [shape: f32[3,128,32], index: 1, kind: input, shape index: {}]
  %s2 = inlined_call_operand.vmem [shape: f32[1,128], index: 2, kind: input, shape index: {}]
  %s3 = inlined_call_operand.hbm [shape: f32[16,32], index: 3, kind: output, shape index: {}]
  %s4 = sld [smem:[#allocation0]]
  $region45: #{viterbi_vq_residual.1} parent=0
    _
  %s6 = ssub.s32 1, %s4
  %s7 = scalar_select 0, %s6, %s4
  $region1: #{viterbi_vq_residual.1} parent=0
    #allocation2 [shape = 'u8[8192]{0}', space=vmem, size = 0x2000, scoped, tag = 'output window, operand 0']
    #allocation3 [shape = 's32[2]{0}', space=sflag, size = 0x8, scoped, tag = 'scoped memory for viterbi_vq_residual.1']
    %8 = vsyncpa [#allocation3], 0
    %s9 = scalar_lea.sflag [#allocation3], 1
    %10 = vsyncpa %s9, 0
    loop: start=0, step=1, limit=4
    $region2: #{viterbi_vq_residual.1} parent=1 // loop_pre_header
      _
    $region3: #{viterbi_vq_residual.1} parent=1 // loop_header
      %s12 = sphi 0, %s16
      %p13 = scmp.ge.s32.totalorder %s12, 4
      %s22 = sphi 0, %s24
      %s25 = sphi 0, %s22
      %s26 = sphi 0, %s25
      %s42 = sphi 0, %s26
      %s46 = sphi 0, %s46
      %s48 = sphi 0, %s46
      %s49 = sphi 0, %s48
      %s63 = sphi 0, %s49
      %s67 = sphi 0, %s67
      %s69 = sphi 0, %s67
      %s70 = sphi 0, %s69
      %s84 = sphi 0, %s70
      %s90 = sphi 0, %s92
      %s93 = sphi 0, %s90
      %s94 = sphi 0, %s93
      %s110 = sphi 0, %s94
    $region4: #{viterbi_vq_residual.1} parent=1 // loop_header_branch
      %15 = sbr.rel (%p13) target = $region8
    $region5: #{viterbi_vq_residual.1} parent=1 // loop_body
      %s17 = ssub.s32 %s12, 1
      %s18 = ssub.s32 %s12, 2
      %s19 = sadd.s32 %s12, 1
      %s20 = ssub.s32 %s12, %s19
      %p21 = scmp.eq.s32.totalorder %s20, 0
      %s23 = sadd.s32 %s22, 1
      %s24 = scalar_select %p21, %s22, %s23
      %p27 = pneg %p21
      %p28 = scmp.eq.s32.totalorder %s12, 1
      %p29 = por %p27, %p28
      %p30 = scmp.ne.s32.totalorder %s22, %s25
      %p31 = scmp.eq.s32.totalorder %s12, 0
      %p32 = por %p30, %p31
      %p33 = scmp.ne.s32.totalorder %s22, %s25
      %p34 = scmp.eq.s32.totalorder %s17, 1
      %p35 = por %p33, %p34
      %p36 = scmp.ne.s32.totalorder %s25, %s26
      %p37 = scmp.eq.s32.totalorder %s17, 0
      %p38 = por %p36, %p37
      %p39 = scmp.ne.s32.totalorder %s25, %s26
      %p40 = scmp.eq.s32.totalorder %s18, 1
      %p41 = por %p39, %p40
      %p43 = scmp.ne.s32.totalorder %s26, %s42
      %p44 = scmp.eq.s32.totalorder %s18, 0
      %p45 = por %p43, %p44
      %s47 = sadd.s32 %s46, 1
      %p50 = scmp.eq.s32.totalorder %s12, 1
      %p51 = scmp.ne.s32.totalorder %s46, %s48
      %p52 = scmp.eq.s32.totalorder %s12, 0
      %p53 = por %p51, %p52
      %p54 = scmp.ne.s32.totalorder %s46, %s48
      %p55 = scmp.eq.s32.totalorder %s17, 1
      %p56 = por %p54, %p55
      %p57 = scmp.ne.s32.totalorder %s48, %s49
      %p58 = scmp.eq.s32.totalorder %s17, 0
      %p59 = por %p57, %p58
      %p60 = scmp.ne.s32.totalorder %s48, %s49
      %p61 = scmp.eq.s32.totalorder %s18, 1
      %p62 = por %p60, %p61
      %p64 = scmp.ne.s32.totalorder %s49, %s63
      %p65 = scmp.eq.s32.totalorder %s18, 0
      %p66 = por %p64, %p65
      %s68 = sadd.s32 %s67, 1
      %p71 = scmp.eq.s32.totalorder %s12, 1
      %p72 = scmp.ne.s32.totalorder %s67, %s69
      %p73 = scmp.eq.s32.totalorder %s12, 0
      %p74 = por %p72, %p73
      %p75 = scmp.ne.s32.totalorder %s67, %s69
      %p76 = scmp.eq.s32.totalorder %s17, 1
      %p77 = por %p75, %p76
      %p78 = scmp.ne.s32.totalorder %s69, %s70
      %p79 = scmp.eq.s32.totalorder %s17, 0
      %p80 = por %p78, %p79
      %p81 = scmp.ne.s32.totalorder %s69, %s70
      %p82 = scmp.eq.s32.totalorder %s18, 1
      %p83 = por %p81, %p82
      %p85 = scmp.ne.s32.totalorder %s70, %s84
      %p86 = scmp.eq.s32.totalorder %s18, 0
      %p87 = por %p85, %p86
      %s88 = ssub.s32 %s12, %s19
      %p89 = scmp.eq.s32.totalorder %s88, 0
      %s91 = sadd.s32 %s90, 1
      %s92 = scalar_select %p89, %s90, %s91
      %p95 = pneg %p89
      %p96 = scmp.eq.s32.totalorder %s12, 1
      %p97 = por %p95, %p96
      %p98 = scmp.ne.s32.totalorder %s90, %s93
      %p99 = scmp.eq.s32.totalorder %s12, 0
      %p100 = por %p98, %p99
      %p101 = scmp.ne.s32.totalorder %s90, %s93
      %p102 = scmp.eq.s32.totalorder %s17, 1
      %p103 = por %p101, %p102
      %p104 = scmp.ne.s32.totalorder %s93, %s94
      %p105 = scmp.eq.s32.totalorder %s17, 0
      %p106 = por %p104, %p105
      %p107 = scmp.ne.s32.totalorder %s93, %s94
      %p108 = scmp.eq.s32.totalorder %s18, 1
      %p109 = por %p107, %p108
      %p111 = scmp.ne.s32.totalorder %s94, %s110
      %p112 = scmp.eq.s32.totalorder %s18, 0
      %p113 = por %p111, %p112
      %p114 = scmp.le.s32.totalorder 1, %s12
      %p115 = scmp.lt.s32.totalorder %s12, 3
      %p116 = pnand %p114, %p115
      %p117 = pneg %p116
      // Predicated region
      $region9: #{viterbi_vq_residual.1} parent=5 // pred_check
        _
      $region10: #{viterbi_vq_residual.1} parent=5 // pred_check_branch
        %119 = sbr.rel (%p116) target = $region12
      $region11: #{viterbi_vq_residual.1} parent=5 // pred_region
        %s120 = ssub.s32 %s12, 1
        // Predicated region
        $region13: #{viterbi_vq_residual.1} parent=11 // pred_check
          %p121 = pneg %p59
        $region14: #{viterbi_vq_residual.1} parent=11 // pred_check_branch
          %123 = sbr.rel (%p121) target = $region16
        $region15: #{viterbi_vq_residual.1} parent=11 // pred_region
          _
        $region16: #{viterbi_vq_residual.1} parent=11 // pred_fallthru
          _
        // Predicated region
        $region17: #{viterbi_vq_residual.1} parent=11 // pred_check
          %p124 = pneg %p80
        $region18: #{viterbi_vq_residual.1} parent=11 // pred_check_branch
          %126 = sbr.rel (%p124) target = $region20
        $region19: #{viterbi_vq_residual.1} parent=11 // pred_region
          _
        $region20: #{viterbi_vq_residual.1} parent=11 // pred_fallthru
          _
      $region12: #{viterbi_vq_residual.1} parent=5 // pred_fallthru
        _
      %p127 = scmp.lt.s32.totalorder %s12, 2
      // Predicated region
      $region21: #{viterbi_vq_residual.1} parent=5 // pred_check
        %p128 = pneg %p127
      $region22: #{viterbi_vq_residual.1} parent=5 // pred_check_branch
        %130 = sbr.rel (%p128) target = $region24
      $region23: #{viterbi_vq_residual.1} parent=5 // pred_region
        // Predicated region
        $region25: #{viterbi_vq_residual.1} parent=23 // pred_check
          %p131 = pneg %p32
        $region26: #{viterbi_vq_residual.1} parent=23 // pred_check_branch
          %133 = sbr.rel (%p131) target = $region28
        $region27: #{viterbi_vq_residual.1} parent=23 // pred_region
          %p134 = scmp.lt.s32.totalorder %s12, 1
          %s135 = scalar_select %p134, %s12, 1
          %s136 = smul.addr %s135, 8
          %s137 = scalar_lea.vmem %s0, %s136
        $region28: #{viterbi_vq_residual.1} parent=23 // pred_fallthru
          _
      $region24: #{viterbi_vq_residual.1} parent=5 // pred_fallthru
        _
      %p138 = scmp.le.s32.totalorder 1, %s12
      %p139 = scmp.lt.s32.totalorder %s12, 3
      %p140 = pnand %p138, %p139
      %p141 = pneg %p140
      // Predicated region
      $region29: #{viterbi_vq_residual.1} parent=5 // pred_check
        _
      $region30: #{viterbi_vq_residual.1} parent=5 // pred_check_branch
        %143 = sbr.rel (%p140) target = $region32
      $region31: #{viterbi_vq_residual.1} parent=5 // pred_region
        %s144 = ssub.s32 %s12, 1
        %p145 = scmp.lt.s32.totalorder %s17, 1
        %s146 = scalar_select %p145, %s17, 1
        %s147 = smul.addr %s146, 8
        %s148 = scalar_lea.vmem %s0, %s147
        %p149 = pneg %p38
        %p150 = pneg %p35
        %p151 = pneg %p59
        %p152 = pneg %p56
        %p153 = pneg %p80
        %p154 = pneg %p77
        %p155 = pneg %p106
        %p156 = pneg %p103
        %s157 = sand.u32 %s93, 1
        %s158 = scalar_lea.sflag [#allocation3], %s157
        %s159 = sand.u32 %s93, 1
        %s160 = smul.addr %s159, 8
        %s161 = scalar_lea.vmem [#allocation2], %s160
        %p162 = scmp.lt.s32.totalorder %s17, 1
        %s163 = scalar_select %p162, %s17, 1
        %s164 = smul.addr %s163, 8
        %s165 = scalar_lea.vmem %s0, %s164
        %v166 = vld [vmem:[%s165] sm:$0xff]
        %v168 = vrot.slane %v166, 1
        %v169 = vrot.slane %v166, 2
        %v170 = vrot.slane %v166, 3
        %v171 = vrot.slane %v166, 4
        %v172 = vrot.slane %v166, 5
        %v173 = vrot.slane %v166, 6
        %v174 = vrot.slane %v166, 7
        %v175 = vld [vmem:[%s1] sm:$0xff]
        %v176 = vld [vmem:[%s1 + $0x8] sm:$0xff]
        %v177 = vld [vmem:[%s1 + $0x10] sm:$0xff]
        %v178 = vld [vmem:[%s1 + $0x18] sm:$0xff]
        %v179 = vld [vmem:[%s1 + $0x20] sm:$0xff]
        %v180 = vld [vmem:[%s1 + $0x28] sm:$0xff]
        %v181 = vld [vmem:[%s1 + $0x30] sm:$0xff]
        %v182 = vld [vmem:[%s1 + $0x38] sm:$0xff]
        %v183 = vld [vmem:[%s1 + $0x40] sm:$0xff]
        %v184 = vld [vmem:[%s1 + $0x48] sm:$0xff]
        %v185 = vld [vmem:[%s1 + $0x50] sm:$0xff]
        %v186 = vld [vmem:[%s1 + $0x58] sm:$0xff]
        %v187 = vld [vmem:[%s1 + $0x60] sm:$0xff]
        %v188 = vld [vmem:[%s1 + $0x68] sm:$0xff]
        %v189 = vld [vmem:[%s1 + $0x70] sm:$0xff]
        %v190 = vld [vmem:[%s1 + $0x78] sm:$0xff]
        %v191 = vperm.slane %v166, 0
        %v192 = vperm.slane %v168, 0
        %v193 = vperm.slane %v169, 0
        %v194 = vperm.slane %v170, 0
        %v195 = vperm.slane %v171, 0
        %v196 = vperm.slane %v172, 0
        %v197 = vperm.slane %v173, 0
        %v198 = vperm.slane %v174, 0
        %v207 = vsub.f32 %v191, %v175
        %v208 = vsub.f32 %v191, %v176
        %v209 = vsub.f32 %v191, %v177
        %v210 = vsub.f32 %v191, %v178
        %v211 = vsub.f32 %v191, %v179
        %v212 = vsub.f32 %v191, %v180
        %v213 = vsub.f32 %v191, %v181
        %v214 = vsub.f32 %v191, %v182
        %v215 = vsub.f32 %v191, %v183
        %v216 = vsub.f32 %v191, %v184
        %v217 = vsub.f32 %v191, %v185
        %v218 = vsub.f32 %v191, %v186
        %v219 = vsub.f32 %v191, %v187
        %v220 = vsub.f32 %v191, %v188
        %v221 = vsub.f32 %v191, %v189
        %v222 = vsub.f32 %v191, %v190
        %v223 = vsub.f32 %v192, %v175
        %v224 = vsub.f32 %v192, %v176
        %v225 = vsub.f32 %v192, %v177
        %v226 = vsub.f32 %v192, %v178
        %v227 = vsub.f32 %v192, %v179
        %v228 = vsub.f32 %v192, %v180
        %v229 = vsub.f32 %v192, %v181
        %v230 = vsub.f32 %v192, %v182
        %v231 = vsub.f32 %v192, %v183
        %v232 = vsub.f32 %v192, %v184
        %v233 = vsub.f32 %v192, %v185
        %v234 = vsub.f32 %v192, %v186
        %v235 = vsub.f32 %v192, %v187
        %v236 = vsub.f32 %v192, %v188
        %v237 = vsub.f32 %v192, %v189
        %v238 = vsub.f32 %v192, %v190
        %v239 = vsub.f32 %v193, %v175
        %v240 = vsub.f32 %v193, %v176
        %v241 = vsub.f32 %v193, %v177
        %v242 = vsub.f32 %v193, %v178
        %v243 = vsub.f32 %v193, %v179
        %v244 = vsub.f32 %v193, %v180
        %v245 = vsub.f32 %v193, %v181
        %v246 = vsub.f32 %v193, %v182
        %v247 = vsub.f32 %v193, %v183
        %v248 = vsub.f32 %v193, %v184
        %v249 = vsub.f32 %v193, %v185
        %v250 = vsub.f32 %v193, %v186
        %v251 = vsub.f32 %v193, %v187
        %v252 = vsub.f32 %v193, %v188
        %v253 = vsub.f32 %v193, %v189
        %v254 = vsub.f32 %v193, %v190
        %v255 = vsub.f32 %v194, %v175
        %v256 = vsub.f32 %v194, %v176
        %v257 = vsub.f32 %v194, %v177
        %v258 = vsub.f32 %v194, %v178
        %v259 = vsub.f32 %v194, %v179
        %v260 = vsub.f32 %v194, %v180
        %v261 = vsub.f32 %v194, %v181
        %v262 = vsub.f32 %v194, %v182
        %v263 = vsub.f32 %v194, %v183
        %v264 = vsub.f32 %v194, %v184
        %v265 = vsub.f32 %v194, %v185
        %v266 = vsub.f32 %v194, %v186
        %v267 = vsub.f32 %v194, %v187
        %v268 = vsub.f32 %v194, %v188
        %v269 = vsub.f32 %v194, %v189
        %v270 = vsub.f32 %v194, %v190
        %v271 = vsub.f32 %v195, %v175
        %v272 = vsub.f32 %v195, %v176
        %v273 = vsub.f32 %v195, %v177
        %v274 = vsub.f32 %v195, %v178
        %v275 = vsub.f32 %v195, %v179
        %v276 = vsub.f32 %v195, %v180
        %v277 = vsub.f32 %v195, %v181
        %v278 = vsub.f32 %v195, %v182
        %v279 = vsub.f32 %v195, %v183
        %v280 = vsub.f32 %v195, %v184
        %v281 = vsub.f32 %v195, %v185
        %v282 = vsub.f32 %v195, %v186
        %v283 = vsub.f32 %v195, %v187
        %v284 = vsub.f32 %v195, %v188
        %v285 = vsub.f32 %v195, %v189
        %v286 = vsub.f32 %v195, %v190
        %v287 = vsub.f32 %v196, %v175
        %v288 = vsub.f32 %v196, %v176
        %v289 = vsub.f32 %v196, %v177
        %v290 = vsub.f32 %v196, %v178
        %v291 = vsub.f32 %v196, %v179
        %v292 = vsub.f32 %v196, %v180
        %v293 = vsub.f32 %v196, %v181
        %v294 = vsub.f32 %v196, %v182
        %v295 = vsub.f32 %v196, %v183
        %v296 = vsub.f32 %v196, %v184
        %v297 = vsub.f32 %v196, %v185
        %v298 = vsub.f32 %v196, %v186
        %v299 = vsub.f32 %v196, %v187
        %v300 = vsub.f32 %v196, %v188
        %v301 = vsub.f32 %v196, %v189
        %v302 = vsub.f32 %v196, %v190
        %v303 = vsub.f32 %v197, %v175
        %v304 = vsub.f32 %v197, %v176
        %v305 = vsub.f32 %v197, %v177
        %v306 = vsub.f32 %v197, %v178
        %v307 = vsub.f32 %v197, %v179
        %v308 = vsub.f32 %v197, %v180
        %v309 = vsub.f32 %v197, %v181
        %v310 = vsub.f32 %v197, %v182
        %v311 = vsub.f32 %v197, %v183
        %v312 = vsub.f32 %v197, %v184
        %v313 = vsub.f32 %v197, %v185
        %v314 = vsub.f32 %v197, %v186
        %v315 = vsub.f32 %v197, %v187
        %v316 = vsub.f32 %v197, %v188
        %v317 = vsub.f32 %v197, %v189
        %v318 = vsub.f32 %v197, %v190
        %v319 = vsub.f32 %v198, %v175
        %v320 = vsub.f32 %v198, %v176
        %v321 = vsub.f32 %v198, %v177
        %v322 = vsub.f32 %v198, %v178
        %v323 = vsub.f32 %v198, %v179
        %v324 = vsub.f32 %v198, %v180
        %v325 = vsub.f32 %v198, %v181
        %v326 = vsub.f32 %v198, %v182
        %v327 = vsub.f32 %v198, %v183
        %v328 = vsub.f32 %v198, %v184
        %v329 = vsub.f32 %v198, %v185
        %v330 = vsub.f32 %v198, %v186
        %v331 = vsub.f32 %v198, %v187
        %v332 = vsub.f32 %v198, %v188
        %v333 = vsub.f32 %v198, %v189
        %v334 = vsub.f32 %v198, %v190
        %v335 = vlaneseq
        %v336 = vshrl.u32 %v335, 7
        %v337 = vadd.s32 %v336, 8
        %v338 = vadd.s32 %v336, 16
        %v339 = vadd.s32 %v336, 24
        %v340 = vadd.s32 %v336, 32
        %v341 = vadd.s32 %v336, 40
        %v342 = vadd.s32 %v336, 48
        %v343 = vadd.s32 %v336, 56
        %v344 = vadd.s32 %v336, 64
        %v345 = vadd.s32 %v336, 72
        %v346 = vadd.s32 %v336, 80
        %v347 = vadd.s32 %v336, 88
        %v348 = vadd.s32 %v336, 96
        %v349 = vadd.s32 %v336, 104
        %v350 = vadd.s32 %v336, 112
        %v351 = vadd.s32 %v336, 120
        %v352 = vlaneseq
        %v353 = vand.u32 %v352, 127
        %v354 = vcvt.s32.f32 %v336
        %v355 = vcvt.s32.f32 %v337
        %v356 = vcvt.s32.f32 %v338
        %v357 = vcvt.s32.f32 %v339
        %v358 = vcvt.s32.f32 %v340
        %v359 = vcvt.s32.f32 %v341
        %v360 = vcvt.s32.f32 %v342
        %v361 = vcvt.s32.f32 %v343
        %v362 = vcvt.s32.f32 %v344
        %v363 = vcvt.s32.f32 %v345
        %v364 = vcvt.s32.f32 %v346
        %v365 = vcvt.s32.f32 %v347
        %v366 = vcvt.s32.f32 %v348
        %v367 = vcvt.s32.f32 %v349
        %v368 = vcvt.s32.f32 %v350
        %v369 = vcvt.s32.f32 %v351
        %v370 = vmul.u32 %v353, 128
        %v371 = vadd.s32 %v370, %v336
        %v372 = vadd.s32 %v370, %v337
        %v373 = vadd.s32 %v370, %v338
        %v374 = vadd.s32 %v370, %v339
        %v375 = vadd.s32 %v370, %v340
        %v376 = vadd.s32 %v370, %v341
        %v377 = vadd.s32 %v370, %v342
        %v378 = vadd.s32 %v370, %v343
        %v379 = vadd.s32 %v370, %v344
        %v380 = vadd.s32 %v370, %v345
        %v381 = vadd.s32 %v370, %v346
        %v382 = vadd.s32 %v370, %v347
        %v383 = vadd.s32 %v370, %v348
        %v384 = vadd.s32 %v370, %v349
        %v385 = vadd.s32 %v370, %v350
        %v386 = vadd.s32 %v370, %v351
        %v387 = vcvt.s32.f32 %v371
        %v388 = vcvt.s32.f32 %v372
        %v389 = vcvt.s32.f32 %v373
        %v390 = vcvt.s32.f32 %v374
        %v391 = vcvt.s32.f32 %v375
        %v392 = vcvt.s32.f32 %v376
        %v393 = vcvt.s32.f32 %v377
        %v394 = vcvt.s32.f32 %v378
        %v395 = vcvt.s32.f32 %v379
        %v396 = vcvt.s32.f32 %v380
        %v397 = vcvt.s32.f32 %v381
        %v398 = vcvt.s32.f32 %v382
        %v399 = vcvt.s32.f32 %v383
        %v400 = vcvt.s32.f32 %v384
        %v401 = vcvt.s32.f32 %v385
        %v402 = vcvt.s32.f32 %v386
        %s403 = scalar_lea.vmem %s1, 128
        %v404 = vld [vmem:[%s403] sm:$0xff]
        %v405 = vld [vmem:[%s403 + $0x8] sm:$0xff]
        %v406 = vld [vmem:[%s403 + $0x10] sm:$0xff]
        %v407 = vld [vmem:[%s403 + $0x18] sm:$0xff]
        %v408 = vld [vmem:[%s403 + $0x20] sm:$0xff]
        %v409 = vld [vmem:[%s403 + $0x28] sm:$0xff]
        %v410 = vld [vmem:[%s403 + $0x30] sm:$0xff]
        %v411 = vld [vmem:[%s403 + $0x38] sm:$0xff]
        %v412 = vld [vmem:[%s403 + $0x40] sm:$0xff]
        %v413 = vld [vmem:[%s403 + $0x48] sm:$0xff]
        %v414 = vld [vmem:[%s403 + $0x50] sm:$0xff]
        %v415 = vld [vmem:[%s403 + $0x58] sm:$0xff]
        %v416 = vld [vmem:[%s403 + $0x60] sm:$0xff]
        %v417 = vld [vmem:[%s403 + $0x68] sm:$0xff]
        %v418 = vld [vmem:[%s403 + $0x70] sm:$0xff]
        %v419 = vld [vmem:[%s403 + $0x78] sm:$0xff]
        %vm420 = vcmask 261120
        %v422 = vsel %vm420, %v207, 0
        %v425 = vsel %vm420, %v208, 0
        %v428 = vsel %vm420, %v209, 0
        %v431 = vsel %vm420, %v210, 0
        %v434 = vsel %vm420, %v211, 0
        %v437 = vsel %vm420, %v212, 0
        %v440 = vsel %vm420, %v213, 0
        %v443 = vsel %vm420, %v214, 0
        %v446 = vsel %vm420, %v215, 0
        %v449 = vsel %vm420, %v216, 0
        %v452 = vsel %vm420, %v217, 0
        %v455 = vsel %vm420, %v218, 0
        %v458 = vsel %vm420, %v219, 0
        %v461 = vsel %vm420, %v220, 0
        %v464 = vsel %vm420, %v221, 0
        %v467 = vsel %vm420, %v222, 0
        %v470 = vsel %vm420, %v223, 0
        %v473 = vsel %vm420, %v224, 0
        %v476 = vsel %vm420, %v225, 0
        %v479 = vsel %vm420, %v226, 0
        %v482 = vsel %vm420, %v227, 0
        %v485 = vsel %vm420, %v228, 0
        %v488 = vsel %vm420, %v229, 0
        %v491 = vsel %vm420, %v230, 0
        %v494 = vsel %vm420, %v231, 0
        %v497 = vsel %vm420, %v232, 0
        %v500 = vsel %vm420, %v233, 0
        %v503 = vsel %vm420, %v234, 0
        %v506 = vsel %vm420, %v235, 0
        %v509 = vsel %vm420, %v236, 0
        %v512 = vsel %vm420, %v237, 0
        %v515 = vsel %vm420, %v238, 0
        %v518 = vsel %vm420, %v239, 0
        %v521 = vsel %vm420, %v240, 0
        %v524 = vsel %vm420, %v241, 0
        %v527 = vsel %vm420, %v242, 0
        %v530 = vsel %vm420, %v243, 0
        %v533 = vsel %vm420, %v244, 0
        %v536 = vsel %vm420, %v245, 0
        %v539 = vsel %vm420, %v246, 0
        %v542 = vsel %vm420, %v247, 0
        %v545 = vsel %vm420, %v248, 0
        %v548 = vsel %vm420, %v249, 0
        %v551 = vsel %vm420, %v250, 0
        %v554 = vsel %vm420, %v251, 0
        %v557 = vsel %vm420, %v252, 0
        %v560 = vsel %vm420, %v253, 0
        %v563 = vsel %vm420, %v254, 0
        %v566 = vsel %vm420, %v255, 0
        %v569 = vsel %vm420, %v256, 0
        %v572 = vsel %vm420, %v257, 0
        %v575 = vsel %vm420, %v258, 0
        %v578 = vsel %vm420, %v259, 0
        %v581 = vsel %vm420, %v260, 0
        %v584 = vsel %vm420, %v261, 0
        %v587 = vsel %vm420, %v262, 0
        %v590 = vsel %vm420, %v263, 0
        %v593 = vsel %vm420, %v264, 0
        %v596 = vsel %vm420, %v265, 0
        %v599 = vsel %vm420, %v266, 0
        %v602 = vsel %vm420, %v267, 0
        %v605 = vsel %vm420, %v268, 0
        %v608 = vsel %vm420, %v269, 0
        %v611 = vsel %vm420, %v270, 0
        %v614 = vsel %vm420, %v271, 0
        %v617 = vsel %vm420, %v272, 0
        %v620 = vsel %vm420, %v273, 0
        %v623 = vsel %vm420, %v274, 0
        %v626 = vsel %vm420, %v275, 0
        %v629 = vsel %vm420, %v276, 0
        %v632 = vsel %vm420, %v277, 0
        %v635 = vsel %vm420, %v278, 0
        %v638 = vsel %vm420, %v279, 0
        %v641 = vsel %vm420, %v280, 0
        %v644 = vsel %vm420, %v281, 0
        %v647 = vsel %vm420, %v282, 0
        %v650 = vsel %vm420, %v283, 0
        %v653 = vsel %vm420, %v284, 0
        %v656 = vsel %vm420, %v285, 0
        %v659 = vsel %vm420, %v286, 0
        %v662 = vsel %vm420, %v287, 0
        %v665 = vsel %vm420, %v288, 0
        %v668 = vsel %vm420, %v289, 0
        %v671 = vsel %vm420, %v290, 0
        %v674 = vsel %vm420, %v291, 0
        %v677 = vsel %vm420, %v292, 0
        %v680 = vsel %vm420, %v293, 0
        %v683 = vsel %vm420, %v294, 0
        %v686 = vsel %vm420, %v295, 0
        %v689 = vsel %vm420, %v296, 0
        %v692 = vsel %vm420, %v297, 0
        %v695 = vsel %vm420, %v298, 0
        %v698 = vsel %vm420, %v299, 0
        %v701 = vsel %vm420, %v300, 0
        %v704 = vsel %vm420, %v301, 0
        %v707 = vsel %vm420, %v302, 0
        %v710 = vsel %vm420, %v303, 0
        %v713 = vsel %vm420, %v304, 0
        %v716 = vsel %vm420, %v305, 0
        %v719 = vsel %vm420, %v306, 0
        %v722 = vsel %vm420, %v307, 0
        %v725 = vsel %vm420, %v308, 0
        %v728 = vsel %vm420, %v309, 0
        %v731 = vsel %vm420, %v310, 0
        %v734 = vsel %vm420, %v311, 0
        %v737 = vsel %vm420, %v312, 0
        %v740 = vsel %vm420, %v313, 0
        %v743 = vsel %vm420, %v314, 0
        %v746 = vsel %vm420, %v315, 0
        %v749 = vsel %vm420, %v316, 0
        %v752 = vsel %vm420, %v317, 0
        %v755 = vsel %vm420, %v318, 0
        %v758 = vsel %vm420, %v319, 0
        %v761 = vsel %vm420, %v320, 0
        %v764 = vsel %vm420, %v321, 0
        %v767 = vsel %vm420, %v322, 0
        %v770 = vsel %vm420, %v323, 0
        %v773 = vsel %vm420, %v324, 0
        %v776 = vsel %vm420, %v325, 0
        %v779 = vsel %vm420, %v326, 0
        %v782 = vsel %vm420, %v327, 0
        %v785 = vsel %vm420, %v328, 0
        %v788 = vsel %vm420, %v329, 0
        %v791 = vsel %vm420, %v330, 0
        %v794 = vsel %vm420, %v331, 0
        %v797 = vsel %vm420, %v332, 0
        %v800 = vsel %vm420, %v333, 0
        %v803 = vsel %vm420, %v334, 0
        %v806 = vsel %vm420, %v404, 0
        %v809 = vsel %vm420, %v405, 0
        %v812 = vsel %vm420, %v406, 0
        %v815 = vsel %vm420, %v407, 0
        %v818 = vsel %vm420, %v408, 0
        %v821 = vsel %vm420, %v409, 0
        %v824 = vsel %vm420, %v410, 0
        %v827 = vsel %vm420, %v411, 0
        %v830 = vsel %vm420, %v412, 0
        %v833 = vsel %vm420, %v413, 0
        %v836 = vsel %vm420, %v414, 0
        %v839 = vsel %vm420, %v415, 0
        %v842 = vsel %vm420, %v416, 0
        %v845 = vsel %vm420, %v417, 0
        %v848 = vsel %vm420, %v418, 0
        %v851 = vsel %vm420, %v419, 0
        %853 = vmatpush.xpose.msra.mxu0 %v851
        %854 = vmatpush.xpose.msra.mxu0 %v848
        %855 = vmatpush.xpose.msra.mxu0 %v845
        %856 = vmatpush.xpose.msra.mxu0 %v842
        %857 = vmatpush.xpose.msra.mxu0 %v839
        %858 = vmatpush.xpose.msra.mxu0 %v836
        %859 = vmatpush.xpose.msra.mxu0 %v833
        %860 = vmatpush.xpose.msra.mxu0 %v830
        %861 = vmatpush.xpose.msra.mxu0 %v827
        %862 = vmatpush.xpose.msra.mxu0 %v824
        %863 = vmatpush.xpose.msra.mxu0 %v821
        %864 = vmatpush.xpose.msra.mxu0 %v818
        %865 = vmatpush.xpose.msra.mxu0 %v815
        %866 = vmatpush.xpose.msra.mxu0 %v812
        %867 = vmatpush.xpose.msra.mxu0 %v809
        %868 = vmatpush.xpose.msra.mxu0 %v806
        %869 = vmatmul.f32.gmra.mxu0 %v422
        %v870 = vpop.f32.mrf.mxu0
        %v871 = vadd.f32 0.0, %v870
        %872 = vmatmul.f32.gmra.mxu0 %v425
        %v873 = vpop.f32.mrf.mxu0
        %v874 = vadd.f32 0.0, %v873
        %875 = vmatmul.f32.gmra.mxu0 %v428
        %v876 = vpop.f32.mrf.mxu0
        %v877 = vadd.f32 0.0, %v876
        %878 = vmatmul.f32.gmra.mxu0 %v431
        %v879 = vpop.f32.mrf.mxu0
        %v880 = vadd.f32 0.0, %v879
        %881 = vmatmul.f32.gmra.mxu0 %v434
        %v882 = vpop.f32.mrf.mxu0
        %v883 = vadd.f32 0.0, %v882
        %884 = vmatmul.f32.gmra.mxu0 %v437
        %v885 = vpop.f32.mrf.mxu0
        %v886 = vadd.f32 0.0, %v885
        %887 = vmatmul.f32.gmra.mxu0 %v440
        %v888 = vpop.f32.mrf.mxu0
        %v889 = vadd.f32 0.0, %v888
        %890 = vmatmul.f32.gmra.mxu0 %v443
        %v891 = vpop.f32.mrf.mxu0
        %v892 = vadd.f32 0.0, %v891
        %893 = vmatmul.f32.gmra.mxu0 %v446
        %v894 = vpop.f32.mrf.mxu0
        %v895 = vadd.f32 0.0, %v894
        %896 = vmatmul.f32.gmra.mxu0 %v449
        %v897 = vpop.f32.mrf.mxu0
        %v898 = vadd.f32 0.0, %v897
        %899 = vmatmul.f32.gmra.mxu0 %v452
        %v900 = vpop.f32.mrf.mxu0
        %v901 = vadd.f32 0.0, %v900
        %902 = vmatmul.f32.gmra.mxu0 %v455
        %v903 = vpop.f32.mrf.mxu0
        %v904 = vadd.f32 0.0, %v903
        %905 = vmatmul.f32.gmra.mxu0 %v458
        %v906 = vpop.f32.mrf.mxu0
        %v907 = vadd.f32 0.0, %v906
        %908 = vmatmul.f32.gmra.mxu0 %v461
        %v909 = vpop.f32.mrf.mxu0
        %v910 = vadd.f32 0.0, %v909
        %911 = vmatmul.f32.gmra.mxu0 %v464
        %v912 = vpop.f32.mrf.mxu0
        %v913 = vadd.f32 0.0, %v912
        %914 = vmatmul.f32.gmra.mxu0 %v467
        %v915 = vpop.f32.mrf.mxu0
        %v916 = vadd.f32 0.0, %v915
        %917 = vmatmul.f32.gmra.mxu0 %v470
        %v918 = vpop.f32.mrf.mxu0
        %v919 = vadd.f32 0.0, %v918
        %920 = vmatmul.f32.gmra.mxu0 %v473
        %v921 = vpop.f32.mrf.mxu0
        %v922 = vadd.f32 0.0, %v921
        %923 = vmatmul.f32.gmra.mxu0 %v476
        %v924 = vpop.f32.mrf.mxu0
        %v925 = vadd.f32 0.0, %v924
        %926 = vmatmul.f32.gmra.mxu0 %v479
        %v927 = vpop.f32.mrf.mxu0
        %v928 = vadd.f32 0.0, %v927
        %929 = vmatmul.f32.gmra.mxu0 %v482
        %v930 = vpop.f32.mrf.mxu0
        %v931 = vadd.f32 0.0, %v930
        %932 = vmatmul.f32.gmra.mxu0 %v485
        %v933 = vpop.f32.mrf.mxu0
        %v934 = vadd.f32 0.0, %v933
        %935 = vmatmul.f32.gmra.mxu0 %v488
        %v936 = vpop.f32.mrf.mxu0
        %v937 = vadd.f32 0.0, %v936
        %938 = vmatmul.f32.gmra.mxu0 %v491
        %v939 = vpop.f32.mrf.mxu0
        %v940 = vadd.f32 0.0, %v939
        %941 = vmatmul.f32.gmra.mxu0 %v494
        %v942 = vpop.f32.mrf.mxu0
        %v943 = vadd.f32 0.0, %v942
        %944 = vmatmul.f32.gmra.mxu0 %v497
        %v945 = vpop.f32.mrf.mxu0
        %v946 = vadd.f32 0.0, %v945
        %947 = vmatmul.f32.gmra.mxu0 %v500
        %v948 = vpop.f32.mrf.mxu0
        %v949 = vadd.f32 0.0, %v948
        %950 = vmatmul.f32.gmra.mxu0 %v503
        %v951 = vpop.f32.mrf.mxu0
        %v952 = vadd.f32 0.0, %v951
        %953 = vmatmul.f32.gmra.mxu0 %v506
        %v954 = vpop.f32.mrf.mxu0
        %v955 = vadd.f32 0.0, %v954
        %956 = vmatmul.f32.gmra.mxu0 %v509
        %v957 = vpop.f32.mrf.mxu0
        %v958 = vadd.f32 0.0, %v957
        %959 = vmatmul.f32.gmra.mxu0 %v512
        %v960 = vpop.f32.mrf.mxu0
        %v961 = vadd.f32 0.0, %v960
        %962 = vmatmul.f32.gmra.mxu0 %v515
        %v963 = vpop.f32.mrf.mxu0
        %v964 = vadd.f32 0.0, %v963
        %965 = vmatmul.f32.gmra.mxu0 %v518
        %v966 = vpop.f32.mrf.mxu0
        %v967 = vadd.f32 0.0, %v966
        %968 = vmatmul.f32.gmra.mxu0 %v521
        %v969 = vpop.f32.mrf.mxu0
        %v970 = vadd.f32 0.0, %v969
        %971 = vmatmul.f32.gmra.mxu0 %v524
        %v972 = vpop.f32.mrf.mxu0
        %v973 = vadd.f32 0.0, %v972
        %974 = vmatmul.f32.gmra.mxu0 %v527
        %v975 = vpop.f32.mrf.mxu0
        %v976 = vadd.f32 0.0, %v975
        %977 = vmatmul.f32.gmra.mxu0 %v530
        %v978 = vpop.f32.mrf.mxu0
        %v979 = vadd.f32 0.0, %v978
        %980 = vmatmul.f32.gmra.mxu0 %v533
        %v981 = vpop.f32.mrf.mxu0
        %v982 = vadd.f32 0.0, %v981
        %983 = vmatmul.f32.gmra.mxu0 %v536
        %v984 = vpop.f32.mrf.mxu0
        %v985 = vadd.f32 0.0, %v984
        %986 = vmatmul.f32.gmra.mxu0 %v539
        %v987 = vpop.f32.mrf.mxu0
        %v988 = vadd.f32 0.0, %v987
        %989 = vmatmul.f32.gmra.mxu0 %v542
        %v990 = vpop.f32.mrf.mxu0
        %v991 = vadd.f32 0.0, %v990
        %992 = vmatmul.f32.gmra.mxu0 %v545
        %v993 = vpop.f32.mrf.mxu0
        %v994 = vadd.f32 0.0, %v993
        %995 = vmatmul.f32.gmra.mxu0 %v548
        %v996 = vpop.f32.mrf.mxu0
        %v997 = vadd.f32 0.0, %v996
        %998 = vmatmul.f32.gmra.mxu0 %v551
        %v999 = vpop.f32.mrf.mxu0
        %v1000 = vadd.f32 0.0, %v999
        %1001 = vmatmul.f32.gmra.mxu0 %v554
        %v1002 = vpop.f32.mrf.mxu0
        %v1003 = vadd.f32 0.0, %v1002
        %1004 = vmatmul.f32.gmra.mxu0 %v557
        %v1005 = vpop.f32.mrf.mxu0
        %v1006 = vadd.f32 0.0, %v1005
        %1007 = vmatmul.f32.gmra.mxu0 %v560
        %v1008 = vpop.f32.mrf.mxu0
        %v1009 = vadd.f32 0.0, %v1008
        %1010 = vmatmul.f32.gmra.mxu0 %v563
        %v1011 = vpop.f32.mrf.mxu0
        %v1012 = vadd.f32 0.0, %v1011
        %1013 = vmatmul.f32.gmra.mxu0 %v566
        %v1014 = vpop.f32.mrf.mxu0
        %v1015 = vadd.f32 0.0, %v1014
        %1016 = vmatmul.f32.gmra.mxu0 %v569
        %v1017 = vpop.f32.mrf.mxu0
        %v1018 = vadd.f32 0.0, %v1017
        %1019 = vmatmul.f32.gmra.mxu0 %v572
        %v1020 = vpop.f32.mrf.mxu0
        %v1021 = vadd.f32 0.0, %v1020
        %1022 = vmatmul.f32.gmra.mxu0 %v575
        %v1023 = vpop.f32.mrf.mxu0
        %v1024 = vadd.f32 0.0, %v1023
        %1025 = vmatmul.f32.gmra.mxu0 %v578
        %v1026 = vpop.f32.mrf.mxu0
        %v1027 = vadd.f32 0.0, %v1026
        %1028 = vmatmul.f32.gmra.mxu0 %v581
        %v1029 = vpop.f32.mrf.mxu0
        %v1030 = vadd.f32 0.0, %v1029
        %1031 = vmatmul.f32.gmra.mxu0 %v584
        %v1032 = vpop.f32.mrf.mxu0
        %v1033 = vadd.f32 0.0, %v1032
        %1034 = vmatmul.f32.gmra.mxu0 %v587
        %v1035 = vpop.f32.mrf.mxu0
        %v1036 = vadd.f32 0.0, %v1035
        %1037 = vmatmul.f32.gmra.mxu0 %v590
        %v1038 = vpop.f32.mrf.mxu0
        %v1039 = vadd.f32 0.0, %v1038
        %1040 = vmatmul.f32.gmra.mxu0 %v593
        %v1041 = vpop.f32.mrf.mxu0
        %v1042 = vadd.f32 0.0, %v1041
        %1043 = vmatmul.f32.gmra.mxu0 %v596
        %v1044 = vpop.f32.mrf.mxu0
        %v1045 = vadd.f32 0.0, %v1044
        %1046 = vmatmul.f32.gmra.mxu0 %v599
        %v1047 = vpop.f32.mrf.mxu0
        %v1048 = vadd.f32 0.0, %v1047
        %1049 = vmatmul.f32.gmra.mxu0 %v602
        %v1050 = vpop.f32.mrf.mxu0
        %v1051 = vadd.f32 0.0, %v1050
        %1052 = vmatmul.f32.gmra.mxu0 %v605
        %v1053 = vpop.f32.mrf.mxu0
        %v1054 = vadd.f32 0.0, %v1053
        %1055 = vmatmul.f32.gmra.mxu0 %v608
        %v1056 = vpop.f32.mrf.mxu0
        %v1057 = vadd.f32 0.0, %v1056
        %1058 = vmatmul.f32.gmra.mxu0 %v611
        %v1059 = vpop.f32.mrf.mxu0
        %v1060 = vadd.f32 0.0, %v1059
        %1061 = vmatmul.f32.gmra.mxu0 %v614
        %v1062 = vpop.f32.mrf.mxu0
        %v1063 = vadd.f32 0.0, %v1062
        %1064 = vmatmul.f32.gmra.mxu0 %v617
        %v1065 = vpop.f32.mrf.mxu0
        %v1066 = vadd.f32 0.0, %v1065
        %1067 = vmatmul.f32.gmra.mxu0 %v620
        %v1068 = vpop.f32.mrf.mxu0
        %v1069 = vadd.f32 0.0, %v1068
        %1070 = vmatmul.f32.gmra.mxu0 %v623
        %v1071 = vpop.f32.mrf.mxu0
        %v1072 = vadd.f32 0.0, %v1071
        %1073 = vmatmul.f32.gmra.mxu0 %v626
        %v1074 = vpop.f32.mrf.mxu0
        %v1075 = vadd.f32 0.0, %v1074
        %1076 = vmatmul.f32.gmra.mxu0 %v629
        %v1077 = vpop.f32.mrf.mxu0
        %v1078 = vadd.f32 0.0, %v1077
        %1079 = vmatmul.f32.gmra.mxu0 %v632
        %v1080 = vpop.f32.mrf.mxu0
        %v1081 = vadd.f32 0.0, %v1080
        %1082 = vmatmul.f32.gmra.mxu0 %v635
        %v1083 = vpop.f32.mrf.mxu0
        %v1084 = vadd.f32 0.0, %v1083
        %1085 = vmatmul.f32.gmra.mxu0 %v638
        %v1086 = vpop.f32.mrf.mxu0
        %v1087 = vadd.f32 0.0, %v1086
        %1088 = vmatmul.f32.gmra.mxu0 %v641
        %v1089 = vpop.f32.mrf.mxu0
        %v1090 = vadd.f32 0.0, %v1089
        %1091 = vmatmul.f32.gmra.mxu0 %v644
        %v1092 = vpop.f32.mrf.mxu0
        %v1093 = vadd.f32 0.0, %v1092
        %1094 = vmatmul.f32.gmra.mxu0 %v647
        %v1095 = vpop.f32.mrf.mxu0
        %v1096 = vadd.f32 0.0, %v1095
        %1097 = vmatmul.f32.gmra.mxu0 %v650
        %v1098 = vpop.f32.mrf.mxu0
        %v1099 = vadd.f32 0.0, %v1098
        %1100 = vmatmul.f32.gmra.mxu0 %v653
        %v1101 = vpop.f32.mrf.mxu0
        %v1102 = vadd.f32 0.0, %v1101
        %1103 = vmatmul.f32.gmra.mxu0 %v656
        %v1104 = vpop.f32.mrf.mxu0
        %v1105 = vadd.f32 0.0, %v1104
        %1106 = vmatmul.f32.gmra.mxu0 %v659
        %v1107 = vpop.f32.mrf.mxu0
        %v1108 = vadd.f32 0.0, %v1107
        %1109 = vmatmul.f32.gmra.mxu0 %v662
        %v1110 = vpop.f32.mrf.mxu0
        %v1111 = vadd.f32 0.0, %v1110
        %1112 = vmatmul.f32.gmra.mxu0 %v665
        %v1113 = vpop.f32.mrf.mxu0
        %v1114 = vadd.f32 0.0, %v1113
        %1115 = vmatmul.f32.gmra.mxu0 %v668
        %v1116 = vpop.f32.mrf.mxu0
        %v1117 = vadd.f32 0.0, %v1116
        %1118 = vmatmul.f32.gmra.mxu0 %v671
        %v1119 = vpop.f32.mrf.mxu0
        %v1120 = vadd.f32 0.0, %v1119
        %1121 = vmatmul.f32.gmra.mxu0 %v674
        %v1122 = vpop.f32.mrf.mxu0
        %v1123 = vadd.f32 0.0, %v1122
        %1124 = vmatmul.f32.gmra.mxu0 %v677
        %v1125 = vpop.f32.mrf.mxu0
        %v1126 = vadd.f32 0.0, %v1125
        %1127 = vmatmul.f32.gmra.mxu0 %v680
        %v1128 = vpop.f32.mrf.mxu0
        %v1129 = vadd.f32 0.0, %v1128
        %1130 = vmatmul.f32.gmra.mxu0 %v683
        %v1131 = vpop.f32.mrf.mxu0
        %v1132 = vadd.f32 0.0, %v1131
        %1133 = vmatmul.f32.gmra.mxu0 %v686
        %v1134 = vpop.f32.mrf.mxu0
        %v1135 = vadd.f32 0.0, %v1134
        %1136 = vmatmul.f32.gmra.mxu0 %v689
        %v1137 = vpop.f32.mrf.mxu0
        %v1138 = vadd.f32 0.0, %v1137
        %1139 = vmatmul.f32.gmra.mxu0 %v692
        %v1140 = vpop.f32.mrf.mxu0
        %v1141 = vadd.f32 0.0, %v1140
        %1142 = vmatmul.f32.gmra.mxu0 %v695
        %v1143 = vpop.f32.mrf.mxu0
        %v1144 = vadd.f32 0.0, %v1143
        %1145 = vmatmul.f32.gmra.mxu0 %v698
        %v1146 = vpop.f32.mrf.mxu0
        %v1147 = vadd.f32 0.0, %v1146
        %1148 = vmatmul.f32.gmra.mxu0 %v701
        %v1149 = vpop.f32.mrf.mxu0
        %v1150 = vadd.f32 0.0, %v1149
        %1151 = vmatmul.f32.gmra.mxu0 %v704
        %v1152 = vpop.f32.mrf.mxu0
        %v1153 = vadd.f32 0.0, %v1152
        %1154 = vmatmul.f32.gmra.mxu0 %v707
        %v1155 = vpop.f32.mrf.mxu0
        %v1156 = vadd.f32 0.0, %v1155
        %1157 = vmatmul.f32.gmra.mxu0 %v710
        %v1158 = vpop.f32.mrf.mxu0
        %v1159 = vadd.f32 0.0, %v1158
        %1160 = vmatmul.f32.gmra.mxu0 %v713
        %v1161 = vpop.f32.mrf.mxu0
        %v1162 = vadd.f32 0.0, %v1161
        %1163 = vmatmul.f32.gmra.mxu0 %v716
        %v1164 = vpop.f32.mrf.mxu0
        %v1165 = vadd.f32 0.0, %v1164
        %1166 = vmatmul.f32.gmra.mxu0 %v719
        %v1167 = vpop.f32.mrf.mxu0
        %v1168 = vadd.f32 0.0, %v1167
        %1169 = vmatmul.f32.gmra.mxu0 %v722
        %v1170 = vpop.f32.mrf.mxu0
        %v1171 = vadd.f32 0.0, %v1170
        %1172 = vmatmul.f32.gmra.mxu0 %v725
        %v1173 = vpop.f32.mrf.mxu0
        %v1174 = vadd.f32 0.0, %v1173
        %1175 = vmatmul.f32.gmra.mxu0 %v728
        %v1176 = vpop.f32.mrf.mxu0
        %v1177 = vadd.f32 0.0, %v1176
        %1178 = vmatmul.f32.gmra.mxu0 %v731
        %v1179 = vpop.f32.mrf.mxu0
        %v1180 = vadd.f32 0.0, %v1179
        %1181 = vmatmul.f32.gmra.mxu0 %v734
        %v1182 = vpop.f32.mrf.mxu0
        %v1183 = vadd.f32 0.0, %v1182
        %1184 = vmatmul.f32.gmra.mxu0 %v737
        %v1185 = vpop.f32.mrf.mxu0
        %v1186 = vadd.f32 0.0, %v1185
        %1187 = vmatmul.f32.gmra.mxu0 %v740
        %v1188 = vpop.f32.mrf.mxu0
        %v1189 = vadd.f32 0.0, %v1188
        %1190 = vmatmul.f32.gmra.mxu0 %v743
        %v1191 = vpop.f32.mrf.mxu0
        %v1192 = vadd.f32 0.0, %v1191
        %1193 = vmatmul.f32.gmra.mxu0 %v746
        %v1194 = vpop.f32.mrf.mxu0
        %v1195 = vadd.f32 0.0, %v1194
        %1196 = vmatmul.f32.gmra.mxu0 %v749
        %v1197 = vpop.f32.mrf.mxu0
        %v1198 = vadd.f32 0.0, %v1197
        %1199 = vmatmul.f32.gmra.mxu0 %v752
        %v1200 = vpop.f32.mrf.mxu0
        %v1201 = vadd.f32 0.0, %v1200
        %1202 = vmatmul.f32.gmra.mxu0 %v755
        %v1203 = vpop.f32.mrf.mxu0
        %v1204 = vadd.f32 0.0, %v1203
        %1205 = vmatmul.f32.gmra.mxu0 %v758
        %v1206 = vpop.f32.mrf.mxu0
        %v1207 = vadd.f32 0.0, %v1206
        %1208 = vmatmul.f32.gmra.mxu0 %v761
        %v1209 = vpop.f32.mrf.mxu0
        %v1210 = vadd.f32 0.0, %v1209
        %1211 = vmatmul.f32.gmra.mxu0 %v764
        %v1212 = vpop.f32.mrf.mxu0
        %v1213 = vadd.f32 0.0, %v1212
        %1214 = vmatmul.f32.gmra.mxu0 %v767
        %v1215 = vpop.f32.mrf.mxu0
        %v1216 = vadd.f32 0.0, %v1215
        %1217 = vmatmul.f32.gmra.mxu0 %v770
        %v1218 = vpop.f32.mrf.mxu0
        %v1219 = vadd.f32 0.0, %v1218
        %1220 = vmatmul.f32.gmra.mxu0 %v773
        %v1221 = vpop.f32.mrf.mxu0
        %v1222 = vadd.f32 0.0, %v1221
        %1223 = vmatmul.f32.gmra.mxu0 %v776
        %v1224 = vpop.f32.mrf.mxu0
        %v1225 = vadd.f32 0.0, %v1224
        %1226 = vmatmul.f32.gmra.mxu0 %v779
        %v1227 = vpop.f32.mrf.mxu0
        %v1228 = vadd.f32 0.0, %v1227
        %1229 = vmatmul.f32.gmra.mxu0 %v782
        %v1230 = vpop.f32.mrf.mxu0
        %v1231 = vadd.f32 0.0, %v1230
        %1232 = vmatmul.f32.gmra.mxu0 %v785
        %v1233 = vpop.f32.mrf.mxu0
        %v1234 = vadd.f32 0.0, %v1233
        %1235 = vmatmul.f32.gmra.mxu0 %v788
        %v1236 = vpop.f32.mrf.mxu0
        %v1237 = vadd.f32 0.0, %v1236
        %1238 = vmatmul.f32.gmra.mxu0 %v791
        %v1239 = vpop.f32.mrf.mxu0
        %v1240 = vadd.f32 0.0, %v1239
        %1241 = vmatmul.f32.gmra.mxu0 %v794
        %v1242 = vpop.f32.mrf.mxu0
        %v1243 = vadd.f32 0.0, %v1242
        %1244 = vmatmul.f32.gmra.mxu0 %v797
        %v1245 = vpop.f32.mrf.mxu0
        %v1246 = vadd.f32 0.0, %v1245
        %1247 = vmatmul.f32.gmra.mxu0 %v800
        %v1248 = vpop.f32.mrf.mxu0
        %v1249 = vadd.f32 0.0, %v1248
        %1250 = vmatmul.f32.gmra.mxu0 %v803
        %v1251 = vpop.f32.mrf.mxu0
        %v1252 = vadd.f32 0.0, %v1251
        %1253 = vdwg.mxu0
        %v1254 = vmul.f32 %v207, %v207
        %v1255 = vmul.f32 %v208, %v208
        %v1256 = vmul.f32 %v209, %v209
        %v1257 = vmul.f32 %v210, %v210
        %v1258 = vmul.f32 %v211, %v211
        %v1259 = vmul.f32 %v212, %v212
        %v1260 = vmul.f32 %v213, %v213
        %v1261 = vmul.f32 %v214, %v214
        %v1262 = vmul.f32 %v215, %v215
        %v1263 = vmul.f32 %v216, %v216
        %v1264 = vmul.f32 %v217, %v217
        %v1265 = vmul.f32 %v218, %v218
        %v1266 = vmul.f32 %v219, %v219
        %v1267 = vmul.f32 %v220, %v220
        %v1268 = vmul.f32 %v221, %v221
        %v1269 = vmul.f32 %v222, %v222
        %v1270 = vmul.f32 %v223, %v223
        %v1271 = vmul.f32 %v224, %v224
        %v1272 = vmul.f32 %v225, %v225
        %v1273 = vmul.f32 %v226, %v226
        %v1274 = vmul.f32 %v227, %v227
        %v1275 = vmul.f32 %v228, %v228
        %v1276 = vmul.f32 %v229, %v229
        %v1277 = vmul.f32 %v230, %v230
        %v1278 = vmul.f32 %v231, %v231
        %v1279 = vmul.f32 %v232, %v232
        %v1280 = vmul.f32 %v233, %v233
        %v1281 = vmul.f32 %v234, %v234
        %v1282 = vmul.f32 %v235, %v235
        %v1283 = vmul.f32 %v236, %v236
        %v1284 = vmul.f32 %v237, %v237
        %v1285 = vmul.f32 %v238, %v238
        %v1286 = vmul.f32 %v239, %v239
        %v1287 = vmul.f32 %v240, %v240
        %v1288 = vmul.f32 %v241, %v241
        %v1289 = vmul.f32 %v242, %v242
        %v1290 = vmul.f32 %v243, %v243
        %v1291 = vmul.f32 %v244, %v244
        %v1292 = vmul.f32 %v245, %v245
        %v1293 = vmul.f32 %v246, %v246
        %v1294 = vmul.f32 %v247, %v247
        %v1295 = vmul.f32 %v248, %v248
        %v1296 = vmul.f32 %v249, %v249
        %v1297 = vmul.f32 %v250, %v250
        %v1298 = vmul.f32 %v251, %v251
        %v1299 = vmul.f32 %v252, %v252
        %v1300 = vmul.f32 %v253, %v253
        %v1301 = vmul.f32 %v254, %v254
        %v1302 = vmul.f32 %v255, %v255
        %v1303 = vmul.f32 %v256, %v256
        %v1304 = vmul.f32 %v257, %v257
        %v1305 = vmul.f32 %v258, %v258
        %v1306 = vmul.f32 %v259, %v259
        %v1307 = vmul.f32 %v260, %v260
        %v1308 = vmul.f32 %v261, %v261
        %v1309 = vmul.f32 %v262, %v262
        %v1310 = vmul.f32 %v263, %v263
        %v1311 = vmul.f32 %v264, %v264
        %v1312 = vmul.f32 %v265, %v265
        %v1313 = vmul.f32 %v266, %v266
        %v1314 = vmul.f32 %v267, %v267
        %v1315 = vmul.f32 %v268, %v268
        %v1316 = vmul.f32 %v269, %v269
        %v1317 = vmul.f32 %v270, %v270
        %v1318 = vmul.f32 %v271, %v271
        %v1319 = vmul.f32 %v272, %v272
        %v1320 = vmul.f32 %v273, %v273
        %v1321 = vmul.f32 %v274, %v274
        %v1322 = vmul.f32 %v275, %v275
        %v1323 = vmul.f32 %v276, %v276
        %v1324 = vmul.f32 %v277, %v277
        %v1325 = vmul.f32 %v278, %v278
        %v1326 = vmul.f32 %v279, %v279
        %v1327 = vmul.f32 %v280, %v280
        %v1328 = vmul.f32 %v281, %v281
        %v1329 = vmul.f32 %v282, %v282
        %v1330 = vmul.f32 %v283, %v283
        %v1331 = vmul.f32 %v284, %v284
        %v1332 = vmul.f32 %v285, %v285
        %v1333 = vmul.f32 %v286, %v286
        %v1334 = vmul.f32 %v287, %v287
        %v1335 = vmul.f32 %v288, %v288
        %v1336 = vmul.f32 %v289, %v289
        %v1337 = vmul.f32 %v290, %v290
        %v1338 = vmul.f32 %v291, %v291
        %v1339 = vmul.f32 %v292, %v292
        %v1340 = vmul.f32 %v293, %v293
        %v1341 = vmul.f32 %v294, %v294
        %v1342 = vmul.f32 %v295, %v295
        %v1343 = vmul.f32 %v296, %v296
        %v1344 = vmul.f32 %v297, %v297
        %v1345 = vmul.f32 %v298, %v298
        %v1346 = vmul.f32 %v299, %v299
        %v1347 = vmul.f32 %v300, %v300
        %v1348 = vmul.f32 %v301, %v301
        %v1349 = vmul.f32 %v302, %v302
        %v1350 = vmul.f32 %v303, %v303
        %v1351 = vmul.f32 %v304, %v304
        %v1352 = vmul.f32 %v305, %v305
        %v1353 = vmul.f32 %v306, %v306
        %v1354 = vmul.f32 %v307, %v307
        %v1355 = vmul.f32 %v308, %v308
        %v1356 = vmul.f32 %v309, %v309
        %v1357 = vmul.f32 %v310, %v310
        %v1358 = vmul.f32 %v311, %v311
        %v1359 = vmul.f32 %v312, %v312
        %v1360 = vmul.f32 %v313, %v313
        %v1361 = vmul.f32 %v314, %v314
        %v1362 = vmul.f32 %v315, %v315
        %v1363 = vmul.f32 %v316, %v316
        %v1364 = vmul.f32 %v317, %v317
        %v1365 = vmul.f32 %v318, %v318
        %v1366 = vmul.f32 %v319, %v319
        %v1367 = vmul.f32 %v320, %v320
        %v1368 = vmul.f32 %v321, %v321
        %v1369 = vmul.f32 %v322, %v322
        %v1370 = vmul.f32 %v323, %v323
        %v1371 = vmul.f32 %v324, %v324
        %v1372 = vmul.f32 %v325, %v325
        %v1373 = vmul.f32 %v326, %v326
        %v1374 = vmul.f32 %v327, %v327
        %v1375 = vmul.f32 %v328, %v328
        %v1376 = vmul.f32 %v329, %v329
        %v1377 = vmul.f32 %v330, %v330
        %v1378 = vmul.f32 %v331, %v331
        %v1379 = vmul.f32 %v332, %v332
        %v1380 = vmul.f32 %v333, %v333
        %v1381 = vmul.f32 %v334, %v334
        %v1382 = vsel %vm420, %v1254, 0.0
        %1383 = vadd.xlane.f32.xlu0 %v1382
        %v1384 = vpop.xlane.xlu0 %1383
        %v1385 = vsel %vm420, %v1255, 0.0
        %1386 = vadd.xlane.f32.xlu0 %v1385
        %v1387 = vpop.xlane.xlu0 %1386
        %v1388 = vsel %vm420, %v1256, 0.0
        %1389 = vadd.xlane.f32.xlu0 %v1388
        %v1390 = vpop.xlane.xlu0 %1389
        %v1391 = vsel %vm420, %v1257, 0.0
        %1392 = vadd.xlane.f32.xlu0 %v1391
        %v1393 = vpop.xlane.xlu0 %1392
        %v1394 = vsel %vm420, %v1258, 0.0
        %1395 = vadd.xlane.f32.xlu0 %v1394
        %v1396 = vpop.xlane.xlu0 %1395
        %v1397 = vsel %vm420, %v1259, 0.0
        %1398 = vadd.xlane.f32.xlu0 %v1397
        %v1399 = vpop.xlane.xlu0 %1398
        %v1400 = vsel %vm420, %v1260, 0.0
        %1401 = vadd.xlane.f32.xlu0 %v1400
        %v1402 = vpop.xlane.xlu0 %1401
        %v1403 = vsel %vm420, %v1261, 0.0
        %1404 = vadd.xlane.f32.xlu0 %v1403
        %v1405 = vpop.xlane.xlu0 %1404
        %v1406 = vsel %vm420, %v1262, 0.0
        %1407 = vadd.xlane.f32.xlu0 %v1406
        %v1408 = vpop.xlane.xlu0 %1407
        %v1409 = vsel %vm420, %v1263, 0.0
        %1410 = vadd.xlane.f32.xlu0 %v1409
        %v1411 = vpop.xlane.xlu0 %1410
        %v1412 = vsel %vm420, %v1264, 0.0
        %1413 = vadd.xlane.f32.xlu0 %v1412
        %v1414 = vpop.xlane.xlu0 %1413
        %v1415 = vsel %vm420, %v1265, 0.0
        %1416 = vadd.xlane.f32.xlu0 %v1415
        %v1417 = vpop.xlane.xlu0 %1416
        %v1418 = vsel %vm420, %v1266, 0.0
        %1419 = vadd.xlane.f32.xlu0 %v1418
        %v1420 = vpop.xlane.xlu0 %1419
        %v1421 = vsel %vm420, %v1267, 0.0
        %1422 = vadd.xlane.f32.xlu0 %v1421
        %v1423 = vpop.xlane.xlu0 %1422
        %v1424 = vsel %vm420, %v1268, 0.0
        %1425 = vadd.xlane.f32.xlu0 %v1424
        %v1426 = vpop.xlane.xlu0 %1425
        %v1427 = vsel %vm420, %v1269, 0.0
        %1428 = vadd.xlane.f32.xlu0 %v1427
        %v1429 = vpop.xlane.xlu0 %1428
        %v1430 = vsel %vm420, %v1270, 0.0
        %1431 = vadd.xlane.f32.xlu0 %v1430
        %v1432 = vpop.xlane.xlu0 %1431
        %v1433 = vsel %vm420, %v1271, 0.0
        %1434 = vadd.xlane.f32.xlu0 %v1433
        %v1435 = vpop.xlane.xlu0 %1434
        %v1436 = vsel %vm420, %v1272, 0.0
        %1437 = vadd.xlane.f32.xlu0 %v1436
        %v1438 = vpop.xlane.xlu0 %1437
        %v1439 = vsel %vm420, %v1273, 0.0
        %1440 = vadd.xlane.f32.xlu0 %v1439
        %v1441 = vpop.xlane.xlu0 %1440
        %v1442 = vsel %vm420, %v1274, 0.0
        %1443 = vadd.xlane.f32.xlu0 %v1442
        %v1444 = vpop.xlane.xlu0 %1443
        %v1445 = vsel %vm420, %v1275, 0.0
        %1446 = vadd.xlane.f32.xlu0 %v1445
        %v1447 = vpop.xlane.xlu0 %1446
        %v1448 = vsel %vm420, %v1276, 0.0
        %1449 = vadd.xlane.f32.xlu0 %v1448
        %v1450 = vpop.xlane.xlu0 %1449
        %v1451 = vsel %vm420, %v1277, 0.0
        %1452 = vadd.xlane.f32.xlu0 %v1451
        %v1453 = vpop.xlane.xlu0 %1452
        %v1454 = vsel %vm420, %v1278, 0.0
        %1455 = vadd.xlane.f32.xlu0 %v1454
        %v1456 = vpop.xlane.xlu0 %1455
        %v1457 = vsel %vm420, %v1279, 0.0
        %1458 = vadd.xlane.f32.xlu0 %v1457
        %v1459 = vpop.xlane.xlu0 %1458
        %v1460 = vsel %vm420, %v1280, 0.0
        %1461 = vadd.xlane.f32.xlu0 %v1460
        %v1462 = vpop.xlane.xlu0 %1461
        %v1463 = vsel %vm420, %v1281, 0.0
        %1464 = vadd.xlane.f32.xlu0 %v1463
        %v1465 = vpop.xlane.xlu0 %1464
        %v1466 = vsel %vm420, %v1282, 0.0
        %1467 = vadd.xlane.f32.xlu0 %v1466
        %v1468 = vpop.xlane.xlu0 %1467
        %v1469 = vsel %vm420, %v1283, 0.0
        %1470 = vadd.xlane.f32.xlu0 %v1469
        %v1471 = vpop.xlane.xlu0 %1470
        %v1472 = vsel %vm420, %v1284, 0.0
        %1473 = vadd.xlane.f32.xlu0 %v1472
        %v1474 = vpop.xlane.xlu0 %1473
        %v1475 = vsel %vm420, %v1285, 0.0
        %1476 = vadd.xlane.f32.xlu0 %v1475
        %v1477 = vpop.xlane.xlu0 %1476
        %v1478 = vsel %vm420, %v1286, 0.0
        %1479 = vadd.xlane.f32.xlu0 %v1478
        %v1480 = vpop.xlane.xlu0 %1479
        %v1481 = vsel %vm420, %v1287, 0.0
        %1482 = vadd.xlane.f32.xlu0 %v1481
        %v1483 = vpop.xlane.xlu0 %1482
        %v1484 = vsel %vm420, %v1288, 0.0
        %1485 = vadd.xlane.f32.xlu0 %v1484
        %v1486 = vpop.xlane.xlu0 %1485
        %v1487 = vsel %vm420, %v1289, 0.0
        %1488 = vadd.xlane.f32.xlu0 %v1487
        %v1489 = vpop.xlane.xlu0 %1488
        %v1490 = vsel %vm420, %v1290, 0.0
        %1491 = vadd.xlane.f32.xlu0 %v1490
        %v1492 = vpop.xlane.xlu0 %1491
        %v1493 = vsel %vm420, %v1291, 0.0
        %1494 = vadd.xlane.f32.xlu0 %v1493
        %v1495 = vpop.xlane.xlu0 %1494
        %v1496 = vsel %vm420, %v1292, 0.0
        %1497 = vadd.xlane.f32.xlu0 %v1496
        %v1498 = vpop.xlane.xlu0 %1497
        %v1499 = vsel %vm420, %v1293, 0.0
        %1500 = vadd.xlane.f32.xlu0 %v1499
        %v1501 = vpop.xlane.xlu0 %1500
        %v1502 = vsel %vm420, %v1294, 0.0
        %1503 = vadd.xlane.f32.xlu0 %v1502
        %v1504 = vpop.xlane.xlu0 %1503
        %v1505 = vsel %vm420, %v1295, 0.0
        %1506 = vadd.xlane.f32.xlu0 %v1505
        %v1507 = vpop.xlane.xlu0 %1506
        %v1508 = vsel %vm420, %v1296, 0.0
        %1509 = vadd.xlane.f32.xlu0 %v1508
        %v1510 = vpop.xlane.xlu0 %1509
        %v1511 = vsel %vm420, %v1297, 0.0
        %1512 = vadd.xlane.f32.xlu0 %v1511
        %v1513 = vpop.xlane.xlu0 %1512
        %v1514 = vsel %vm420, %v1298, 0.0
        %1515 = vadd.xlane.f32.xlu0 %v1514
        %v1516 = vpop.xlane.xlu0 %1515
        %v1517 = vsel %vm420, %v1299, 0.0
        %1518 = vadd.xlane.f32.xlu0 %v1517
        %v1519 = vpop.xlane.xlu0 %1518
        %v1520 = vsel %vm420, %v1300, 0.0
        %1521 = vadd.xlane.f32.xlu0 %v1520
        %v1522 = vpop.xlane.xlu0 %1521
        %v1523 = vsel %vm420, %v1301, 0.0
        %1524 = vadd.xlane.f32.xlu0 %v1523
        %v1525 = vpop.xlane.xlu0 %1524
        %v1526 = vsel %vm420, %v1302, 0.0
        %1527 = vadd.xlane.f32.xlu0 %v1526
        %v1528 = vpop.xlane.xlu0 %1527
        %v1529 = vsel %vm420, %v1303, 0.0
        %1530 = vadd.xlane.f32.xlu0 %v1529
        %v1531 = vpop.xlane.xlu0 %1530
        %v1532 = vsel %vm420, %v1304, 0.0
        %1533 = vadd.xlane.f32.xlu0 %v1532
        %v1534 = vpop.xlane.xlu0 %1533
        %v1535 = vsel %vm420, %v1305, 0.0
        %1536 = vadd.xlane.f32.xlu0 %v1535
        %v1537 = vpop.xlane.xlu0 %1536
        %v1538 = vsel %vm420, %v1306, 0.0
        %1539 = vadd.xlane.f32.xlu0 %v1538
        %v1540 = vpop.xlane.xlu0 %1539
        %v1541 = vsel %vm420, %v1307, 0.0
        %1542 = vadd.xlane.f32.xlu0 %v1541
        %v1543 = vpop.xlane.xlu0 %1542
        %v1544 = vsel %vm420, %v1308, 0.0
        %1545 = vadd.xlane.f32.xlu0 %v1544
        %v1546 = vpop.xlane.xlu0 %1545
        %v1547 = vsel %vm420, %v1309, 0.0
        %1548 = vadd.xlane.f32.xlu0 %v1547
        %v1549 = vpop.xlane.xlu0 %1548
        %v1550 = vsel %vm420, %v1310, 0.0
        %1551 = vadd.xlane.f32.xlu0 %v1550
        %v1552 = vpop.xlane.xlu0 %1551
        %v1553 = vsel %vm420, %v1311, 0.0
        %1554 = vadd.xlane.f32.xlu0 %v1553
        %v1555 = vpop.xlane.xlu0 %1554
        %v1556 = vsel %vm420, %v1312, 0.0
        %1557 = vadd.xlane.f32.xlu0 %v1556
        %v1558 = vpop.xlane.xlu0 %1557
        %v1559 = vsel %vm420, %v1313, 0.0
        %1560 = vadd.xlane.f32.xlu0 %v1559
        %v1561 = vpop.xlane.xlu0 %1560
        %v1562 = vsel %vm420, %v1314, 0.0
        %1563 = vadd.xlane.f32.xlu0 %v1562
        %v1564 = vpop.xlane.xlu0 %1563
        %v1565 = vsel %vm420, %v1315, 0.0
        %1566 = vadd.xlane.f32.xlu0 %v1565
        %v1567 = vpop.xlane.xlu0 %1566
        %v1568 = vsel %vm420, %v1316, 0.0
        %1569 = vadd.xlane.f32.xlu0 %v1568
        %v1570 = vpop.xlane.xlu0 %1569
        %v1571 = vsel %vm420, %v1317, 0.0
        %1572 = vadd.xlane.f32.xlu0 %v1571
        %v1573 = vpop.xlane.xlu0 %1572
        %v1574 = vsel %vm420, %v1318, 0.0
        %1575 = vadd.xlane.f32.xlu0 %v1574
        %v1576 = vpop.xlane.xlu0 %1575
        %v1577 = vsel %vm420, %v1319, 0.0
        %1578 = vadd.xlane.f32.xlu0 %v1577
        %v1579 = vpop.xlane.xlu0 %1578
        %v1580 = vsel %vm420, %v1320, 0.0
        %1581 = vadd.xlane.f32.xlu0 %v1580
        %v1582 = vpop.xlane.xlu0 %1581
        %v1583 = vsel %vm420, %v1321, 0.0
        %1584 = vadd.xlane.f32.xlu0 %v1583
        %v1585 = vpop.xlane.xlu0 %1584
        %v1586 = vsel %vm420, %v1322, 0.0
        %1587 = vadd.xlane.f32.xlu0 %v1586
        %v1588 = vpop.xlane.xlu0 %1587
        %v1589 = vsel %vm420, %v1323, 0.0
        %1590 = vadd.xlane.f32.xlu0 %v1589
        %v1591 = vpop.xlane.xlu0 %1590
        %v1592 = vsel %vm420, %v1324, 0.0
        %1593 = vadd.xlane.f32.xlu0 %v1592
        %v1594 = vpop.xlane.xlu0 %1593
        %v1595 = vsel %vm420, %v1325, 0.0
        %1596 = vadd.xlane.f32.xlu0 %v1595
        %v1597 = vpop.xlane.xlu0 %1596
        %v1598 = vsel %vm420, %v1326, 0.0
        %1599 = vadd.xlane.f32.xlu0 %v1598
        %v1600 = vpop.xlane.xlu0 %1599
        %v1601 = vsel %vm420, %v1327, 0.0
        %1602 = vadd.xlane.f32.xlu0 %v1601
        %v1603 = vpop.xlane.xlu0 %1602
        %v1604 = vsel %vm420, %v1328, 0.0
        %1605 = vadd.xlane.f32.xlu0 %v1604
        %v1606 = vpop.xlane.xlu0 %1605
        %v1607 = vsel %vm420, %v1329, 0.0
        %1608 = vadd.xlane.f32.xlu0 %v1607
        %v1609 = vpop.xlane.xlu0 %1608
        %v1610 = vsel %vm420, %v1330, 0.0
        %1611 = vadd.xlane.f32.xlu0 %v1610
        %v1612 = vpop.xlane.xlu0 %1611
        %v1613 = vsel %vm420, %v1331, 0.0
        %1614 = vadd.xlane.f32.xlu0 %v1613
        %v1615 = vpop.xlane.xlu0 %1614
        %v1616 = vsel %vm420, %v1332, 0.0
        %1617 = vadd.xlane.f32.xlu0 %v1616
        %v1618 = vpop.xlane.xlu0 %1617
        %v1619 = vsel %vm420, %v1333, 0.0
        %1620 = vadd.xlane.f32.xlu0 %v1619
        %v1621 = vpop.xlane.xlu0 %1620
        %v1622 = vsel %vm420, %v1334, 0.0
        %1623 = vadd.xlane.f32.xlu0 %v1622
        %v1624 = vpop.xlane.xlu0 %1623
        %v1625 = vsel %vm420, %v1335, 0.0
        %1626 = vadd.xlane.f32.xlu0 %v1625
        %v1627 = vpop.xlane.xlu0 %1626
        %v1628 = vsel %vm420, %v1336, 0.0
        %1629 = vadd.xlane.f32.xlu0 %v1628
        %v1630 = vpop.xlane.xlu0 %1629
        %v1631 = vsel %vm420, %v1337, 0.0
        %1632 = vadd.xlane.f32.xlu0 %v1631
        %v1633 = vpop.xlane.xlu0 %1632
        %v1634 = vsel %vm420, %v1338, 0.0
        %1635 = vadd.xlane.f32.xlu0 %v1634
        %v1636 = vpop.xlane.xlu0 %1635
        %v1637 = vsel %vm420, %v1339, 0.0
        %1638 = vadd.xlane.f32.xlu0 %v1637
        %v1639 = vpop.xlane.xlu0 %1638
        %v1640 = vsel %vm420, %v1340, 0.0
        %1641 = vadd.xlane.f32.xlu0 %v1640
        %v1642 = vpop.xlane.xlu0 %1641
        %v1643 = vsel %vm420, %v1341, 0.0
        %1644 = vadd.xlane.f32.xlu0 %v1643
        %v1645 = vpop.xlane.xlu0 %1644
        %v1646 = vsel %vm420, %v1342, 0.0
        %1647 = vadd.xlane.f32.xlu0 %v1646
        %v1648 = vpop.xlane.xlu0 %1647
        %v1649 = vsel %vm420, %v1343, 0.0
        %1650 = vadd.xlane.f32.xlu0 %v1649
        %v1651 = vpop.xlane.xlu0 %1650
        %v1652 = vsel %vm420, %v1344, 0.0
        %1653 = vadd.xlane.f32.xlu0 %v1652
        %v1654 = vpop.xlane.xlu0 %1653
        %v1655 = vsel %vm420, %v1345, 0.0
        %1656 = vadd.xlane.f32.xlu0 %v1655
        %v1657 = vpop.xlane.xlu0 %1656
        %v1658 = vsel %vm420, %v1346, 0.0
        %1659 = vadd.xlane.f32.xlu0 %v1658
        %v1660 = vpop.xlane.xlu0 %1659
        %v1661 = vsel %vm420, %v1347, 0.0
        %1662 = vadd.xlane.f32.xlu0 %v1661
        %v1663 = vpop.xlane.xlu0 %1662
        %v1664 = vsel %vm420, %v1348, 0.0
        %1665 = vadd.xlane.f32.xlu0 %v1664
        %v1666 = vpop.xlane.xlu0 %1665
        %v1667 = vsel %vm420, %v1349, 0.0
        %1668 = vadd.xlane.f32.xlu0 %v1667
        %v1669 = vpop.xlane.xlu0 %1668
        %v1670 = vsel %vm420, %v1350, 0.0
        %1671 = vadd.xlane.f32.xlu0 %v1670
        %v1672 = vpop.xlane.xlu0 %1671
        %v1673 = vsel %vm420, %v1351, 0.0
        %1674 = vadd.xlane.f32.xlu0 %v1673
        %v1675 = vpop.xlane.xlu0 %1674
        %v1676 = vsel %vm420, %v1352, 0.0
        %1677 = vadd.xlane.f32.xlu0 %v1676
        %v1678 = vpop.xlane.xlu0 %1677
        %v1679 = vsel %vm420, %v1353, 0.0
        %1680 = vadd.xlane.f32.xlu0 %v1679
        %v1681 = vpop.xlane.xlu0 %1680
        %v1682 = vsel %vm420, %v1354, 0.0
        %1683 = vadd.xlane.f32.xlu0 %v1682
        %v1684 = vpop.xlane.xlu0 %1683
        %v1685 = vsel %vm420, %v1355, 0.0
        %1686 = vadd.xlane.f32.xlu0 %v1685
        %v1687 = vpop.xlane.xlu0 %1686
        %v1688 = vsel %vm420, %v1356, 0.0
        %1689 = vadd.xlane.f32.xlu0 %v1688
        %v1690 = vpop.xlane.xlu0 %1689
        %v1691 = vsel %vm420, %v1357, 0.0
        %1692 = vadd.xlane.f32.xlu0 %v1691
        %v1693 = vpop.xlane.xlu0 %1692
        %v1694 = vsel %vm420, %v1358, 0.0
        %1695 = vadd.xlane.f32.xlu0 %v1694
        %v1696 = vpop.xlane.xlu0 %1695
        %v1697 = vsel %vm420, %v1359, 0.0
        %1698 = vadd.xlane.f32.xlu0 %v1697
        %v1699 = vpop.xlane.xlu0 %1698
        %v1700 = vsel %vm420, %v1360, 0.0
        %1701 = vadd.xlane.f32.xlu0 %v1700
        %v1702 = vpop.xlane.xlu0 %1701
        %v1703 = vsel %vm420, %v1361, 0.0
        %1704 = vadd.xlane.f32.xlu0 %v1703
        %v1705 = vpop.xlane.xlu0 %1704
        %v1706 = vsel %vm420, %v1362, 0.0
        %1707 = vadd.xlane.f32.xlu0 %v1706
        %v1708 = vpop.xlane.xlu0 %1707
        %v1709 = vsel %vm420, %v1363, 0.0
        %1710 = vadd.xlane.f32.xlu0 %v1709
        %v1711 = vpop.xlane.xlu0 %1710
        %v1712 = vsel %vm420, %v1364, 0.0
        %1713 = vadd.xlane.f32.xlu0 %v1712
        %v1714 = vpop.xlane.xlu0 %1713
        %v1715 = vsel %vm420, %v1365, 0.0
        %1716 = vadd.xlane.f32.xlu0 %v1715
        %v1717 = vpop.xlane.xlu0 %1716
        %v1718 = vsel %vm420, %v1366, 0.0
        %1719 = vadd.xlane.f32.xlu0 %v1718
        %v1720 = vpop.xlane.xlu0 %1719
        %v1721 = vsel %vm420, %v1367, 0.0
        %1722 = vadd.xlane.f32.xlu0 %v1721
        %v1723 = vpop.xlane.xlu0 %1722
        %v1724 = vsel %vm420, %v1368, 0.0
        %1725 = vadd.xlane.f32.xlu0 %v1724
        %v1726 = vpop.xlane.xlu0 %1725
        %v1727 = vsel %vm420, %v1369, 0.0
        %1728 = vadd.xlane.f32.xlu0 %v1727
        %v1729 = vpop.xlane.xlu0 %1728
        %v1730 = vsel %vm420, %v1370, 0.0
        %1731 = vadd.xlane.f32.xlu0 %v1730
        %v1732 = vpop.xlane.xlu0 %1731
        %v1733 = vsel %vm420, %v1371, 0.0
        %1734 = vadd.xlane.f32.xlu0 %v1733
        %v1735 = vpop.xlane.xlu0 %1734
        %v1736 = vsel %vm420, %v1372, 0.0
        %1737 = vadd.xlane.f32.xlu0 %v1736
        %v1738 = vpop.xlane.xlu0 %1737
        %v1739 = vsel %vm420, %v1373, 0.0
        %1740 = vadd.xlane.f32.xlu0 %v1739
        %v1741 = vpop.xlane.xlu0 %1740
        %v1742 = vsel %vm420, %v1374, 0.0
        %1743 = vadd.xlane.f32.xlu0 %v1742
        %v1744 = vpop.xlane.xlu0 %1743
        %v1745 = vsel %vm420, %v1375, 0.0
        %1746 = vadd.xlane.f32.xlu0 %v1745
        %v1747 = vpop.xlane.xlu0 %1746
        %v1748 = vsel %vm420, %v1376, 0.0
        %1749 = vadd.xlane.f32.xlu0 %v1748
        %v1750 = vpop.xlane.xlu0 %1749
        %v1751 = vsel %vm420, %v1377, 0.0
        %1752 = vadd.xlane.f32.xlu0 %v1751
        %v1753 = vpop.xlane.xlu0 %1752
        %v1754 = vsel %vm420, %v1378, 0.0
        %1755 = vadd.xlane.f32.xlu0 %v1754
        %v1756 = vpop.xlane.xlu0 %1755
        %v1757 = vsel %vm420, %v1379, 0.0
        %1758 = vadd.xlane.f32.xlu0 %v1757
        %v1759 = vpop.xlane.xlu0 %1758
        %v1760 = vsel %vm420, %v1380, 0.0
        %1761 = vadd.xlane.f32.xlu0 %v1760
        %v1762 = vpop.xlane.xlu0 %1761
        %v1763 = vsel %vm420, %v1381, 0.0
        %1764 = vadd.xlane.f32.xlu0 %v1763
        %v1765 = vpop.xlane.xlu0 %1764
        %v1766 = vmul.f32 %v1384, 0.5
        %v1767 = vmul.f32 %v1387, 0.5
        %v1768 = vmul.f32 %v1390, 0.5
        %v1769 = vmul.f32 %v1393, 0.5
        %v1770 = vmul.f32 %v1396, 0.5
        %v1771 = vmul.f32 %v1399, 0.5
        %v1772 = vmul.f32 %v1402, 0.5
        %v1773 = vmul.f32 %v1405, 0.5
        %v1774 = vmul.f32 %v1408, 0.5
        %v1775 = vmul.f32 %v1411, 0.5
        %v1776 = vmul.f32 %v1414, 0.5
        %v1777 = vmul.f32 %v1417, 0.5
        %v1778 = vmul.f32 %v1420, 0.5
        %v1779 = vmul.f32 %v1423, 0.5
        %v1780 = vmul.f32 %v1426, 0.5
        %v1781 = vmul.f32 %v1429, 0.5
        %v1782 = vmul.f32 %v1432, 0.5
        %v1783 = vmul.f32 %v1435, 0.5
        %v1784 = vmul.f32 %v1438, 0.5
        %v1785 = vmul.f32 %v1441, 0.5
        %v1786 = vmul.f32 %v1444, 0.5
        %v1787 = vmul.f32 %v1447, 0.5
        %v1788 = vmul.f32 %v1450, 0.5
        %v1789 = vmul.f32 %v1453, 0.5
        %v1790 = vmul.f32 %v1456, 0.5
        %v1791 = vmul.f32 %v1459, 0.5
        %v1792 = vmul.f32 %v1462, 0.5
        %v1793 = vmul.f32 %v1465, 0.5
        %v1794 = vmul.f32 %v1468, 0.5
        %v1795 = vmul.f32 %v1471, 0.5
        %v1796 = vmul.f32 %v1474, 0.5
        %v1797 = vmul.f32 %v1477, 0.5
        %v1798 = vmul.f32 %v1480, 0.5
        %v1799 = vmul.f32 %v1483, 0.5
        %v1800 = vmul.f32 %v1486, 0.5
        %v1801 = vmul.f32 %v1489, 0.5
        %v1802 = vmul.f32 %v1492, 0.5
        %v1803 = vmul.f32 %v1495, 0.5
        %v1804 = vmul.f32 %v1498, 0.5
        %v1805 = vmul.f32 %v1501, 0.5
        %v1806 = vmul.f32 %v1504, 0.5
        %v1807 = vmul.f32 %v1507, 0.5
        %v1808 = vmul.f32 %v1510, 0.5
        %v1809 = vmul.f32 %v1513, 0.5
        %v1810 = vmul.f32 %v1516, 0.5
        %v1811 = vmul.f32 %v1519, 0.5
        %v1812 = vmul.f32 %v1522, 0.5
        %v1813 = vmul.f32 %v1525, 0.5
        %v1814 = vmul.f32 %v1528, 0.5
        %v1815 = vmul.f32 %v1531, 0.5
        %v1816 = vmul.f32 %v1534, 0.5
        %v1817 = vmul.f32 %v1537, 0.5
        %v1818 = vmul.f32 %v1540, 0.5
        %v1819 = vmul.f32 %v1543, 0.5
        %v1820 = vmul.f32 %v1546, 0.5
        %v1821 = vmul.f32 %v1549, 0.5
        %v1822 = vmul.f32 %v1552, 0.5
        %v1823 = vmul.f32 %v1555, 0.5
        %v1824 = vmul.f32 %v1558, 0.5
        %v1825 = vmul.f32 %v1561, 0.5
        %v1826 = vmul.f32 %v1564, 0.5
        %v1827 = vmul.f32 %v1567, 0.5
        %v1828 = vmul.f32 %v1570, 0.5
        %v1829 = vmul.f32 %v1573, 0.5
        %v1830 = vmul.f32 %v1576, 0.5
        %v1831 = vmul.f32 %v1579, 0.5
        %v1832 = vmul.f32 %v1582, 0.5
        %v1833 = vmul.f32 %v1585, 0.5
        %v1834 = vmul.f32 %v1588, 0.5
        %v1835 = vmul.f32 %v1591, 0.5
        %v1836 = vmul.f32 %v1594, 0.5
        %v1837 = vmul.f32 %v1597, 0.5
        %v1838 = vmul.f32 %v1600, 0.5
        %v1839 = vmul.f32 %v1603, 0.5
        %v1840 = vmul.f32 %v1606, 0.5
        %v1841 = vmul.f32 %v1609, 0.5
        %v1842 = vmul.f32 %v1612, 0.5
        %v1843 = vmul.f32 %v1615, 0.5
        %v1844 = vmul.f32 %v1618, 0.5
        %v1845 = vmul.f32 %v1621, 0.5
        %v1846 = vmul.f32 %v1624, 0.5
        %v1847 = vmul.f32 %v1627, 0.5
        %v1848 = vmul.f32 %v1630, 0.5
        %v1849 = vmul.f32 %v1633, 0.5
        %v1850 = vmul.f32 %v1636, 0.5
        %v1851 = vmul.f32 %v1639, 0.5
        %v1852 = vmul.f32 %v1642, 0.5
        %v1853 = vmul.f32 %v1645, 0.5
        %v1854 = vmul.f32 %v1648, 0.5
        %v1855 = vmul.f32 %v1651, 0.5
        %v1856 = vmul.f32 %v1654, 0.5
        %v1857 = vmul.f32 %v1657, 0.5
        %v1858 = vmul.f32 %v1660, 0.5
        %v1859 = vmul.f32 %v1663, 0.5
        %v1860 = vmul.f32 %v1666, 0.5
        %v1861 = vmul.f32 %v1669, 0.5
        %v1862 = vmul.f32 %v1672, 0.5
        %v1863 = vmul.f32 %v1675, 0.5
        %v1864 = vmul.f32 %v1678, 0.5
        %v1865 = vmul.f32 %v1681, 0.5
        %v1866 = vmul.f32 %v1684, 0.5
        %v1867 = vmul.f32 %v1687, 0.5
        %v1868 = vmul.f32 %v1690, 0.5
        %v1869 = vmul.f32 %v1693, 0.5
        %v1870 = vmul.f32 %v1696, 0.5
        %v1871 = vmul.f32 %v1699, 0.5
        %v1872 = vmul.f32 %v1702, 0.5
        %v1873 = vmul.f32 %v1705, 0.5
        %v1874 = vmul.f32 %v1708, 0.5
        %v1875 = vmul.f32 %v1711, 0.5
        %v1876 = vmul.f32 %v1714, 0.5
        %v1877 = vmul.f32 %v1717, 0.5
        %v1878 = vmul.f32 %v1720, 0.5
        %v1879 = vmul.f32 %v1723, 0.5
        %v1880 = vmul.f32 %v1726, 0.5
        %v1881 = vmul.f32 %v1729, 0.5
        %v1882 = vmul.f32 %v1732, 0.5
        %v1883 = vmul.f32 %v1735, 0.5
        %v1884 = vmul.f32 %v1738, 0.5
        %v1885 = vmul.f32 %v1741, 0.5
        %v1886 = vmul.f32 %v1744, 0.5
        %v1887 = vmul.f32 %v1747, 0.5
        %v1888 = vmul.f32 %v1750, 0.5
        %v1889 = vmul.f32 %v1753, 0.5
        %v1890 = vmul.f32 %v1756, 0.5
        %v1891 = vmul.f32 %v1759, 0.5
        %v1892 = vmul.f32 %v1762, 0.5
        %v1893 = vmul.f32 %v1765, 0.5
        %v1894 = vsub.f32 %v1766, %v871
        %v1895 = vsub.f32 %v1767, %v874
        %v1896 = vsub.f32 %v1768, %v877
        %v1897 = vsub.f32 %v1769, %v880
        %v1898 = vsub.f32 %v1770, %v883
        %v1899 = vsub.f32 %v1771, %v886
        %v1900 = vsub.f32 %v1772, %v889
        %v1901 = vsub.f32 %v1773, %v892
        %v1902 = vsub.f32 %v1774, %v895
        %v1903 = vsub.f32 %v1775, %v898
        %v1904 = vsub.f32 %v1776, %v901
        %v1905 = vsub.f32 %v1777, %v904
        %v1906 = vsub.f32 %v1778, %v907
        %v1907 = vsub.f32 %v1779, %v910
        %v1908 = vsub.f32 %v1780, %v913
        %v1909 = vsub.f32 %v1781, %v916
        %v1910 = vsub.f32 %v1782, %v919
        %v1911 = vsub.f32 %v1783, %v922
        %v1912 = vsub.f32 %v1784, %v925
        %v1913 = vsub.f32 %v1785, %v928
        %v1914 = vsub.f32 %v1786, %v931
        %v1915 = vsub.f32 %v1787, %v934
        %v1916 = vsub.f32 %v1788, %v937
        %v1917 = vsub.f32 %v1789, %v940
        %v1918 = vsub.f32 %v1790, %v943
        %v1919 = vsub.f32 %v1791, %v946
        %v1920 = vsub.f32 %v1792, %v949
        %v1921 = vsub.f32 %v1793, %v952
        %v1922 = vsub.f32 %v1794, %v955
        %v1923 = vsub.f32 %v1795, %v958
        %v1924 = vsub.f32 %v1796, %v961
        %v1925 = vsub.f32 %v1797, %v964
        %v1926 = vsub.f32 %v1798, %v967
        %v1927 = vsub.f32 %v1799, %v970
        %v1928 = vsub.f32 %v1800, %v973
        %v1929 = vsub.f32 %v1801, %v976
        %v1930 = vsub.f32 %v1802, %v979
        %v1931 = vsub.f32 %v1803, %v982
        %v1932 = vsub.f32 %v1804, %v985
        %v1933 = vsub.f32 %v1805, %v988
        %v1934 = vsub.f32 %v1806, %v991
        %v1935 = vsub.f32 %v1807, %v994
        %v1936 = vsub.f32 %v1808, %v997
        %v1937 = vsub.f32 %v1809, %v1000
        %v1938 = vsub.f32 %v1810, %v1003
        %v1939 = vsub.f32 %v1811, %v1006
        %v1940 = vsub.f32 %v1812, %v1009
        %v1941 = vsub.f32 %v1813, %v1012
        %v1942 = vsub.f32 %v1814, %v1015
        %v1943 = vsub.f32 %v1815, %v1018
        %v1944 = vsub.f32 %v1816, %v1021
        %v1945 = vsub.f32 %v1817, %v1024
        %v1946 = vsub.f32 %v1818, %v1027
        %v1947 = vsub.f32 %v1819, %v1030
        %v1948 = vsub.f32 %v1820, %v1033
        %v1949 = vsub.f32 %v1821, %v1036
        %v1950 = vsub.f32 %v1822, %v1039
        %v1951 = vsub.f32 %v1823, %v1042
        %v1952 = vsub.f32 %v1824, %v1045
        %v1953 = vsub.f32 %v1825, %v1048
        %v1954 = vsub.f32 %v1826, %v1051
        %v1955 = vsub.f32 %v1827, %v1054
        %v1956 = vsub.f32 %v1828, %v1057
        %v1957 = vsub.f32 %v1829, %v1060
        %v1958 = vsub.f32 %v1830, %v1063
        %v1959 = vsub.f32 %v1831, %v1066
        %v1960 = vsub.f32 %v1832, %v1069
        %v1961 = vsub.f32 %v1833, %v1072
        %v1962 = vsub.f32 %v1834, %v1075
        %v1963 = vsub.f32 %v1835, %v1078
        %v1964 = vsub.f32 %v1836, %v1081
        %v1965 = vsub.f32 %v1837, %v1084
        %v1966 = vsub.f32 %v1838, %v1087
        %v1967 = vsub.f32 %v1839, %v1090
        %v1968 = vsub.f32 %v1840, %v1093
        %v1969 = vsub.f32 %v1841, %v1096
        %v1970 = vsub.f32 %v1842, %v1099
        %v1971 = vsub.f32 %v1843, %v1102
        %v1972 = vsub.f32 %v1844, %v1105
        %v1973 = vsub.f32 %v1845, %v1108
        %v1974 = vsub.f32 %v1846, %v1111
        %v1975 = vsub.f32 %v1847, %v1114
        %v1976 = vsub.f32 %v1848, %v1117
        %v1977 = vsub.f32 %v1849, %v1120
        %v1978 = vsub.f32 %v1850, %v1123
        %v1979 = vsub.f32 %v1851, %v1126
        %v1980 = vsub.f32 %v1852, %v1129
        %v1981 = vsub.f32 %v1853, %v1132
        %v1982 = vsub.f32 %v1854, %v1135
        %v1983 = vsub.f32 %v1855, %v1138
        %v1984 = vsub.f32 %v1856, %v1141
        %v1985 = vsub.f32 %v1857, %v1144
        %v1986 = vsub.f32 %v1858, %v1147
        %v1987 = vsub.f32 %v1859, %v1150
        %v1988 = vsub.f32 %v1860, %v1153
        %v1989 = vsub.f32 %v1861, %v1156
        %v1990 = vsub.f32 %v1862, %v1159
        %v1991 = vsub.f32 %v1863, %v1162
        %v1992 = vsub.f32 %v1864, %v1165
        %v1993 = vsub.f32 %v1865, %v1168
        %v1994 = vsub.f32 %v1866, %v1171
        %v1995 = vsub.f32 %v1867, %v1174
        %v1996 = vsub.f32 %v1868, %v1177
        %v1997 = vsub.f32 %v1869, %v1180
        %v1998 = vsub.f32 %v1870, %v1183
        %v1999 = vsub.f32 %v1871, %v1186
        %v2000 = vsub.f32 %v1872, %v1189
        %v2001 = vsub.f32 %v1873, %v1192
        %v2002 = vsub.f32 %v1874, %v1195
        %v2003 = vsub.f32 %v1875, %v1198
        %v2004 = vsub.f32 %v1876, %v1201
        %v2005 = vsub.f32 %v1877, %v1204
        %v2006 = vsub.f32 %v1878, %v1207
        %v2007 = vsub.f32 %v1879, %v1210
        %v2008 = vsub.f32 %v1880, %v1213
        %v2009 = vsub.f32 %v1881, %v1216
        %v2010 = vsub.f32 %v1882, %v1219
        %v2011 = vsub.f32 %v1883, %v1222
        %v2012 = vsub.f32 %v1884, %v1225
        %v2013 = vsub.f32 %v1885, %v1228
        %v2014 = vsub.f32 %v1886, %v1231
        %v2015 = vsub.f32 %v1887, %v1234
        %v2016 = vsub.f32 %v1888, %v1237
        %v2017 = vsub.f32 %v1889, %v1240
        %v2018 = vsub.f32 %v1890, %v1243
        %v2019 = vsub.f32 %v1891, %v1246
        %v2020 = vsub.f32 %v1892, %v1249
        %v2021 = vsub.f32 %v1893, %v1252
        %v2022 = vmin.f32 %v1894, %v1895
        %v2023 = vmin.f32 %v2022, %v1896
        %v2024 = vmin.f32 %v2023, %v1897
        %v2025 = vmin.f32 %v2024, %v1898
        %v2026 = vmin.f32 %v2025, %v1899
        %v2027 = vmin.f32 %v2026, %v1900
        %v2028 = vmin.f32 %v2027, %v1901
        %v2029 = vmin.f32 %v2028, %v1902
        %v2030 = vmin.f32 %v2029, %v1903
        %v2031 = vmin.f32 %v2030, %v1904
        %v2032 = vmin.f32 %v2031, %v1905
        %v2033 = vmin.f32 %v2032, %v1906
        %v2034 = vmin.f32 %v2033, %v1907
        %v2035 = vmin.f32 %v2034, %v1908
        %v2036 = vmin.f32 %v2035, %v1909
        %v2037 = vrot.slane %v2036, 4
        %v2038 = vmin.f32 %v2036, %v2037
        %v2039 = vrot.slane %v2038, 2
        %v2040 = vmin.f32 %v2038, %v2039
        %v2041 = vrot.slane %v2040, 1
        %v2042 = vmin.f32 %v2040, %v2041
        %v2043 = vmin.f32 %v1910, %v1911
        %v2044 = vmin.f32 %v2043, %v1912
        %v2045 = vmin.f32 %v2044, %v1913
        %v2046 = vmin.f32 %v2045, %v1914
        %v2047 = vmin.f32 %v2046, %v1915
        %v2048 = vmin.f32 %v2047, %v1916
        %v2049 = vmin.f32 %v2048, %v1917
        %v2050 = vmin.f32 %v2049, %v1918
        %v2051 = vmin.f32 %v2050, %v1919
        %v2052 = vmin.f32 %v2051, %v1920
        %v2053 = vmin.f32 %v2052, %v1921
        %v2054 = vmin.f32 %v2053, %v1922
        %v2055 = vmin.f32 %v2054, %v1923
        %v2056 = vmin.f32 %v2055, %v1924
        %v2057 = vmin.f32 %v2056, %v1925
        %v2058 = vrot.slane %v2057, 4
        %v2059 = vmin.f32 %v2057, %v2058
        %v2060 = vrot.slane %v2059, 2
        %v2061 = vmin.f32 %v2059, %v2060
        %v2062 = vrot.slane %v2061, 1
        %v2063 = vmin.f32 %v2061, %v2062
        %v2064 = vmin.f32 %v1926, %v1927
        %v2065 = vmin.f32 %v2064, %v1928
        %v2066 = vmin.f32 %v2065, %v1929
        %v2067 = vmin.f32 %v2066, %v1930
        %v2068 = vmin.f32 %v2067, %v1931
        %v2069 = vmin.f32 %v2068, %v1932
        %v2070 = vmin.f32 %v2069, %v1933
        %v2071 = vmin.f32 %v2070, %v1934
        %v2072 = vmin.f32 %v2071, %v1935
        %v2073 = vmin.f32 %v2072, %v1936
        %v2074 = vmin.f32 %v2073, %v1937
        %v2075 = vmin.f32 %v2074, %v1938
        %v2076 = vmin.f32 %v2075, %v1939
        %v2077 = vmin.f32 %v2076, %v1940
        %v2078 = vmin.f32 %v2077, %v1941
        %v2079 = vrot.slane %v2078, 4
        %v2080 = vmin.f32 %v2078, %v2079
        %v2081 = vrot.slane %v2080, 2
        %v2082 = vmin.f32 %v2080, %v2081
        %v2083 = vrot.slane %v2082, 1
        %v2084 = vmin.f32 %v2082, %v2083
        %v2085 = vmin.f32 %v1942, %v1943
        %v2086 = vmin.f32 %v2085, %v1944
        %v2087 = vmin.f32 %v2086, %v1945
        %v2088 = vmin.f32 %v2087, %v1946
        %v2089 = vmin.f32 %v2088, %v1947
        %v2090 = vmin.f32 %v2089, %v1948
        %v2091 = vmin.f32 %v2090, %v1949
        %v2092 = vmin.f32 %v2091, %v1950
        %v2093 = vmin.f32 %v2092, %v1951
        %v2094 = vmin.f32 %v2093, %v1952
        %v2095 = vmin.f32 %v2094, %v1953
        %v2096 = vmin.f32 %v2095, %v1954
        %v2097 = vmin.f32 %v2096, %v1955
        %v2098 = vmin.f32 %v2097, %v1956
        %v2099 = vmin.f32 %v2098, %v1957
        %v2100 = vrot.slane %v2099, 4
        %v2101 = vmin.f32 %v2099, %v2100
        %v2102 = vrot.slane %v2101, 2
        %v2103 = vmin.f32 %v2101, %v2102
        %v2104 = vrot.slane %v2103, 1
        %v2105 = vmin.f32 %v2103, %v2104
        %v2106 = vmin.f32 %v1958, %v1959
        %v2107 = vmin.f32 %v2106, %v1960
        %v2108 = vmin.f32 %v2107, %v1961
        %v2109 = vmin.f32 %v2108, %v1962
        %v2110 = vmin.f32 %v2109, %v1963
        %v2111 = vmin.f32 %v2110, %v1964
        %v2112 = vmin.f32 %v2111, %v1965
        %v2113 = vmin.f32 %v2112, %v1966
        %v2114 = vmin.f32 %v2113, %v1967
        %v2115 = vmin.f32 %v2114, %v1968
        %v2116 = vmin.f32 %v2115, %v1969
        %v2117 = vmin.f32 %v2116, %v1970
        %v2118 = vmin.f32 %v2117, %v1971
        %v2119 = vmin.f32 %v2118, %v1972
        %v2120 = vmin.f32 %v2119, %v1973
        %v2121 = vrot.slane %v2120, 4
        %v2122 = vmin.f32 %v2120, %v2121
        %v2123 = vrot.slane %v2122, 2
        %v2124 = vmin.f32 %v2122, %v2123
        %v2125 = vrot.slane %v2124, 1
        %v2126 = vmin.f32 %v2124, %v2125
        %v2127 = vmin.f32 %v1974, %v1975
        %v2128 = vmin.f32 %v2127, %v1976
        %v2129 = vmin.f32 %v2128, %v1977
        %v2130 = vmin.f32 %v2129, %v1978
        %v2131 = vmin.f32 %v2130, %v1979
        %v2132 = vmin.f32 %v2131, %v1980
        %v2133 = vmin.f32 %v2132, %v1981
        %v2134 = vmin.f32 %v2133, %v1982
        %v2135 = vmin.f32 %v2134, %v1983
        %v2136 = vmin.f32 %v2135, %v1984
        %v2137 = vmin.f32 %v2136, %v1985
        %v2138 = vmin.f32 %v2137, %v1986
        %v2139 = vmin.f32 %v2138, %v1987
        %v2140 = vmin.f32 %v2139, %v1988
        %v2141 = vmin.f32 %v2140, %v1989
        %v2142 = vrot.slane %v2141, 4
        %v2143 = vmin.f32 %v2141, %v2142
        %v2144 = vrot.slane %v2143, 2
        %v2145 = vmin.f32 %v2143, %v2144
        %v2146 = vrot.slane %v2145, 1
        %v2147 = vmin.f32 %v2145, %v2146
        %v2148 = vmin.f32 %v1990, %v1991
        %v2149 = vmin.f32 %v2148, %v1992
        %v2150 = vmin.f32 %v2149, %v1993
        %v2151 = vmin.f32 %v2150, %v1994
        %v2152 = vmin.f32 %v2151, %v1995
        %v2153 = vmin.f32 %v2152, %v1996
        %v2154 = vmin.f32 %v2153, %v1997
        %v2155 = vmin.f32 %v2154, %v1998
        %v2156 = vmin.f32 %v2155, %v1999
        %v2157 = vmin.f32 %v2156, %v2000
        %v2158 = vmin.f32 %v2157, %v2001
        %v2159 = vmin.f32 %v2158, %v2002
        %v2160 = vmin.f32 %v2159, %v2003
        %v2161 = vmin.f32 %v2160, %v2004
        %v2162 = vmin.f32 %v2161, %v2005
        %v2163 = vrot.slane %v2162, 4
        %v2164 = vmin.f32 %v2162, %v2163
        %v2165 = vrot.slane %v2164, 2
        %v2166 = vmin.f32 %v2164, %v2165
        %v2167 = vrot.slane %v2166, 1
        %v2168 = vmin.f32 %v2166, %v2167
        %v2169 = vmin.f32 %v2006, %v2007
        %v2170 = vmin.f32 %v2169, %v2008
        %v2171 = vmin.f32 %v2170, %v2009
        %v2172 = vmin.f32 %v2171, %v2010
        %v2173 = vmin.f32 %v2172, %v2011
        %v2174 = vmin.f32 %v2173, %v2012
        %v2175 = vmin.f32 %v2174, %v2013
        %v2176 = vmin.f32 %v2175, %v2014
        %v2177 = vmin.f32 %v2176, %v2015
        %v2178 = vmin.f32 %v2177, %v2016
        %v2179 = vmin.f32 %v2178, %v2017
        %v2180 = vmin.f32 %v2179, %v2018
        %v2181 = vmin.f32 %v2180, %v2019
        %v2182 = vmin.f32 %v2181, %v2020
        %v2183 = vmin.f32 %v2182, %v2021
        %v2184 = vrot.slane %v2183, 4
        %v2185 = vmin.f32 %v2183, %v2184
        %v2186 = vrot.slane %v2185, 2
        %v2187 = vmin.f32 %v2185, %v2186
        %v2188 = vrot.slane %v2187, 1
        %v2189 = vmin.f32 %v2187, %v2188
        %vm2190 = vcmp.le.f32.partialorder %v1894, %v2042
        %vm2191 = vcmp.le.f32.partialorder %v1895, %v2042
        %vm2192 = vcmp.le.f32.partialorder %v1896, %v2042
        %vm2193 = vcmp.le.f32.partialorder %v1897, %v2042
        %vm2194 = vcmp.le.f32.partialorder %v1898, %v2042
        %vm2195 = vcmp.le.f32.partialorder %v1899, %v2042
        %vm2196 = vcmp.le.f32.partialorder %v1900, %v2042
        %vm2197 = vcmp.le.f32.partialorder %v1901, %v2042
        %vm2198 = vcmp.le.f32.partialorder %v1902, %v2042
        %vm2199 = vcmp.le.f32.partialorder %v1903, %v2042
        %vm2200 = vcmp.le.f32.partialorder %v1904, %v2042
        %vm2201 = vcmp.le.f32.partialorder %v1905, %v2042
        %vm2202 = vcmp.le.f32.partialorder %v1906, %v2042
        %vm2203 = vcmp.le.f32.partialorder %v1907, %v2042
        %vm2204 = vcmp.le.f32.partialorder %v1908, %v2042
        %vm2205 = vcmp.le.f32.partialorder %v1909, %v2042
        %vm2206 = vcmp.le.f32.partialorder %v1910, %v2063
        %vm2207 = vcmp.le.f32.partialorder %v1911, %v2063
        %vm2208 = vcmp.le.f32.partialorder %v1912, %v2063
        %vm2209 = vcmp.le.f32.partialorder %v1913, %v2063
        %vm2210 = vcmp.le.f32.partialorder %v1914, %v2063
        %vm2211 = vcmp.le.f32.partialorder %v1915, %v2063
        %vm2212 = vcmp.le.f32.partialorder %v1916, %v2063
        %vm2213 = vcmp.le.f32.partialorder %v1917, %v2063
        %vm2214 = vcmp.le.f32.partialorder %v1918, %v2063
        %vm2215 = vcmp.le.f32.partialorder %v1919, %v2063
        %vm2216 = vcmp.le.f32.partialorder %v1920, %v2063
        %vm2217 = vcmp.le.f32.partialorder %v1921, %v2063
        %vm2218 = vcmp.le.f32.partialorder %v1922, %v2063
        %vm2219 = vcmp.le.f32.partialorder %v1923, %v2063
        %vm2220 = vcmp.le.f32.partialorder %v1924, %v2063
        %vm2221 = vcmp.le.f32.partialorder %v1925, %v2063
        %vm2222 = vcmp.le.f32.partialorder %v1926, %v2084
        %vm2223 = vcmp.le.f32.partialorder %v1927, %v2084
        %vm2224 = vcmp.le.f32.partialorder %v1928, %v2084
        %vm2225 = vcmp.le.f32.partialorder %v1929, %v2084
        %vm2226 = vcmp.le.f32.partialorder %v1930, %v2084
        %vm2227 = vcmp.le.f32.partialorder %v1931, %v2084
        %vm2228 = vcmp.le.f32.partialorder %v1932, %v2084
        %vm2229 = vcmp.le.f32.partialorder %v1933, %v2084
        %vm2230 = vcmp.le.f32.partialorder %v1934, %v2084
        %vm2231 = vcmp.le.f32.partialorder %v1935, %v2084
        %vm2232 = vcmp.le.f32.partialorder %v1936, %v2084
        %vm2233 = vcmp.le.f32.partialorder %v1937, %v2084
        %vm2234 = vcmp.le.f32.partialorder %v1938, %v2084
        %vm2235 = vcmp.le.f32.partialorder %v1939, %v2084
        %vm2236 = vcmp.le.f32.partialorder %v1940, %v2084
        %vm2237 = vcmp.le.f32.partialorder %v1941, %v2084
        %vm2238 = vcmp.le.f32.partialorder %v1942, %v2105
        %vm2239 = vcmp.le.f32.partialorder %v1943, %v2105
        %vm2240 = vcmp.le.f32.partialorder %v1944, %v2105
        %vm2241 = vcmp.le.f32.partialorder %v1945, %v2105
        %vm2242 = vcmp.le.f32.partialorder %v1946, %v2105
        %vm2243 = vcmp.le.f32.partialorder %v1947, %v2105
        %vm2244 = vcmp.le.f32.partialorder %v1948, %v2105
        %vm2245 = vcmp.le.f32.partialorder %v1949, %v2105
        %vm2246 = vcmp.le.f32.partialorder %v1950, %v2105
        %vm2247 = vcmp.le.f32.partialorder %v1951, %v2105
        %vm2248 = vcmp.le.f32.partialorder %v1952, %v2105
        %vm2249 = vcmp.le.f32.partialorder %v1953, %v2105
        %vm2250 = vcmp.le.f32.partialorder %v1954, %v2105
        %vm2251 = vcmp.le.f32.partialorder %v1955, %v2105
        %vm2252 = vcmp.le.f32.partialorder %v1956, %v2105
        %vm2253 = vcmp.le.f32.partialorder %v1957, %v2105
        %vm2254 = vcmp.le.f32.partialorder %v1958, %v2126
        %vm2255 = vcmp.le.f32.partialorder %v1959, %v2126
        %vm2256 = vcmp.le.f32.partialorder %v1960, %v2126
        %vm2257 = vcmp.le.f32.partialorder %v1961, %v2126
        %vm2258 = vcmp.le.f32.partialorder %v1962, %v2126
        %vm2259 = vcmp.le.f32.partialorder %v1963, %v2126
        %vm2260 = vcmp.le.f32.partialorder %v1964, %v2126
        %vm2261 = vcmp.le.f32.partialorder %v1965, %v2126
        %vm2262 = vcmp.le.f32.partialorder %v1966, %v2126
        %vm2263 = vcmp.le.f32.partialorder %v1967, %v2126
        %vm2264 = vcmp.le.f32.partialorder %v1968, %v2126
        %vm2265 = vcmp.le.f32.partialorder %v1969, %v2126
        %vm2266 = vcmp.le.f32.partialorder %v1970, %v2126
        %vm2267 = vcmp.le.f32.partialorder %v1971, %v2126
        %vm2268 = vcmp.le.f32.partialorder %v1972, %v2126
        %vm2269 = vcmp.le.f32.partialorder %v1973, %v2126
        %vm2270 = vcmp.le.f32.partialorder %v1974, %v2147
        %vm2271 = vcmp.le.f32.partialorder %v1975, %v2147
        %vm2272 = vcmp.le.f32.partialorder %v1976, %v2147
        %vm2273 = vcmp.le.f32.partialorder %v1977, %v2147
        %vm2274 = vcmp.le.f32.partialorder %v1978, %v2147
        %vm2275 = vcmp.le.f32.partialorder %v1979, %v2147
        %vm2276 = vcmp.le.f32.partialorder %v1980, %v2147
        %vm2277 = vcmp.le.f32.partialorder %v1981, %v2147
        %vm2278 = vcmp.le.f32.partialorder %v1982, %v2147
        %vm2279 = vcmp.le.f32.partialorder %v1983, %v2147
        %vm2280 = vcmp.le.f32.partialorder %v1984, %v2147
        %vm2281 = vcmp.le.f32.partialorder %v1985, %v2147
        %vm2282 = vcmp.le.f32.partialorder %v1986, %v2147
        %vm2283 = vcmp.le.f32.partialorder %v1987, %v2147
        %vm2284 = vcmp.le.f32.partialorder %v1988, %v2147
        %vm2285 = vcmp.le.f32.partialorder %v1989, %v2147
        %vm2286 = vcmp.le.f32.partialorder %v1990, %v2168
        %vm2287 = vcmp.le.f32.partialorder %v1991, %v2168
        %vm2288 = vcmp.le.f32.partialorder %v1992, %v2168
        %vm2289 = vcmp.le.f32.partialorder %v1993, %v2168
        %vm2290 = vcmp.le.f32.partialorder %v1994, %v2168
        %vm2291 = vcmp.le.f32.partialorder %v1995, %v2168
        %vm2292 = vcmp.le.f32.partialorder %v1996, %v2168
        %vm2293 = vcmp.le.f32.partialorder %v1997, %v2168
        %vm2294 = vcmp.le.f32.partialorder %v1998, %v2168
        %vm2295 = vcmp.le.f32.partialorder %v1999, %v2168
        %vm2296 = vcmp.le.f32.partialorder %v2000, %v2168
        %vm2297 = vcmp.le.f32.partialorder %v2001, %v2168
        %vm2298 = vcmp.le.f32.partialorder %v2002, %v2168
        %vm2299 = vcmp.le.f32.partialorder %v2003, %v2168
        %vm2300 = vcmp.le.f32.partialorder %v2004, %v2168
        %vm2301 = vcmp.le.f32.partialorder %v2005, %v2168
        %vm2302 = vcmp.le.f32.partialorder %v2006, %v2189
        %vm2303 = vcmp.le.f32.partialorder %v2007, %v2189
        %vm2304 = vcmp.le.f32.partialorder %v2008, %v2189
        %vm2305 = vcmp.le.f32.partialorder %v2009, %v2189
        %vm2306 = vcmp.le.f32.partialorder %v2010, %v2189
        %vm2307 = vcmp.le.f32.partialorder %v2011, %v2189
        %vm2308 = vcmp.le.f32.partialorder %v2012, %v2189
        %vm2309 = vcmp.le.f32.partialorder %v2013, %v2189
        %vm2310 = vcmp.le.f32.partialorder %v2014, %v2189
        %vm2311 = vcmp.le.f32.partialorder %v2015, %v2189
        %vm2312 = vcmp.le.f32.partialorder %v2016, %v2189
        %vm2313 = vcmp.le.f32.partialorder %v2017, %v2189
        %vm2314 = vcmp.le.f32.partialorder %v2018, %v2189
        %vm2315 = vcmp.le.f32.partialorder %v2019, %v2189
        %vm2316 = vcmp.le.f32.partialorder %v2020, %v2189
        %vm2317 = vcmp.le.f32.partialorder %v2021, %v2189
        %v2318 = vsel %vm2190, %v354, 128.0
        %v2319 = vsel %vm2191, %v355, 128.0
        %v2320 = vsel %vm2192, %v356, 128.0
        %v2321 = vsel %vm2193, %v357, 128.0
        %v2322 = vsel %vm2194, %v358, 128.0
        %v2323 = vsel %vm2195, %v359, 128.0
        %v2324 = vsel %vm2196, %v360, 128.0
        %v2325 = vsel %vm2197, %v361, 128.0
        %v2326 = vsel %vm2198, %v362, 128.0
        %v2327 = vsel %vm2199, %v363, 128.0
        %v2328 = vsel %vm2200, %v364, 128.0
        %v2329 = vsel %vm2201, %v365, 128.0
        %v2330 = vsel %vm2202, %v366, 128.0
        %v2331 = vsel %vm2203, %v367, 128.0
        %v2332 = vsel %vm2204, %v368, 128.0
        %v2333 = vsel %vm2205, %v369, 128.0
        %v2334 = vsel %vm2206, %v354, 128.0
        %v2335 = vsel %vm2207, %v355, 128.0
        %v2336 = vsel %vm2208, %v356, 128.0
        %v2337 = vsel %vm2209, %v357, 128.0
        %v2338 = vsel %vm2210, %v358, 128.0
        %v2339 = vsel %vm2211, %v359, 128.0
        %v2340 = vsel %vm2212, %v360, 128.0
        %v2341 = vsel %vm2213, %v361, 128.0
        %v2342 = vsel %vm2214, %v362, 128.0
        %v2343 = vsel %vm2215, %v363, 128.0
        %v2344 = vsel %vm2216, %v364, 128.0
        %v2345 = vsel %vm2217, %v365, 128.0
        %v2346 = vsel %vm2218, %v366, 128.0
        %v2347 = vsel %vm2219, %v367, 128.0
        %v2348 = vsel %vm2220, %v368, 128.0
        %v2349 = vsel %vm2221, %v369, 128.0
        %v2350 = vsel %vm2222, %v354, 128.0
        %v2351 = vsel %vm2223, %v355, 128.0
        %v2352 = vsel %vm2224, %v356, 128.0
        %v2353 = vsel %vm2225, %v357, 128.0
        %v2354 = vsel %vm2226, %v358, 128.0
        %v2355 = vsel %vm2227, %v359, 128.0
        %v2356 = vsel %vm2228, %v360, 128.0
        %v2357 = vsel %vm2229, %v361, 128.0
        %v2358 = vsel %vm2230, %v362, 128.0
        %v2359 = vsel %vm2231, %v363, 128.0
        %v2360 = vsel %vm2232, %v364, 128.0
        %v2361 = vsel %vm2233, %v365, 128.0
        %v2362 = vsel %vm2234, %v366, 128.0
        %v2363 = vsel %vm2235, %v367, 128.0
        %v2364 = vsel %vm2236, %v368, 128.0
        %v2365 = vsel %vm2237, %v369, 128.0
        %v2366 = vsel %vm2238, %v354, 128.0
        %v2367 = vsel %vm2239, %v355, 128.0
        %v2368 = vsel %vm2240, %v356, 128.0
        %v2369 = vsel %vm2241, %v357, 128.0
        %v2370 = vsel %vm2242, %v358, 128.0
        %v2371 = vsel %vm2243, %v359, 128.0
        %v2372 = vsel %vm2244, %v360, 128.0
        %v2373 = vsel %vm2245, %v361, 128.0
        %v2374 = vsel %vm2246, %v362, 128.0
        %v2375 = vsel %vm2247, %v363, 128.0
        %v2376 = vsel %vm2248, %v364, 128.0
        %v2377 = vsel %vm2249, %v365, 128.0
        %v2378 = vsel %vm2250, %v366, 128.0
        %v2379 = vsel %vm2251, %v367, 128.0
        %v2380 = vsel %vm2252, %v368, 128.0
        %v2381 = vsel %vm2253, %v369, 128.0
        %v2382 = vsel %vm2254, %v354, 128.0
        %v2383 = vsel %vm2255, %v355, 128.0
        %v2384 = vsel %vm2256, %v356, 128.0
        %v2385 = vsel %vm2257, %v357, 128.0
        %v2386 = vsel %vm2258, %v358, 128.0
        %v2387 = vsel %vm2259, %v359, 128.0
        %v2388 = vsel %vm2260, %v360, 128.0
        %v2389 = vsel %vm2261, %v361, 128.0
        %v2390 = vsel %vm2262, %v362, 128.0
        %v2391 = vsel %vm2263, %v363, 128.0
        %v2392 = vsel %vm2264, %v364, 128.0
        %v2393 = vsel %vm2265, %v365, 128.0
        %v2394 = vsel %vm2266, %v366, 128.0
        %v2395 = vsel %vm2267, %v367, 128.0
        %v2396 = vsel %vm2268, %v368, 128.0
        %v2397 = vsel %vm2269, %v369, 128.0
        %v2398 = vsel %vm2270, %v354, 128.0
        %v2399 = vsel %vm2271, %v355, 128.0
        %v2400 = vsel %vm2272, %v356, 128.0
        %v2401 = vsel %vm2273, %v357, 128.0
        %v2402 = vsel %vm2274, %v358, 128.0
        %v2403 = vsel %vm2275, %v359, 128.0
        %v2404 = vsel %vm2276, %v360, 128.0
        %v2405 = vsel %vm2277, %v361, 128.0
        %v2406 = vsel %vm2278, %v362, 128.0
        %v2407 = vsel %vm2279, %v363, 128.0
        %v2408 = vsel %vm2280, %v364, 128.0
        %v2409 = vsel %vm2281, %v365, 128.0
        %v2410 = vsel %vm2282, %v366, 128.0
        %v2411 = vsel %vm2283, %v367, 128.0
        %v2412 = vsel %vm2284, %v368, 128.0
        %v2413 = vsel %vm2285, %v369, 128.0
        %v2414 = vsel %vm2286, %v354, 128.0
        %v2415 = vsel %vm2287, %v355, 128.0
        %v2416 = vsel %vm2288, %v356, 128.0
        %v2417 = vsel %vm2289, %v357, 128.0
        %v2418 = vsel %vm2290, %v358, 128.0
        %v2419 = vsel %vm2291, %v359, 128.0
        %v2420 = vsel %vm2292, %v360, 128.0
        %v2421 = vsel %vm2293, %v361, 128.0
        %v2422 = vsel %vm2294, %v362, 128.0
        %v2423 = vsel %vm2295, %v363, 128.0
        %v2424 = vsel %vm2296, %v364, 128.0
        %v2425 = vsel %vm2297, %v365, 128.0
        %v2426 = vsel %vm2298, %v366, 128.0
        %v2427 = vsel %vm2299, %v367, 128.0
        %v2428 = vsel %vm2300, %v368, 128.0
        %v2429 = vsel %vm2301, %v369, 128.0
        %v2430 = vsel %vm2302, %v354, 128.0
        %v2431 = vsel %vm2303, %v355, 128.0
        %v2432 = vsel %vm2304, %v356, 128.0
        %v2433 = vsel %vm2305, %v357, 128.0
        %v2434 = vsel %vm2306, %v358, 128.0
        %v2435 = vsel %vm2307, %v359, 128.0
        %v2436 = vsel %vm2308, %v360, 128.0
        %v2437 = vsel %vm2309, %v361, 128.0
        %v2438 = vsel %vm2310, %v362, 128.0
        %v2439 = vsel %vm2311, %v363, 128.0
        %v2440 = vsel %vm2312, %v364, 128.0
        %v2441 = vsel %vm2313, %v365, 128.0
        %v2442 = vsel %vm2314, %v366, 128.0
        %v2443 = vsel %vm2315, %v367, 128.0
        %v2444 = vsel %vm2316, %v368, 128.0
        %v2445 = vsel %vm2317, %v369, 128.0
        %v2446 = vmin.f32 %v2318, %v2319
        %v2447 = vmin.f32 %v2446, %v2320
        %v2448 = vmin.f32 %v2447, %v2321
        %v2449 = vmin.f32 %v2448, %v2322
        %v2450 = vmin.f32 %v2449, %v2323
        %v2451 = vmin.f32 %v2450, %v2324
        %v2452 = vmin.f32 %v2451, %v2325
        %v2453 = vmin.f32 %v2452, %v2326
        %v2454 = vmin.f32 %v2453, %v2327
        %v2455 = vmin.f32 %v2454, %v2328
        %v2456 = vmin.f32 %v2455, %v2329
        %v2457 = vmin.f32 %v2456, %v2330
        %v2458 = vmin.f32 %v2457, %v2331
        %v2459 = vmin.f32 %v2458, %v2332
        %v2460 = vmin.f32 %v2459, %v2333
        %v2461 = vrot.slane %v2460, 4
        %v2462 = vmin.f32 %v2460, %v2461
        %v2463 = vrot.slane %v2462, 2
        %v2464 = vmin.f32 %v2462, %v2463
        %v2465 = vrot.slane %v2464, 1
        %v2466 = vmin.f32 %v2464, %v2465
        %v2467 = vmin.f32 %v2334, %v2335
        %v2468 = vmin.f32 %v2467, %v2336
        %v2469 = vmin.f32 %v2468, %v2337
        %v2470 = vmin.f32 %v2469, %v2338
        %v2471 = vmin.f32 %v2470, %v2339
        %v2472 = vmin.f32 %v2471, %v2340
        %v2473 = vmin.f32 %v2472, %v2341
        %v2474 = vmin.f32 %v2473, %v2342
        %v2475 = vmin.f32 %v2474, %v2343
        %v2476 = vmin.f32 %v2475, %v2344
        %v2477 = vmin.f32 %v2476, %v2345
        %v2478 = vmin.f32 %v2477, %v2346
        %v2479 = vmin.f32 %v2478, %v2347
        %v2480 = vmin.f32 %v2479, %v2348
        %v2481 = vmin.f32 %v2480, %v2349
        %v2482 = vrot.slane %v2481, 4
        %v2483 = vmin.f32 %v2481, %v2482
        %v2484 = vrot.slane %v2483, 2
        %v2485 = vmin.f32 %v2483, %v2484
        %v2486 = vrot.slane %v2485, 1
        %v2487 = vmin.f32 %v2485, %v2486
        %v2488 = vmin.f32 %v2350, %v2351
        %v2489 = vmin.f32 %v2488, %v2352
        %v2490 = vmin.f32 %v2489, %v2353
        %v2491 = vmin.f32 %v2490, %v2354
        %v2492 = vmin.f32 %v2491, %v2355
        %v2493 = vmin.f32 %v2492, %v2356
        %v2494 = vmin.f32 %v2493, %v2357
        %v2495 = vmin.f32 %v2494, %v2358
        %v2496 = vmin.f32 %v2495, %v2359
        %v2497 = vmin.f32 %v2496, %v2360
        %v2498 = vmin.f32 %v2497, %v2361
        %v2499 = vmin.f32 %v2498, %v2362
        %v2500 = vmin.f32 %v2499, %v2363
        %v2501 = vmin.f32 %v2500, %v2364
        %v2502 = vmin.f32 %v2501, %v2365
        %v2503 = vrot.slane %v2502, 4
        %v2504 = vmin.f32 %v2502, %v2503
        %v2505 = vrot.slane %v2504, 2
        %v2506 = vmin.f32 %v2504, %v2505
        %v2507 = vrot.slane %v2506, 1
        %v2508 = vmin.f32 %v2506, %v2507
        %v2509 = vmin.f32 %v2366, %v2367
        %v2510 = vmin.f32 %v2509, %v2368
        %v2511 = vmin.f32 %v2510, %v2369
        %v2512 = vmin.f32 %v2511, %v2370
        %v2513 = vmin.f32 %v2512, %v2371
        %v2514 = vmin.f32 %v2513, %v2372
        %v2515 = vmin.f32 %v2514, %v2373
        %v2516 = vmin.f32 %v2515, %v2374
        %v2517 = vmin.f32 %v2516, %v2375
        %v2518 = vmin.f32 %v2517, %v2376
        %v2519 = vmin.f32 %v2518, %v2377
        %v2520 = vmin.f32 %v2519, %v2378
        %v2521 = vmin.f32 %v2520, %v2379
        %v2522 = vmin.f32 %v2521, %v2380
        %v2523 = vmin.f32 %v2522, %v2381
        %v2524 = vrot.slane %v2523, 4
        %v2525 = vmin.f32 %v2523, %v2524
        %v2526 = vrot.slane %v2525, 2
        %v2527 = vmin.f32 %v2525, %v2526
        %v2528 = vrot.slane %v2527, 1
        %v2529 = vmin.f32 %v2527, %v2528
        %v2530 = vmin.f32 %v2382, %v2383
        %v2531 = vmin.f32 %v2530, %v2384
        %v2532 = vmin.f32 %v2531, %v2385
        %v2533 = vmin.f32 %v2532, %v2386
        %v2534 = vmin.f32 %v2533, %v2387
        %v2535 = vmin.f32 %v2534, %v2388
        %v2536 = vmin.f32 %v2535, %v2389
        %v2537 = vmin.f32 %v2536, %v2390
        %v2538 = vmin.f32 %v2537, %v2391
        %v2539 = vmin.f32 %v2538, %v2392
        %v2540 = vmin.f32 %v2539, %v2393
        %v2541 = vmin.f32 %v2540, %v2394
        %v2542 = vmin.f32 %v2541, %v2395
        %v2543 = vmin.f32 %v2542, %v2396
        %v2544 = vmin.f32 %v2543, %v2397
        %v2545 = vrot.slane %v2544, 4
        %v2546 = vmin.f32 %v2544, %v2545
        %v2547 = vrot.slane %v2546, 2
        %v2548 = vmin.f32 %v2546, %v2547
        %v2549 = vrot.slane %v2548, 1
        %v2550 = vmin.f32 %v2548, %v2549
        %v2551 = vmin.f32 %v2398, %v2399
        %v2552 = vmin.f32 %v2551, %v2400
        %v2553 = vmin.f32 %v2552, %v2401
        %v2554 = vmin.f32 %v2553, %v2402
        %v2555 = vmin.f32 %v2554, %v2403
        %v2556 = vmin.f32 %v2555, %v2404
        %v2557 = vmin.f32 %v2556, %v2405
        %v2558 = vmin.f32 %v2557, %v2406
        %v2559 = vmin.f32 %v2558, %v2407
        %v2560 = vmin.f32 %v2559, %v2408
        %v2561 = vmin.f32 %v2560, %v2409
        %v2562 = vmin.f32 %v2561, %v2410
        %v2563 = vmin.f32 %v2562, %v2411
        %v2564 = vmin.f32 %v2563, %v2412
        %v2565 = vmin.f32 %v2564, %v2413
        %v2566 = vrot.slane %v2565, 4
        %v2567 = vmin.f32 %v2565, %v2566
        %v2568 = vrot.slane %v2567, 2
        %v2569 = vmin.f32 %v2567, %v2568
        %v2570 = vrot.slane %v2569, 1
        %v2571 = vmin.f32 %v2569, %v2570
        %v2572 = vmin.f32 %v2414, %v2415
        %v2573 = vmin.f32 %v2572, %v2416
        %v2574 = vmin.f32 %v2573, %v2417
        %v2575 = vmin.f32 %v2574, %v2418
        %v2576 = vmin.f32 %v2575, %v2419
        %v2577 = vmin.f32 %v2576, %v2420
        %v2578 = vmin.f32 %v2577, %v2421
        %v2579 = vmin.f32 %v2578, %v2422
        %v2580 = vmin.f32 %v2579, %v2423
        %v2581 = vmin.f32 %v2580, %v2424
        %v2582 = vmin.f32 %v2581, %v2425
        %v2583 = vmin.f32 %v2582, %v2426
        %v2584 = vmin.f32 %v2583, %v2427
        %v2585 = vmin.f32 %v2584, %v2428
        %v2586 = vmin.f32 %v2585, %v2429
        %v2587 = vrot.slane %v2586, 4
        %v2588 = vmin.f32 %v2586, %v2587
        %v2589 = vrot.slane %v2588, 2
        %v2590 = vmin.f32 %v2588, %v2589
        %v2591 = vrot.slane %v2590, 1
        %v2592 = vmin.f32 %v2590, %v2591
        %v2593 = vmin.f32 %v2430, %v2431
        %v2594 = vmin.f32 %v2593, %v2432
        %v2595 = vmin.f32 %v2594, %v2433
        %v2596 = vmin.f32 %v2595, %v2434
        %v2597 = vmin.f32 %v2596, %v2435
        %v2598 = vmin.f32 %v2597, %v2436
        %v2599 = vmin.f32 %v2598, %v2437
        %v2600 = vmin.f32 %v2599, %v2438
        %v2601 = vmin.f32 %v2600, %v2439
        %v2602 = vmin.f32 %v2601, %v2440
        %v2603 = vmin.f32 %v2602, %v2441
        %v2604 = vmin.f32 %v2603, %v2442
        %v2605 = vmin.f32 %v2604, %v2443
        %v2606 = vmin.f32 %v2605, %v2444
        %v2607 = vmin.f32 %v2606, %v2445
        %v2608 = vrot.slane %v2607, 4
        %v2609 = vmin.f32 %v2607, %v2608
        %v2610 = vrot.slane %v2609, 2
        %v2611 = vmin.f32 %v2609, %v2610
        %v2612 = vrot.slane %v2611, 1
        %v2613 = vmin.f32 %v2611, %v2612
        %vm2614 = vcmp.eq.f32.partialorder %v354, %v2466
        %vm2615 = vcmp.eq.f32.partialorder %v355, %v2466
        %vm2616 = vcmp.eq.f32.partialorder %v356, %v2466
        %vm2617 = vcmp.eq.f32.partialorder %v357, %v2466
        %vm2618 = vcmp.eq.f32.partialorder %v358, %v2466
        %vm2619 = vcmp.eq.f32.partialorder %v359, %v2466
        %vm2620 = vcmp.eq.f32.partialorder %v360, %v2466
        %vm2621 = vcmp.eq.f32.partialorder %v361, %v2466
        %vm2622 = vcmp.eq.f32.partialorder %v362, %v2466
        %vm2623 = vcmp.eq.f32.partialorder %v363, %v2466
        %vm2624 = vcmp.eq.f32.partialorder %v364, %v2466
        %vm2625 = vcmp.eq.f32.partialorder %v365, %v2466
        %vm2626 = vcmp.eq.f32.partialorder %v366, %v2466
        %vm2627 = vcmp.eq.f32.partialorder %v367, %v2466
        %vm2628 = vcmp.eq.f32.partialorder %v368, %v2466
        %vm2629 = vcmp.eq.f32.partialorder %v369, %v2466
        %vm2630 = vcmp.eq.f32.partialorder %v354, %v2487
        %vm2631 = vcmp.eq.f32.partialorder %v355, %v2487
        %vm2632 = vcmp.eq.f32.partialorder %v356, %v2487
        %vm2633 = vcmp.eq.f32.partialorder %v357, %v2487
        %vm2634 = vcmp.eq.f32.partialorder %v358, %v2487
        %vm2635 = vcmp.eq.f32.partialorder %v359, %v2487
        %vm2636 = vcmp.eq.f32.partialorder %v360, %v2487
        %vm2637 = vcmp.eq.f32.partialorder %v361, %v2487
        %vm2638 = vcmp.eq.f32.partialorder %v362, %v2487
        %vm2639 = vcmp.eq.f32.partialorder %v363, %v2487
        %vm2640 = vcmp.eq.f32.partialorder %v364, %v2487
        %vm2641 = vcmp.eq.f32.partialorder %v365, %v2487
        %vm2642 = vcmp.eq.f32.partialorder %v366, %v2487
        %vm2643 = vcmp.eq.f32.partialorder %v367, %v2487
        %vm2644 = vcmp.eq.f32.partialorder %v368, %v2487
        %vm2645 = vcmp.eq.f32.partialorder %v369, %v2487
        %vm2646 = vcmp.eq.f32.partialorder %v354, %v2508
        %vm2647 = vcmp.eq.f32.partialorder %v355, %v2508
        %vm2648 = vcmp.eq.f32.partialorder %v356, %v2508
        %vm2649 = vcmp.eq.f32.partialorder %v357, %v2508
        %vm2650 = vcmp.eq.f32.partialorder %v358, %v2508
        %vm2651 = vcmp.eq.f32.partialorder %v359, %v2508
        %vm2652 = vcmp.eq.f32.partialorder %v360, %v2508
        %vm2653 = vcmp.eq.f32.partialorder %v361, %v2508
        %vm2654 = vcmp.eq.f32.partialorder %v362, %v2508
        %vm2655 = vcmp.eq.f32.partialorder %v363, %v2508
        %vm2656 = vcmp.eq.f32.partialorder %v364, %v2508
        %vm2657 = vcmp.eq.f32.partialorder %v365, %v2508
        %vm2658 = vcmp.eq.f32.partialorder %v366, %v2508
        %vm2659 = vcmp.eq.f32.partialorder %v367, %v2508
        %vm2660 = vcmp.eq.f32.partialorder %v368, %v2508
        %vm2661 = vcmp.eq.f32.partialorder %v369, %v2508
        %vm2662 = vcmp.eq.f32.partialorder %v354, %v2529
        %vm2663 = vcmp.eq.f32.partialorder %v355, %v2529
        %vm2664 = vcmp.eq.f32.partialorder %v356, %v2529
        %vm2665 = vcmp.eq.f32.partialorder %v357, %v2529
        %vm2666 = vcmp.eq.f32.partialorder %v358, %v2529
        %vm2667 = vcmp.eq.f32.partialorder %v359, %v2529
        %vm2668 = vcmp.eq.f32.partialorder %v360, %v2529
        %vm2669 = vcmp.eq.f32.partialorder %v361, %v2529
        %vm2670 = vcmp.eq.f32.partialorder %v362, %v2529
        %vm2671 = vcmp.eq.f32.partialorder %v363, %v2529
        %vm2672 = vcmp.eq.f32.partialorder %v364, %v2529
        %vm2673 = vcmp.eq.f32.partialorder %v365, %v2529
        %vm2674 = vcmp.eq.f32.partialorder %v366, %v2529
        %vm2675 = vcmp.eq.f32.partialorder %v367, %v2529
        %vm2676 = vcmp.eq.f32.partialorder %v368, %v2529
        %vm2677 = vcmp.eq.f32.partialorder %v369, %v2529
        %vm2678 = vcmp.eq.f32.partialorder %v354, %v2550
        %vm2679 = vcmp.eq.f32.partialorder %v355, %v2550
        %vm2680 = vcmp.eq.f32.partialorder %v356, %v2550
        %vm2681 = vcmp.eq.f32.partialorder %v357, %v2550
        %vm2682 = vcmp.eq.f32.partialorder %v358, %v2550
        %vm2683 = vcmp.eq.f32.partialorder %v359, %v2550
        %vm2684 = vcmp.eq.f32.partialorder %v360, %v2550
        %vm2685 = vcmp.eq.f32.partialorder %v361, %v2550
        %vm2686 = vcmp.eq.f32.partialorder %v362, %v2550
        %vm2687 = vcmp.eq.f32.partialorder %v363, %v2550
        %vm2688 = vcmp.eq.f32.partialorder %v364, %v2550
        %vm2689 = vcmp.eq.f32.partialorder %v365, %v2550
        %vm2690 = vcmp.eq.f32.partialorder %v366, %v2550
        %vm2691 = vcmp.eq.f32.partialorder %v367, %v2550
        %vm2692 = vcmp.eq.f32.partialorder %v368, %v2550
        %vm2693 = vcmp.eq.f32.partialorder %v369, %v2550
        %vm2694 = vcmp.eq.f32.partialorder %v354, %v2571
        %vm2695 = vcmp.eq.f32.partialorder %v355, %v2571
        %vm2696 = vcmp.eq.f32.partialorder %v356, %v2571
        %vm2697 = vcmp.eq.f32.partialorder %v357, %v2571
        %vm2698 = vcmp.eq.f32.partialorder %v358, %v2571
        %vm2699 = vcmp.eq.f32.partialorder %v359, %v2571
        %vm2700 = vcmp.eq.f32.partialorder %v360, %v2571
        %vm2701 = vcmp.eq.f32.partialorder %v361, %v2571
        %vm2702 = vcmp.eq.f32.partialorder %v362, %v2571
        %vm2703 = vcmp.eq.f32.partialorder %v363, %v2571
        %vm2704 = vcmp.eq.f32.partialorder %v364, %v2571
        %vm2705 = vcmp.eq.f32.partialorder %v365, %v2571
        %vm2706 = vcmp.eq.f32.partialorder %v366, %v2571
        %vm2707 = vcmp.eq.f32.partialorder %v367, %v2571
        %vm2708 = vcmp.eq.f32.partialorder %v368, %v2571
        %vm2709 = vcmp.eq.f32.partialorder %v369, %v2571
        %vm2710 = vcmp.eq.f32.partialorder %v354, %v2592
        %vm2711 = vcmp.eq.f32.partialorder %v355, %v2592
        %vm2712 = vcmp.eq.f32.partialorder %v356, %v2592
        %vm2713 = vcmp.eq.f32.partialorder %v357, %v2592
        %vm2714 = vcmp.eq.f32.partialorder %v358, %v2592
        %vm2715 = vcmp.eq.f32.partialorder %v359, %v2592
        %vm2716 = vcmp.eq.f32.partialorder %v360, %v2592
        %vm2717 = vcmp.eq.f32.partialorder %v361, %v2592
        %vm2718 = vcmp.eq.f32.partialorder %v362, %v2592
        %vm2719 = vcmp.eq.f32.partialorder %v363, %v2592
        %vm2720 = vcmp.eq.f32.partialorder %v364, %v2592
        %vm2721 = vcmp.eq.f32.partialorder %v365, %v2592
        %vm2722 = vcmp.eq.f32.partialorder %v366, %v2592
        %vm2723 = vcmp.eq.f32.partialorder %v367, %v2592
        %vm2724 = vcmp.eq.f32.partialorder %v368, %v2592
        %vm2725 = vcmp.eq.f32.partialorder %v369, %v2592
        %vm2726 = vcmp.eq.f32.partialorder %v354, %v2613
        %vm2727 = vcmp.eq.f32.partialorder %v355, %v2613
        %vm2728 = vcmp.eq.f32.partialorder %v356, %v2613
        %vm2729 = vcmp.eq.f32.partialorder %v357, %v2613
        %vm2730 = vcmp.eq.f32.partialorder %v358, %v2613
        %vm2731 = vcmp.eq.f32.partialorder %v359, %v2613
        %vm2732 = vcmp.eq.f32.partialorder %v360, %v2613
        %vm2733 = vcmp.eq.f32.partialorder %v361, %v2613
        %vm2734 = vcmp.eq.f32.partialorder %v362, %v2613
        %vm2735 = vcmp.eq.f32.partialorder %v363, %v2613
        %vm2736 = vcmp.eq.f32.partialorder %v364, %v2613
        %vm2737 = vcmp.eq.f32.partialorder %v365, %v2613
        %vm2738 = vcmp.eq.f32.partialorder %v366, %v2613
        %vm2739 = vcmp.eq.f32.partialorder %v367, %v2613
        %vm2740 = vcmp.eq.f32.partialorder %v368, %v2613
        %vm2741 = vcmp.eq.f32.partialorder %v369, %v2613
        %v2742 = vsel %vm2614, 1, 0
        %v2743 = vsel %vm2615, 1, 0
        %v2744 = vsel %vm2616, 1, 0
        %v2745 = vsel %vm2617, 1, 0
        %v2746 = vsel %vm2618, 1, 0
        %v2747 = vsel %vm2619, 1, 0
        %v2748 = vsel %vm2620, 1, 0
        %v2749 = vsel %vm2621, 1, 0
        %v2750 = vsel %vm2622, 1, 0
        %v2751 = vsel %vm2623, 1, 0
        %v2752 = vsel %vm2624, 1, 0
        %v2753 = vsel %vm2625, 1, 0
        %v2754 = vsel %vm2626, 1, 0
        %v2755 = vsel %vm2627, 1, 0
        %v2756 = vsel %vm2628, 1, 0
        %v2757 = vsel %vm2629, 1, 0
        %v2758 = vsel %vm2630, 1, 0
        %v2759 = vsel %vm2631, 1, 0
        %v2760 = vsel %vm2632, 1, 0
        %v2761 = vsel %vm2633, 1, 0
        %v2762 = vsel %vm2634, 1, 0
        %v2763 = vsel %vm2635, 1, 0
        %v2764 = vsel %vm2636, 1, 0
        %v2765 = vsel %vm2637, 1, 0
        %v2766 = vsel %vm2638, 1, 0
        %v2767 = vsel %vm2639, 1, 0
        %v2768 = vsel %vm2640, 1, 0
        %v2769 = vsel %vm2641, 1, 0
        %v2770 = vsel %vm2642, 1, 0
        %v2771 = vsel %vm2643, 1, 0
        %v2772 = vsel %vm2644, 1, 0
        %v2773 = vsel %vm2645, 1, 0
        %v2774 = vsel %vm2646, 1, 0
        %v2775 = vsel %vm2647, 1, 0
        %v2776 = vsel %vm2648, 1, 0
        %v2777 = vsel %vm2649, 1, 0
        %v2778 = vsel %vm2650, 1, 0
        %v2779 = vsel %vm2651, 1, 0
        %v2780 = vsel %vm2652, 1, 0
        %v2781 = vsel %vm2653, 1, 0
        %v2782 = vsel %vm2654, 1, 0
        %v2783 = vsel %vm2655, 1, 0
        %v2784 = vsel %vm2656, 1, 0
        %v2785 = vsel %vm2657, 1, 0
        %v2786 = vsel %vm2658, 1, 0
        %v2787 = vsel %vm2659, 1, 0
        %v2788 = vsel %vm2660, 1, 0
        %v2789 = vsel %vm2661, 1, 0
        %v2790 = vsel %vm2662, 1, 0
        %v2791 = vsel %vm2663, 1, 0
        %v2792 = vsel %vm2664, 1, 0
        %v2793 = vsel %vm2665, 1, 0
        %v2794 = vsel %vm2666, 1, 0
        %v2795 = vsel %vm2667, 1, 0
        %v2796 = vsel %vm2668, 1, 0
        %v2797 = vsel %vm2669, 1, 0
        %v2798 = vsel %vm2670, 1, 0
        %v2799 = vsel %vm2671, 1, 0
        %v2800 = vsel %vm2672, 1, 0
        %v2801 = vsel %vm2673, 1, 0
        %v2802 = vsel %vm2674, 1, 0
        %v2803 = vsel %vm2675, 1, 0
        %v2804 = vsel %vm2676, 1, 0
        %v2805 = vsel %vm2677, 1, 0
        %v2806 = vsel %vm2678, 1, 0
        %v2807 = vsel %vm2679, 1, 0
        %v2808 = vsel %vm2680, 1, 0
        %v2809 = vsel %vm2681, 1, 0
        %v2810 = vsel %vm2682, 1, 0
        %v2811 = vsel %vm2683, 1, 0
        %v2812 = vsel %vm2684, 1, 0
        %v2813 = vsel %vm2685, 1, 0
        %v2814 = vsel %vm2686, 1, 0
        %v2815 = vsel %vm2687, 1, 0
        %v2816 = vsel %vm2688, 1, 0
        %v2817 = vsel %vm2689, 1, 0
        %v2818 = vsel %vm2690, 1, 0
        %v2819 = vsel %vm2691, 1, 0
        %v2820 = vsel %vm2692, 1, 0
        %v2821 = vsel %vm2693, 1, 0
        %v2822 = vsel %vm2694, 1, 0
        %v2823 = vsel %vm2695, 1, 0
        %v2824 = vsel %vm2696, 1, 0
        %v2825 = vsel %vm2697, 1, 0
        %v2826 = vsel %vm2698, 1, 0
        %v2827 = vsel %vm2699, 1, 0
        %v2828 = vsel %vm2700, 1, 0
        %v2829 = vsel %vm2701, 1, 0
        %v2830 = vsel %vm2702, 1, 0
        %v2831 = vsel %vm2703, 1, 0
        %v2832 = vsel %vm2704, 1, 0
        %v2833 = vsel %vm2705, 1, 0
        %v2834 = vsel %vm2706, 1, 0
        %v2835 = vsel %vm2707, 1, 0
        %v2836 = vsel %vm2708, 1, 0
        %v2837 = vsel %vm2709, 1, 0
        %v2838 = vsel %vm2710, 1, 0
        %v2839 = vsel %vm2711, 1, 0
        %v2840 = vsel %vm2712, 1, 0
        %v2841 = vsel %vm2713, 1, 0
        %v2842 = vsel %vm2714, 1, 0
        %v2843 = vsel %vm2715, 1, 0
        %v2844 = vsel %vm2716, 1, 0
        %v2845 = vsel %vm2717, 1, 0
        %v2846 = vsel %vm2718, 1, 0
        %v2847 = vsel %vm2719, 1, 0
        %v2848 = vsel %vm2720, 1, 0
        %v2849 = vsel %vm2721, 1, 0
        %v2850 = vsel %vm2722, 1, 0
        %v2851 = vsel %vm2723, 1, 0
        %v2852 = vsel %vm2724, 1, 0
        %v2853 = vsel %vm2725, 1, 0
        %v2854 = vsel %vm2726, 1, 0
        %v2855 = vsel %vm2727, 1, 0
        %v2856 = vsel %vm2728, 1, 0
        %v2857 = vsel %vm2729, 1, 0
        %v2858 = vsel %vm2730, 1, 0
        %v2859 = vsel %vm2731, 1, 0
        %v2860 = vsel %vm2732, 1, 0
        %v2861 = vsel %vm2733, 1, 0
        %v2862 = vsel %vm2734, 1, 0
        %v2863 = vsel %vm2735, 1, 0
        %v2864 = vsel %vm2736, 1, 0
        %v2865 = vsel %vm2737, 1, 0
        %v2866 = vsel %vm2738, 1, 0
        %v2867 = vsel %vm2739, 1, 0
        %v2868 = vsel %vm2740, 1, 0
        %v2869 = vsel %vm2741, 1, 0
        %v2870 = vcvt.s32.f32 %v2742
        %v2871 = vcvt.s32.f32 %v2743
        %v2872 = vcvt.s32.f32 %v2744
        %v2873 = vcvt.s32.f32 %v2745
        %v2874 = vcvt.s32.f32 %v2746
        %v2875 = vcvt.s32.f32 %v2747
        %v2876 = vcvt.s32.f32 %v2748
        %v2877 = vcvt.s32.f32 %v2749
        %v2878 = vcvt.s32.f32 %v2750
        %v2879 = vcvt.s32.f32 %v2751
        %v2880 = vcvt.s32.f32 %v2752
        %v2881 = vcvt.s32.f32 %v2753
        %v2882 = vcvt.s32.f32 %v2754
        %v2883 = vcvt.s32.f32 %v2755
        %v2884 = vcvt.s32.f32 %v2756
        %v2885 = vcvt.s32.f32 %v2757
        %v2886 = vcvt.s32.f32 %v2758
        %v2887 = vcvt.s32.f32 %v2759
        %v2888 = vcvt.s32.f32 %v2760
        %v2889 = vcvt.s32.f32 %v2761
        %v2890 = vcvt.s32.f32 %v2762
        %v2891 = vcvt.s32.f32 %v2763
        %v2892 = vcvt.s32.f32 %v2764
        %v2893 = vcvt.s32.f32 %v2765
        %v2894 = vcvt.s32.f32 %v2766
        %v2895 = vcvt.s32.f32 %v2767
        %v2896 = vcvt.s32.f32 %v2768
        %v2897 = vcvt.s32.f32 %v2769
        %v2898 = vcvt.s32.f32 %v2770
        %v2899 = vcvt.s32.f32 %v2771
        %v2900 = vcvt.s32.f32 %v2772
        %v2901 = vcvt.s32.f32 %v2773
        %v2902 = vcvt.s32.f32 %v2774
        %v2903 = vcvt.s32.f32 %v2775
        %v2904 = vcvt.s32.f32 %v2776
        %v2905 = vcvt.s32.f32 %v2777
        %v2906 = vcvt.s32.f32 %v2778
        %v2907 = vcvt.s32.f32 %v2779
        %v2908 = vcvt.s32.f32 %v2780
        %v2909 = vcvt.s32.f32 %v2781
        %v2910 = vcvt.s32.f32 %v2782
        %v2911 = vcvt.s32.f32 %v2783
        %v2912 = vcvt.s32.f32 %v2784
        %v2913 = vcvt.s32.f32 %v2785
        %v2914 = vcvt.s32.f32 %v2786
        %v2915 = vcvt.s32.f32 %v2787
        %v2916 = vcvt.s32.f32 %v2788
        %v2917 = vcvt.s32.f32 %v2789
        %v2918 = vcvt.s32.f32 %v2790
        %v2919 = vcvt.s32.f32 %v2791
        %v2920 = vcvt.s32.f32 %v2792
        %v2921 = vcvt.s32.f32 %v2793
        %v2922 = vcvt.s32.f32 %v2794
        %v2923 = vcvt.s32.f32 %v2795
        %v2924 = vcvt.s32.f32 %v2796
        %v2925 = vcvt.s32.f32 %v2797
        %v2926 = vcvt.s32.f32 %v2798
        %v2927 = vcvt.s32.f32 %v2799
        %v2928 = vcvt.s32.f32 %v2800
        %v2929 = vcvt.s32.f32 %v2801
        %v2930 = vcvt.s32.f32 %v2802
        %v2931 = vcvt.s32.f32 %v2803
        %v2932 = vcvt.s32.f32 %v2804
        %v2933 = vcvt.s32.f32 %v2805
        %v2934 = vcvt.s32.f32 %v2806
        %v2935 = vcvt.s32.f32 %v2807
        %v2936 = vcvt.s32.f32 %v2808
        %v2937 = vcvt.s32.f32 %v2809
        %v2938 = vcvt.s32.f32 %v2810
        %v2939 = vcvt.s32.f32 %v2811
        %v2940 = vcvt.s32.f32 %v2812
        %v2941 = vcvt.s32.f32 %v2813
        %v2942 = vcvt.s32.f32 %v2814
        %v2943 = vcvt.s32.f32 %v2815
        %v2944 = vcvt.s32.f32 %v2816
        %v2945 = vcvt.s32.f32 %v2817
        %v2946 = vcvt.s32.f32 %v2818
        %v2947 = vcvt.s32.f32 %v2819
        %v2948 = vcvt.s32.f32 %v2820
        %v2949 = vcvt.s32.f32 %v2821
        %v2950 = vcvt.s32.f32 %v2822
        %v2951 = vcvt.s32.f32 %v2823
        %v2952 = vcvt.s32.f32 %v2824
        %v2953 = vcvt.s32.f32 %v2825
        %v2954 = vcvt.s32.f32 %v2826
        %v2955 = vcvt.s32.f32 %v2827
        %v2956 = vcvt.s32.f32 %v2828
        %v2957 = vcvt.s32.f32 %v2829
        %v2958 = vcvt.s32.f32 %v2830
        %v2959 = vcvt.s32.f32 %v2831
        %v2960 = vcvt.s32.f32 %v2832
        %v2961 = vcvt.s32.f32 %v2833
        %v2962 = vcvt.s32.f32 %v2834
        %v2963 = vcvt.s32.f32 %v2835
        %v2964 = vcvt.s32.f32 %v2836
        %v2965 = vcvt.s32.f32 %v2837
        %v2966 = vcvt.s32.f32 %v2838
        %v2967 = vcvt.s32.f32 %v2839
        %v2968 = vcvt.s32.f32 %v2840
        %v2969 = vcvt.s32.f32 %v2841
        %v2970 = vcvt.s32.f32 %v2842
        %v2971 = vcvt.s32.f32 %v2843
        %v2972 = vcvt.s32.f32 %v2844
        %v2973 = vcvt.s32.f32 %v2845
        %v2974 = vcvt.s32.f32 %v2846
        %v2975 = vcvt.s32.f32 %v2847
        %v2976 = vcvt.s32.f32 %v2848
        %v2977 = vcvt.s32.f32 %v2849
        %v2978 = vcvt.s32.f32 %v2850
        %v2979 = vcvt.s32.f32 %v2851
        %v2980 = vcvt.s32.f32 %v2852
        %v2981 = vcvt.s32.f32 %v2853
        %v2982 = vcvt.s32.f32 %v2854
        %v2983 = vcvt.s32.f32 %v2855
        %v2984 = vcvt.s32.f32 %v2856
        %v2985 = vcvt.s32.f32 %v2857
        %v2986 = vcvt.s32.f32 %v2858
        %v2987 = vcvt.s32.f32 %v2859
        %v2988 = vcvt.s32.f32 %v2860
        %v2989 = vcvt.s32.f32 %v2861
        %v2990 = vcvt.s32.f32 %v2862
        %v2991 = vcvt.s32.f32 %v2863
        %v2992 = vcvt.s32.f32 %v2864
        %v2993 = vcvt.s32.f32 %v2865
        %v2994 = vcvt.s32.f32 %v2866
        %v2995 = vcvt.s32.f32 %v2867
        %v2996 = vcvt.s32.f32 %v2868
        %v2997 = vcvt.s32.f32 %v2869
        %2998 = vxpose.xlu0.b32.start [1/16] %v2870, 128
        %2999 = vxpose.xlu0.b32.cont [2/16] %v2871, 128
        %3000 = vxpose.xlu0.b32.cont [3/16] %v2872, 128
        %3001 = vxpose.xlu0.b32.cont [4/16] %v2873, 128
        %3002 = vxpose.xlu0.b32.cont [5/16] %v2874, 128
        %3003 = vxpose.xlu0.b32.cont [6/16] %v2875, 128
        %3004 = vxpose.xlu0.b32.cont [7/16] %v2876, 128
        %3005 = vxpose.xlu0.b32.cont [8/16] %v2877, 128
        %3006 = vxpose.xlu0.b32.cont [9/16] %v2878, 128
        %3007 = vxpose.xlu0.b32.cont [10/16] %v2879, 128
        %3008 = vxpose.xlu0.b32.cont [11/16] %v2880, 128
        %3009 = vxpose.xlu0.b32.cont [12/16] %v2881, 128
        %3010 = vxpose.xlu0.b32.cont [13/16] %v2882, 128
        %3011 = vxpose.xlu0.b32.cont [14/16] %v2883, 128
        %3012 = vxpose.xlu0.b32.cont [15/16] %v2884, 128
        %3013 = vxpose.xlu0.b32.end [16/16] %v2885, 128
        %v3014 = vpop.trf.xlu0
        %v3015 = vpop.trf.xlu0
        %v3016 = vpop.trf.xlu0
        %v3017 = vpop.trf.xlu0
        %v3018 = vpop.trf.xlu0
        %v3019 = vpop.trf.xlu0
        %v3020 = vpop.trf.xlu0
        %v3021 = vpop.trf.xlu0
        %v3022 = vpop.trf.xlu0
        %v3023 = vpop.trf.xlu0
        %v3024 = vpop.trf.xlu0
        %v3025 = vpop.trf.xlu0
        %v3026 = vpop.trf.xlu0
        %v3027 = vpop.trf.xlu0
        %v3028 = vpop.trf.xlu0
        %v3029 = vpop.trf.xlu0
        %3030 = vmatpush.msra.mxu0 %v222
        %3031 = vmatpush.msra.mxu0 %v221
        %3032 = vmatpush.msra.mxu0 %v220
        %3033 = vmatpush.msra.mxu0 %v219
        %3034 = vmatpush.msra.mxu0 %v218
        %3035 = vmatpush.msra.mxu0 %v217
        %3036 = vmatpush.msra.mxu0 %v216
        %3037 = vmatpush.msra.mxu0 %v215
        %3038 = vmatpush.msra.mxu0 %v214
        %3039 = vmatpush.msra.mxu0 %v213
        %3040 = vmatpush.msra.mxu0 %v212
        %3041 = vmatpush.msra.mxu0 %v211
        %3042 = vmatpush.msra.mxu0 %v210
        %3043 = vmatpush.msra.mxu0 %v209
        %3044 = vmatpush.msra.mxu0 %v208
        %3045 = vmatpush.msra.mxu0 %v207
        %3046 = vmatmul.f32.gmra.mxu0 %v3014
        %v3047 = vpop.f32.mrf.mxu0
        %v3048 = vadd.f32 0.0, %v3047
        %3049 = vmatmul.f32.gmra.mxu0 %v3015
        %v3050 = vpop.f32.mrf.mxu0
        %v3051 = vadd.f32 0.0, %v3050
        %3052 = vmatmul.f32.gmra.mxu0 %v3016
        %v3053 = vpop.f32.mrf.mxu0
        %v3054 = vadd.f32 0.0, %v3053
        %3055 = vmatmul.f32.gmra.mxu0 %v3017
        %v3056 = vpop.f32.mrf.mxu0
        %v3057 = vadd.f32 0.0, %v3056
        %3058 = vmatmul.f32.gmra.mxu0 %v3018
        %v3059 = vpop.f32.mrf.mxu0
        %v3060 = vadd.f32 0.0, %v3059
        %3061 = vmatmul.f32.gmra.mxu0 %v3019
        %v3062 = vpop.f32.mrf.mxu0
        %v3063 = vadd.f32 0.0, %v3062
        %3064 = vmatmul.f32.gmra.mxu0 %v3020
        %v3065 = vpop.f32.mrf.mxu0
        %v3066 = vadd.f32 0.0, %v3065
        %3067 = vmatmul.f32.gmra.mxu0 %v3021
        %v3068 = vpop.f32.mrf.mxu0
        %v3069 = vadd.f32 0.0, %v3068
        %3070 = vmatmul.f32.gmra.mxu0 %v3022
        %v3071 = vpop.f32.mrf.mxu0
        %v3072 = vadd.f32 0.0, %v3071
        %3073 = vmatmul.f32.gmra.mxu0 %v3023
        %v3074 = vpop.f32.mrf.mxu0
        %v3075 = vadd.f32 0.0, %v3074
        %3076 = vmatmul.f32.gmra.mxu0 %v3024
        %v3077 = vpop.f32.mrf.mxu0
        %v3078 = vadd.f32 0.0, %v3077
        %3079 = vmatmul.f32.gmra.mxu0 %v3025
        %v3080 = vpop.f32.mrf.mxu0
        %v3081 = vadd.f32 0.0, %v3080
        %3082 = vmatmul.f32.gmra.mxu0 %v3026
        %v3083 = vpop.f32.mrf.mxu0
        %v3084 = vadd.f32 0.0, %v3083
        %3085 = vmatmul.f32.gmra.mxu0 %v3027
        %v3086 = vpop.f32.mrf.mxu0
        %v3087 = vadd.f32 0.0, %v3086
        %3088 = vmatmul.f32.gmra.mxu0 %v3028
        %v3089 = vpop.f32.mrf.mxu0
        %v3090 = vadd.f32 0.0, %v3089
        %3091 = vmatmul.f32.gmra.mxu0 %v3029
        %v3092 = vpop.f32.mrf.mxu0
        %v3093 = vadd.f32 0.0, %v3092
        %3094 = vdwg.mxu0
        %3095 = vxpose.xlu0.b32.start [1/16] %v2886, 128
        %3096 = vxpose.xlu0.b32.cont [2/16] %v2887, 128
        %3097 = vxpose.xlu0.b32.cont [3/16] %v2888, 128
        %3098 = vxpose.xlu0.b32.cont [4/16] %v2889, 128
        %3099 = vxpose.xlu0.b32.cont [5/16] %v2890, 128
        %3100 = vxpose.xlu0.b32.cont [6/16] %v2891, 128
        %3101 = vxpose.xlu0.b32.cont [7/16] %v2892, 128
        %3102 = vxpose.xlu0.b32.cont [8/16] %v2893, 128
        %3103 = vxpose.xlu0.b32.cont [9/16] %v2894, 128
        %3104 = vxpose.xlu0.b32.cont [10/16] %v2895, 128
        %3105 = vxpose.xlu0.b32.cont [11/16] %v2896, 128
        %3106 = vxpose.xlu0.b32.cont [12/16] %v2897, 128
        %3107 = vxpose.xlu0.b32.cont [13/16] %v2898, 128
        %3108 = vxpose.xlu0.b32.cont [14/16] %v2899, 128
        %3109 = vxpose.xlu0.b32.cont [15/16] %v2900, 128
        %3110 = vxpose.xlu0.b32.end [16/16] %v2901, 128
        %v3111 = vpop.trf.xlu0
        %v3112 = vpop.trf.xlu0
        %v3113 = vpop.trf.xlu0
        %v3114 = vpop.trf.xlu0
        %v3115 = vpop.trf.xlu0
        %v3116 = vpop.trf.xlu0
        %v3117 = vpop.trf.xlu0
        %v3118 = vpop.trf.xlu0
        %v3119 = vpop.trf.xlu0
        %v3120 = vpop.trf.xlu0
        %v3121 = vpop.trf.xlu0
        %v3122 = vpop.trf.xlu0
        %v3123 = vpop.trf.xlu0
        %v3124 = vpop.trf.xlu0
        %v3125 = vpop.trf.xlu0
        %v3126 = vpop.trf.xlu0
        %3127 = vmatpush.msra.mxu0 %v238
        %3128 = vmatpush.msra.mxu0 %v237
        %3129 = vmatpush.msra.mxu0 %v236
        %3130 = vmatpush.msra.mxu0 %v235
        %3131 = vmatpush.msra.mxu0 %v234
        %3132 = vmatpush.msra.mxu0 %v233
        %3133 = vmatpush.msra.mxu0 %v232
        %3134 = vmatpush.msra.mxu0 %v231
        %3135 = vmatpush.msra.mxu0 %v230
        %3136 = vmatpush.msra.mxu0 %v229
        %3137 = vmatpush.msra.mxu0 %v228
        %3138 = vmatpush.msra.mxu0 %v227
        %3139 = vmatpush.msra.mxu0 %v226
        %3140 = vmatpush.msra.mxu0 %v225
        %3141 = vmatpush.msra.mxu0 %v224
        %3142 = vmatpush.msra.mxu0 %v223
        %3143 = vmatmul.f32.gmra.mxu0 %v3111
        %v3144 = vpop.f32.mrf.mxu0
        %v3145 = vadd.f32 0.0, %v3144
        %3146 = vmatmul.f32.gmra.mxu0 %v3112
        %v3147 = vpop.f32.mrf.mxu0
        %v3148 = vadd.f32 0.0, %v3147
        %3149 = vmatmul.f32.gmra.mxu0 %v3113
        %v3150 = vpop.f32.mrf.mxu0
        %v3151 = vadd.f32 0.0, %v3150
        %3152 = vmatmul.f32.gmra.mxu0 %v3114
        %v3153 = vpop.f32.mrf.mxu0
        %v3154 = vadd.f32 0.0, %v3153
        %3155 = vmatmul.f32.gmra.mxu0 %v3115
        %v3156 = vpop.f32.mrf.mxu0
        %v3157 = vadd.f32 0.0, %v3156
        %3158 = vmatmul.f32.gmra.mxu0 %v3116
        %v3159 = vpop.f32.mrf.mxu0
        %v3160 = vadd.f32 0.0, %v3159
        %3161 = vmatmul.f32.gmra.mxu0 %v3117
        %v3162 = vpop.f32.mrf.mxu0
        %v3163 = vadd.f32 0.0, %v3162
        %3164 = vmatmul.f32.gmra.mxu0 %v3118
        %v3165 = vpop.f32.mrf.mxu0
        %v3166 = vadd.f32 0.0, %v3165
        %3167 = vmatmul.f32.gmra.mxu0 %v3119
        %v3168 = vpop.f32.mrf.mxu0
        %v3169 = vadd.f32 0.0, %v3168
        %3170 = vmatmul.f32.gmra.mxu0 %v3120
        %v3171 = vpop.f32.mrf.mxu0
        %v3172 = vadd.f32 0.0, %v3171
        %3173 = vmatmul.f32.gmra.mxu0 %v3121
        %v3174 = vpop.f32.mrf.mxu0
        %v3175 = vadd.f32 0.0, %v3174
        %3176 = vmatmul.f32.gmra.mxu0 %v3122
        %v3177 = vpop.f32.mrf.mxu0
        %v3178 = vadd.f32 0.0, %v3177
        %3179 = vmatmul.f32.gmra.mxu0 %v3123
        %v3180 = vpop.f32.mrf.mxu0
        %v3181 = vadd.f32 0.0, %v3180
        %3182 = vmatmul.f32.gmra.mxu0 %v3124
        %v3183 = vpop.f32.mrf.mxu0
        %v3184 = vadd.f32 0.0, %v3183
        %3185 = vmatmul.f32.gmra.mxu0 %v3125
        %v3186 = vpop.f32.mrf.mxu0
        %v3187 = vadd.f32 0.0, %v3186
        %3188 = vmatmul.f32.gmra.mxu0 %v3126
        %v3189 = vpop.f32.mrf.mxu0
        %v3190 = vadd.f32 0.0, %v3189
        %3191 = vdwg.mxu0
        %3192 = vxpose.xlu0.b32.start [1/16] %v2902, 128
        %3193 = vxpose.xlu0.b32.cont [2/16] %v2903, 128
        %3194 = vxpose.xlu0.b32.cont [3/16] %v2904, 128
        %3195 = vxpose.xlu0.b32.cont [4/16] %v2905, 128
        %3196 = vxpose.xlu0.b32.cont [5/16] %v2906, 128
        %3197 = vxpose.xlu0.b32.cont [6/16] %v2907, 128
        %3198 = vxpose.xlu0.b32.cont [7/16] %v2908, 128
        %3199 = vxpose.xlu0.b32.cont [8/16] %v2909, 128
        %3200 = vxpose.xlu0.b32.cont [9/16] %v2910, 128
        %3201 = vxpose.xlu0.b32.cont [10/16] %v2911, 128
        %3202 = vxpose.xlu0.b32.cont [11/16] %v2912, 128
        %3203 = vxpose.xlu0.b32.cont [12/16] %v2913, 128
        %3204 = vxpose.xlu0.b32.cont [13/16] %v2914, 128
        %3205 = vxpose.xlu0.b32.cont [14/16] %v2915, 128
        %3206 = vxpose.xlu0.b32.cont [15/16] %v2916, 128
        %3207 = vxpose.xlu0.b32.end [16/16] %v2917, 128
        %v3208 = vpop.trf.xlu0
        %v3209 = vpop.trf.xlu0
        %v3210 = vpop.trf.xlu0
        %v3211 = vpop.trf.xlu0
        %v3212 = vpop.trf.xlu0
        %v3213 = vpop.trf.xlu0
        %v3214 = vpop.trf.xlu0
        %v3215 = vpop.trf.xlu0
        %v3216 = vpop.trf.xlu0
        %v3217 = vpop.trf.xlu0
        %v3218 = vpop.trf.xlu0
        %v3219 = vpop.trf.xlu0
        %v3220 = vpop.trf.xlu0
        %v3221 = vpop.trf.xlu0
        %v3222 = vpop.trf.xlu0
        %v3223 = vpop.trf.xlu0
        %3224 = vmatpush.msra.mxu0 %v254
        %3225 = vmatpush.msra.mxu0 %v253
        %3226 = vmatpush.msra.mxu0 %v252
        %3227 = vmatpush.msra.mxu0 %v251
        %3228 = vmatpush.msra.mxu0 %v250
        %3229 = vmatpush.msra.mxu0 %v249
        %3230 = vmatpush.msra.mxu0 %v248
        %3231 = vmatpush.msra.mxu0 %v247
        %3232 = vmatpush.msra.mxu0 %v246
        %3233 = vmatpush.msra.mxu0 %v245
        %3234 = vmatpush.msra.mxu0 %v244
        %3235 = vmatpush.msra.mxu0 %v243
        %3236 = vmatpush.msra.mxu0 %v242
        %3237 = vmatpush.msra.mxu0 %v241
        %3238 = vmatpush.msra.mxu0 %v240
        %3239 = vmatpush.msra.mxu0 %v239
        %3240 = vmatmul.f32.gmra.mxu0 %v3208
        %v3241 = vpop.f32.mrf.mxu0
        %v3242 = vadd.f32 0.0, %v3241
        %3243 = vmatmul.f32.gmra.mxu0 %v3209
        %v3244 = vpop.f32.mrf.mxu0
        %v3245 = vadd.f32 0.0, %v3244
        %3246 = vmatmul.f32.gmra.mxu0 %v3210
        %v3247 = vpop.f32.mrf.mxu0
        %v3248 = vadd.f32 0.0, %v3247
        %3249 = vmatmul.f32.gmra.mxu0 %v3211
        %v3250 = vpop.f32.mrf.mxu0
        %v3251 = vadd.f32 0.0, %v3250
        %3252 = vmatmul.f32.gmra.mxu0 %v3212
        %v3253 = vpop.f32.mrf.mxu0
        %v3254 = vadd.f32 0.0, %v3253
        %3255 = vmatmul.f32.gmra.mxu0 %v3213
        %v3256 = vpop.f32.mrf.mxu0
        %v3257 = vadd.f32 0.0, %v3256
        %3258 = vmatmul.f32.gmra.mxu0 %v3214
        %v3259 = vpop.f32.mrf.mxu0
        %v3260 = vadd.f32 0.0, %v3259
        %3261 = vmatmul.f32.gmra.mxu0 %v3215
        %v3262 = vpop.f32.mrf.mxu0
        %v3263 = vadd.f32 0.0, %v3262
        %3264 = vmatmul.f32.gmra.mxu0 %v3216
        %v3265 = vpop.f32.mrf.mxu0
        %v3266 = vadd.f32 0.0, %v3265
        %3267 = vmatmul.f32.gmra.mxu0 %v3217
        %v3268 = vpop.f32.mrf.mxu0
        %v3269 = vadd.f32 0.0, %v3268
        %3270 = vmatmul.f32.gmra.mxu0 %v3218
        %v3271 = vpop.f32.mrf.mxu0
        %v3272 = vadd.f32 0.0, %v3271
        %3273 = vmatmul.f32.gmra.mxu0 %v3219
        %v3274 = vpop.f32.mrf.mxu0
        %v3275 = vadd.f32 0.0, %v3274
        %3276 = vmatmul.f32.gmra.mxu0 %v3220
        %v3277 = vpop.f32.mrf.mxu0
        %v3278 = vadd.f32 0.0, %v3277
        %3279 = vmatmul.f32.gmra.mxu0 %v3221
        %v3280 = vpop.f32.mrf.mxu0
        %v3281 = vadd.f32 0.0, %v3280
        %3282 = vmatmul.f32.gmra.mxu0 %v3222
        %v3283 = vpop.f32.mrf.mxu0
        %v3284 = vadd.f32 0.0, %v3283
        %3285 = vmatmul.f32.gmra.mxu0 %v3223
        %v3286 = vpop.f32.mrf.mxu0
        %v3287 = vadd.f32 0.0, %v3286
        %3288 = vdwg.mxu0
        %3289 = vxpose.xlu0.b32.start [1/16] %v2918, 128
        %3290 = vxpose.xlu0.b32.cont [2/16] %v2919, 128
        %3291 = vxpose.xlu0.b32.cont [3/16] %v2920, 128
        %3292 = vxpose.xlu0.b32.cont [4/16] %v2921, 128
        %3293 = vxpose.xlu0.b32.cont [5/16] %v2922, 128
        %3294 = vxpose.xlu0.b32.cont [6/16] %v2923, 128
        %3295 = vxpose.xlu0.b32.cont [7/16] %v2924, 128
        %3296 = vxpose.xlu0.b32.cont [8/16] %v2925, 128
        %3297 = vxpose.xlu0.b32.cont [9/16] %v2926, 128
        %3298 = vxpose.xlu0.b32.cont [10/16] %v2927, 128
        %3299 = vxpose.xlu0.b32.cont [11/16] %v2928, 128
        %3300 = vxpose.xlu0.b32.cont [12/16] %v2929, 128
        %3301 = vxpose.xlu0.b32.cont [13/16] %v2930, 128
        %3302 = vxpose.xlu0.b32.cont [14/16] %v2931, 128
        %3303 = vxpose.xlu0.b32.cont [15/16] %v2932, 128
        %3304 = vxpose.xlu0.b32.end [16/16] %v2933, 128
        %v3305 = vpop.trf.xlu0
        %v3306 = vpop.trf.xlu0
        %v3307 = vpop.trf.xlu0
        %v3308 = vpop.trf.xlu0
        %v3309 = vpop.trf.xlu0
        %v3310 = vpop.trf.xlu0
        %v3311 = vpop.trf.xlu0
        %v3312 = vpop.trf.xlu0
        %v3313 = vpop.trf.xlu0
        %v3314 = vpop.trf.xlu0
        %v3315 = vpop.trf.xlu0
        %v3316 = vpop.trf.xlu0
        %v3317 = vpop.trf.xlu0
        %v3318 = vpop.trf.xlu0
        %v3319 = vpop.trf.xlu0
        %v3320 = vpop.trf.xlu0
        %3321 = vmatpush.msra.mxu0 %v270
        %3322 = vmatpush.msra.mxu0 %v269
        %3323 = vmatpush.msra.mxu0 %v268
        %3324 = vmatpush.msra.mxu0 %v267
        %3325 = vmatpush.msra.mxu0 %v266
        %3326 = vmatpush.msra.mxu0 %v265
        %3327 = vmatpush.msra.mxu0 %v264
        %3328 = vmatpush.msra.mxu0 %v263
        %3329 = vmatpush.msra.mxu0 %v262
        %3330 = vmatpush.msra.mxu0 %v261
        %3331 = vmatpush.msra.mxu0 %v260
        %3332 = vmatpush.msra.mxu0 %v259
        %3333 = vmatpush.msra.mxu0 %v258
        %3334 = vmatpush.msra.mxu0 %v257
        %3335 = vmatpush.msra.mxu0 %v256
        %3336 = vmatpush.msra.mxu0 %v255
        %3337 = vmatmul.f32.gmra.mxu0 %v3305
        %v3338 = vpop.f32.mrf.mxu0
        %v3339 = vadd.f32 0.0, %v3338
        %3340 = vmatmul.f32.gmra.mxu0 %v3306
        %v3341 = vpop.f32.mrf.mxu0
        %v3342 = vadd.f32 0.0, %v3341
        %3343 = vmatmul.f32.gmra.mxu0 %v3307
        %v3344 = vpop.f32.mrf.mxu0
        %v3345 = vadd.f32 0.0, %v3344
        %3346 = vmatmul.f32.gmra.mxu0 %v3308
        %v3347 = vpop.f32.mrf.mxu0
        %v3348 = vadd.f32 0.0, %v3347
        %3349 = vmatmul.f32.gmra.mxu0 %v3309
        %v3350 = vpop.f32.mrf.mxu0
        %v3351 = vadd.f32 0.0, %v3350
        %3352 = vmatmul.f32.gmra.mxu0 %v3310
        %v3353 = vpop.f32.mrf.mxu0
        %v3354 = vadd.f32 0.0, %v3353
        %3355 = vmatmul.f32.gmra.mxu0 %v3311
        %v3356 = vpop.f32.mrf.mxu0
        %v3357 = vadd.f32 0.0, %v3356
        %3358 = vmatmul.f32.gmra.mxu0 %v3312
        %v3359 = vpop.f32.mrf.mxu0
        %v3360 = vadd.f32 0.0, %v3359
        %3361 = vmatmul.f32.gmra.mxu0 %v3313
        %v3362 = vpop.f32.mrf.mxu0
        %v3363 = vadd.f32 0.0, %v3362
        %3364 = vmatmul.f32.gmra.mxu0 %v3314
        %v3365 = vpop.f32.mrf.mxu0
        %v3366 = vadd.f32 0.0, %v3365
        %3367 = vmatmul.f32.gmra.mxu0 %v3315
        %v3368 = vpop.f32.mrf.mxu0
        %v3369 = vadd.f32 0.0, %v3368
        %3370 = vmatmul.f32.gmra.mxu0 %v3316
        %v3371 = vpop.f32.mrf.mxu0
        %v3372 = vadd.f32 0.0, %v3371
        %3373 = vmatmul.f32.gmra.mxu0 %v3317
        %v3374 = vpop.f32.mrf.mxu0
        %v3375 = vadd.f32 0.0, %v3374
        %3376 = vmatmul.f32.gmra.mxu0 %v3318
        %v3377 = vpop.f32.mrf.mxu0
        %v3378 = vadd.f32 0.0, %v3377
        %3379 = vmatmul.f32.gmra.mxu0 %v3319
        %v3380 = vpop.f32.mrf.mxu0
        %v3381 = vadd.f32 0.0, %v3380
        %3382 = vmatmul.f32.gmra.mxu0 %v3320
        %v3383 = vpop.f32.mrf.mxu0
        %v3384 = vadd.f32 0.0, %v3383
        %3385 = vdwg.mxu0
        %3386 = vxpose.xlu0.b32.start [1/16] %v2934, 128
        %3387 = vxpose.xlu0.b32.cont [2/16] %v2935, 128
        %3388 = vxpose.xlu0.b32.cont [3/16] %v2936, 128
        %3389 = vxpose.xlu0.b32.cont [4/16] %v2937, 128
        %3390 = vxpose.xlu0.b32.cont [5/16] %v2938, 128
        %3391 = vxpose.xlu0.b32.cont [6/16] %v2939, 128
        %3392 = vxpose.xlu0.b32.cont [7/16] %v2940, 128
        %3393 = vxpose.xlu0.b32.cont [8/16] %v2941, 128
        %3394 = vxpose.xlu0.b32.cont [9/16] %v2942, 128
        %3395 = vxpose.xlu0.b32.cont [10/16] %v2943, 128
        %3396 = vxpose.xlu0.b32.cont [11/16] %v2944, 128
        %3397 = vxpose.xlu0.b32.cont [12/16] %v2945, 128
        %3398 = vxpose.xlu0.b32.cont [13/16] %v2946, 128
        %3399 = vxpose.xlu0.b32.cont [14/16] %v2947, 128
        %3400 = vxpose.xlu0.b32.cont [15/16] %v2948, 128
        %3401 = vxpose.xlu0.b32.end [16/16] %v2949, 128
        %v3402 = vpop.trf.xlu0
        %v3403 = vpop.trf.xlu0
        %v3404 = vpop.trf.xlu0
        %v3405 = vpop.trf.xlu0
        %v3406 = vpop.trf.xlu0
        %v3407 = vpop.trf.xlu0
        %v3408 = vpop.trf.xlu0
        %v3409 = vpop.trf.xlu0
        %v3410 = vpop.trf.xlu0
        %v3411 = vpop.trf.xlu0
        %v3412 = vpop.trf.xlu0
        %v3413 = vpop.trf.xlu0
        %v3414 = vpop.trf.xlu0
        %v3415 = vpop.trf.xlu0
        %v3416 = vpop.trf.xlu0
        %v3417 = vpop.trf.xlu0
        %3418 = vmatpush.msra.mxu0 %v286
        %3419 = vmatpush.msra.mxu0 %v285
        %3420 = vmatpush.msra.mxu0 %v284
        %3421 = vmatpush.msra.mxu0 %v283
        %3422 = vmatpush.msra.mxu0 %v282
        %3423 = vmatpush.msra.mxu0 %v281
        %3424 = vmatpush.msra.mxu0 %v280
        %3425 = vmatpush.msra.mxu0 %v279
        %3426 = vmatpush.msra.mxu0 %v278
        %3427 = vmatpush.msra.mxu0 %v277
        %3428 = vmatpush.msra.mxu0 %v276
        %3429 = vmatpush.msra.mxu0 %v275
        %3430 = vmatpush.msra.mxu0 %v274
        %3431 = vmatpush.msra.mxu0 %v273
        %3432 = vmatpush.msra.mxu0 %v272
        %3433 = vmatpush.msra.mxu0 %v271
        %3434 = vmatmul.f32.gmra.mxu0 %v3402
        %v3435 = vpop.f32.mrf.mxu0
        %v3436 = vadd.f32 0.0, %v3435
        %3437 = vmatmul.f32.gmra.mxu0 %v3403
        %v3438 = vpop.f32.mrf.mxu0
        %v3439 = vadd.f32 0.0, %v3438
        %3440 = vmatmul.f32.gmra.mxu0 %v3404
        %v3441 = vpop.f32.mrf.mxu0
        %v3442 = vadd.f32 0.0, %v3441
        %3443 = vmatmul.f32.gmra.mxu0 %v3405
        %v3444 = vpop.f32.mrf.mxu0
        %v3445 = vadd.f32 0.0, %v3444
        %3446 = vmatmul.f32.gmra.mxu0 %v3406
        %v3447 = vpop.f32.mrf.mxu0
        %v3448 = vadd.f32 0.0, %v3447
        %3449 = vmatmul.f32.gmra.mxu0 %v3407
        %v3450 = vpop.f32.mrf.mxu0
        %v3451 = vadd.f32 0.0, %v3450
        %3452 = vmatmul.f32.gmra.mxu0 %v3408
        %v3453 = vpop.f32.mrf.mxu0
        %v3454 = vadd.f32 0.0, %v3453
        %3455 = vmatmul.f32.gmra.mxu0 %v3409
        %v3456 = vpop.f32.mrf.mxu0
        %v3457 = vadd.f32 0.0, %v3456
        %3458 = vmatmul.f32.gmra.mxu0 %v3410
        %v3459 = vpop.f32.mrf.mxu0
        %v3460 = vadd.f32 0.0, %v3459
        %3461 = vmatmul.f32.gmra.mxu0 %v3411
        %v3462 = vpop.f32.mrf.mxu0
        %v3463 = vadd.f32 0.0, %v3462
        %3464 = vmatmul.f32.gmra.mxu0 %v3412
        %v3465 = vpop.f32.mrf.mxu0
        %v3466 = vadd.f32 0.0, %v3465
        %3467 = vmatmul.f32.gmra.mxu0 %v3413
        %v3468 = vpop.f32.mrf.mxu0
        %v3469 = vadd.f32 0.0, %v3468
        %3470 = vmatmul.f32.gmra.mxu0 %v3414
        %v3471 = vpop.f32.mrf.mxu0
        %v3472 = vadd.f32 0.0, %v3471
        %3473 = vmatmul.f32.gmra.mxu0 %v3415
        %v3474 = vpop.f32.mrf.mxu0
        %v3475 = vadd.f32 0.0, %v3474
        %3476 = vmatmul.f32.gmra.mxu0 %v3416
        %v3477 = vpop.f32.mrf.mxu0
        %v3478 = vadd.f32 0.0, %v3477
        %3479 = vmatmul.f32.gmra.mxu0 %v3417
        %v3480 = vpop.f32.mrf.mxu0
        %v3481 = vadd.f32 0.0, %v3480
        %3482 = vdwg.mxu0
        %3483 = vxpose.xlu0.b32.start [1/16] %v2950, 128
        %3484 = vxpose.xlu0.b32.cont [2/16] %v2951, 128
        %3485 = vxpose.xlu0.b32.cont [3/16] %v2952, 128
        %3486 = vxpose.xlu0.b32.cont [4/16] %v2953, 128
        %3487 = vxpose.xlu0.b32.cont [5/16] %v2954, 128
        %3488 = vxpose.xlu0.b32.cont [6/16] %v2955, 128
        %3489 = vxpose.xlu0.b32.cont [7/16] %v2956, 128
        %3490 = vxpose.xlu0.b32.cont [8/16] %v2957, 128
        %3491 = vxpose.xlu0.b32.cont [9/16] %v2958, 128
        %3492 = vxpose.xlu0.b32.cont [10/16] %v2959, 128
        %3493 = vxpose.xlu0.b32.cont [11/16] %v2960, 128
        %3494 = vxpose.xlu0.b32.cont [12/16] %v2961, 128
        %3495 = vxpose.xlu0.b32.cont [13/16] %v2962, 128
        %3496 = vxpose.xlu0.b32.cont [14/16] %v2963, 128
        %3497 = vxpose.xlu0.b32.cont [15/16] %v2964, 128
        %3498 = vxpose.xlu0.b32.end [16/16] %v2965, 128
        %v3499 = vpop.trf.xlu0
        %v3500 = vpop.trf.xlu0
        %v3501 = vpop.trf.xlu0
        %v3502 = vpop.trf.xlu0
        %v3503 = vpop.trf.xlu0
        %v3504 = vpop.trf.xlu0
        %v3505 = vpop.trf.xlu0
        %v3506 = vpop.trf.xlu0
        %v3507 = vpop.trf.xlu0
        %v3508 = vpop.trf.xlu0
        %v3509 = vpop.trf.xlu0
        %v3510 = vpop.trf.xlu0
        %v3511 = vpop.trf.xlu0
        %v3512 = vpop.trf.xlu0
        %v3513 = vpop.trf.xlu0
        %v3514 = vpop.trf.xlu0
        %3515 = vmatpush.msra.mxu0 %v302
        %3516 = vmatpush.msra.mxu0 %v301
        %3517 = vmatpush.msra.mxu0 %v300
        %3518 = vmatpush.msra.mxu0 %v299
        %3519 = vmatpush.msra.mxu0 %v298
        %3520 = vmatpush.msra.mxu0 %v297
        %3521 = vmatpush.msra.mxu0 %v296
        %3522 = vmatpush.msra.mxu0 %v295
        %3523 = vmatpush.msra.mxu0 %v294
        %3524 = vmatpush.msra.mxu0 %v293
        %3525 = vmatpush.msra.mxu0 %v292
        %3526 = vmatpush.msra.mxu0 %v291
        %3527 = vmatpush.msra.mxu0 %v290
        %3528 = vmatpush.msra.mxu0 %v289
        %3529 = vmatpush.msra.mxu0 %v288
        %3530 = vmatpush.msra.mxu0 %v287
        %3531 = vmatmul.f32.gmra.mxu0 %v3499
        %v3532 = vpop.f32.mrf.mxu0
        %v3533 = vadd.f32 0.0, %v3532
        %3534 = vmatmul.f32.gmra.mxu0 %v3500
        %v3535 = vpop.f32.mrf.mxu0
        %v3536 = vadd.f32 0.0, %v3535
        %3537 = vmatmul.f32.gmra.mxu0 %v3501
        %v3538 = vpop.f32.mrf.mxu0
        %v3539 = vadd.f32 0.0, %v3538
        %3540 = vmatmul.f32.gmra.mxu0 %v3502
        %v3541 = vpop.f32.mrf.mxu0
        %v3542 = vadd.f32 0.0, %v3541
        %3543 = vmatmul.f32.gmra.mxu0 %v3503
        %v3544 = vpop.f32.mrf.mxu0
        %v3545 = vadd.f32 0.0, %v3544
        %3546 = vmatmul.f32.gmra.mxu0 %v3504
        %v3547 = vpop.f32.mrf.mxu0
        %v3548 = vadd.f32 0.0, %v3547
        %3549 = vmatmul.f32.gmra.mxu0 %v3505
        %v3550 = vpop.f32.mrf.mxu0
        %v3551 = vadd.f32 0.0, %v3550
        %3552 = vmatmul.f32.gmra.mxu0 %v3506
        %v3553 = vpop.f32.mrf.mxu0
        %v3554 = vadd.f32 0.0, %v3553
        %3555 = vmatmul.f32.gmra.mxu0 %v3507
        %v3556 = vpop.f32.mrf.mxu0
        %v3557 = vadd.f32 0.0, %v3556
        %3558 = vmatmul.f32.gmra.mxu0 %v3508
        %v3559 = vpop.f32.mrf.mxu0
        %v3560 = vadd.f32 0.0, %v3559
        %3561 = vmatmul.f32.gmra.mxu0 %v3509
        %v3562 = vpop.f32.mrf.mxu0
        %v3563 = vadd.f32 0.0, %v3562
        %3564 = vmatmul.f32.gmra.mxu0 %v3510
        %v3565 = vpop.f32.mrf.mxu0
        %v3566 = vadd.f32 0.0, %v3565
        %3567 = vmatmul.f32.gmra.mxu0 %v3511
        %v3568 = vpop.f32.mrf.mxu0
        %v3569 = vadd.f32 0.0, %v3568
        %3570 = vmatmul.f32.gmra.mxu0 %v3512
        %v3571 = vpop.f32.mrf.mxu0
        %v3572 = vadd.f32 0.0, %v3571
        %3573 = vmatmul.f32.gmra.mxu0 %v3513
        %v3574 = vpop.f32.mrf.mxu0
        %v3575 = vadd.f32 0.0, %v3574
        %3576 = vmatmul.f32.gmra.mxu0 %v3514
        %v3577 = vpop.f32.mrf.mxu0
        %v3578 = vadd.f32 0.0, %v3577
        %3579 = vdwg.mxu0
        %3580 = vxpose.xlu0.b32.start [1/16] %v2966, 128
        %3581 = vxpose.xlu0.b32.cont [2/16] %v2967, 128
        %3582 = vxpose.xlu0.b32.cont [3/16] %v2968, 128
        %3583 = vxpose.xlu0.b32.cont [4/16] %v2969, 128
        %3584 = vxpose.xlu0.b32.cont [5/16] %v2970, 128
        %3585 = vxpose.xlu0.b32.cont [6/16] %v2971, 128
        %3586 = vxpose.xlu0.b32.cont [7/16] %v2972, 128
        %3587 = vxpose.xlu0.b32.cont [8/16] %v2973, 128
        %3588 = vxpose.xlu0.b32.cont [9/16] %v2974, 128
        %3589 = vxpose.xlu0.b32.cont [10/16] %v2975, 128
        %3590 = vxpose.xlu0.b32.cont [11/16] %v2976, 128
        %3591 = vxpose.xlu0.b32.cont [12/16] %v2977, 128
        %3592 = vxpose.xlu0.b32.cont [13/16] %v2978, 128
        %3593 = vxpose.xlu0.b32.cont [14/16] %v2979, 128
        %3594 = vxpose.xlu0.b32.cont [15/16] %v2980, 128
        %3595 = vxpose.xlu0.b32.end [16/16] %v2981, 128
        %v3596 = vpop.trf.xlu0
        %v3597 = vpop.trf.xlu0
        %v3598 = vpop.trf.xlu0
        %v3599 = vpop.trf.xlu0
        %v3600 = vpop.trf.xlu0
        %v3601 = vpop.trf.xlu0
        %v3602 = vpop.trf.xlu0
        %v3603 = vpop.trf.xlu0
        %v3604 = vpop.trf.xlu0
        %v3605 = vpop.trf.xlu0
        %v3606 = vpop.trf.xlu0
        %v3607 = vpop.trf.xlu0
        %v3608 = vpop.trf.xlu0
        %v3609 = vpop.trf.xlu0
        %v3610 = vpop.trf.xlu0
        %v3611 = vpop.trf.xlu0
        %3612 = vmatpush.msra.mxu0 %v318
        %3613 = vmatpush.msra.mxu0 %v317
        %3614 = vmatpush.msra.mxu0 %v316
        %3615 = vmatpush.msra.mxu0 %v315
        %3616 = vmatpush.msra.mxu0 %v314
        %3617 = vmatpush.msra.mxu0 %v313
        %3618 = vmatpush.msra.mxu0 %v312
        %3619 = vmatpush.msra.mxu0 %v311
        %3620 = vmatpush.msra.mxu0 %v310
        %3621 = vmatpush.msra.mxu0 %v309
        %3622 = vmatpush.msra.mxu0 %v308
        %3623 = vmatpush.msra.mxu0 %v307
        %3624 = vmatpush.msra.mxu0 %v306
        %3625 = vmatpush.msra.mxu0 %v305
        %3626 = vmatpush.msra.mxu0 %v304
        %3627 = vmatpush.msra.mxu0 %v303
        %3628 = vmatmul.f32.gmra.mxu0 %v3596
        %v3629 = vpop.f32.mrf.mxu0
        %v3630 = vadd.f32 0.0, %v3629
        %3631 = vmatmul.f32.gmra.mxu0 %v3597
        %v3632 = vpop.f32.mrf.mxu0
        %v3633 = vadd.f32 0.0, %v3632
        %3634 = vmatmul.f32.gmra.mxu0 %v3598
        %v3635 = vpop.f32.mrf.mxu0
        %v3636 = vadd.f32 0.0, %v3635
        %3637 = vmatmul.f32.gmra.mxu0 %v3599
        %v3638 = vpop.f32.mrf.mxu0
        %v3639 = vadd.f32 0.0, %v3638
        %3640 = vmatmul.f32.gmra.mxu0 %v3600
        %v3641 = vpop.f32.mrf.mxu0
        %v3642 = vadd.f32 0.0, %v3641
        %3643 = vmatmul.f32.gmra.mxu0 %v3601
        %v3644 = vpop.f32.mrf.mxu0
        %v3645 = vadd.f32 0.0, %v3644
        %3646 = vmatmul.f32.gmra.mxu0 %v3602
        %v3647 = vpop.f32.mrf.mxu0
        %v3648 = vadd.f32 0.0, %v3647
        %3649 = vmatmul.f32.gmra.mxu0 %v3603
        %v3650 = vpop.f32.mrf.mxu0
        %v3651 = vadd.f32 0.0, %v3650
        %3652 = vmatmul.f32.gmra.mxu0 %v3604
        %v3653 = vpop.f32.mrf.mxu0
        %v3654 = vadd.f32 0.0, %v3653
        %3655 = vmatmul.f32.gmra.mxu0 %v3605
        %v3656 = vpop.f32.mrf.mxu0
        %v3657 = vadd.f32 0.0, %v3656
        %3658 = vmatmul.f32.gmra.mxu0 %v3606
        %v3659 = vpop.f32.mrf.mxu0
        %v3660 = vadd.f32 0.0, %v3659
        %3661 = vmatmul.f32.gmra.mxu0 %v3607
        %v3662 = vpop.f32.mrf.mxu0
        %v3663 = vadd.f32 0.0, %v3662
        %3664 = vmatmul.f32.gmra.mxu0 %v3608
        %v3665 = vpop.f32.mrf.mxu0
        %v3666 = vadd.f32 0.0, %v3665
        %3667 = vmatmul.f32.gmra.mxu0 %v3609
        %v3668 = vpop.f32.mrf.mxu0
        %v3669 = vadd.f32 0.0, %v3668
        %3670 = vmatmul.f32.gmra.mxu0 %v3610
        %v3671 = vpop.f32.mrf.mxu0
        %v3672 = vadd.f32 0.0, %v3671
        %3673 = vmatmul.f32.gmra.mxu0 %v3611
        %v3674 = vpop.f32.mrf.mxu0
        %v3675 = vadd.f32 0.0, %v3674
        %3676 = vdwg.mxu0
        %3677 = vxpose.xlu0.b32.start [1/16] %v2982, 128
        %3678 = vxpose.xlu0.b32.cont [2/16] %v2983, 128
        %3679 = vxpose.xlu0.b32.cont [3/16] %v2984, 128
        %3680 = vxpose.xlu0.b32.cont [4/16] %v2985, 128
        %3681 = vxpose.xlu0.b32.cont [5/16] %v2986, 128
        %3682 = vxpose.xlu0.b32.cont [6/16] %v2987, 128
        %3683 = vxpose.xlu0.b32.cont [7/16] %v2988, 128
        %3684 = vxpose.xlu0.b32.cont [8/16] %v2989, 128
        %3685 = vxpose.xlu0.b32.cont [9/16] %v2990, 128
        %3686 = vxpose.xlu0.b32.cont [10/16] %v2991, 128
        %3687 = vxpose.xlu0.b32.cont [11/16] %v2992, 128
        %3688 = vxpose.xlu0.b32.cont [12/16] %v2993, 128
        %3689 = vxpose.xlu0.b32.cont [13/16] %v2994, 128
        %3690 = vxpose.xlu0.b32.cont [14/16] %v2995, 128
        %3691 = vxpose.xlu0.b32.cont [15/16] %v2996, 128
        %3692 = vxpose.xlu0.b32.end [16/16] %v2997, 128
        %v3693 = vpop.trf.xlu0
        %v3694 = vpop.trf.xlu0
        %v3695 = vpop.trf.xlu0
        %v3696 = vpop.trf.xlu0
        %v3697 = vpop.trf.xlu0
        %v3698 = vpop.trf.xlu0
        %v3699 = vpop.trf.xlu0
        %v3700 = vpop.trf.xlu0
        %v3701 = vpop.trf.xlu0
        %v3702 = vpop.trf.xlu0
        %v3703 = vpop.trf.xlu0
        %v3704 = vpop.trf.xlu0
        %v3705 = vpop.trf.xlu0
        %v3706 = vpop.trf.xlu0
        %v3707 = vpop.trf.xlu0
        %v3708 = vpop.trf.xlu0
        %3709 = vmatpush.msra.mxu0 %v334
        %3710 = vmatpush.msra.mxu0 %v333
        %3711 = vmatpush.msra.mxu0 %v332
        %3712 = vmatpush.msra.mxu0 %v331
        %3713 = vmatpush.msra.mxu0 %v330
        %3714 = vmatpush.msra.mxu0 %v329
        %3715 = vmatpush.msra.mxu0 %v328
        %3716 = vmatpush.msra.mxu0 %v327
        %3717 = vmatpush.msra.mxu0 %v326
        %3718 = vmatpush.msra.mxu0 %v325
        %3719 = vmatpush.msra.mxu0 %v324
        %3720 = vmatpush.msra.mxu0 %v323
        %3721 = vmatpush.msra.mxu0 %v322
        %3722 = vmatpush.msra.mxu0 %v321
        %3723 = vmatpush.msra.mxu0 %v320
        %3724 = vmatpush.msra.mxu0 %v319
        %3725 = vmatmul.f32.gmra.mxu0 %v3693
        %v3726 = vpop.f32.mrf.mxu0
        %v3727 = vadd.f32 0.0, %v3726
        %3728 = vmatmul.f32.gmra.mxu0 %v3694
        %v3729 = vpop.f32.mrf.mxu0
        %v3730 = vadd.f32 0.0, %v3729
        %3731 = vmatmul.f32.gmra.mxu0 %v3695
        %v3732 = vpop.f32.mrf.mxu0
        %v3733 = vadd.f32 0.0, %v3732
        %3734 = vmatmul.f32.gmra.mxu0 %v3696
        %v3735 = vpop.f32.mrf.mxu0
        %v3736 = vadd.f32 0.0, %v3735
        %3737 = vmatmul.f32.gmra.mxu0 %v3697
        %v3738 = vpop.f32.mrf.mxu0
        %v3739 = vadd.f32 0.0, %v3738
        %3740 = vmatmul.f32.gmra.mxu0 %v3698
        %v3741 = vpop.f32.mrf.mxu0
        %v3742 = vadd.f32 0.0, %v3741
        %3743 = vmatmul.f32.gmra.mxu0 %v3699
        %v3744 = vpop.f32.mrf.mxu0
        %v3745 = vadd.f32 0.0, %v3744
        %3746 = vmatmul.f32.gmra.mxu0 %v3700
        %v3747 = vpop.f32.mrf.mxu0
        %v3748 = vadd.f32 0.0, %v3747
        %3749 = vmatmul.f32.gmra.mxu0 %v3701
        %v3750 = vpop.f32.mrf.mxu0
        %v3751 = vadd.f32 0.0, %v3750
        %3752 = vmatmul.f32.gmra.mxu0 %v3702
        %v3753 = vpop.f32.mrf.mxu0
        %v3754 = vadd.f32 0.0, %v3753
        %3755 = vmatmul.f32.gmra.mxu0 %v3703
        %v3756 = vpop.f32.mrf.mxu0
        %v3757 = vadd.f32 0.0, %v3756
        %3758 = vmatmul.f32.gmra.mxu0 %v3704
        %v3759 = vpop.f32.mrf.mxu0
        %v3760 = vadd.f32 0.0, %v3759
        %3761 = vmatmul.f32.gmra.mxu0 %v3705
        %v3762 = vpop.f32.mrf.mxu0
        %v3763 = vadd.f32 0.0, %v3762
        %3764 = vmatmul.f32.gmra.mxu0 %v3706
        %v3765 = vpop.f32.mrf.mxu0
        %v3766 = vadd.f32 0.0, %v3765
        %3767 = vmatmul.f32.gmra.mxu0 %v3707
        %v3768 = vpop.f32.mrf.mxu0
        %v3769 = vadd.f32 0.0, %v3768
        %3770 = vmatmul.f32.gmra.mxu0 %v3708
        %v3771 = vpop.f32.mrf.mxu0
        %v3772 = vadd.f32 0.0, %v3771
        %3773 = vdwg.mxu0
        %v3774 = vsub.f32 %v3048, %v404
        %v3775 = vsub.f32 %v3051, %v405
        %v3776 = vsub.f32 %v3054, %v406
        %v3777 = vsub.f32 %v3057, %v407
        %v3778 = vsub.f32 %v3060, %v408
        %v3779 = vsub.f32 %v3063, %v409
        %v3780 = vsub.f32 %v3066, %v410
        %v3781 = vsub.f32 %v3069, %v411
        %v3782 = vsub.f32 %v3072, %v412
        %v3783 = vsub.f32 %v3075, %v413
        %v3784 = vsub.f32 %v3078, %v414
        %v3785 = vsub.f32 %v3081, %v415
        %v3786 = vsub.f32 %v3084, %v416
        %v3787 = vsub.f32 %v3087, %v417
        %v3788 = vsub.f32 %v3090, %v418
        %v3789 = vsub.f32 %v3093, %v419
        %v3790 = vsub.f32 %v3145, %v404
        %v3791 = vsub.f32 %v3148, %v405
        %v3792 = vsub.f32 %v3151, %v406
        %v3793 = vsub.f32 %v3154, %v407
        %v3794 = vsub.f32 %v3157, %v408
        %v3795 = vsub.f32 %v3160, %v409
        %v3796 = vsub.f32 %v3163, %v410
        %v3797 = vsub.f32 %v3166, %v411
        %v3798 = vsub.f32 %v3169, %v412
        %v3799 = vsub.f32 %v3172, %v413
        %v3800 = vsub.f32 %v3175, %v414
        %v3801 = vsub.f32 %v3178, %v415
        %v3802 = vsub.f32 %v3181, %v416
        %v3803 = vsub.f32 %v3184, %v417
        %v3804 = vsub.f32 %v3187, %v418
        %v3805 = vsub.f32 %v3190, %v419
        %v3806 = vsub.f32 %v3242, %v404
        %v3807 = vsub.f32 %v3245, %v405
        %v3808 = vsub.f32 %v3248, %v406
        %v3809 = vsub.f32 %v3251, %v407
        %v3810 = vsub.f32 %v3254, %v408
        %v3811 = vsub.f32 %v3257, %v409
        %v3812 = vsub.f32 %v3260, %v410
        %v3813 = vsub.f32 %v3263, %v411
        %v3814 = vsub.f32 %v3266, %v412
        %v3815 = vsub.f32 %v3269, %v413
        %v3816 = vsub.f32 %v3272, %v414
        %v3817 = vsub.f32 %v3275, %v415
        %v3818 = vsub.f32 %v3278, %v416
        %v3819 = vsub.f32 %v3281, %v417
        %v3820 = vsub.f32 %v3284, %v418
        %v3821 = vsub.f32 %v3287, %v419
        %v3822 = vsub.f32 %v3339, %v404
        %v3823 = vsub.f32 %v3342, %v405
        %v3824 = vsub.f32 %v3345, %v406
        %v3825 = vsub.f32 %v3348, %v407
        %v3826 = vsub.f32 %v3351, %v408
        %v3827 = vsub.f32 %v3354, %v409
        %v3828 = vsub.f32 %v3357, %v410
        %v3829 = vsub.f32 %v3360, %v411
        %v3830 = vsub.f32 %v3363, %v412
        %v3831 = vsub.f32 %v3366, %v413
        %v3832 = vsub.f32 %v3369, %v414
        %v3833 = vsub.f32 %v3372, %v415
        %v3834 = vsub.f32 %v3375, %v416
        %v3835 = vsub.f32 %v3378, %v417
        %v3836 = vsub.f32 %v3381, %v418
        %v3837 = vsub.f32 %v3384, %v419
        %v3838 = vsub.f32 %v3436, %v404
        %v3839 = vsub.f32 %v3439, %v405
        %v3840 = vsub.f32 %v3442, %v406
        %v3841 = vsub.f32 %v3445, %v407
        %v3842 = vsub.f32 %v3448, %v408
        %v3843 = vsub.f32 %v3451, %v409
        %v3844 = vsub.f32 %v3454, %v410
        %v3845 = vsub.f32 %v3457, %v411
        %v3846 = vsub.f32 %v3460, %v412
        %v3847 = vsub.f32 %v3463, %v413
        %v3848 = vsub.f32 %v3466, %v414
        %v3849 = vsub.f32 %v3469, %v415
        %v3850 = vsub.f32 %v3472, %v416
        %v3851 = vsub.f32 %v3475, %v417
        %v3852 = vsub.f32 %v3478, %v418
        %v3853 = vsub.f32 %v3481, %v419
        %v3854 = vsub.f32 %v3533, %v404
        %v3855 = vsub.f32 %v3536, %v405
        %v3856 = vsub.f32 %v3539, %v406
        %v3857 = vsub.f32 %v3542, %v407
        %v3858 = vsub.f32 %v3545, %v408
        %v3859 = vsub.f32 %v3548, %v409
        %v3860 = vsub.f32 %v3551, %v410
        %v3861 = vsub.f32 %v3554, %v411
        %v3862 = vsub.f32 %v3557, %v412
        %v3863 = vsub.f32 %v3560, %v413
        %v3864 = vsub.f32 %v3563, %v414
        %v3865 = vsub.f32 %v3566, %v415
        %v3866 = vsub.f32 %v3569, %v416
        %v3867 = vsub.f32 %v3572, %v417
        %v3868 = vsub.f32 %v3575, %v418
        %v3869 = vsub.f32 %v3578, %v419
        %v3870 = vsub.f32 %v3630, %v404
        %v3871 = vsub.f32 %v3633, %v405
        %v3872 = vsub.f32 %v3636, %v406
        %v3873 = vsub.f32 %v3639, %v407
        %v3874 = vsub.f32 %v3642, %v408
        %v3875 = vsub.f32 %v3645, %v409
        %v3876 = vsub.f32 %v3648, %v410
        %v3877 = vsub.f32 %v3651, %v411
        %v3878 = vsub.f32 %v3654, %v412
        %v3879 = vsub.f32 %v3657, %v413
        %v3880 = vsub.f32 %v3660, %v414
        %v3881 = vsub.f32 %v3663, %v415
        %v3882 = vsub.f32 %v3666, %v416
        %v3883 = vsub.f32 %v3669, %v417
        %v3884 = vsub.f32 %v3672, %v418
        %v3885 = vsub.f32 %v3675, %v419
        %v3886 = vsub.f32 %v3727, %v404
        %v3887 = vsub.f32 %v3730, %v405
        %v3888 = vsub.f32 %v3733, %v406
        %v3889 = vsub.f32 %v3736, %v407
        %v3890 = vsub.f32 %v3739, %v408
        %v3891 = vsub.f32 %v3742, %v409
        %v3892 = vsub.f32 %v3745, %v410
        %v3893 = vsub.f32 %v3748, %v411
        %v3894 = vsub.f32 %v3751, %v412
        %v3895 = vsub.f32 %v3754, %v413
        %v3896 = vsub.f32 %v3757, %v414
        %v3897 = vsub.f32 %v3760, %v415
        %v3898 = vsub.f32 %v3763, %v416
        %v3899 = vsub.f32 %v3766, %v417
        %v3900 = vsub.f32 %v3769, %v418
        %v3901 = vsub.f32 %v3772, %v419
        %s3902 = scalar_lea.vmem %s1, 256
        %v3903 = vld [vmem:[%s3902] sm:$0xff]
        %v3904 = vld [vmem:[%s3902 + $0x8] sm:$0xff]
        %v3905 = vld [vmem:[%s3902 + $0x10] sm:$0xff]
        %v3906 = vld [vmem:[%s3902 + $0x18] sm:$0xff]
        %v3907 = vld [vmem:[%s3902 + $0x20] sm:$0xff]
        %v3908 = vld [vmem:[%s3902 + $0x28] sm:$0xff]
        %v3909 = vld [vmem:[%s3902 + $0x30] sm:$0xff]
        %v3910 = vld [vmem:[%s3902 + $0x38] sm:$0xff]
        %v3911 = vld [vmem:[%s3902 + $0x40] sm:$0xff]
        %v3912 = vld [vmem:[%s3902 + $0x48] sm:$0xff]
        %v3913 = vld [vmem:[%s3902 + $0x50] sm:$0xff]
        %v3914 = vld [vmem:[%s3902 + $0x58] sm:$0xff]
        %v3915 = vld [vmem:[%s3902 + $0x60] sm:$0xff]
        %v3916 = vld [vmem:[%s3902 + $0x68] sm:$0xff]
        %v3917 = vld [vmem:[%s3902 + $0x70] sm:$0xff]
        %v3918 = vld [vmem:[%s3902 + $0x78] sm:$0xff]
        %v3920 = vsel %vm420, %v3774, 0
        %v3923 = vsel %vm420, %v3775, 0
        %v3926 = vsel %vm420, %v3776, 0
        %v3929 = vsel %vm420, %v3777, 0
        %v3932 = vsel %vm420, %v3778, 0
        %v3935 = vsel %vm420, %v3779, 0
        %v3938 = vsel %vm420, %v3780, 0
        %v3941 = vsel %vm420, %v3781, 0
        %v3944 = vsel %vm420, %v3782, 0
        %v3947 = vsel %vm420, %v3783, 0
        %v3950 = vsel %vm420, %v3784, 0
        %v3953 = vsel %vm420, %v3785, 0
        %v3956 = vsel %vm420, %v3786, 0
        %v3959 = vsel %vm420, %v3787, 0
        %v3962 = vsel %vm420, %v3788, 0
        %v3965 = vsel %vm420, %v3789, 0
        %v3968 = vsel %vm420, %v3790, 0
        %v3971 = vsel %vm420, %v3791, 0
        %v3974 = vsel %vm420, %v3792, 0
        %v3977 = vsel %vm420, %v3793, 0
        %v3980 = vsel %vm420, %v3794, 0
        %v3983 = vsel %vm420, %v3795, 0
        %v3986 = vsel %vm420, %v3796, 0
        %v3989 = vsel %vm420, %v3797, 0
        %v3992 = vsel %vm420, %v3798, 0
        %v3995 = vsel %vm420, %v3799, 0
        %v3998 = vsel %vm420, %v3800, 0
        %v4001 = vsel %vm420, %v3801, 0
        %v4004 = vsel %vm420, %v3802, 0
        %v4007 = vsel %vm420, %v3803, 0
        %v4010 = vsel %vm420, %v3804, 0
        %v4013 = vsel %vm420, %v3805, 0
        %v4016 = vsel %vm420, %v3806, 0
        %v4019 = vsel %vm420, %v3807, 0
        %v4022 = vsel %vm420, %v3808, 0
        %v4025 = vsel %vm420, %v3809, 0
        %v4028 = vsel %vm420, %v3810, 0
        %v4031 = vsel %vm420, %v3811, 0
        %v4034 = vsel %vm420, %v3812, 0
        %v4037 = vsel %vm420, %v3813, 0
        %v4040 = vsel %vm420, %v3814, 0
        %v4043 = vsel %vm420, %v3815, 0
        %v4046 = vsel %vm420, %v3816, 0
        %v4049 = vsel %vm420, %v3817, 0
        %v4052 = vsel %vm420, %v3818, 0
        %v4055 = vsel %vm420, %v3819, 0
        %v4058 = vsel %vm420, %v3820, 0
        %v4061 = vsel %vm420, %v3821, 0
        %v4064 = vsel %vm420, %v3822, 0
        %v4067 = vsel %vm420, %v3823, 0
        %v4070 = vsel %vm420, %v3824, 0
        %v4073 = vsel %vm420, %v3825, 0
        %v4076 = vsel %vm420, %v3826, 0
        %v4079 = vsel %vm420, %v3827, 0
        %v4082 = vsel %vm420, %v3828, 0
        %v4085 = vsel %vm420, %v3829, 0
        %v4088 = vsel %vm420, %v3830, 0
        %v4091 = vsel %vm420, %v3831, 0
        %v4094 = vsel %vm420, %v3832, 0
        %v4097 = vsel %vm420, %v3833, 0
        %v4100 = vsel %vm420, %v3834, 0
        %v4103 = vsel %vm420, %v3835, 0
        %v4106 = vsel %vm420, %v3836, 0
        %v4109 = vsel %vm420, %v3837, 0
        %v4112 = vsel %vm420, %v3838, 0
        %v4115 = vsel %vm420, %v3839, 0
        %v4118 = vsel %vm420, %v3840, 0
        %v4121 = vsel %vm420, %v3841, 0
        %v4124 = vsel %vm420, %v3842, 0
        %v4127 = vsel %vm420, %v3843, 0
        %v4130 = vsel %vm420, %v3844, 0
        %v4133 = vsel %vm420, %v3845, 0
        %v4136 = vsel %vm420, %v3846, 0
        %v4139 = vsel %vm420, %v3847, 0
        %v4142 = vsel %vm420, %v3848, 0
        %v4145 = vsel %vm420, %v3849, 0
        %v4148 = vsel %vm420, %v3850, 0
        %v4151 = vsel %vm420, %v3851, 0
        %v4154 = vsel %vm420, %v3852, 0
        %v4157 = vsel %vm420, %v3853, 0
        %v4160 = vsel %vm420, %v3854, 0
        %v4163 = vsel %vm420, %v3855, 0
        %v4166 = vsel %vm420, %v3856, 0
        %v4169 = vsel %vm420, %v3857, 0
        %v4172 = vsel %vm420, %v3858, 0
        %v4175 = vsel %vm420, %v3859, 0
        %v4178 = vsel %vm420, %v3860, 0
        %v4181 = vsel %vm420, %v3861, 0
        %v4184 = vsel %vm420, %v3862, 0
        %v4187 = vsel %vm420, %v3863, 0
        %v4190 = vsel %vm420, %v3864, 0
        %v4193 = vsel %vm420, %v3865, 0
        %v4196 = vsel %vm420, %v3866, 0
        %v4199 = vsel %vm420, %v3867, 0
        %v4202 = vsel %vm420, %v3868, 0
        %v4205 = vsel %vm420, %v3869, 0
        %v4208 = vsel %vm420, %v3870, 0
        %v4211 = vsel %vm420, %v3871, 0
        %v4214 = vsel %vm420, %v3872, 0
        %v4217 = vsel %vm420, %v3873, 0
        %v4220 = vsel %vm420, %v3874, 0
        %v4223 = vsel %vm420, %v3875, 0
        %v4226 = vsel %vm420, %v3876, 0
        %v4229 = vsel %vm420, %v3877, 0
        %v4232 = vsel %vm420, %v3878, 0
        %v4235 = vsel %vm420, %v3879, 0
        %v4238 = vsel %vm420, %v3880, 0
        %v4241 = vsel %vm420, %v3881, 0
        %v4244 = vsel %vm420, %v3882, 0
        %v4247 = vsel %vm420, %v3883, 0
        %v4250 = vsel %vm420, %v3884, 0
        %v4253 = vsel %vm420, %v3885, 0
        %v4256 = vsel %vm420, %v3886, 0
        %v4259 = vsel %vm420, %v3887, 0
        %v4262 = vsel %vm420, %v3888, 0
        %v4265 = vsel %vm420, %v3889, 0
        %v4268 = vsel %vm420, %v3890, 0
        %v4271 = vsel %vm420, %v3891, 0
        %v4274 = vsel %vm420, %v3892, 0
        %v4277 = vsel %vm420, %v3893, 0
        %v4280 = vsel %vm420, %v3894, 0
        %v4283 = vsel %vm420, %v3895, 0
        %v4286 = vsel %vm420, %v3896, 0
        %v4289 = vsel %vm420, %v3897, 0
        %v4292 = vsel %vm420, %v3898, 0
        %v4295 = vsel %vm420, %v3899, 0
        %v4298 = vsel %vm420, %v3900, 0
        %v4301 = vsel %vm420, %v3901, 0
        %v4304 = vsel %vm420, %v3903, 0
        %v4307 = vsel %vm420, %v3904, 0
        %v4310 = vsel %vm420, %v3905, 0
        %v4313 = vsel %vm420, %v3906, 0
        %v4316 = vsel %vm420, %v3907, 0
        %v4319 = vsel %vm420, %v3908, 0
        %v4322 = vsel %vm420, %v3909, 0
        %v4325 = vsel %vm420, %v3910, 0
        %v4328 = vsel %vm420, %v3911, 0
        %v4331 = vsel %vm420, %v3912, 0
        %v4334 = vsel %vm420, %v3913, 0
        %v4337 = vsel %vm420, %v3914, 0
        %v4340 = vsel %vm420, %v3915, 0
        %v4343 = vsel %vm420, %v3916, 0
        %v4346 = vsel %vm420, %v3917, 0
        %v4349 = vsel %vm420, %v3918, 0
        %4351 = vmatpush.xpose.msra.mxu0 %v4349
        %4352 = vmatpush.xpose.msra.mxu0 %v4346
        %4353 = vmatpush.xpose.msra.mxu0 %v4343
        %4354 = vmatpush.xpose.msra.mxu0 %v4340
        %4355 = vmatpush.xpose.msra.mxu0 %v4337
        %4356 = vmatpush.xpose.msra.mxu0 %v4334
        %4357 = vmatpush.xpose.msra.mxu0 %v4331
        %4358 = vmatpush.xpose.msra.mxu0 %v4328
        %4359 = vmatpush.xpose.msra.mxu0 %v4325
        %4360 = vmatpush.xpose.msra.mxu0 %v4322
        %4361 = vmatpush.xpose.msra.mxu0 %v4319
        %4362 = vmatpush.xpose.msra.mxu0 %v4316
        %4363 = vmatpush.xpose.msra.mxu0 %v4313
        %4364 = vmatpush.xpose.msra.mxu0 %v4310
        %4365 = vmatpush.xpose.msra.mxu0 %v4307
        %4366 = vmatpush.xpose.msra.mxu0 %v4304
        %4367 = vmatmul.f32.gmra.mxu0 %v3920
        %v4368 = vpop.f32.mrf.mxu0
        %v4369 = vadd.f32 0.0, %v4368
        %4370 = vmatmul.f32.gmra.mxu0 %v3923
        %v4371 = vpop.f32.mrf.mxu0
        %v4372 = vadd.f32 0.0, %v4371
        %4373 = vmatmul.f32.gmra.mxu0 %v3926
        %v4374 = vpop.f32.mrf.mxu0
        %v4375 = vadd.f32 0.0, %v4374
        %4376 = vmatmul.f32.gmra.mxu0 %v3929
        %v4377 = vpop.f32.mrf.mxu0
        %v4378 = vadd.f32 0.0, %v4377
        %4379 = vmatmul.f32.gmra.mxu0 %v3932
        %v4380 = vpop.f32.mrf.mxu0
        %v4381 = vadd.f32 0.0, %v4380
        %4382 = vmatmul.f32.gmra.mxu0 %v3935
        %v4383 = vpop.f32.mrf.mxu0
        %v4384 = vadd.f32 0.0, %v4383
        %4385 = vmatmul.f32.gmra.mxu0 %v3938
        %v4386 = vpop.f32.mrf.mxu0
        %v4387 = vadd.f32 0.0, %v4386
        %4388 = vmatmul.f32.gmra.mxu0 %v3941
        %v4389 = vpop.f32.mrf.mxu0
        %v4390 = vadd.f32 0.0, %v4389
        %4391 = vmatmul.f32.gmra.mxu0 %v3944
        %v4392 = vpop.f32.mrf.mxu0
        %v4393 = vadd.f32 0.0, %v4392
        %4394 = vmatmul.f32.gmra.mxu0 %v3947
        %v4395 = vpop.f32.mrf.mxu0
        %v4396 = vadd.f32 0.0, %v4395
        %4397 = vmatmul.f32.gmra.mxu0 %v3950
        %v4398 = vpop.f32.mrf.mxu0
        %v4399 = vadd.f32 0.0, %v4398
        %4400 = vmatmul.f32.gmra.mxu0 %v3953
        %v4401 = vpop.f32.mrf.mxu0
        %v4402 = vadd.f32 0.0, %v4401
        %4403 = vmatmul.f32.gmra.mxu0 %v3956
        %v4404 = vpop.f32.mrf.mxu0
        %v4405 = vadd.f32 0.0, %v4404
        %4406 = vmatmul.f32.gmra.mxu0 %v3959
        %v4407 = vpop.f32.mrf.mxu0
        %v4408 = vadd.f32 0.0, %v4407
        %4409 = vmatmul.f32.gmra.mxu0 %v3962
        %v4410 = vpop.f32.mrf.mxu0
        %v4411 = vadd.f32 0.0, %v4410
        %4412 = vmatmul.f32.gmra.mxu0 %v3965
        %v4413 = vpop.f32.mrf.mxu0
        %v4414 = vadd.f32 0.0, %v4413
        %4415 = vmatmul.f32.gmra.mxu0 %v3968
        %v4416 = vpop.f32.mrf.mxu0
        %v4417 = vadd.f32 0.0, %v4416
        %4418 = vmatmul.f32.gmra.mxu0 %v3971
        %v4419 = vpop.f32.mrf.mxu0
        %v4420 = vadd.f32 0.0, %v4419
        %4421 = vmatmul.f32.gmra.mxu0 %v3974
        %v4422 = vpop.f32.mrf.mxu0
        %v4423 = vadd.f32 0.0, %v4422
        %4424 = vmatmul.f32.gmra.mxu0 %v3977
        %v4425 = vpop.f32.mrf.mxu0
        %v4426 = vadd.f32 0.0, %v4425
        %4427 = vmatmul.f32.gmra.mxu0 %v3980
        %v4428 = vpop.f32.mrf.mxu0
        %v4429 = vadd.f32 0.0, %v4428
        %4430 = vmatmul.f32.gmra.mxu0 %v3983
        %v4431 = vpop.f32.mrf.mxu0
        %v4432 = vadd.f32 0.0, %v4431
        %4433 = vmatmul.f32.gmra.mxu0 %v3986
        %v4434 = vpop.f32.mrf.mxu0
        %v4435 = vadd.f32 0.0, %v4434
        %4436 = vmatmul.f32.gmra.mxu0 %v3989
        %v4437 = vpop.f32.mrf.mxu0
        %v4438 = vadd.f32 0.0, %v4437
        %4439 = vmatmul.f32.gmra.mxu0 %v3992
        %v4440 = vpop.f32.mrf.mxu0
        %v4441 = vadd.f32 0.0, %v4440
        %4442 = vmatmul.f32.gmra.mxu0 %v3995
        %v4443 = vpop.f32.mrf.mxu0
        %v4444 = vadd.f32 0.0, %v4443
        %4445 = vmatmul.f32.gmra.mxu0 %v3998
        %v4446 = vpop.f32.mrf.mxu0
        %v4447 = vadd.f32 0.0, %v4446
        %4448 = vmatmul.f32.gmra.mxu0 %v4001
        %v4449 = vpop.f32.mrf.mxu0
        %v4450 = vadd.f32 0.0, %v4449
        %4451 = vmatmul.f32.gmra.mxu0 %v4004
        %v4452 = vpop.f32.mrf.mxu0
        %v4453 = vadd.f32 0.0, %v4452
        %4454 = vmatmul.f32.gmra.mxu0 %v4007
        %v4455 = vpop.f32.mrf.mxu0
        %v4456 = vadd.f32 0.0, %v4455
        %4457 = vmatmul.f32.gmra.mxu0 %v4010
        %v4458 = vpop.f32.mrf.mxu0
        %v4459 = vadd.f32 0.0, %v4458
        %4460 = vmatmul.f32.gmra.mxu0 %v4013
        %v4461 = vpop.f32.mrf.mxu0
        %v4462 = vadd.f32 0.0, %v4461
        %4463 = vmatmul.f32.gmra.mxu0 %v4016
        %v4464 = vpop.f32.mrf.mxu0
        %v4465 = vadd.f32 0.0, %v4464
        %4466 = vmatmul.f32.gmra.mxu0 %v4019
        %v4467 = vpop.f32.mrf.mxu0
        %v4468 = vadd.f32 0.0, %v4467
        %4469 = vmatmul.f32.gmra.mxu0 %v4022
        %v4470 = vpop.f32.mrf.mxu0
        %v4471 = vadd.f32 0.0, %v4470
        %4472 = vmatmul.f32.gmra.mxu0 %v4025
        %v4473 = vpop.f32.mrf.mxu0
        %v4474 = vadd.f32 0.0, %v4473
        %4475 = vmatmul.f32.gmra.mxu0 %v4028
        %v4476 = vpop.f32.mrf.mxu0
        %v4477 = vadd.f32 0.0, %v4476
        %4478 = vmatmul.f32.gmra.mxu0 %v4031
        %v4479 = vpop.f32.mrf.mxu0
        %v4480 = vadd.f32 0.0, %v4479
        %4481 = vmatmul.f32.gmra.mxu0 %v4034
        %v4482 = vpop.f32.mrf.mxu0
        %v4483 = vadd.f32 0.0, %v4482
        %4484 = vmatmul.f32.gmra.mxu0 %v4037
        %v4485 = vpop.f32.mrf.mxu0
        %v4486 = vadd.f32 0.0, %v4485
        %4487 = vmatmul.f32.gmra.mxu0 %v4040
        %v4488 = vpop.f32.mrf.mxu0
        %v4489 = vadd.f32 0.0, %v4488
        %4490 = vmatmul.f32.gmra.mxu0 %v4043
        %v4491 = vpop.f32.mrf.mxu0
        %v4492 = vadd.f32 0.0, %v4491
        %4493 = vmatmul.f32.gmra.mxu0 %v4046
        %v4494 = vpop.f32.mrf.mxu0
        %v4495 = vadd.f32 0.0, %v4494
        %4496 = vmatmul.f32.gmra.mxu0 %v4049
        %v4497 = vpop.f32.mrf.mxu0
        %v4498 = vadd.f32 0.0, %v4497
        %4499 = vmatmul.f32.gmra.mxu0 %v4052
        %v4500 = vpop.f32.mrf.mxu0
        %v4501 = vadd.f32 0.0, %v4500
        %4502 = vmatmul.f32.gmra.mxu0 %v4055
        %v4503 = vpop.f32.mrf.mxu0
        %v4504 = vadd.f32 0.0, %v4503
        %4505 = vmatmul.f32.gmra.mxu0 %v4058
        %v4506 = vpop.f32.mrf.mxu0
        %v4507 = vadd.f32 0.0, %v4506
        %4508 = vmatmul.f32.gmra.mxu0 %v4061
        %v4509 = vpop.f32.mrf.mxu0
        %v4510 = vadd.f32 0.0, %v4509
        %4511 = vmatmul.f32.gmra.mxu0 %v4064
        %v4512 = vpop.f32.mrf.mxu0
        %v4513 = vadd.f32 0.0, %v4512
        %4514 = vmatmul.f32.gmra.mxu0 %v4067
        %v4515 = vpop.f32.mrf.mxu0
        %v4516 = vadd.f32 0.0, %v4515
        %4517 = vmatmul.f32.gmra.mxu0 %v4070
        %v4518 = vpop.f32.mrf.mxu0
        %v4519 = vadd.f32 0.0, %v4518
        %4520 = vmatmul.f32.gmra.mxu0 %v4073
        %v4521 = vpop.f32.mrf.mxu0
        %v4522 = vadd.f32 0.0, %v4521
        %4523 = vmatmul.f32.gmra.mxu0 %v4076
        %v4524 = vpop.f32.mrf.mxu0
        %v4525 = vadd.f32 0.0, %v4524
        %4526 = vmatmul.f32.gmra.mxu0 %v4079
        %v4527 = vpop.f32.mrf.mxu0
        %v4528 = vadd.f32 0.0, %v4527
        %4529 = vmatmul.f32.gmra.mxu0 %v4082
        %v4530 = vpop.f32.mrf.mxu0
        %v4531 = vadd.f32 0.0, %v4530
        %4532 = vmatmul.f32.gmra.mxu0 %v4085
        %v4533 = vpop.f32.mrf.mxu0
        %v4534 = vadd.f32 0.0, %v4533
        %4535 = vmatmul.f32.gmra.mxu0 %v4088
        %v4536 = vpop.f32.mrf.mxu0
        %v4537 = vadd.f32 0.0, %v4536
        %4538 = vmatmul.f32.gmra.mxu0 %v4091
        %v4539 = vpop.f32.mrf.mxu0
        %v4540 = vadd.f32 0.0, %v4539
        %4541 = vmatmul.f32.gmra.mxu0 %v4094
        %v4542 = vpop.f32.mrf.mxu0
        %v4543 = vadd.f32 0.0, %v4542
        %4544 = vmatmul.f32.gmra.mxu0 %v4097
        %v4545 = vpop.f32.mrf.mxu0
        %v4546 = vadd.f32 0.0, %v4545
        %4547 = vmatmul.f32.gmra.mxu0 %v4100
        %v4548 = vpop.f32.mrf.mxu0
        %v4549 = vadd.f32 0.0, %v4548
        %4550 = vmatmul.f32.gmra.mxu0 %v4103
        %v4551 = vpop.f32.mrf.mxu0
        %v4552 = vadd.f32 0.0, %v4551
        %4553 = vmatmul.f32.gmra.mxu0 %v4106
        %v4554 = vpop.f32.mrf.mxu0
        %v4555 = vadd.f32 0.0, %v4554
        %4556 = vmatmul.f32.gmra.mxu0 %v4109
        %v4557 = vpop.f32.mrf.mxu0
        %v4558 = vadd.f32 0.0, %v4557
        %4559 = vmatmul.f32.gmra.mxu0 %v4112
        %v4560 = vpop.f32.mrf.mxu0
        %v4561 = vadd.f32 0.0, %v4560
        %4562 = vmatmul.f32.gmra.mxu0 %v4115
        %v4563 = vpop.f32.mrf.mxu0
        %v4564 = vadd.f32 0.0, %v4563
        %4565 = vmatmul.f32.gmra.mxu0 %v4118
        %v4566 = vpop.f32.mrf.mxu0
        %v4567 = vadd.f32 0.0, %v4566
        %4568 = vmatmul.f32.gmra.mxu0 %v4121
        %v4569 = vpop.f32.mrf.mxu0
        %v4570 = vadd.f32 0.0, %v4569
        %4571 = vmatmul.f32.gmra.mxu0 %v4124
        %v4572 = vpop.f32.mrf.mxu0
        %v4573 = vadd.f32 0.0, %v4572
        %4574 = vmatmul.f32.gmra.mxu0 %v4127
        %v4575 = vpop.f32.mrf.mxu0
        %v4576 = vadd.f32 0.0, %v4575
        %4577 = vmatmul.f32.gmra.mxu0 %v4130
        %v4578 = vpop.f32.mrf.mxu0
        %v4579 = vadd.f32 0.0, %v4578
        %4580 = vmatmul.f32.gmra.mxu0 %v4133
        %v4581 = vpop.f32.mrf.mxu0
        %v4582 = vadd.f32 0.0, %v4581
        %4583 = vmatmul.f32.gmra.mxu0 %v4136
        %v4584 = vpop.f32.mrf.mxu0
        %v4585 = vadd.f32 0.0, %v4584
        %4586 = vmatmul.f32.gmra.mxu0 %v4139
        %v4587 = vpop.f32.mrf.mxu0
        %v4588 = vadd.f32 0.0, %v4587
        %4589 = vmatmul.f32.gmra.mxu0 %v4142
        %v4590 = vpop.f32.mrf.mxu0
        %v4591 = vadd.f32 0.0, %v4590
        %4592 = vmatmul.f32.gmra.mxu0 %v4145
        %v4593 = vpop.f32.mrf.mxu0
        %v4594 = vadd.f32 0.0, %v4593
        %4595 = vmatmul.f32.gmra.mxu0 %v4148
        %v4596 = vpop.f32.mrf.mxu0
        %v4597 = vadd.f32 0.0, %v4596
        %4598 = vmatmul.f32.gmra.mxu0 %v4151
        %v4599 = vpop.f32.mrf.mxu0
        %v4600 = vadd.f32 0.0, %v4599
        %4601 = vmatmul.f32.gmra.mxu0 %v4154
        %v4602 = vpop.f32.mrf.mxu0
        %v4603 = vadd.f32 0.0, %v4602
        %4604 = vmatmul.f32.gmra.mxu0 %v4157
        %v4605 = vpop.f32.mrf.mxu0
        %v4606 = vadd.f32 0.0, %v4605
        %4607 = vmatmul.f32.gmra.mxu0 %v4160
        %v4608 = vpop.f32.mrf.mxu0
        %v4609 = vadd.f32 0.0, %v4608
        %4610 = vmatmul.f32.gmra.mxu0 %v4163
        %v4611 = vpop.f32.mrf.mxu0
        %v4612 = vadd.f32 0.0, %v4611
        %4613 = vmatmul.f32.gmra.mxu0 %v4166
        %v4614 = vpop.f32.mrf.mxu0
        %v4615 = vadd.f32 0.0, %v4614
        %4616 = vmatmul.f32.gmra.mxu0 %v4169
        %v4617 = vpop.f32.mrf.mxu0
        %v4618 = vadd.f32 0.0, %v4617
        %4619 = vmatmul.f32.gmra.mxu0 %v4172
        %v4620 = vpop.f32.mrf.mxu0
        %v4621 = vadd.f32 0.0, %v4620
        %4622 = vmatmul.f32.gmra.mxu0 %v4175
        %v4623 = vpop.f32.mrf.mxu0
        %v4624 = vadd.f32 0.0, %v4623
        %4625 = vmatmul.f32.gmra.mxu0 %v4178
        %v4626 = vpop.f32.mrf.mxu0
        %v4627 = vadd.f32 0.0, %v4626
        %4628 = vmatmul.f32.gmra.mxu0 %v4181
        %v4629 = vpop.f32.mrf.mxu0
        %v4630 = vadd.f32 0.0, %v4629
        %4631 = vmatmul.f32.gmra.mxu0 %v4184
        %v4632 = vpop.f32.mrf.mxu0
        %v4633 = vadd.f32 0.0, %v4632
        %4634 = vmatmul.f32.gmra.mxu0 %v4187
        %v4635 = vpop.f32.mrf.mxu0
        %v4636 = vadd.f32 0.0, %v4635
        %4637 = vmatmul.f32.gmra.mxu0 %v4190
        %v4638 = vpop.f32.mrf.mxu0
        %v4639 = vadd.f32 0.0, %v4638
        %4640 = vmatmul.f32.gmra.mxu0 %v4193
        %v4641 = vpop.f32.mrf.mxu0
        %v4642 = vadd.f32 0.0, %v4641
        %4643 = vmatmul.f32.gmra.mxu0 %v4196
        %v4644 = vpop.f32.mrf.mxu0
        %v4645 = vadd.f32 0.0, %v4644
        %4646 = vmatmul.f32.gmra.mxu0 %v4199
        %v4647 = vpop.f32.mrf.mxu0
        %v4648 = vadd.f32 0.0, %v4647
        %4649 = vmatmul.f32.gmra.mxu0 %v4202
        %v4650 = vpop.f32.mrf.mxu0
        %v4651 = vadd.f32 0.0, %v4650
        %4652 = vmatmul.f32.gmra.mxu0 %v4205
        %v4653 = vpop.f32.mrf.mxu0
        %v4654 = vadd.f32 0.0, %v4653
        %4655 = vmatmul.f32.gmra.mxu0 %v4208
        %v4656 = vpop.f32.mrf.mxu0
        %v4657 = vadd.f32 0.0, %v4656
        %4658 = vmatmul.f32.gmra.mxu0 %v4211
        %v4659 = vpop.f32.mrf.mxu0
        %v4660 = vadd.f32 0.0, %v4659
        %4661 = vmatmul.f32.gmra.mxu0 %v4214
        %v4662 = vpop.f32.mrf.mxu0
        %v4663 = vadd.f32 0.0, %v4662
        %4664 = vmatmul.f32.gmra.mxu0 %v4217
        %v4665 = vpop.f32.mrf.mxu0
        %v4666 = vadd.f32 0.0, %v4665
        %4667 = vmatmul.f32.gmra.mxu0 %v4220
        %v4668 = vpop.f32.mrf.mxu0
        %v4669 = vadd.f32 0.0, %v4668
        %4670 = vmatmul.f32.gmra.mxu0 %v4223
        %v4671 = vpop.f32.mrf.mxu0
        %v4672 = vadd.f32 0.0, %v4671
        %4673 = vmatmul.f32.gmra.mxu0 %v4226
        %v4674 = vpop.f32.mrf.mxu0
        %v4675 = vadd.f32 0.0, %v4674
        %4676 = vmatmul.f32.gmra.mxu0 %v4229
        %v4677 = vpop.f32.mrf.mxu0
        %v4678 = vadd.f32 0.0, %v4677
        %4679 = vmatmul.f32.gmra.mxu0 %v4232
        %v4680 = vpop.f32.mrf.mxu0
        %v4681 = vadd.f32 0.0, %v4680
        %4682 = vmatmul.f32.gmra.mxu0 %v4235
        %v4683 = vpop.f32.mrf.mxu0
        %v4684 = vadd.f32 0.0, %v4683
        %4685 = vmatmul.f32.gmra.mxu0 %v4238
        %v4686 = vpop.f32.mrf.mxu0
        %v4687 = vadd.f32 0.0, %v4686
        %4688 = vmatmul.f32.gmra.mxu0 %v4241
        %v4689 = vpop.f32.mrf.mxu0
        %v4690 = vadd.f32 0.0, %v4689
        %4691 = vmatmul.f32.gmra.mxu0 %v4244
        %v4692 = vpop.f32.mrf.mxu0
        %v4693 = vadd.f32 0.0, %v4692
        %4694 = vmatmul.f32.gmra.mxu0 %v4247
        %v4695 = vpop.f32.mrf.mxu0
        %v4696 = vadd.f32 0.0, %v4695
        %4697 = vmatmul.f32.gmra.mxu0 %v4250
        %v4698 = vpop.f32.mrf.mxu0
        %v4699 = vadd.f32 0.0, %v4698
        %4700 = vmatmul.f32.gmra.mxu0 %v4253
        %v4701 = vpop.f32.mrf.mxu0
        %v4702 = vadd.f32 0.0, %v4701
        %4703 = vmatmul.f32.gmra.mxu0 %v4256
        %v4704 = vpop.f32.mrf.mxu0
        %v4705 = vadd.f32 0.0, %v4704
        %4706 = vmatmul.f32.gmra.mxu0 %v4259
        %v4707 = vpop.f32.mrf.mxu0
        %v4708 = vadd.f32 0.0, %v4707
        %4709 = vmatmul.f32.gmra.mxu0 %v4262
        %v4710 = vpop.f32.mrf.mxu0
        %v4711 = vadd.f32 0.0, %v4710
        %4712 = vmatmul.f32.gmra.mxu0 %v4265
        %v4713 = vpop.f32.mrf.mxu0
        %v4714 = vadd.f32 0.0, %v4713
        %4715 = vmatmul.f32.gmra.mxu0 %v4268
        %v4716 = vpop.f32.mrf.mxu0
        %v4717 = vadd.f32 0.0, %v4716
        %4718 = vmatmul.f32.gmra.mxu0 %v4271
        %v4719 = vpop.f32.mrf.mxu0
        %v4720 = vadd.f32 0.0, %v4719
        %4721 = vmatmul.f32.gmra.mxu0 %v4274
        %v4722 = vpop.f32.mrf.mxu0
        %v4723 = vadd.f32 0.0, %v4722
        %4724 = vmatmul.f32.gmra.mxu0 %v4277
        %v4725 = vpop.f32.mrf.mxu0
        %v4726 = vadd.f32 0.0, %v4725
        %4727 = vmatmul.f32.gmra.mxu0 %v4280
        %v4728 = vpop.f32.mrf.mxu0
        %v4729 = vadd.f32 0.0, %v4728
        %4730 = vmatmul.f32.gmra.mxu0 %v4283
        %v4731 = vpop.f32.mrf.mxu0
        %v4732 = vadd.f32 0.0, %v4731
        %4733 = vmatmul.f32.gmra.mxu0 %v4286
        %v4734 = vpop.f32.mrf.mxu0
        %v4735 = vadd.f32 0.0, %v4734
        %4736 = vmatmul.f32.gmra.mxu0 %v4289
        %v4737 = vpop.f32.mrf.mxu0
        %v4738 = vadd.f32 0.0, %v4737
        %4739 = vmatmul.f32.gmra.mxu0 %v4292
        %v4740 = vpop.f32.mrf.mxu0
        %v4741 = vadd.f32 0.0, %v4740
        %4742 = vmatmul.f32.gmra.mxu0 %v4295
        %v4743 = vpop.f32.mrf.mxu0
        %v4744 = vadd.f32 0.0, %v4743
        %4745 = vmatmul.f32.gmra.mxu0 %v4298
        %v4746 = vpop.f32.mrf.mxu0
        %v4747 = vadd.f32 0.0, %v4746
        %4748 = vmatmul.f32.gmra.mxu0 %v4301
        %v4749 = vpop.f32.mrf.mxu0
        %v4750 = vadd.f32 0.0, %v4749
        %4751 = vdwg.mxu0
        %v4752 = vmul.f32 %v3774, %v3774
        %v4753 = vmul.f32 %v3775, %v3775
        %v4754 = vmul.f32 %v3776, %v3776
        %v4755 = vmul.f32 %v3777, %v3777
        %v4756 = vmul.f32 %v3778, %v3778
        %v4757 = vmul.f32 %v3779, %v3779
        %v4758 = vmul.f32 %v3780, %v3780
        %v4759 = vmul.f32 %v3781, %v3781
        %v4760 = vmul.f32 %v3782, %v3782
        %v4761 = vmul.f32 %v3783, %v3783
        %v4762 = vmul.f32 %v3784, %v3784
        %v4763 = vmul.f32 %v3785, %v3785
        %v4764 = vmul.f32 %v3786, %v3786
        %v4765 = vmul.f32 %v3787, %v3787
        %v4766 = vmul.f32 %v3788, %v3788
        %v4767 = vmul.f32 %v3789, %v3789
        %v4768 = vmul.f32 %v3790, %v3790
        %v4769 = vmul.f32 %v3791, %v3791
        %v4770 = vmul.f32 %v3792, %v3792
        %v4771 = vmul.f32 %v3793, %v3793
        %v4772 = vmul.f32 %v3794, %v3794
        %v4773 = vmul.f32 %v3795, %v3795
        %v4774 = vmul.f32 %v3796, %v3796
        %v4775 = vmul.f32 %v3797, %v3797
        %v4776 = vmul.f32 %v3798, %v3798
        %v4777 = vmul.f32 %v3799, %v3799
        %v4778 = vmul.f32 %v3800, %v3800
        %v4779 = vmul.f32 %v3801, %v3801
        %v4780 = vmul.f32 %v3802, %v3802
        %v4781 = vmul.f32 %v3803, %v3803
        %v4782 = vmul.f32 %v3804, %v3804
        %v4783 = vmul.f32 %v3805, %v3805
        %v4784 = vmul.f32 %v3806, %v3806
        %v4785 = vmul.f32 %v3807, %v3807
        %v4786 = vmul.f32 %v3808, %v3808
        %v4787 = vmul.f32 %v3809, %v3809
        %v4788 = vmul.f32 %v3810, %v3810
        %v4789 = vmul.f32 %v3811, %v3811
        %v4790 = vmul.f32 %v3812, %v3812
        %v4791 = vmul.f32 %v3813, %v3813
        %v4792 = vmul.f32 %v3814, %v3814
        %v4793 = vmul.f32 %v3815, %v3815
        %v4794 = vmul.f32 %v3816, %v3816
        %v4795 = vmul.f32 %v3817, %v3817
        %v4796 = vmul.f32 %v3818, %v3818
        %v4797 = vmul.f32 %v3819, %v3819
        %v4798 = vmul.f32 %v3820, %v3820
        %v4799 = vmul.f32 %v3821, %v3821
        %v4800 = vmul.f32 %v3822, %v3822
        %v4801 = vmul.f32 %v3823, %v3823
        %v4802 = vmul.f32 %v3824, %v3824
        %v4803 = vmul.f32 %v3825, %v3825
        %v4804 = vmul.f32 %v3826, %v3826
        %v4805 = vmul.f32 %v3827, %v3827
        %v4806 = vmul.f32 %v3828, %v3828
        %v4807 = vmul.f32 %v3829, %v3829
        %v4808 = vmul.f32 %v3830, %v3830
        %v4809 = vmul.f32 %v3831, %v3831
        %v4810 = vmul.f32 %v3832, %v3832
        %v4811 = vmul.f32 %v3833, %v3833
        %v4812 = vmul.f32 %v3834, %v3834
        %v4813 = vmul.f32 %v3835, %v3835
        %v4814 = vmul.f32 %v3836, %v3836
        %v4815 = vmul.f32 %v3837, %v3837
        %v4816 = vmul.f32 %v3838, %v3838
        %v4817 = vmul.f32 %v3839, %v3839
        %v4818 = vmul.f32 %v3840, %v3840
        %v4819 = vmul.f32 %v3841, %v3841
        %v4820 = vmul.f32 %v3842, %v3842
        %v4821 = vmul.f32 %v3843, %v3843
        %v4822 = vmul.f32 %v3844, %v3844
        %v4823 = vmul.f32 %v3845, %v3845
        %v4824 = vmul.f32 %v3846, %v3846
        %v4825 = vmul.f32 %v3847, %v3847
        %v4826 = vmul.f32 %v3848, %v3848
        %v4827 = vmul.f32 %v3849, %v3849
        %v4828 = vmul.f32 %v3850, %v3850
        %v4829 = vmul.f32 %v3851, %v3851
        %v4830 = vmul.f32 %v3852, %v3852
        %v4831 = vmul.f32 %v3853, %v3853
        %v4832 = vmul.f32 %v3854, %v3854
        %v4833 = vmul.f32 %v3855, %v3855
        %v4834 = vmul.f32 %v3856, %v3856
        %v4835 = vmul.f32 %v3857, %v3857
        %v4836 = vmul.f32 %v3858, %v3858
        %v4837 = vmul.f32 %v3859, %v3859
        %v4838 = vmul.f32 %v3860, %v3860
        %v4839 = vmul.f32 %v3861, %v3861
        %v4840 = vmul.f32 %v3862, %v3862
        %v4841 = vmul.f32 %v3863, %v3863
        %v4842 = vmul.f32 %v3864, %v3864
        %v4843 = vmul.f32 %v3865, %v3865
        %v4844 = vmul.f32 %v3866, %v3866
        %v4845 = vmul.f32 %v3867, %v3867
        %v4846 = vmul.f32 %v3868, %v3868
        %v4847 = vmul.f32 %v3869, %v3869
        %v4848 = vmul.f32 %v3870, %v3870
        %v4849 = vmul.f32 %v3871, %v3871
        %v4850 = vmul.f32 %v3872, %v3872
        %v4851 = vmul.f32 %v3873, %v3873
        %v4852 = vmul.f32 %v3874, %v3874
        %v4853 = vmul.f32 %v3875, %v3875
        %v4854 = vmul.f32 %v3876, %v3876
        %v4855 = vmul.f32 %v3877, %v3877
        %v4856 = vmul.f32 %v3878, %v3878
        %v4857 = vmul.f32 %v3879, %v3879
        %v4858 = vmul.f32 %v3880, %v3880
        %v4859 = vmul.f32 %v3881, %v3881
        %v4860 = vmul.f32 %v3882, %v3882
        %v4861 = vmul.f32 %v3883, %v3883
        %v4862 = vmul.f32 %v3884, %v3884
        %v4863 = vmul.f32 %v3885, %v3885
        %v4864 = vmul.f32 %v3886, %v3886
        %v4865 = vmul.f32 %v3887, %v3887
        %v4866 = vmul.f32 %v3888, %v3888
        %v4867 = vmul.f32 %v3889, %v3889
        %v4868 = vmul.f32 %v3890, %v3890
        %v4869 = vmul.f32 %v3891, %v3891
        %v4870 = vmul.f32 %v3892, %v3892
        %v4871 = vmul.f32 %v3893, %v3893
        %v4872 = vmul.f32 %v3894, %v3894
        %v4873 = vmul.f32 %v3895, %v3895
        %v4874 = vmul.f32 %v3896, %v3896
        %v4875 = vmul.f32 %v3897, %v3897
        %v4876 = vmul.f32 %v3898, %v3898
        %v4877 = vmul.f32 %v3899, %v3899
        %v4878 = vmul.f32 %v3900, %v3900
        %v4879 = vmul.f32 %v3901, %v3901
        %v4880 = vsel %vm420, %v4752, 0.0
        %4881 = vadd.xlane.f32.xlu0 %v4880
        %v4882 = vpop.xlane.xlu0 %4881
        %v4883 = vsel %vm420, %v4753, 0.0
        %4884 = vadd.xlane.f32.xlu0 %v4883
        %v4885 = vpop.xlane.xlu0 %4884
        %v4886 = vsel %vm420, %v4754, 0.0
        %4887 = vadd.xlane.f32.xlu0 %v4886
        %v4888 = vpop.xlane.xlu0 %4887
        %v4889 = vsel %vm420, %v4755, 0.0
        %4890 = vadd.xlane.f32.xlu0 %v4889
        %v4891 = vpop.xlane.xlu0 %4890
        %v4892 = vsel %vm420, %v4756, 0.0
        %4893 = vadd.xlane.f32.xlu0 %v4892
        %v4894 = vpop.xlane.xlu0 %4893
        %v4895 = vsel %vm420, %v4757, 0.0
        %4896 = vadd.xlane.f32.xlu0 %v4895
        %v4897 = vpop.xlane.xlu0 %4896
        %v4898 = vsel %vm420, %v4758, 0.0
        %4899 = vadd.xlane.f32.xlu0 %v4898
        %v4900 = vpop.xlane.xlu0 %4899
        %v4901 = vsel %vm420, %v4759, 0.0
        %4902 = vadd.xlane.f32.xlu0 %v4901
        %v4903 = vpop.xlane.xlu0 %4902
        %v4904 = vsel %vm420, %v4760, 0.0
        %4905 = vadd.xlane.f32.xlu0 %v4904
        %v4906 = vpop.xlane.xlu0 %4905
        %v4907 = vsel %vm420, %v4761, 0.0
        %4908 = vadd.xlane.f32.xlu0 %v4907
        %v4909 = vpop.xlane.xlu0 %4908
        %v4910 = vsel %vm420, %v4762, 0.0
        %4911 = vadd.xlane.f32.xlu0 %v4910
        %v4912 = vpop.xlane.xlu0 %4911
        %v4913 = vsel %vm420, %v4763, 0.0
        %4914 = vadd.xlane.f32.xlu0 %v4913
        %v4915 = vpop.xlane.xlu0 %4914
        %v4916 = vsel %vm420, %v4764, 0.0
        %4917 = vadd.xlane.f32.xlu0 %v4916
        %v4918 = vpop.xlane.xlu0 %4917
        %v4919 = vsel %vm420, %v4765, 0.0
        %4920 = vadd.xlane.f32.xlu0 %v4919
        %v4921 = vpop.xlane.xlu0 %4920
        %v4922 = vsel %vm420, %v4766, 0.0
        %4923 = vadd.xlane.f32.xlu0 %v4922
        %v4924 = vpop.xlane.xlu0 %4923
        %v4925 = vsel %vm420, %v4767, 0.0
        %4926 = vadd.xlane.f32.xlu0 %v4925
        %v4927 = vpop.xlane.xlu0 %4926
        %v4928 = vsel %vm420, %v4768, 0.0
        %4929 = vadd.xlane.f32.xlu0 %v4928
        %v4930 = vpop.xlane.xlu0 %4929
        %v4931 = vsel %vm420, %v4769, 0.0
        %4932 = vadd.xlane.f32.xlu0 %v4931
        %v4933 = vpop.xlane.xlu0 %4932
        %v4934 = vsel %vm420, %v4770, 0.0
        %4935 = vadd.xlane.f32.xlu0 %v4934
        %v4936 = vpop.xlane.xlu0 %4935
        %v4937 = vsel %vm420, %v4771, 0.0
        %4938 = vadd.xlane.f32.xlu0 %v4937
        %v4939 = vpop.xlane.xlu0 %4938
        %v4940 = vsel %vm420, %v4772, 0.0
        %4941 = vadd.xlane.f32.xlu0 %v4940
        %v4942 = vpop.xlane.xlu0 %4941
        %v4943 = vsel %vm420, %v4773, 0.0
        %4944 = vadd.xlane.f32.xlu0 %v4943
        %v4945 = vpop.xlane.xlu0 %4944
        %v4946 = vsel %vm420, %v4774, 0.0
        %4947 = vadd.xlane.f32.xlu0 %v4946
        %v4948 = vpop.xlane.xlu0 %4947
        %v4949 = vsel %vm420, %v4775, 0.0
        %4950 = vadd.xlane.f32.xlu0 %v4949
        %v4951 = vpop.xlane.xlu0 %4950
        %v4952 = vsel %vm420, %v4776, 0.0
        %4953 = vadd.xlane.f32.xlu0 %v4952
        %v4954 = vpop.xlane.xlu0 %4953
        %v4955 = vsel %vm420, %v4777, 0.0
        %4956 = vadd.xlane.f32.xlu0 %v4955
        %v4957 = vpop.xlane.xlu0 %4956
        %v4958 = vsel %vm420, %v4778, 0.0
        %4959 = vadd.xlane.f32.xlu0 %v4958
        %v4960 = vpop.xlane.xlu0 %4959
        %v4961 = vsel %vm420, %v4779, 0.0
        %4962 = vadd.xlane.f32.xlu0 %v4961
        %v4963 = vpop.xlane.xlu0 %4962
        %v4964 = vsel %vm420, %v4780, 0.0
        %4965 = vadd.xlane.f32.xlu0 %v4964
        %v4966 = vpop.xlane.xlu0 %4965
        %v4967 = vsel %vm420, %v4781, 0.0
        %4968 = vadd.xlane.f32.xlu0 %v4967
        %v4969 = vpop.xlane.xlu0 %4968
        %v4970 = vsel %vm420, %v4782, 0.0
        %4971 = vadd.xlane.f32.xlu0 %v4970
        %v4972 = vpop.xlane.xlu0 %4971
        %v4973 = vsel %vm420, %v4783, 0.0
        %4974 = vadd.xlane.f32.xlu0 %v4973
        %v4975 = vpop.xlane.xlu0 %4974
        %v4976 = vsel %vm420, %v4784, 0.0
        %4977 = vadd.xlane.f32.xlu0 %v4976
        %v4978 = vpop.xlane.xlu0 %4977
        %v4979 = vsel %vm420, %v4785, 0.0
        %4980 = vadd.xlane.f32.xlu0 %v4979
        %v4981 = vpop.xlane.xlu0 %4980
        %v4982 = vsel %vm420, %v4786, 0.0
        %4983 = vadd.xlane.f32.xlu0 %v4982
        %v4984 = vpop.xlane.xlu0 %4983
        %v4985 = vsel %vm420, %v4787, 0.0
        %4986 = vadd.xlane.f32.xlu0 %v4985
        %v4987 = vpop.xlane.xlu0 %4986
        %v4988 = vsel %vm420, %v4788, 0.0
        %4989 = vadd.xlane.f32.xlu0 %v4988
        %v4990 = vpop.xlane.xlu0 %4989
        %v4991 = vsel %vm420, %v4789, 0.0
        %4992 = vadd.xlane.f32.xlu0 %v4991
        %v4993 = vpop.xlane.xlu0 %4992
        %v4994 = vsel %vm420, %v4790, 0.0
        %4995 = vadd.xlane.f32.xlu0 %v4994
        %v4996 = vpop.xlane.xlu0 %4995
        %v4997 = vsel %vm420, %v4791, 0.0
        %4998 = vadd.xlane.f32.xlu0 %v4997
        %v4999 = vpop.xlane.xlu0 %4998
        %v5000 = vsel %vm420, %v4792, 0.0
        %5001 = vadd.xlane.f32.xlu0 %v5000
        %v5002 = vpop.xlane.xlu0 %5001
        %v5003 = vsel %vm420, %v4793, 0.0
        %5004 = vadd.xlane.f32.xlu0 %v5003
        %v5005 = vpop.xlane.xlu0 %5004
        %v5006 = vsel %vm420, %v4794, 0.0
        %5007 = vadd.xlane.f32.xlu0 %v5006
        %v5008 = vpop.xlane.xlu0 %5007
        %v5009 = vsel %vm420, %v4795, 0.0
        %5010 = vadd.xlane.f32.xlu0 %v5009
        %v5011 = vpop.xlane.xlu0 %5010
        %v5012 = vsel %vm420, %v4796, 0.0
        %5013 = vadd.xlane.f32.xlu0 %v5012
        %v5014 = vpop.xlane.xlu0 %5013
        %v5015 = vsel %vm420, %v4797, 0.0
        %5016 = vadd.xlane.f32.xlu0 %v5015
        %v5017 = vpop.xlane.xlu0 %5016
        %v5018 = vsel %vm420, %v4798, 0.0
        %5019 = vadd.xlane.f32.xlu0 %v5018
        %v5020 = vpop.xlane.xlu0 %5019
        %v5021 = vsel %vm420, %v4799, 0.0
        %5022 = vadd.xlane.f32.xlu0 %v5021
        %v5023 = vpop.xlane.xlu0 %5022
        %v5024 = vsel %vm420, %v4800, 0.0
        %5025 = vadd.xlane.f32.xlu0 %v5024
        %v5026 = vpop.xlane.xlu0 %5025
        %v5027 = vsel %vm420, %v4801, 0.0
        %5028 = vadd.xlane.f32.xlu0 %v5027
        %v5029 = vpop.xlane.xlu0 %5028
        %v5030 = vsel %vm420, %v4802, 0.0
        %5031 = vadd.xlane.f32.xlu0 %v5030
        %v5032 = vpop.xlane.xlu0 %5031
        %v5033 = vsel %vm420, %v4803, 0.0
        %5034 = vadd.xlane.f32.xlu0 %v5033
        %v5035 = vpop.xlane.xlu0 %5034
        %v5036 = vsel %vm420, %v4804, 0.0
        %5037 = vadd.xlane.f32.xlu0 %v5036
        %v5038 = vpop.xlane.xlu0 %5037
        %v5039 = vsel %vm420, %v4805, 0.0
        %5040 = vadd.xlane.f32.xlu0 %v5039
        %v5041 = vpop.xlane.xlu0 %5040
        %v5042 = vsel %vm420, %v4806, 0.0
        %5043 = vadd.xlane.f32.xlu0 %v5042
        %v5044 = vpop.xlane.xlu0 %5043
        %v5045 = vsel %vm420, %v4807, 0.0
        %5046 = vadd.xlane.f32.xlu0 %v5045
        %v5047 = vpop.xlane.xlu0 %5046
        %v5048 = vsel %vm420, %v4808, 0.0
        %5049 = vadd.xlane.f32.xlu0 %v5048
        %v5050 = vpop.xlane.xlu0 %5049
        %v5051 = vsel %vm420, %v4809, 0.0
        %5052 = vadd.xlane.f32.xlu0 %v5051
        %v5053 = vpop.xlane.xlu0 %5052
        %v5054 = vsel %vm420, %v4810, 0.0
        %5055 = vadd.xlane.f32.xlu0 %v5054
        %v5056 = vpop.xlane.xlu0 %5055
        %v5057 = vsel %vm420, %v4811, 0.0
        %5058 = vadd.xlane.f32.xlu0 %v5057
        %v5059 = vpop.xlane.xlu0 %5058
        %v5060 = vsel %vm420, %v4812, 0.0
        %5061 = vadd.xlane.f32.xlu0 %v5060
        %v5062 = vpop.xlane.xlu0 %5061
        %v5063 = vsel %vm420, %v4813, 0.0
        %5064 = vadd.xlane.f32.xlu0 %v5063
        %v5065 = vpop.xlane.xlu0 %5064
        %v5066 = vsel %vm420, %v4814, 0.0
        %5067 = vadd.xlane.f32.xlu0 %v5066
        %v5068 = vpop.xlane.xlu0 %5067
        %v5069 = vsel %vm420, %v4815, 0.0
        %5070 = vadd.xlane.f32.xlu0 %v5069
        %v5071 = vpop.xlane.xlu0 %5070
        %v5072 = vsel %vm420, %v4816, 0.0
        %5073 = vadd.xlane.f32.xlu0 %v5072
        %v5074 = vpop.xlane.xlu0 %5073
        %v5075 = vsel %vm420, %v4817, 0.0
        %5076 = vadd.xlane.f32.xlu0 %v5075
        %v5077 = vpop.xlane.xlu0 %5076
        %v5078 = vsel %vm420, %v4818, 0.0
        %5079 = vadd.xlane.f32.xlu0 %v5078
        %v5080 = vpop.xlane.xlu0 %5079
        %v5081 = vsel %vm420, %v4819, 0.0
        %5082 = vadd.xlane.f32.xlu0 %v5081
        %v5083 = vpop.xlane.xlu0 %5082
        %v5084 = vsel %vm420, %v4820, 0.0
        %5085 = vadd.xlane.f32.xlu0 %v5084
        %v5086 = vpop.xlane.xlu0 %5085
        %v5087 = vsel %vm420, %v4821, 0.0
        %5088 = vadd.xlane.f32.xlu0 %v5087
        %v5089 = vpop.xlane.xlu0 %5088
        %v5090 = vsel %vm420, %v4822, 0.0
        %5091 = vadd.xlane.f32.xlu0 %v5090
        %v5092 = vpop.xlane.xlu0 %5091
        %v5093 = vsel %vm420, %v4823, 0.0
        %5094 = vadd.xlane.f32.xlu0 %v5093
        %v5095 = vpop.xlane.xlu0 %5094
        %v5096 = vsel %vm420, %v4824, 0.0
        %5097 = vadd.xlane.f32.xlu0 %v5096
        %v5098 = vpop.xlane.xlu0 %5097
        %v5099 = vsel %vm420, %v4825, 0.0
        %5100 = vadd.xlane.f32.xlu0 %v5099
        %v5101 = vpop.xlane.xlu0 %5100
        %v5102 = vsel %vm420, %v4826, 0.0
        %5103 = vadd.xlane.f32.xlu0 %v5102
        %v5104 = vpop.xlane.xlu0 %5103
        %v5105 = vsel %vm420, %v4827, 0.0
        %5106 = vadd.xlane.f32.xlu0 %v5105
        %v5107 = vpop.xlane.xlu0 %5106
        %v5108 = vsel %vm420, %v4828, 0.0
        %5109 = vadd.xlane.f32.xlu0 %v5108
        %v5110 = vpop.xlane.xlu0 %5109
        %v5111 = vsel %vm420, %v4829, 0.0
        %5112 = vadd.xlane.f32.xlu0 %v5111
        %v5113 = vpop.xlane.xlu0 %5112
        %v5114 = vsel %vm420, %v4830, 0.0
        %5115 = vadd.xlane.f32.xlu0 %v5114
        %v5116 = vpop.xlane.xlu0 %5115
        %v5117 = vsel %vm420, %v4831, 0.0
        %5118 = vadd.xlane.f32.xlu0 %v5117
        %v5119 = vpop.xlane.xlu0 %5118
        %v5120 = vsel %vm420, %v4832, 0.0
        %5121 = vadd.xlane.f32.xlu0 %v5120
        %v5122 = vpop.xlane.xlu0 %5121
        %v5123 = vsel %vm420, %v4833, 0.0
        %5124 = vadd.xlane.f32.xlu0 %v5123
        %v5125 = vpop.xlane.xlu0 %5124
        %v5126 = vsel %vm420, %v4834, 0.0
        %5127 = vadd.xlane.f32.xlu0 %v5126
        %v5128 = vpop.xlane.xlu0 %5127
        %v5129 = vsel %vm420, %v4835, 0.0
        %5130 = vadd.xlane.f32.xlu0 %v5129
        %v5131 = vpop.xlane.xlu0 %5130
        %v5132 = vsel %vm420, %v4836, 0.0
        %5133 = vadd.xlane.f32.xlu0 %v5132
        %v5134 = vpop.xlane.xlu0 %5133
        %v5135 = vsel %vm420, %v4837, 0.0
        %5136 = vadd.xlane.f32.xlu0 %v5135
        %v5137 = vpop.xlane.xlu0 %5136
        %v5138 = vsel %vm420, %v4838, 0.0
        %5139 = vadd.xlane.f32.xlu0 %v5138
        %v5140 = vpop.xlane.xlu0 %5139
        %v5141 = vsel %vm420, %v4839, 0.0
        %5142 = vadd.xlane.f32.xlu0 %v5141
        %v5143 = vpop.xlane.xlu0 %5142
        %v5144 = vsel %vm420, %v4840, 0.0
        %5145 = vadd.xlane.f32.xlu0 %v5144
        %v5146 = vpop.xlane.xlu0 %5145
        %v5147 = vsel %vm420, %v4841, 0.0
        %5148 = vadd.xlane.f32.xlu0 %v5147
        %v5149 = vpop.xlane.xlu0 %5148
        %v5150 = vsel %vm420, %v4842, 0.0
        %5151 = vadd.xlane.f32.xlu0 %v5150
        %v5152 = vpop.xlane.xlu0 %5151
        %v5153 = vsel %vm420, %v4843, 0.0
        %5154 = vadd.xlane.f32.xlu0 %v5153
        %v5155 = vpop.xlane.xlu0 %5154
        %v5156 = vsel %vm420, %v4844, 0.0
        %5157 = vadd.xlane.f32.xlu0 %v5156
        %v5158 = vpop.xlane.xlu0 %5157
        %v5159 = vsel %vm420, %v4845, 0.0
        %5160 = vadd.xlane.f32.xlu0 %v5159
        %v5161 = vpop.xlane.xlu0 %5160
        %v5162 = vsel %vm420, %v4846, 0.0
        %5163 = vadd.xlane.f32.xlu0 %v5162
        %v5164 = vpop.xlane.xlu0 %5163
        %v5165 = vsel %vm420, %v4847, 0.0
        %5166 = vadd.xlane.f32.xlu0 %v5165
        %v5167 = vpop.xlane.xlu0 %5166
        %v5168 = vsel %vm420, %v4848, 0.0
        %5169 = vadd.xlane.f32.xlu0 %v5168
        %v5170 = vpop.xlane.xlu0 %5169
        %v5171 = vsel %vm420, %v4849, 0.0
        %5172 = vadd.xlane.f32.xlu0 %v5171
        %v5173 = vpop.xlane.xlu0 %5172
        %v5174 = vsel %vm420, %v4850, 0.0
        %5175 = vadd.xlane.f32.xlu0 %v5174
        %v5176 = vpop.xlane.xlu0 %5175
        %v5177 = vsel %vm420, %v4851, 0.0
        %5178 = vadd.xlane.f32.xlu0 %v5177
        %v5179 = vpop.xlane.xlu0 %5178
        %v5180 = vsel %vm420, %v4852, 0.0
        %5181 = vadd.xlane.f32.xlu0 %v5180
        %v5182 = vpop.xlane.xlu0 %5181
        %v5183 = vsel %vm420, %v4853, 0.0
        %5184 = vadd.xlane.f32.xlu0 %v5183
        %v5185 = vpop.xlane.xlu0 %5184
        %v5186 = vsel %vm420, %v4854, 0.0
        %5187 = vadd.xlane.f32.xlu0 %v5186
        %v5188 = vpop.xlane.xlu0 %5187
        %v5189 = vsel %vm420, %v4855, 0.0
        %5190 = vadd.xlane.f32.xlu0 %v5189
        %v5191 = vpop.xlane.xlu0 %5190
        %v5192 = vsel %vm420, %v4856, 0.0
        %5193 = vadd.xlane.f32.xlu0 %v5192
        %v5194 = vpop.xlane.xlu0 %5193
        %v5195 = vsel %vm420, %v4857, 0.0
        %5196 = vadd.xlane.f32.xlu0 %v5195
        %v5197 = vpop.xlane.xlu0 %5196
        %v5198 = vsel %vm420, %v4858, 0.0
        %5199 = vadd.xlane.f32.xlu0 %v5198
        %v5200 = vpop.xlane.xlu0 %5199
        %v5201 = vsel %vm420, %v4859, 0.0
        %5202 = vadd.xlane.f32.xlu0 %v5201
        %v5203 = vpop.xlane.xlu0 %5202
        %v5204 = vsel %vm420, %v4860, 0.0
        %5205 = vadd.xlane.f32.xlu0 %v5204
        %v5206 = vpop.xlane.xlu0 %5205
        %v5207 = vsel %vm420, %v4861, 0.0
        %5208 = vadd.xlane.f32.xlu0 %v5207
        %v5209 = vpop.xlane.xlu0 %5208
        %v5210 = vsel %vm420, %v4862, 0.0
        %5211 = vadd.xlane.f32.xlu0 %v5210
        %v5212 = vpop.xlane.xlu0 %5211
        %v5213 = vsel %vm420, %v4863, 0.0
        %5214 = vadd.xlane.f32.xlu0 %v5213
        %v5215 = vpop.xlane.xlu0 %5214
        %v5216 = vsel %vm420, %v4864, 0.0
        %5217 = vadd.xlane.f32.xlu0 %v5216
        %v5218 = vpop.xlane.xlu0 %5217
        %v5219 = vsel %vm420, %v4865, 0.0
        %5220 = vadd.xlane.f32.xlu0 %v5219
        %v5221 = vpop.xlane.xlu0 %5220
        %v5222 = vsel %vm420, %v4866, 0.0
        %5223 = vadd.xlane.f32.xlu0 %v5222
        %v5224 = vpop.xlane.xlu0 %5223
        %v5225 = vsel %vm420, %v4867, 0.0
        %5226 = vadd.xlane.f32.xlu0 %v5225
        %v5227 = vpop.xlane.xlu0 %5226
        %v5228 = vsel %vm420, %v4868, 0.0
        %5229 = vadd.xlane.f32.xlu0 %v5228
        %v5230 = vpop.xlane.xlu0 %5229
        %v5231 = vsel %vm420, %v4869, 0.0
        %5232 = vadd.xlane.f32.xlu0 %v5231
        %v5233 = vpop.xlane.xlu0 %5232
        %v5234 = vsel %vm420, %v4870, 0.0
        %5235 = vadd.xlane.f32.xlu0 %v5234
        %v5236 = vpop.xlane.xlu0 %5235
        %v5237 = vsel %vm420, %v4871, 0.0
        %5238 = vadd.xlane.f32.xlu0 %v5237
        %v5239 = vpop.xlane.xlu0 %5238
        %v5240 = vsel %vm420, %v4872, 0.0
        %5241 = vadd.xlane.f32.xlu0 %v5240
        %v5242 = vpop.xlane.xlu0 %5241
        %v5243 = vsel %vm420, %v4873, 0.0
        %5244 = vadd.xlane.f32.xlu0 %v5243
        %v5245 = vpop.xlane.xlu0 %5244
        %v5246 = vsel %vm420, %v4874, 0.0
        %5247 = vadd.xlane.f32.xlu0 %v5246
        %v5248 = vpop.xlane.xlu0 %5247
        %v5249 = vsel %vm420, %v4875, 0.0
        %5250 = vadd.xlane.f32.xlu0 %v5249
        %v5251 = vpop.xlane.xlu0 %5250
        %v5252 = vsel %vm420, %v4876, 0.0
        %5253 = vadd.xlane.f32.xlu0 %v5252
        %v5254 = vpop.xlane.xlu0 %5253
        %v5255 = vsel %vm420, %v4877, 0.0
        %5256 = vadd.xlane.f32.xlu0 %v5255
        %v5257 = vpop.xlane.xlu0 %5256
        %v5258 = vsel %vm420, %v4878, 0.0
        %5259 = vadd.xlane.f32.xlu0 %v5258
        %v5260 = vpop.xlane.xlu0 %5259
        %v5261 = vsel %vm420, %v4879, 0.0
        %5262 = vadd.xlane.f32.xlu0 %v5261
        %v5263 = vpop.xlane.xlu0 %5262
        %v5264 = vmul.f32 %v4882, 0.5
        %v5265 = vmul.f32 %v4885, 0.5
        %v5266 = vmul.f32 %v4888, 0.5
        %v5267 = vmul.f32 %v4891, 0.5
        %v5268 = vmul.f32 %v4894, 0.5
        %v5269 = vmul.f32 %v4897, 0.5
        %v5270 = vmul.f32 %v4900, 0.5
        %v5271 = vmul.f32 %v4903, 0.5
        %v5272 = vmul.f32 %v4906, 0.5
        %v5273 = vmul.f32 %v4909, 0.5
        %v5274 = vmul.f32 %v4912, 0.5
        %v5275 = vmul.f32 %v4915, 0.5
        %v5276 = vmul.f32 %v4918, 0.5
        %v5277 = vmul.f32 %v4921, 0.5
        %v5278 = vmul.f32 %v4924, 0.5
        %v5279 = vmul.f32 %v4927, 0.5
        %v5280 = vmul.f32 %v4930, 0.5
        %v5281 = vmul.f32 %v4933, 0.5
        %v5282 = vmul.f32 %v4936, 0.5
        %v5283 = vmul.f32 %v4939, 0.5
        %v5284 = vmul.f32 %v4942, 0.5
        %v5285 = vmul.f32 %v4945, 0.5
        %v5286 = vmul.f32 %v4948, 0.5
        %v5287 = vmul.f32 %v4951, 0.5
        %v5288 = vmul.f32 %v4954, 0.5
        %v5289 = vmul.f32 %v4957, 0.5
        %v5290 = vmul.f32 %v4960, 0.5
        %v5291 = vmul.f32 %v4963, 0.5
        %v5292 = vmul.f32 %v4966, 0.5
        %v5293 = vmul.f32 %v4969, 0.5
        %v5294 = vmul.f32 %v4972, 0.5
        %v5295 = vmul.f32 %v4975, 0.5
        %v5296 = vmul.f32 %v4978, 0.5
        %v5297 = vmul.f32 %v4981, 0.5
        %v5298 = vmul.f32 %v4984, 0.5
        %v5299 = vmul.f32 %v4987, 0.5
        %v5300 = vmul.f32 %v4990, 0.5
        %v5301 = vmul.f32 %v4993, 0.5
        %v5302 = vmul.f32 %v4996, 0.5
        %v5303 = vmul.f32 %v4999, 0.5
        %v5304 = vmul.f32 %v5002, 0.5
        %v5305 = vmul.f32 %v5005, 0.5
        %v5306 = vmul.f32 %v5008, 0.5
        %v5307 = vmul.f32 %v5011, 0.5
        %v5308 = vmul.f32 %v5014, 0.5
        %v5309 = vmul.f32 %v5017, 0.5
        %v5310 = vmul.f32 %v5020, 0.5
        %v5311 = vmul.f32 %v5023, 0.5
        %v5312 = vmul.f32 %v5026, 0.5
        %v5313 = vmul.f32 %v5029, 0.5
        %v5314 = vmul.f32 %v5032, 0.5
        %v5315 = vmul.f32 %v5035, 0.5
        %v5316 = vmul.f32 %v5038, 0.5
        %v5317 = vmul.f32 %v5041, 0.5
        %v5318 = vmul.f32 %v5044, 0.5
        %v5319 = vmul.f32 %v5047, 0.5
        %v5320 = vmul.f32 %v5050, 0.5
        %v5321 = vmul.f32 %v5053, 0.5
        %v5322 = vmul.f32 %v5056, 0.5
        %v5323 = vmul.f32 %v5059, 0.5
        %v5324 = vmul.f32 %v5062, 0.5
        %v5325 = vmul.f32 %v5065, 0.5
        %v5326 = vmul.f32 %v5068, 0.5
        %v5327 = vmul.f32 %v5071, 0.5
        %v5328 = vmul.f32 %v5074, 0.5
        %v5329 = vmul.f32 %v5077, 0.5
        %v5330 = vmul.f32 %v5080, 0.5
        %v5331 = vmul.f32 %v5083, 0.5
        %v5332 = vmul.f32 %v5086, 0.5
        %v5333 = vmul.f32 %v5089, 0.5
        %v5334 = vmul.f32 %v5092, 0.5
        %v5335 = vmul.f32 %v5095, 0.5
        %v5336 = vmul.f32 %v5098, 0.5
        %v5337 = vmul.f32 %v5101, 0.5
        %v5338 = vmul.f32 %v5104, 0.5
        %v5339 = vmul.f32 %v5107, 0.5
        %v5340 = vmul.f32 %v5110, 0.5
        %v5341 = vmul.f32 %v5113, 0.5
        %v5342 = vmul.f32 %v5116, 0.5
        %v5343 = vmul.f32 %v5119, 0.5
        %v5344 = vmul.f32 %v5122, 0.5
        %v5345 = vmul.f32 %v5125, 0.5
        %v5346 = vmul.f32 %v5128, 0.5
        %v5347 = vmul.f32 %v5131, 0.5
        %v5348 = vmul.f32 %v5134, 0.5
        %v5349 = vmul.f32 %v5137, 0.5
        %v5350 = vmul.f32 %v5140, 0.5
        %v5351 = vmul.f32 %v5143, 0.5
        %v5352 = vmul.f32 %v5146, 0.5
        %v5353 = vmul.f32 %v5149, 0.5
        %v5354 = vmul.f32 %v5152, 0.5
        %v5355 = vmul.f32 %v5155, 0.5
        %v5356 = vmul.f32 %v5158, 0.5
        %v5357 = vmul.f32 %v5161, 0.5
        %v5358 = vmul.f32 %v5164, 0.5
        %v5359 = vmul.f32 %v5167, 0.5
        %v5360 = vmul.f32 %v5170, 0.5
        %v5361 = vmul.f32 %v5173, 0.5
        %v5362 = vmul.f32 %v5176, 0.5
        %v5363 = vmul.f32 %v5179, 0.5
        %v5364 = vmul.f32 %v5182, 0.5
        %v5365 = vmul.f32 %v5185, 0.5
        %v5366 = vmul.f32 %v5188, 0.5
        %v5367 = vmul.f32 %v5191, 0.5
        %v5368 = vmul.f32 %v5194, 0.5
        %v5369 = vmul.f32 %v5197, 0.5
        %v5370 = vmul.f32 %v5200, 0.5
        %v5371 = vmul.f32 %v5203, 0.5
        %v5372 = vmul.f32 %v5206, 0.5
        %v5373 = vmul.f32 %v5209, 0.5
        %v5374 = vmul.f32 %v5212, 0.5
        %v5375 = vmul.f32 %v5215, 0.5
        %v5376 = vmul.f32 %v5218, 0.5
        %v5377 = vmul.f32 %v5221, 0.5
        %v5378 = vmul.f32 %v5224, 0.5
        %v5379 = vmul.f32 %v5227, 0.5
        %v5380 = vmul.f32 %v5230, 0.5
        %v5381 = vmul.f32 %v5233, 0.5
        %v5382 = vmul.f32 %v5236, 0.5
        %v5383 = vmul.f32 %v5239, 0.5
        %v5384 = vmul.f32 %v5242, 0.5
        %v5385 = vmul.f32 %v5245, 0.5
        %v5386 = vmul.f32 %v5248, 0.5
        %v5387 = vmul.f32 %v5251, 0.5
        %v5388 = vmul.f32 %v5254, 0.5
        %v5389 = vmul.f32 %v5257, 0.5
        %v5390 = vmul.f32 %v5260, 0.5
        %v5391 = vmul.f32 %v5263, 0.5
        %v5392 = vsub.f32 %v5264, %v4369
        %v5393 = vsub.f32 %v5265, %v4372
        %v5394 = vsub.f32 %v5266, %v4375
        %v5395 = vsub.f32 %v5267, %v4378
        %v5396 = vsub.f32 %v5268, %v4381
        %v5397 = vsub.f32 %v5269, %v4384
        %v5398 = vsub.f32 %v5270, %v4387
        %v5399 = vsub.f32 %v5271, %v4390
        %v5400 = vsub.f32 %v5272, %v4393
        %v5401 = vsub.f32 %v5273, %v4396
        %v5402 = vsub.f32 %v5274, %v4399
        %v5403 = vsub.f32 %v5275, %v4402
        %v5404 = vsub.f32 %v5276, %v4405
        %v5405 = vsub.f32 %v5277, %v4408
        %v5406 = vsub.f32 %v5278, %v4411
        %v5407 = vsub.f32 %v5279, %v4414
        %v5408 = vsub.f32 %v5280, %v4417
        %v5409 = vsub.f32 %v5281, %v4420
        %v5410 = vsub.f32 %v5282, %v4423
        %v5411 = vsub.f32 %v5283, %v4426
        %v5412 = vsub.f32 %v5284, %v4429
        %v5413 = vsub.f32 %v5285, %v4432
        %v5414 = vsub.f32 %v5286, %v4435
        %v5415 = vsub.f32 %v5287, %v4438
        %v5416 = vsub.f32 %v5288, %v4441
        %v5417 = vsub.f32 %v5289, %v4444
        %v5418 = vsub.f32 %v5290, %v4447
        %v5419 = vsub.f32 %v5291, %v4450
        %v5420 = vsub.f32 %v5292, %v4453
        %v5421 = vsub.f32 %v5293, %v4456
        %v5422 = vsub.f32 %v5294, %v4459
        %v5423 = vsub.f32 %v5295, %v4462
        %v5424 = vsub.f32 %v5296, %v4465
        %v5425 = vsub.f32 %v5297, %v4468
        %v5426 = vsub.f32 %v5298, %v4471
        %v5427 = vsub.f32 %v5299, %v4474
        %v5428 = vsub.f32 %v5300, %v4477
        %v5429 = vsub.f32 %v5301, %v4480
        %v5430 = vsub.f32 %v5302, %v4483
        %v5431 = vsub.f32 %v5303, %v4486
        %v5432 = vsub.f32 %v5304, %v4489
        %v5433 = vsub.f32 %v5305, %v4492
        %v5434 = vsub.f32 %v5306, %v4495
        %v5435 = vsub.f32 %v5307, %v4498
        %v5436 = vsub.f32 %v5308, %v4501
        %v5437 = vsub.f32 %v5309, %v4504
        %v5438 = vsub.f32 %v5310, %v4507
        %v5439 = vsub.f32 %v5311, %v4510
        %v5440 = vsub.f32 %v5312, %v4513
        %v5441 = vsub.f32 %v5313, %v4516
        %v5442 = vsub.f32 %v5314, %v4519
        %v5443 = vsub.f32 %v5315, %v4522
        %v5444 = vsub.f32 %v5316, %v4525
        %v5445 = vsub.f32 %v5317, %v4528
        %v5446 = vsub.f32 %v5318, %v4531
        %v5447 = vsub.f32 %v5319, %v4534
        %v5448 = vsub.f32 %v5320, %v4537
        %v5449 = vsub.f32 %v5321, %v4540
        %v5450 = vsub.f32 %v5322, %v4543
        %v5451 = vsub.f32 %v5323, %v4546
        %v5452 = vsub.f32 %v5324, %v4549
        %v5453 = vsub.f32 %v5325, %v4552
        %v5454 = vsub.f32 %v5326, %v4555
        %v5455 = vsub.f32 %v5327, %v4558
        %v5456 = vsub.f32 %v5328, %v4561
        %v5457 = vsub.f32 %v5329, %v4564
        %v5458 = vsub.f32 %v5330, %v4567
        %v5459 = vsub.f32 %v5331, %v4570
        %v5460 = vsub.f32 %v5332, %v4573
        %v5461 = vsub.f32 %v5333, %v4576
        %v5462 = vsub.f32 %v5334, %v4579
        %v5463 = vsub.f32 %v5335, %v4582
        %v5464 = vsub.f32 %v5336, %v4585
        %v5465 = vsub.f32 %v5337, %v4588
        %v5466 = vsub.f32 %v5338, %v4591
        %v5467 = vsub.f32 %v5339, %v4594
        %v5468 = vsub.f32 %v5340, %v4597
        %v5469 = vsub.f32 %v5341, %v4600
        %v5470 = vsub.f32 %v5342, %v4603
        %v5471 = vsub.f32 %v5343, %v4606
        %v5472 = vsub.f32 %v5344, %v4609
        %v5473 = vsub.f32 %v5345, %v4612
        %v5474 = vsub.f32 %v5346, %v4615
        %v5475 = vsub.f32 %v5347, %v4618
        %v5476 = vsub.f32 %v5348, %v4621
        %v5477 = vsub.f32 %v5349, %v4624
        %v5478 = vsub.f32 %v5350, %v4627
        %v5479 = vsub.f32 %v5351, %v4630
        %v5480 = vsub.f32 %v5352, %v4633
        %v5481 = vsub.f32 %v5353, %v4636
        %v5482 = vsub.f32 %v5354, %v4639
        %v5483 = vsub.f32 %v5355, %v4642
        %v5484 = vsub.f32 %v5356, %v4645
        %v5485 = vsub.f32 %v5357, %v4648
        %v5486 = vsub.f32 %v5358, %v4651
        %v5487 = vsub.f32 %v5359, %v4654
        %v5488 = vsub.f32 %v5360, %v4657
        %v5489 = vsub.f32 %v5361, %v4660
        %v5490 = vsub.f32 %v5362, %v4663
        %v5491 = vsub.f32 %v5363, %v4666
        %v5492 = vsub.f32 %v5364, %v4669
        %v5493 = vsub.f32 %v5365, %v4672
        %v5494 = vsub.f32 %v5366, %v4675
        %v5495 = vsub.f32 %v5367, %v4678
        %v5496 = vsub.f32 %v5368, %v4681
        %v5497 = vsub.f32 %v5369, %v4684
        %v5498 = vsub.f32 %v5370, %v4687
        %v5499 = vsub.f32 %v5371, %v4690
        %v5500 = vsub.f32 %v5372, %v4693
        %v5501 = vsub.f32 %v5373, %v4696
        %v5502 = vsub.f32 %v5374, %v4699
        %v5503 = vsub.f32 %v5375, %v4702
        %v5504 = vsub.f32 %v5376, %v4705
        %v5505 = vsub.f32 %v5377, %v4708
        %v5506 = vsub.f32 %v5378, %v4711
        %v5507 = vsub.f32 %v5379, %v4714
        %v5508 = vsub.f32 %v5380, %v4717
        %v5509 = vsub.f32 %v5381, %v4720
        %v5510 = vsub.f32 %v5382, %v4723
        %v5511 = vsub.f32 %v5383, %v4726
        %v5512 = vsub.f32 %v5384, %v4729
        %v5513 = vsub.f32 %v5385, %v4732
        %v5514 = vsub.f32 %v5386, %v4735
        %v5515 = vsub.f32 %v5387, %v4738
        %v5516 = vsub.f32 %v5388, %v4741
        %v5517 = vsub.f32 %v5389, %v4744
        %v5518 = vsub.f32 %v5390, %v4747
        %v5519 = vsub.f32 %v5391, %v4750
        %v5520 = vld [vmem:[%s2] sm:$0x1]
        %v5522 = vperm.slane %v5520, 0
        %v5524 = vadd.f32 %v5392, %v5522
        %v5525 = vadd.f32 %v5393, %v5522
        %v5526 = vadd.f32 %v5394, %v5522
        %v5527 = vadd.f32 %v5395, %v5522
        %v5528 = vadd.f32 %v5396, %v5522
        %v5529 = vadd.f32 %v5397, %v5522
        %v5530 = vadd.f32 %v5398, %v5522
        %v5531 = vadd.f32 %v5399, %v5522
        %v5532 = vadd.f32 %v5400, %v5522
        %v5533 = vadd.f32 %v5401, %v5522
        %v5534 = vadd.f32 %v5402, %v5522
        %v5535 = vadd.f32 %v5403, %v5522
        %v5536 = vadd.f32 %v5404, %v5522
        %v5537 = vadd.f32 %v5405, %v5522
        %v5538 = vadd.f32 %v5406, %v5522
        %v5539 = vadd.f32 %v5407, %v5522
        %v5540 = vadd.f32 %v5408, %v5522
        %v5541 = vadd.f32 %v5409, %v5522
        %v5542 = vadd.f32 %v5410, %v5522
        %v5543 = vadd.f32 %v5411, %v5522
        %v5544 = vadd.f32 %v5412, %v5522
        %v5545 = vadd.f32 %v5413, %v5522
        %v5546 = vadd.f32 %v5414, %v5522
        %v5547 = vadd.f32 %v5415, %v5522
        %v5548 = vadd.f32 %v5416, %v5522
        %v5549 = vadd.f32 %v5417, %v5522
        %v5550 = vadd.f32 %v5418, %v5522
        %v5551 = vadd.f32 %v5419, %v5522
        %v5552 = vadd.f32 %v5420, %v5522
        %v5553 = vadd.f32 %v5421, %v5522
        %v5554 = vadd.f32 %v5422, %v5522
        %v5555 = vadd.f32 %v5423, %v5522
        %v5556 = vadd.f32 %v5424, %v5522
        %v5557 = vadd.f32 %v5425, %v5522
        %v5558 = vadd.f32 %v5426, %v5522
        %v5559 = vadd.f32 %v5427, %v5522
        %v5560 = vadd.f32 %v5428, %v5522
        %v5561 = vadd.f32 %v5429, %v5522
        %v5562 = vadd.f32 %v5430, %v5522
        %v5563 = vadd.f32 %v5431, %v5522
        %v5564 = vadd.f32 %v5432, %v5522
        %v5565 = vadd.f32 %v5433, %v5522
        %v5566 = vadd.f32 %v5434, %v5522
        %v5567 = vadd.f32 %v5435, %v5522
        %v5568 = vadd.f32 %v5436, %v5522
        %v5569 = vadd.f32 %v5437, %v5522
        %v5570 = vadd.f32 %v5438, %v5522
        %v5571 = vadd.f32 %v5439, %v5522
        %v5572 = vadd.f32 %v5440, %v5522
        %v5573 = vadd.f32 %v5441, %v5522
        %v5574 = vadd.f32 %v5442, %v5522
        %v5575 = vadd.f32 %v5443, %v5522
        %v5576 = vadd.f32 %v5444, %v5522
        %v5577 = vadd.f32 %v5445, %v5522
        %v5578 = vadd.f32 %v5446, %v5522
        %v5579 = vadd.f32 %v5447, %v5522
        %v5580 = vadd.f32 %v5448, %v5522
        %v5581 = vadd.f32 %v5449, %v5522
        %v5582 = vadd.f32 %v5450, %v5522
        %v5583 = vadd.f32 %v5451, %v5522
        %v5584 = vadd.f32 %v5452, %v5522
        %v5585 = vadd.f32 %v5453, %v5522
        %v5586 = vadd.f32 %v5454, %v5522
        %v5587 = vadd.f32 %v5455, %v5522
        %v5588 = vadd.f32 %v5456, %v5522
        %v5589 = vadd.f32 %v5457, %v5522
        %v5590 = vadd.f32 %v5458, %v5522
        %v5591 = vadd.f32 %v5459, %v5522
        %v5592 = vadd.f32 %v5460, %v5522
        %v5593 = vadd.f32 %v5461, %v5522
        %v5594 = vadd.f32 %v5462, %v5522
        %v5595 = vadd.f32 %v5463, %v5522
        %v5596 = vadd.f32 %v5464, %v5522
        %v5597 = vadd.f32 %v5465, %v5522
        %v5598 = vadd.f32 %v5466, %v5522
        %v5599 = vadd.f32 %v5467, %v5522
        %v5600 = vadd.f32 %v5468, %v5522
        %v5601 = vadd.f32 %v5469, %v5522
        %v5602 = vadd.f32 %v5470, %v5522
        %v5603 = vadd.f32 %v5471, %v5522
        %v5604 = vadd.f32 %v5472, %v5522
        %v5605 = vadd.f32 %v5473, %v5522
        %v5606 = vadd.f32 %v5474, %v5522
        %v5607 = vadd.f32 %v5475, %v5522
        %v5608 = vadd.f32 %v5476, %v5522
        %v5609 = vadd.f32 %v5477, %v5522
        %v5610 = vadd.f32 %v5478, %v5522
        %v5611 = vadd.f32 %v5479, %v5522
        %v5612 = vadd.f32 %v5480, %v5522
        %v5613 = vadd.f32 %v5481, %v5522
        %v5614 = vadd.f32 %v5482, %v5522
        %v5615 = vadd.f32 %v5483, %v5522
        %v5616 = vadd.f32 %v5484, %v5522
        %v5617 = vadd.f32 %v5485, %v5522
        %v5618 = vadd.f32 %v5486, %v5522
        %v5619 = vadd.f32 %v5487, %v5522
        %v5620 = vadd.f32 %v5488, %v5522
        %v5621 = vadd.f32 %v5489, %v5522
        %v5622 = vadd.f32 %v5490, %v5522
        %v5623 = vadd.f32 %v5491, %v5522
        %v5624 = vadd.f32 %v5492, %v5522
        %v5625 = vadd.f32 %v5493, %v5522
        %v5626 = vadd.f32 %v5494, %v5522
        %v5627 = vadd.f32 %v5495, %v5522
        %v5628 = vadd.f32 %v5496, %v5522
        %v5629 = vadd.f32 %v5497, %v5522
        %v5630 = vadd.f32 %v5498, %v5522
        %v5631 = vadd.f32 %v5499, %v5522
        %v5632 = vadd.f32 %v5500, %v5522
        %v5633 = vadd.f32 %v5501, %v5522
        %v5634 = vadd.f32 %v5502, %v5522
        %v5635 = vadd.f32 %v5503, %v5522
        %v5636 = vadd.f32 %v5504, %v5522
        %v5637 = vadd.f32 %v5505, %v5522
        %v5638 = vadd.f32 %v5506, %v5522
        %v5639 = vadd.f32 %v5507, %v5522
        %v5640 = vadd.f32 %v5508, %v5522
        %v5641 = vadd.f32 %v5509, %v5522
        %v5642 = vadd.f32 %v5510, %v5522
        %v5643 = vadd.f32 %v5511, %v5522
        %v5644 = vadd.f32 %v5512, %v5522
        %v5645 = vadd.f32 %v5513, %v5522
        %v5646 = vadd.f32 %v5514, %v5522
        %v5647 = vadd.f32 %v5515, %v5522
        %v5648 = vadd.f32 %v5516, %v5522
        %v5649 = vadd.f32 %v5517, %v5522
        %v5650 = vadd.f32 %v5518, %v5522
        %v5651 = vadd.f32 %v5519, %v5522
        %5652 = vmin.xlane.f32.xlu0 %v5524
        %v5653 = vpop.xlane.xlu0 %5652
        %5654 = vmin.xlane.f32.xlu0 %v5525
        %v5655 = vpop.xlane.xlu0 %5654
        %5656 = vmin.xlane.f32.xlu0 %v5526
        %v5657 = vpop.xlane.xlu0 %5656
        %5658 = vmin.xlane.f32.xlu0 %v5527
        %v5659 = vpop.xlane.xlu0 %5658
        %5660 = vmin.xlane.f32.xlu0 %v5528
        %v5661 = vpop.xlane.xlu0 %5660
        %5662 = vmin.xlane.f32.xlu0 %v5529
        %v5663 = vpop.xlane.xlu0 %5662
        %5664 = vmin.xlane.f32.xlu0 %v5530
        %v5665 = vpop.xlane.xlu0 %5664
        %5666 = vmin.xlane.f32.xlu0 %v5531
        %v5667 = vpop.xlane.xlu0 %5666
        %5668 = vmin.xlane.f32.xlu0 %v5532
        %v5669 = vpop.xlane.xlu0 %5668
        %5670 = vmin.xlane.f32.xlu0 %v5533
        %v5671 = vpop.xlane.xlu0 %5670
        %5672 = vmin.xlane.f32.xlu0 %v5534
        %v5673 = vpop.xlane.xlu0 %5672
        %5674 = vmin.xlane.f32.xlu0 %v5535
        %v5675 = vpop.xlane.xlu0 %5674
        %5676 = vmin.xlane.f32.xlu0 %v5536
        %v5677 = vpop.xlane.xlu0 %5676
        %5678 = vmin.xlane.f32.xlu0 %v5537
        %v5679 = vpop.xlane.xlu0 %5678
        %5680 = vmin.xlane.f32.xlu0 %v5538
        %v5681 = vpop.xlane.xlu0 %5680
        %5682 = vmin.xlane.f32.xlu0 %v5539
        %v5683 = vpop.xlane.xlu0 %5682
        %5684 = vmin.xlane.f32.xlu0 %v5540
        %v5685 = vpop.xlane.xlu0 %5684
        %5686 = vmin.xlane.f32.xlu0 %v5541
        %v5687 = vpop.xlane.xlu0 %5686
        %5688 = vmin.xlane.f32.xlu0 %v5542
        %v5689 = vpop.xlane.xlu0 %5688
        %5690 = vmin.xlane.f32.xlu0 %v5543
        %v5691 = vpop.xlane.xlu0 %5690
        %5692 = vmin.xlane.f32.xlu0 %v5544
        %v5693 = vpop.xlane.xlu0 %5692
        %5694 = vmin.xlane.f32.xlu0 %v5545
        %v5695 = vpop.xlane.xlu0 %5694
        %5696 = vmin.xlane.f32.xlu0 %v5546
        %v5697 = vpop.xlane.xlu0 %5696
        %5698 = vmin.xlane.f32.xlu0 %v5547
        %v5699 = vpop.xlane.xlu0 %5698
        %5700 = vmin.xlane.f32.xlu0 %v5548
        %v5701 = vpop.xlane.xlu0 %5700
        %5702 = vmin.xlane.f32.xlu0 %v5549
        %v5703 = vpop.xlane.xlu0 %5702
        %5704 = vmin.xlane.f32.xlu0 %v5550
        %v5705 = vpop.xlane.xlu0 %5704
        %5706 = vmin.xlane.f32.xlu0 %v5551
        %v5707 = vpop.xlane.xlu0 %5706
        %5708 = vmin.xlane.f32.xlu0 %v5552
        %v5709 = vpop.xlane.xlu0 %5708
        %5710 = vmin.xlane.f32.xlu0 %v5553
        %v5711 = vpop.xlane.xlu0 %5710
        %5712 = vmin.xlane.f32.xlu0 %v5554
        %v5713 = vpop.xlane.xlu0 %5712
        %5714 = vmin.xlane.f32.xlu0 %v5555
        %v5715 = vpop.xlane.xlu0 %5714
        %5716 = vmin.xlane.f32.xlu0 %v5556
        %v5717 = vpop.xlane.xlu0 %5716
        %5718 = vmin.xlane.f32.xlu0 %v5557
        %v5719 = vpop.xlane.xlu0 %5718
        %5720 = vmin.xlane.f32.xlu0 %v5558
        %v5721 = vpop.xlane.xlu0 %5720
        %5722 = vmin.xlane.f32.xlu0 %v5559
        %v5723 = vpop.xlane.xlu0 %5722
        %5724 = vmin.xlane.f32.xlu0 %v5560
        %v5725 = vpop.xlane.xlu0 %5724
        %5726 = vmin.xlane.f32.xlu0 %v5561
        %v5727 = vpop.xlane.xlu0 %5726
        %5728 = vmin.xlane.f32.xlu0 %v5562
        %v5729 = vpop.xlane.xlu0 %5728
        %5730 = vmin.xlane.f32.xlu0 %v5563
        %v5731 = vpop.xlane.xlu0 %5730
        %5732 = vmin.xlane.f32.xlu0 %v5564
        %v5733 = vpop.xlane.xlu0 %5732
        %5734 = vmin.xlane.f32.xlu0 %v5565
        %v5735 = vpop.xlane.xlu0 %5734
        %5736 = vmin.xlane.f32.xlu0 %v5566
        %v5737 = vpop.xlane.xlu0 %5736
        %5738 = vmin.xlane.f32.xlu0 %v5567
        %v5739 = vpop.xlane.xlu0 %5738
        %5740 = vmin.xlane.f32.xlu0 %v5568
        %v5741 = vpop.xlane.xlu0 %5740
        %5742 = vmin.xlane.f32.xlu0 %v5569
        %v5743 = vpop.xlane.xlu0 %5742
        %5744 = vmin.xlane.f32.xlu0 %v5570
        %v5745 = vpop.xlane.xlu0 %5744
        %5746 = vmin.xlane.f32.xlu0 %v5571
        %v5747 = vpop.xlane.xlu0 %5746
        %5748 = vmin.xlane.f32.xlu0 %v5572
        %v5749 = vpop.xlane.xlu0 %5748
        %5750 = vmin.xlane.f32.xlu0 %v5573
        %v5751 = vpop.xlane.xlu0 %5750
        %5752 = vmin.xlane.f32.xlu0 %v5574
        %v5753 = vpop.xlane.xlu0 %5752
        %5754 = vmin.xlane.f32.xlu0 %v5575
        %v5755 = vpop.xlane.xlu0 %5754
        %5756 = vmin.xlane.f32.xlu0 %v5576
        %v5757 = vpop.xlane.xlu0 %5756
        %5758 = vmin.xlane.f32.xlu0 %v5577
        %v5759 = vpop.xlane.xlu0 %5758
        %5760 = vmin.xlane.f32.xlu0 %v5578
        %v5761 = vpop.xlane.xlu0 %5760
        %5762 = vmin.xlane.f32.xlu0 %v5579
        %v5763 = vpop.xlane.xlu0 %5762
        %5764 = vmin.xlane.f32.xlu0 %v5580
        %v5765 = vpop.xlane.xlu0 %5764
        %5766 = vmin.xlane.f32.xlu0 %v5581
        %v5767 = vpop.xlane.xlu0 %5766
        %5768 = vmin.xlane.f32.xlu0 %v5582
        %v5769 = vpop.xlane.xlu0 %5768
        %5770 = vmin.xlane.f32.xlu0 %v5583
        %v5771 = vpop.xlane.xlu0 %5770
        %5772 = vmin.xlane.f32.xlu0 %v5584
        %v5773 = vpop.xlane.xlu0 %5772
        %5774 = vmin.xlane.f32.xlu0 %v5585
        %v5775 = vpop.xlane.xlu0 %5774
        %5776 = vmin.xlane.f32.xlu0 %v5586
        %v5777 = vpop.xlane.xlu0 %5776
        %5778 = vmin.xlane.f32.xlu0 %v5587
        %v5779 = vpop.xlane.xlu0 %5778
        %5780 = vmin.xlane.f32.xlu0 %v5588
        %v5781 = vpop.xlane.xlu0 %5780
        %5782 = vmin.xlane.f32.xlu0 %v5589
        %v5783 = vpop.xlane.xlu0 %5782
        %5784 = vmin.xlane.f32.xlu0 %v5590
        %v5785 = vpop.xlane.xlu0 %5784
        %5786 = vmin.xlane.f32.xlu0 %v5591
        %v5787 = vpop.xlane.xlu0 %5786
        %5788 = vmin.xlane.f32.xlu0 %v5592
        %v5789 = vpop.xlane.xlu0 %5788
        %5790 = vmin.xlane.f32.xlu0 %v5593
        %v5791 = vpop.xlane.xlu0 %5790
        %5792 = vmin.xlane.f32.xlu0 %v5594
        %v5793 = vpop.xlane.xlu0 %5792
        %5794 = vmin.xlane.f32.xlu0 %v5595
        %v5795 = vpop.xlane.xlu0 %5794
        %5796 = vmin.xlane.f32.xlu0 %v5596
        %v5797 = vpop.xlane.xlu0 %5796
        %5798 = vmin.xlane.f32.xlu0 %v5597
        %v5799 = vpop.xlane.xlu0 %5798
        %5800 = vmin.xlane.f32.xlu0 %v5598
        %v5801 = vpop.xlane.xlu0 %5800
        %5802 = vmin.xlane.f32.xlu0 %v5599
        %v5803 = vpop.xlane.xlu0 %5802
        %5804 = vmin.xlane.f32.xlu0 %v5600
        %v5805 = vpop.xlane.xlu0 %5804
        %5806 = vmin.xlane.f32.xlu0 %v5601
        %v5807 = vpop.xlane.xlu0 %5806
        %5808 = vmin.xlane.f32.xlu0 %v5602
        %v5809 = vpop.xlane.xlu0 %5808
        %5810 = vmin.xlane.f32.xlu0 %v5603
        %v5811 = vpop.xlane.xlu0 %5810
        %5812 = vmin.xlane.f32.xlu0 %v5604
        %v5813 = vpop.xlane.xlu0 %5812
        %5814 = vmin.xlane.f32.xlu0 %v5605
        %v5815 = vpop.xlane.xlu0 %5814
        %5816 = vmin.xlane.f32.xlu0 %v5606
        %v5817 = vpop.xlane.xlu0 %5816
        %5818 = vmin.xlane.f32.xlu0 %v5607
        %v5819 = vpop.xlane.xlu0 %5818
        %5820 = vmin.xlane.f32.xlu0 %v5608
        %v5821 = vpop.xlane.xlu0 %5820
        %5822 = vmin.xlane.f32.xlu0 %v5609
        %v5823 = vpop.xlane.xlu0 %5822
        %5824 = vmin.xlane.f32.xlu0 %v5610
        %v5825 = vpop.xlane.xlu0 %5824
        %5826 = vmin.xlane.f32.xlu0 %v5611
        %v5827 = vpop.xlane.xlu0 %5826
        %5828 = vmin.xlane.f32.xlu0 %v5612
        %v5829 = vpop.xlane.xlu0 %5828
        %5830 = vmin.xlane.f32.xlu0 %v5613
        %v5831 = vpop.xlane.xlu0 %5830
        %5832 = vmin.xlane.f32.xlu0 %v5614
        %v5833 = vpop.xlane.xlu0 %5832
        %5834 = vmin.xlane.f32.xlu0 %v5615
        %v5835 = vpop.xlane.xlu0 %5834
        %5836 = vmin.xlane.f32.xlu0 %v5616
        %v5837 = vpop.xlane.xlu0 %5836
        %5838 = vmin.xlane.f32.xlu0 %v5617
        %v5839 = vpop.xlane.xlu0 %5838
        %5840 = vmin.xlane.f32.xlu0 %v5618
        %v5841 = vpop.xlane.xlu0 %5840
        %5842 = vmin.xlane.f32.xlu0 %v5619
        %v5843 = vpop.xlane.xlu0 %5842
        %5844 = vmin.xlane.f32.xlu0 %v5620
        %v5845 = vpop.xlane.xlu0 %5844
        %5846 = vmin.xlane.f32.xlu0 %v5621
        %v5847 = vpop.xlane.xlu0 %5846
        %5848 = vmin.xlane.f32.xlu0 %v5622
        %v5849 = vpop.xlane.xlu0 %5848
        %5850 = vmin.xlane.f32.xlu0 %v5623
        %v5851 = vpop.xlane.xlu0 %5850
        %5852 = vmin.xlane.f32.xlu0 %v5624
        %v5853 = vpop.xlane.xlu0 %5852
        %5854 = vmin.xlane.f32.xlu0 %v5625
        %v5855 = vpop.xlane.xlu0 %5854
        %5856 = vmin.xlane.f32.xlu0 %v5626
        %v5857 = vpop.xlane.xlu0 %5856
        %5858 = vmin.xlane.f32.xlu0 %v5627
        %v5859 = vpop.xlane.xlu0 %5858
        %5860 = vmin.xlane.f32.xlu0 %v5628
        %v5861 = vpop.xlane.xlu0 %5860
        %5862 = vmin.xlane.f32.xlu0 %v5629
        %v5863 = vpop.xlane.xlu0 %5862
        %5864 = vmin.xlane.f32.xlu0 %v5630
        %v5865 = vpop.xlane.xlu0 %5864
        %5866 = vmin.xlane.f32.xlu0 %v5631
        %v5867 = vpop.xlane.xlu0 %5866
        %5868 = vmin.xlane.f32.xlu0 %v5632
        %v5869 = vpop.xlane.xlu0 %5868
        %5870 = vmin.xlane.f32.xlu0 %v5633
        %v5871 = vpop.xlane.xlu0 %5870
        %5872 = vmin.xlane.f32.xlu0 %v5634
        %v5873 = vpop.xlane.xlu0 %5872
        %5874 = vmin.xlane.f32.xlu0 %v5635
        %v5875 = vpop.xlane.xlu0 %5874
        %5876 = vmin.xlane.f32.xlu0 %v5636
        %v5877 = vpop.xlane.xlu0 %5876
        %5878 = vmin.xlane.f32.xlu0 %v5637
        %v5879 = vpop.xlane.xlu0 %5878
        %5880 = vmin.xlane.f32.xlu0 %v5638
        %v5881 = vpop.xlane.xlu0 %5880
        %5882 = vmin.xlane.f32.xlu0 %v5639
        %v5883 = vpop.xlane.xlu0 %5882
        %5884 = vmin.xlane.f32.xlu0 %v5640
        %v5885 = vpop.xlane.xlu0 %5884
        %5886 = vmin.xlane.f32.xlu0 %v5641
        %v5887 = vpop.xlane.xlu0 %5886
        %5888 = vmin.xlane.f32.xlu0 %v5642
        %v5889 = vpop.xlane.xlu0 %5888
        %5890 = vmin.xlane.f32.xlu0 %v5643
        %v5891 = vpop.xlane.xlu0 %5890
        %5892 = vmin.xlane.f32.xlu0 %v5644
        %v5893 = vpop.xlane.xlu0 %5892
        %5894 = vmin.xlane.f32.xlu0 %v5645
        %v5895 = vpop.xlane.xlu0 %5894
        %5896 = vmin.xlane.f32.xlu0 %v5646
        %v5897 = vpop.xlane.xlu0 %5896
        %5898 = vmin.xlane.f32.xlu0 %v5647
        %v5899 = vpop.xlane.xlu0 %5898
        %5900 = vmin.xlane.f32.xlu0 %v5648
        %v5901 = vpop.xlane.xlu0 %5900
        %5902 = vmin.xlane.f32.xlu0 %v5649
        %v5903 = vpop.xlane.xlu0 %5902
        %5904 = vmin.xlane.f32.xlu0 %v5650
        %v5905 = vpop.xlane.xlu0 %5904
        %5906 = vmin.xlane.f32.xlu0 %v5651
        %v5907 = vpop.xlane.xlu0 %5906
        %v5908 = vmin.f32 %v5653, %v5655
        %v5909 = vmin.f32 %v5908, %v5657
        %v5910 = vmin.f32 %v5909, %v5659
        %v5911 = vmin.f32 %v5910, %v5661
        %v5912 = vmin.f32 %v5911, %v5663
        %v5913 = vmin.f32 %v5912, %v5665
        %v5914 = vmin.f32 %v5913, %v5667
        %v5915 = vmin.f32 %v5914, %v5669
        %v5916 = vmin.f32 %v5915, %v5671
        %v5917 = vmin.f32 %v5916, %v5673
        %v5918 = vmin.f32 %v5917, %v5675
        %v5919 = vmin.f32 %v5918, %v5677
        %v5920 = vmin.f32 %v5919, %v5679
        %v5921 = vmin.f32 %v5920, %v5681
        %v5922 = vmin.f32 %v5921, %v5683
        %v5923 = vrot.slane %v5922, 4
        %v5924 = vmin.f32 %v5922, %v5923
        %v5925 = vrot.slane %v5924, 2
        %v5926 = vmin.f32 %v5924, %v5925
        %v5927 = vrot.slane %v5926, 1
        %v5928 = vmin.f32 %v5926, %v5927
        %v5929 = vmin.f32 %v5685, %v5687
        %v5930 = vmin.f32 %v5929, %v5689
        %v5931 = vmin.f32 %v5930, %v5691
        %v5932 = vmin.f32 %v5931, %v5693
        %v5933 = vmin.f32 %v5932, %v5695
        %v5934 = vmin.f32 %v5933, %v5697
        %v5935 = vmin.f32 %v5934, %v5699
        %v5936 = vmin.f32 %v5935, %v5701
        %v5937 = vmin.f32 %v5936, %v5703
        %v5938 = vmin.f32 %v5937, %v5705
        %v5939 = vmin.f32 %v5938, %v5707
        %v5940 = vmin.f32 %v5939, %v5709
        %v5941 = vmin.f32 %v5940, %v5711
        %v5942 = vmin.f32 %v5941, %v5713
        %v5943 = vmin.f32 %v5942, %v5715
        %v5944 = vrot.slane %v5943, 4
        %v5945 = vmin.f32 %v5943, %v5944
        %v5946 = vrot.slane %v5945, 2
        %v5947 = vmin.f32 %v5945, %v5946
        %v5948 = vrot.slane %v5947, 1
        %v5949 = vmin.f32 %v5947, %v5948
        %v5950 = vmin.f32 %v5717, %v5719
        %v5951 = vmin.f32 %v5950, %v5721
        %v5952 = vmin.f32 %v5951, %v5723
        %v5953 = vmin.f32 %v5952, %v5725
        %v5954 = vmin.f32 %v5953, %v5727
        %v5955 = vmin.f32 %v5954, %v5729
        %v5956 = vmin.f32 %v5955, %v5731
        %v5957 = vmin.f32 %v5956, %v5733
        %v5958 = vmin.f32 %v5957, %v5735
        %v5959 = vmin.f32 %v5958, %v5737
        %v5960 = vmin.f32 %v5959, %v5739
        %v5961 = vmin.f32 %v5960, %v5741
        %v5962 = vmin.f32 %v5961, %v5743
        %v5963 = vmin.f32 %v5962, %v5745
        %v5964 = vmin.f32 %v5963, %v5747
        %v5965 = vrot.slane %v5964, 4
        %v5966 = vmin.f32 %v5964, %v5965
        %v5967 = vrot.slane %v5966, 2
        %v5968 = vmin.f32 %v5966, %v5967
        %v5969 = vrot.slane %v5968, 1
        %v5970 = vmin.f32 %v5968, %v5969
        %v5971 = vmin.f32 %v5749, %v5751
        %v5972 = vmin.f32 %v5971, %v5753
        %v5973 = vmin.f32 %v5972, %v5755
        %v5974 = vmin.f32 %v5973, %v5757
        %v5975 = vmin.f32 %v5974, %v5759
        %v5976 = vmin.f32 %v5975, %v5761
        %v5977 = vmin.f32 %v5976, %v5763
        %v5978 = vmin.f32 %v5977, %v5765
        %v5979 = vmin.f32 %v5978, %v5767
        %v5980 = vmin.f32 %v5979, %v5769
        %v5981 = vmin.f32 %v5980, %v5771
        %v5982 = vmin.f32 %v5981, %v5773
        %v5983 = vmin.f32 %v5982, %v5775
        %v5984 = vmin.f32 %v5983, %v5777
        %v5985 = vmin.f32 %v5984, %v5779
        %v5986 = vrot.slane %v5985, 4
        %v5987 = vmin.f32 %v5985, %v5986
        %v5988 = vrot.slane %v5987, 2
        %v5989 = vmin.f32 %v5987, %v5988
        %v5990 = vrot.slane %v5989, 1
        %v5991 = vmin.f32 %v5989, %v5990
        %v5992 = vmin.f32 %v5781, %v5783
        %v5993 = vmin.f32 %v5992, %v5785
        %v5994 = vmin.f32 %v5993, %v5787
        %v5995 = vmin.f32 %v5994, %v5789
        %v5996 = vmin.f32 %v5995, %v5791
        %v5997 = vmin.f32 %v5996, %v5793
        %v5998 = vmin.f32 %v5997, %v5795
        %v5999 = vmin.f32 %v5998, %v5797
        %v6000 = vmin.f32 %v5999, %v5799
        %v6001 = vmin.f32 %v6000, %v5801
        %v6002 = vmin.f32 %v6001, %v5803
        %v6003 = vmin.f32 %v6002, %v5805
        %v6004 = vmin.f32 %v6003, %v5807
        %v6005 = vmin.f32 %v6004, %v5809
        %v6006 = vmin.f32 %v6005, %v5811
        %v6007 = vrot.slane %v6006, 4
        %v6008 = vmin.f32 %v6006, %v6007
        %v6009 = vrot.slane %v6008, 2
        %v6010 = vmin.f32 %v6008, %v6009
        %v6011 = vrot.slane %v6010, 1
        %v6012 = vmin.f32 %v6010, %v6011
        %v6013 = vmin.f32 %v5813, %v5815
        %v6014 = vmin.f32 %v6013, %v5817
        %v6015 = vmin.f32 %v6014, %v5819
        %v6016 = vmin.f32 %v6015, %v5821
        %v6017 = vmin.f32 %v6016, %v5823
        %v6018 = vmin.f32 %v6017, %v5825
        %v6019 = vmin.f32 %v6018, %v5827
        %v6020 = vmin.f32 %v6019, %v5829
        %v6021 = vmin.f32 %v6020, %v5831
        %v6022 = vmin.f32 %v6021, %v5833
        %v6023 = vmin.f32 %v6022, %v5835
        %v6024 = vmin.f32 %v6023, %v5837
        %v6025 = vmin.f32 %v6024, %v5839
        %v6026 = vmin.f32 %v6025, %v5841
        %v6027 = vmin.f32 %v6026, %v5843
        %v6028 = vrot.slane %v6027, 4
        %v6029 = vmin.f32 %v6027, %v6028
        %v6030 = vrot.slane %v6029, 2
        %v6031 = vmin.f32 %v6029, %v6030
        %v6032 = vrot.slane %v6031, 1
        %v6033 = vmin.f32 %v6031, %v6032
        %v6034 = vmin.f32 %v5845, %v5847
        %v6035 = vmin.f32 %v6034, %v5849
        %v6036 = vmin.f32 %v6035, %v5851
        %v6037 = vmin.f32 %v6036, %v5853
        %v6038 = vmin.f32 %v6037, %v5855
        %v6039 = vmin.f32 %v6038, %v5857
        %v6040 = vmin.f32 %v6039, %v5859
        %v6041 = vmin.f32 %v6040, %v5861
        %v6042 = vmin.f32 %v6041, %v5863
        %v6043 = vmin.f32 %v6042, %v5865
        %v6044 = vmin.f32 %v6043, %v5867
        %v6045 = vmin.f32 %v6044, %v5869
        %v6046 = vmin.f32 %v6045, %v5871
        %v6047 = vmin.f32 %v6046, %v5873
        %v6048 = vmin.f32 %v6047, %v5875
        %v6049 = vrot.slane %v6048, 4
        %v6050 = vmin.f32 %v6048, %v6049
        %v6051 = vrot.slane %v6050, 2
        %v6052 = vmin.f32 %v6050, %v6051
        %v6053 = vrot.slane %v6052, 1
        %v6054 = vmin.f32 %v6052, %v6053
        %v6055 = vmin.f32 %v5877, %v5879
        %v6056 = vmin.f32 %v6055, %v5881
        %v6057 = vmin.f32 %v6056, %v5883
        %v6058 = vmin.f32 %v6057, %v5885
        %v6059 = vmin.f32 %v6058, %v5887
        %v6060 = vmin.f32 %v6059, %v5889
        %v6061 = vmin.f32 %v6060, %v5891
        %v6062 = vmin.f32 %v6061, %v5893
        %v6063 = vmin.f32 %v6062, %v5895
        %v6064 = vmin.f32 %v6063, %v5897
        %v6065 = vmin.f32 %v6064, %v5899
        %v6066 = vmin.f32 %v6065, %v5901
        %v6067 = vmin.f32 %v6066, %v5903
        %v6068 = vmin.f32 %v6067, %v5905
        %v6069 = vmin.f32 %v6068, %v5907
        %v6070 = vrot.slane %v6069, 4
        %v6071 = vmin.f32 %v6069, %v6070
        %v6072 = vrot.slane %v6071, 2
        %v6073 = vmin.f32 %v6071, %v6072
        %v6074 = vrot.slane %v6073, 1
        %v6075 = vmin.f32 %v6073, %v6074
        %vm6076 = vcmp.le.f32.partialorder %v5524, %v5928
        %vm6077 = vcmp.le.f32.partialorder %v5525, %v5928
        %vm6078 = vcmp.le.f32.partialorder %v5526, %v5928
        %vm6079 = vcmp.le.f32.partialorder %v5527, %v5928
        %vm6080 = vcmp.le.f32.partialorder %v5528, %v5928
        %vm6081 = vcmp.le.f32.partialorder %v5529, %v5928
        %vm6082 = vcmp.le.f32.partialorder %v5530, %v5928
        %vm6083 = vcmp.le.f32.partialorder %v5531, %v5928
        %vm6084 = vcmp.le.f32.partialorder %v5532, %v5928
        %vm6085 = vcmp.le.f32.partialorder %v5533, %v5928
        %vm6086 = vcmp.le.f32.partialorder %v5534, %v5928
        %vm6087 = vcmp.le.f32.partialorder %v5535, %v5928
        %vm6088 = vcmp.le.f32.partialorder %v5536, %v5928
        %vm6089 = vcmp.le.f32.partialorder %v5537, %v5928
        %vm6090 = vcmp.le.f32.partialorder %v5538, %v5928
        %vm6091 = vcmp.le.f32.partialorder %v5539, %v5928
        %vm6092 = vcmp.le.f32.partialorder %v5540, %v5949
        %vm6093 = vcmp.le.f32.partialorder %v5541, %v5949
        %vm6094 = vcmp.le.f32.partialorder %v5542, %v5949
        %vm6095 = vcmp.le.f32.partialorder %v5543, %v5949
        %vm6096 = vcmp.le.f32.partialorder %v5544, %v5949
        %vm6097 = vcmp.le.f32.partialorder %v5545, %v5949
        %vm6098 = vcmp.le.f32.partialorder %v5546, %v5949
        %vm6099 = vcmp.le.f32.partialorder %v5547, %v5949
        %vm6100 = vcmp.le.f32.partialorder %v5548, %v5949
        %vm6101 = vcmp.le.f32.partialorder %v5549, %v5949
        %vm6102 = vcmp.le.f32.partialorder %v5550, %v5949
        %vm6103 = vcmp.le.f32.partialorder %v5551, %v5949
        %vm6104 = vcmp.le.f32.partialorder %v5552, %v5949
        %vm6105 = vcmp.le.f32.partialorder %v5553, %v5949
        %vm6106 = vcmp.le.f32.partialorder %v5554, %v5949
        %vm6107 = vcmp.le.f32.partialorder %v5555, %v5949
        %vm6108 = vcmp.le.f32.partialorder %v5556, %v5970
        %vm6109 = vcmp.le.f32.partialorder %v5557, %v5970
        %vm6110 = vcmp.le.f32.partialorder %v5558, %v5970
        %vm6111 = vcmp.le.f32.partialorder %v5559, %v5970
        %vm6112 = vcmp.le.f32.partialorder %v5560, %v5970
        %vm6113 = vcmp.le.f32.partialorder %v5561, %v5970
        %vm6114 = vcmp.le.f32.partialorder %v5562, %v5970
        %vm6115 = vcmp.le.f32.partialorder %v5563, %v5970
        %vm6116 = vcmp.le.f32.partialorder %v5564, %v5970
        %vm6117 = vcmp.le.f32.partialorder %v5565, %v5970
        %vm6118 = vcmp.le.f32.partialorder %v5566, %v5970
        %vm6119 = vcmp.le.f32.partialorder %v5567, %v5970
        %vm6120 = vcmp.le.f32.partialorder %v5568, %v5970
        %vm6121 = vcmp.le.f32.partialorder %v5569, %v5970
        %vm6122 = vcmp.le.f32.partialorder %v5570, %v5970
        %vm6123 = vcmp.le.f32.partialorder %v5571, %v5970
        %vm6124 = vcmp.le.f32.partialorder %v5572, %v5991
        %vm6125 = vcmp.le.f32.partialorder %v5573, %v5991
        %vm6126 = vcmp.le.f32.partialorder %v5574, %v5991
        %vm6127 = vcmp.le.f32.partialorder %v5575, %v5991
        %vm6128 = vcmp.le.f32.partialorder %v5576, %v5991
        %vm6129 = vcmp.le.f32.partialorder %v5577, %v5991
        %vm6130 = vcmp.le.f32.partialorder %v5578, %v5991
        %vm6131 = vcmp.le.f32.partialorder %v5579, %v5991
        %vm6132 = vcmp.le.f32.partialorder %v5580, %v5991
        %vm6133 = vcmp.le.f32.partialorder %v5581, %v5991
        %vm6134 = vcmp.le.f32.partialorder %v5582, %v5991
        %vm6135 = vcmp.le.f32.partialorder %v5583, %v5991
        %vm6136 = vcmp.le.f32.partialorder %v5584, %v5991
        %vm6137 = vcmp.le.f32.partialorder %v5585, %v5991
        %vm6138 = vcmp.le.f32.partialorder %v5586, %v5991
        %vm6139 = vcmp.le.f32.partialorder %v5587, %v5991
        %vm6140 = vcmp.le.f32.partialorder %v5588, %v6012
        %vm6141 = vcmp.le.f32.partialorder %v5589, %v6012
        %vm6142 = vcmp.le.f32.partialorder %v5590, %v6012
        %vm6143 = vcmp.le.f32.partialorder %v5591, %v6012
        %vm6144 = vcmp.le.f32.partialorder %v5592, %v6012
        %vm6145 = vcmp.le.f32.partialorder %v5593, %v6012
        %vm6146 = vcmp.le.f32.partialorder %v5594, %v6012
        %vm6147 = vcmp.le.f32.partialorder %v5595, %v6012
        %vm6148 = vcmp.le.f32.partialorder %v5596, %v6012
        %vm6149 = vcmp.le.f32.partialorder %v5597, %v6012
        %vm6150 = vcmp.le.f32.partialorder %v5598, %v6012
        %vm6151 = vcmp.le.f32.partialorder %v5599, %v6012
        %vm6152 = vcmp.le.f32.partialorder %v5600, %v6012
        %vm6153 = vcmp.le.f32.partialorder %v5601, %v6012
        %vm6154 = vcmp.le.f32.partialorder %v5602, %v6012
        %vm6155 = vcmp.le.f32.partialorder %v5603, %v6012
        %vm6156 = vcmp.le.f32.partialorder %v5604, %v6033
        %vm6157 = vcmp.le.f32.partialorder %v5605, %v6033
        %vm6158 = vcmp.le.f32.partialorder %v5606, %v6033
        %vm6159 = vcmp.le.f32.partialorder %v5607, %v6033
        %vm6160 = vcmp.le.f32.partialorder %v5608, %v6033
        %vm6161 = vcmp.le.f32.partialorder %v5609, %v6033
        %vm6162 = vcmp.le.f32.partialorder %v5610, %v6033
        %vm6163 = vcmp.le.f32.partialorder %v5611, %v6033
        %vm6164 = vcmp.le.f32.partialorder %v5612, %v6033
        %vm6165 = vcmp.le.f32.partialorder %v5613, %v6033
        %vm6166 = vcmp.le.f32.partialorder %v5614, %v6033
        %vm6167 = vcmp.le.f32.partialorder %v5615, %v6033
        %vm6168 = vcmp.le.f32.partialorder %v5616, %v6033
        %vm6169 = vcmp.le.f32.partialorder %v5617, %v6033
        %vm6170 = vcmp.le.f32.partialorder %v5618, %v6033
        %vm6171 = vcmp.le.f32.partialorder %v5619, %v6033
        %vm6172 = vcmp.le.f32.partialorder %v5620, %v6054
        %vm6173 = vcmp.le.f32.partialorder %v5621, %v6054
        %vm6174 = vcmp.le.f32.partialorder %v5622, %v6054
        %vm6175 = vcmp.le.f32.partialorder %v5623, %v6054
        %vm6176 = vcmp.le.f32.partialorder %v5624, %v6054
        %vm6177 = vcmp.le.f32.partialorder %v5625, %v6054
        %vm6178 = vcmp.le.f32.partialorder %v5626, %v6054
        %vm6179 = vcmp.le.f32.partialorder %v5627, %v6054
        %vm6180 = vcmp.le.f32.partialorder %v5628, %v6054
        %vm6181 = vcmp.le.f32.partialorder %v5629, %v6054
        %vm6182 = vcmp.le.f32.partialorder %v5630, %v6054
        %vm6183 = vcmp.le.f32.partialorder %v5631, %v6054
        %vm6184 = vcmp.le.f32.partialorder %v5632, %v6054
        %vm6185 = vcmp.le.f32.partialorder %v5633, %v6054
        %vm6186 = vcmp.le.f32.partialorder %v5634, %v6054
        %vm6187 = vcmp.le.f32.partialorder %v5635, %v6054
        %vm6188 = vcmp.le.f32.partialorder %v5636, %v6075
        %vm6189 = vcmp.le.f32.partialorder %v5637, %v6075
        %vm6190 = vcmp.le.f32.partialorder %v5638, %v6075
        %vm6191 = vcmp.le.f32.partialorder %v5639, %v6075
        %vm6192 = vcmp.le.f32.partialorder %v5640, %v6075
        %vm6193 = vcmp.le.f32.partialorder %v5641, %v6075
        %vm6194 = vcmp.le.f32.partialorder %v5642, %v6075
        %vm6195 = vcmp.le.f32.partialorder %v5643, %v6075
        %vm6196 = vcmp.le.f32.partialorder %v5644, %v6075
        %vm6197 = vcmp.le.f32.partialorder %v5645, %v6075
        %vm6198 = vcmp.le.f32.partialorder %v5646, %v6075
        %vm6199 = vcmp.le.f32.partialorder %v5647, %v6075
        %vm6200 = vcmp.le.f32.partialorder %v5648, %v6075
        %vm6201 = vcmp.le.f32.partialorder %v5649, %v6075
        %vm6202 = vcmp.le.f32.partialorder %v5650, %v6075
        %vm6203 = vcmp.le.f32.partialorder %v5651, %v6075
        %v6204 = vsel %vm6076, %v387, 16384.0
        %v6205 = vsel %vm6077, %v388, 16384.0
        %v6206 = vsel %vm6078, %v389, 16384.0
        %v6207 = vsel %vm6079, %v390, 16384.0
        %v6208 = vsel %vm6080, %v391, 16384.0
        %v6209 = vsel %vm6081, %v392, 16384.0
        %v6210 = vsel %vm6082, %v393, 16384.0
        %v6211 = vsel %vm6083, %v394, 16384.0
        %v6212 = vsel %vm6084, %v395, 16384.0
        %v6213 = vsel %vm6085, %v396, 16384.0
        %v6214 = vsel %vm6086, %v397, 16384.0
        %v6215 = vsel %vm6087, %v398, 16384.0
        %v6216 = vsel %vm6088, %v399, 16384.0
        %v6217 = vsel %vm6089, %v400, 16384.0
        %v6218 = vsel %vm6090, %v401, 16384.0
        %v6219 = vsel %vm6091, %v402, 16384.0
        %v6220 = vsel %vm6092, %v387, 16384.0
        %v6221 = vsel %vm6093, %v388, 16384.0
        %v6222 = vsel %vm6094, %v389, 16384.0
        %v6223 = vsel %vm6095, %v390, 16384.0
        %v6224 = vsel %vm6096, %v391, 16384.0
        %v6225 = vsel %vm6097, %v392, 16384.0
        %v6226 = vsel %vm6098, %v393, 16384.0
        %v6227 = vsel %vm6099, %v394, 16384.0
        %v6228 = vsel %vm6100, %v395, 16384.0
        %v6229 = vsel %vm6101, %v396, 16384.0
        %v6230 = vsel %vm6102, %v397, 16384.0
        %v6231 = vsel %vm6103, %v398, 16384.0
        %v6232 = vsel %vm6104, %v399, 16384.0
        %v6233 = vsel %vm6105, %v400, 16384.0
        %v6234 = vsel %vm6106, %v401, 16384.0
        %v6235 = vsel %vm6107, %v402, 16384.0
        %v6236 = vsel %vm6108, %v387, 16384.0
        %v6237 = vsel %vm6109, %v388, 16384.0
        %v6238 = vsel %vm6110, %v389, 16384.0
        %v6239 = vsel %vm6111, %v390, 16384.0
        %v6240 = vsel %vm6112, %v391, 16384.0
        %v6241 = vsel %vm6113, %v392, 16384.0
        %v6242 = vsel %vm6114, %v393, 16384.0
        %v6243 = vsel %vm6115, %v394, 16384.0
        %v6244 = vsel %vm6116, %v395, 16384.0
        %v6245 = vsel %vm6117, %v396, 16384.0
        %v6246 = vsel %vm6118, %v397, 16384.0
        %v6247 = vsel %vm6119, %v398, 16384.0
        %v6248 = vsel %vm6120, %v399, 16384.0
        %v6249 = vsel %vm6121, %v400, 16384.0
        %v6250 = vsel %vm6122, %v401, 16384.0
        %v6251 = vsel %vm6123, %v402, 16384.0
        %v6252 = vsel %vm6124, %v387, 16384.0
        %v6253 = vsel %vm6125, %v388, 16384.0
        %v6254 = vsel %vm6126, %v389, 16384.0
        %v6255 = vsel %vm6127, %v390, 16384.0
        %v6256 = vsel %vm6128, %v391, 16384.0
        %v6257 = vsel %vm6129, %v392, 16384.0
        %v6258 = vsel %vm6130, %v393, 16384.0
        %v6259 = vsel %vm6131, %v394, 16384.0
        %v6260 = vsel %vm6132, %v395, 16384.0
        %v6261 = vsel %vm6133, %v396, 16384.0
        %v6262 = vsel %vm6134, %v397, 16384.0
        %v6263 = vsel %vm6135, %v398, 16384.0
        %v6264 = vsel %vm6136, %v399, 16384.0
        %v6265 = vsel %vm6137, %v400, 16384.0
        %v6266 = vsel %vm6138, %v401, 16384.0
        %v6267 = vsel %vm6139, %v402, 16384.0
        %v6268 = vsel %vm6140, %v387, 16384.0
        %v6269 = vsel %vm6141, %v388, 16384.0
        %v6270 = vsel %vm6142, %v389, 16384.0
        %v6271 = vsel %vm6143, %v390, 16384.0
        %v6272 = vsel %vm6144, %v391, 16384.0
        %v6273 = vsel %vm6145, %v392, 16384.0
        %v6274 = vsel %vm6146, %v393, 16384.0
        %v6275 = vsel %vm6147, %v394, 16384.0
        %v6276 = vsel %vm6148, %v395, 16384.0
        %v6277 = vsel %vm6149, %v396, 16384.0
        %v6278 = vsel %vm6150, %v397, 16384.0
        %v6279 = vsel %vm6151, %v398, 16384.0
        %v6280 = vsel %vm6152, %v399, 16384.0
        %v6281 = vsel %vm6153, %v400, 16384.0
        %v6282 = vsel %vm6154, %v401, 16384.0
        %v6283 = vsel %vm6155, %v402, 16384.0
        %v6284 = vsel %vm6156, %v387, 16384.0
        %v6285 = vsel %vm6157, %v388, 16384.0
        %v6286 = vsel %vm6158, %v389, 16384.0
        %v6287 = vsel %vm6159, %v390, 16384.0
        %v6288 = vsel %vm6160, %v391, 16384.0
        %v6289 = vsel %vm6161, %v392, 16384.0
        %v6290 = vsel %vm6162, %v393, 16384.0
        %v6291 = vsel %vm6163, %v394, 16384.0
        %v6292 = vsel %vm6164, %v395, 16384.0
        %v6293 = vsel %vm6165, %v396, 16384.0
        %v6294 = vsel %vm6166, %v397, 16384.0
        %v6295 = vsel %vm6167, %v398, 16384.0
        %v6296 = vsel %vm6168, %v399, 16384.0
        %v6297 = vsel %vm6169, %v400, 16384.0
        %v6298 = vsel %vm6170, %v401, 16384.0
        %v6299 = vsel %vm6171, %v402, 16384.0
        %v6300 = vsel %vm6172, %v387, 16384.0
        %v6301 = vsel %vm6173, %v388, 16384.0
        %v6302 = vsel %vm6174, %v389, 16384.0
        %v6303 = vsel %vm6175, %v390, 16384.0
        %v6304 = vsel %vm6176, %v391, 16384.0
        %v6305 = vsel %vm6177, %v392, 16384.0
        %v6306 = vsel %vm6178, %v393, 16384.0
        %v6307 = vsel %vm6179, %v394, 16384.0
        %v6308 = vsel %vm6180, %v395, 16384.0
        %v6309 = vsel %vm6181, %v396, 16384.0
        %v6310 = vsel %vm6182, %v397, 16384.0
        %v6311 = vsel %vm6183, %v398, 16384.0
        %v6312 = vsel %vm6184, %v399, 16384.0
        %v6313 = vsel %vm6185, %v400, 16384.0
        %v6314 = vsel %vm6186, %v401, 16384.0
        %v6315 = vsel %vm6187, %v402, 16384.0
        %v6316 = vsel %vm6188, %v387, 16384.0
        %v6317 = vsel %vm6189, %v388, 16384.0
        %v6318 = vsel %vm6190, %v389, 16384.0
        %v6319 = vsel %vm6191, %v390, 16384.0
        %v6320 = vsel %vm6192, %v391, 16384.0
        %v6321 = vsel %vm6193, %v392, 16384.0
        %v6322 = vsel %vm6194, %v393, 16384.0
        %v6323 = vsel %vm6195, %v394, 16384.0
        %v6324 = vsel %vm6196, %v395, 16384.0
        %v6325 = vsel %vm6197, %v396, 16384.0
        %v6326 = vsel %vm6198, %v397, 16384.0
        %v6327 = vsel %vm6199, %v398, 16384.0
        %v6328 = vsel %vm6200, %v399, 16384.0
        %v6329 = vsel %vm6201, %v400, 16384.0
        %v6330 = vsel %vm6202, %v401, 16384.0
        %v6331 = vsel %vm6203, %v402, 16384.0
        %6332 = vmin.xlane.f32.xlu0 %v6204
        %v6333 = vpop.xlane.xlu0 %6332
        %6334 = vmin.xlane.f32.xlu0 %v6205
        %v6335 = vpop.xlane.xlu0 %6334
        %6336 = vmin.xlane.f32.xlu0 %v6206
        %v6337 = vpop.xlane.xlu0 %6336
        %6338 = vmin.xlane.f32.xlu0 %v6207
        %v6339 = vpop.xlane.xlu0 %6338
        %6340 = vmin.xlane.f32.xlu0 %v6208
        %v6341 = vpop.xlane.xlu0 %6340
        %6342 = vmin.xlane.f32.xlu0 %v6209
        %v6343 = vpop.xlane.xlu0 %6342
        %6344 = vmin.xlane.f32.xlu0 %v6210
        %v6345 = vpop.xlane.xlu0 %6344
        %6346 = vmin.xlane.f32.xlu0 %v6211
        %v6347 = vpop.xlane.xlu0 %6346
        %6348 = vmin.xlane.f32.xlu0 %v6212
        %v6349 = vpop.xlane.xlu0 %6348
        %6350 = vmin.xlane.f32.xlu0 %v6213
        %v6351 = vpop.xlane.xlu0 %6350
        %6352 = vmin.xlane.f32.xlu0 %v6214
        %v6353 = vpop.xlane.xlu0 %6352
        %6354 = vmin.xlane.f32.xlu0 %v6215
        %v6355 = vpop.xlane.xlu0 %6354
        %6356 = vmin.xlane.f32.xlu0 %v6216
        %v6357 = vpop.xlane.xlu0 %6356
        %6358 = vmin.xlane.f32.xlu0 %v6217
        %v6359 = vpop.xlane.xlu0 %6358
        %6360 = vmin.xlane.f32.xlu0 %v6218
        %v6361 = vpop.xlane.xlu0 %6360
        %6362 = vmin.xlane.f32.xlu0 %v6219
        %v6363 = vpop.xlane.xlu0 %6362
        %6364 = vmin.xlane.f32.xlu0 %v6220
        %v6365 = vpop.xlane.xlu0 %6364
        %6366 = vmin.xlane.f32.xlu0 %v6221
        %v6367 = vpop.xlane.xlu0 %6366
        %6368 = vmin.xlane.f32.xlu0 %v6222
        %v6369 = vpop.xlane.xlu0 %6368
        %6370 = vmin.xlane.f32.xlu0 %v6223
        %v6371 = vpop.xlane.xlu0 %6370
        %6372 = vmin.xlane.f32.xlu0 %v6224
        %v6373 = vpop.xlane.xlu0 %6372
        %6374 = vmin.xlane.f32.xlu0 %v6225
        %v6375 = vpop.xlane.xlu0 %6374
        %6376 = vmin.xlane.f32.xlu0 %v6226
        %v6377 = vpop.xlane.xlu0 %6376
        %6378 = vmin.xlane.f32.xlu0 %v6227
        %v6379 = vpop.xlane.xlu0 %6378
        %6380 = vmin.xlane.f32.xlu0 %v6228
        %v6381 = vpop.xlane.xlu0 %6380
        %6382 = vmin.xlane.f32.xlu0 %v6229
        %v6383 = vpop.xlane.xlu0 %6382
        %6384 = vmin.xlane.f32.xlu0 %v6230
        %v6385 = vpop.xlane.xlu0 %6384
        %6386 = vmin.xlane.f32.xlu0 %v6231
        %v6387 = vpop.xlane.xlu0 %6386
        %6388 = vmin.xlane.f32.xlu0 %v6232
        %v6389 = vpop.xlane.xlu0 %6388
        %6390 = vmin.xlane.f32.xlu0 %v6233
        %v6391 = vpop.xlane.xlu0 %6390
        %6392 = vmin.xlane.f32.xlu0 %v6234
        %v6393 = vpop.xlane.xlu0 %6392
        %6394 = vmin.xlane.f32.xlu0 %v6235
        %v6395 = vpop.xlane.xlu0 %6394
        %6396 = vmin.xlane.f32.xlu0 %v6236
        %v6397 = vpop.xlane.xlu0 %6396
        %6398 = vmin.xlane.f32.xlu0 %v6237
        %v6399 = vpop.xlane.xlu0 %6398
        %6400 = vmin.xlane.f32.xlu0 %v6238
        %v6401 = vpop.xlane.xlu0 %6400
        %6402 = vmin.xlane.f32.xlu0 %v6239
        %v6403 = vpop.xlane.xlu0 %6402
        %6404 = vmin.xlane.f32.xlu0 %v6240
        %v6405 = vpop.xlane.xlu0 %6404
        %6406 = vmin.xlane.f32.xlu0 %v6241
        %v6407 = vpop.xlane.xlu0 %6406
        %6408 = vmin.xlane.f32.xlu0 %v6242
        %v6409 = vpop.xlane.xlu0 %6408
        %6410 = vmin.xlane.f32.xlu0 %v6243
        %v6411 = vpop.xlane.xlu0 %6410
        %6412 = vmin.xlane.f32.xlu0 %v6244
        %v6413 = vpop.xlane.xlu0 %6412
        %6414 = vmin.xlane.f32.xlu0 %v6245
        %v6415 = vpop.xlane.xlu0 %6414
        %6416 = vmin.xlane.f32.xlu0 %v6246
        %v6417 = vpop.xlane.xlu0 %6416
        %6418 = vmin.xlane.f32.xlu0 %v6247
        %v6419 = vpop.xlane.xlu0 %6418
        %6420 = vmin.xlane.f32.xlu0 %v6248
        %v6421 = vpop.xlane.xlu0 %6420
        %6422 = vmin.xlane.f32.xlu0 %v6249
        %v6423 = vpop.xlane.xlu0 %6422
        %6424 = vmin.xlane.f32.xlu0 %v6250
        %v6425 = vpop.xlane.xlu0 %6424
        %6426 = vmin.xlane.f32.xlu0 %v6251
        %v6427 = vpop.xlane.xlu0 %6426
        %6428 = vmin.xlane.f32.xlu0 %v6252
        %v6429 = vpop.xlane.xlu0 %6428
        %6430 = vmin.xlane.f32.xlu0 %v6253
        %v6431 = vpop.xlane.xlu0 %6430
        %6432 = vmin.xlane.f32.xlu0 %v6254
        %v6433 = vpop.xlane.xlu0 %6432
        %6434 = vmin.xlane.f32.xlu0 %v6255
        %v6435 = vpop.xlane.xlu0 %6434
        %6436 = vmin.xlane.f32.xlu0 %v6256
        %v6437 = vpop.xlane.xlu0 %6436
        %6438 = vmin.xlane.f32.xlu0 %v6257
        %v6439 = vpop.xlane.xlu0 %6438
        %6440 = vmin.xlane.f32.xlu0 %v6258
        %v6441 = vpop.xlane.xlu0 %6440
        %6442 = vmin.xlane.f32.xlu0 %v6259
        %v6443 = vpop.xlane.xlu0 %6442
        %6444 = vmin.xlane.f32.xlu0 %v6260
        %v6445 = vpop.xlane.xlu0 %6444
        %6446 = vmin.xlane.f32.xlu0 %v6261
        %v6447 = vpop.xlane.xlu0 %6446
        %6448 = vmin.xlane.f32.xlu0 %v6262
        %v6449 = vpop.xlane.xlu0 %6448
        %6450 = vmin.xlane.f32.xlu0 %v6263
        %v6451 = vpop.xlane.xlu0 %6450
        %6452 = vmin.xlane.f32.xlu0 %v6264
        %v6453 = vpop.xlane.xlu0 %6452
        %6454 = vmin.xlane.f32.xlu0 %v6265
        %v6455 = vpop.xlane.xlu0 %6454
        %6456 = vmin.xlane.f32.xlu0 %v6266
        %v6457 = vpop.xlane.xlu0 %6456
        %6458 = vmin.xlane.f32.xlu0 %v6267
        %v6459 = vpop.xlane.xlu0 %6458
        %6460 = vmin.xlane.f32.xlu0 %v6268
        %v6461 = vpop.xlane.xlu0 %6460
        %6462 = vmin.xlane.f32.xlu0 %v6269
        %v6463 = vpop.xlane.xlu0 %6462
        %6464 = vmin.xlane.f32.xlu0 %v6270
        %v6465 = vpop.xlane.xlu0 %6464
        %6466 = vmin.xlane.f32.xlu0 %v6271
        %v6467 = vpop.xlane.xlu0 %6466
        %6468 = vmin.xlane.f32.xlu0 %v6272
        %v6469 = vpop.xlane.xlu0 %6468
        %6470 = vmin.xlane.f32.xlu0 %v6273
        %v6471 = vpop.xlane.xlu0 %6470
        %6472 = vmin.xlane.f32.xlu0 %v6274
        %v6473 = vpop.xlane.xlu0 %6472
        %6474 = vmin.xlane.f32.xlu0 %v6275
        %v6475 = vpop.xlane.xlu0 %6474
        %6476 = vmin.xlane.f32.xlu0 %v6276
        %v6477 = vpop.xlane.xlu0 %6476
        %6478 = vmin.xlane.f32.xlu0 %v6277
        %v6479 = vpop.xlane.xlu0 %6478
        %6480 = vmin.xlane.f32.xlu0 %v6278
        %v6481 = vpop.xlane.xlu0 %6480
        %6482 = vmin.xlane.f32.xlu0 %v6279
        %v6483 = vpop.xlane.xlu0 %6482
        %6484 = vmin.xlane.f32.xlu0 %v6280
        %v6485 = vpop.xlane.xlu0 %6484
        %6486 = vmin.xlane.f32.xlu0 %v6281
        %v6487 = vpop.xlane.xlu0 %6486
        %6488 = vmin.xlane.f32.xlu0 %v6282
        %v6489 = vpop.xlane.xlu0 %6488
        %6490 = vmin.xlane.f32.xlu0 %v6283
        %v6491 = vpop.xlane.xlu0 %6490
        %6492 = vmin.xlane.f32.xlu0 %v6284
        %v6493 = vpop.xlane.xlu0 %6492
        %6494 = vmin.xlane.f32.xlu0 %v6285
        %v6495 = vpop.xlane.xlu0 %6494
        %6496 = vmin.xlane.f32.xlu0 %v6286
        %v6497 = vpop.xlane.xlu0 %6496
        %6498 = vmin.xlane.f32.xlu0 %v6287
        %v6499 = vpop.xlane.xlu0 %6498
        %6500 = vmin.xlane.f32.xlu0 %v6288
        %v6501 = vpop.xlane.xlu0 %6500
        %6502 = vmin.xlane.f32.xlu0 %v6289
        %v6503 = vpop.xlane.xlu0 %6502
        %6504 = vmin.xlane.f32.xlu0 %v6290
        %v6505 = vpop.xlane.xlu0 %6504
        %6506 = vmin.xlane.f32.xlu0 %v6291
        %v6507 = vpop.xlane.xlu0 %6506
        %6508 = vmin.xlane.f32.xlu0 %v6292
        %v6509 = vpop.xlane.xlu0 %6508
        %6510 = vmin.xlane.f32.xlu0 %v6293
        %v6511 = vpop.xlane.xlu0 %6510
        %6512 = vmin.xlane.f32.xlu0 %v6294
        %v6513 = vpop.xlane.xlu0 %6512
        %6514 = vmin.xlane.f32.xlu0 %v6295
        %v6515 = vpop.xlane.xlu0 %6514
        %6516 = vmin.xlane.f32.xlu0 %v6296
        %v6517 = vpop.xlane.xlu0 %6516
        %6518 = vmin.xlane.f32.xlu0 %v6297
        %v6519 = vpop.xlane.xlu0 %6518
        %6520 = vmin.xlane.f32.xlu0 %v6298
        %v6521 = vpop.xlane.xlu0 %6520
        %6522 = vmin.xlane.f32.xlu0 %v6299
        %v6523 = vpop.xlane.xlu0 %6522
        %6524 = vmin.xlane.f32.xlu0 %v6300
        %v6525 = vpop.xlane.xlu0 %6524
        %6526 = vmin.xlane.f32.xlu0 %v6301
        %v6527 = vpop.xlane.xlu0 %6526
        %6528 = vmin.xlane.f32.xlu0 %v6302
        %v6529 = vpop.xlane.xlu0 %6528
        %6530 = vmin.xlane.f32.xlu0 %v6303
        %v6531 = vpop.xlane.xlu0 %6530
        %6532 = vmin.xlane.f32.xlu0 %v6304
        %v6533 = vpop.xlane.xlu0 %6532
        %6534 = vmin.xlane.f32.xlu0 %v6305
        %v6535 = vpop.xlane.xlu0 %6534
        %6536 = vmin.xlane.f32.xlu0 %v6306
        %v6537 = vpop.xlane.xlu0 %6536
        %6538 = vmin.xlane.f32.xlu0 %v6307
        %v6539 = vpop.xlane.xlu0 %6538
        %6540 = vmin.xlane.f32.xlu0 %v6308
        %v6541 = vpop.xlane.xlu0 %6540
        %6542 = vmin.xlane.f32.xlu0 %v6309
        %v6543 = vpop.xlane.xlu0 %6542
        %6544 = vmin.xlane.f32.xlu0 %v6310
        %v6545 = vpop.xlane.xlu0 %6544
        %6546 = vmin.xlane.f32.xlu0 %v6311
        %v6547 = vpop.xlane.xlu0 %6546
        %6548 = vmin.xlane.f32.xlu0 %v6312
        %v6549 = vpop.xlane.xlu0 %6548
        %6550 = vmin.xlane.f32.xlu0 %v6313
        %v6551 = vpop.xlane.xlu0 %6550
        %6552 = vmin.xlane.f32.xlu0 %v6314
        %v6553 = vpop.xlane.xlu0 %6552
        %6554 = vmin.xlane.f32.xlu0 %v6315
        %v6555 = vpop.xlane.xlu0 %6554
        %6556 = vmin.xlane.f32.xlu0 %v6316
        %v6557 = vpop.xlane.xlu0 %6556
        %6558 = vmin.xlane.f32.xlu0 %v6317
        %v6559 = vpop.xlane.xlu0 %6558
        %6560 = vmin.xlane.f32.xlu0 %v6318
        %v6561 = vpop.xlane.xlu0 %6560
        %6562 = vmin.xlane.f32.xlu0 %v6319
        %v6563 = vpop.xlane.xlu0 %6562
        %6564 = vmin.xlane.f32.xlu0 %v6320
        %v6565 = vpop.xlane.xlu0 %6564
        %6566 = vmin.xlane.f32.xlu0 %v6321
        %v6567 = vpop.xlane.xlu0 %6566
        %6568 = vmin.xlane.f32.xlu0 %v6322
        %v6569 = vpop.xlane.xlu0 %6568
        %6570 = vmin.xlane.f32.xlu0 %v6323
        %v6571 = vpop.xlane.xlu0 %6570
        %6572 = vmin.xlane.f32.xlu0 %v6324
        %v6573 = vpop.xlane.xlu0 %6572
        %6574 = vmin.xlane.f32.xlu0 %v6325
        %v6575 = vpop.xlane.xlu0 %6574
        %6576 = vmin.xlane.f32.xlu0 %v6326
        %v6577 = vpop.xlane.xlu0 %6576
        %6578 = vmin.xlane.f32.xlu0 %v6327
        %v6579 = vpop.xlane.xlu0 %6578
        %6580 = vmin.xlane.f32.xlu0 %v6328
        %v6581 = vpop.xlane.xlu0 %6580
        %6582 = vmin.xlane.f32.xlu0 %v6329
        %v6583 = vpop.xlane.xlu0 %6582
        %6584 = vmin.xlane.f32.xlu0 %v6330
        %v6585 = vpop.xlane.xlu0 %6584
        %6586 = vmin.xlane.f32.xlu0 %v6331
        %v6587 = vpop.xlane.xlu0 %6586
        %v6588 = vmin.f32 %v6333, %v6335
        %v6589 = vmin.f32 %v6588, %v6337
        %v6590 = vmin.f32 %v6589, %v6339
        %v6591 = vmin.f32 %v6590, %v6341
        %v6592 = vmin.f32 %v6591, %v6343
        %v6593 = vmin.f32 %v6592, %v6345
        %v6594 = vmin.f32 %v6593, %v6347
        %v6595 = vmin.f32 %v6594, %v6349
        %v6596 = vmin.f32 %v6595, %v6351
        %v6597 = vmin.f32 %v6596, %v6353
        %v6598 = vmin.f32 %v6597, %v6355
        %v6599 = vmin.f32 %v6598, %v6357
        %v6600 = vmin.f32 %v6599, %v6359
        %v6601 = vmin.f32 %v6600, %v6361
        %v6602 = vmin.f32 %v6601, %v6363
        %v6603 = vrot.slane %v6602, 4
        %v6604 = vmin.f32 %v6602, %v6603
        %v6605 = vrot.slane %v6604, 2
        %v6606 = vmin.f32 %v6604, %v6605
        %v6607 = vrot.slane %v6606, 1
        %v6608 = vmin.f32 %v6606, %v6607
        %v6609 = vmin.f32 %v6365, %v6367
        %v6610 = vmin.f32 %v6609, %v6369
        %v6611 = vmin.f32 %v6610, %v6371
        %v6612 = vmin.f32 %v6611, %v6373
        %v6613 = vmin.f32 %v6612, %v6375
        %v6614 = vmin.f32 %v6613, %v6377
        %v6615 = vmin.f32 %v6614, %v6379
        %v6616 = vmin.f32 %v6615, %v6381
        %v6617 = vmin.f32 %v6616, %v6383
        %v6618 = vmin.f32 %v6617, %v6385
        %v6619 = vmin.f32 %v6618, %v6387
        %v6620 = vmin.f32 %v6619, %v6389
        %v6621 = vmin.f32 %v6620, %v6391
        %v6622 = vmin.f32 %v6621, %v6393
        %v6623 = vmin.f32 %v6622, %v6395
        %v6624 = vrot.slane %v6623, 4
        %v6625 = vmin.f32 %v6623, %v6624
        %v6626 = vrot.slane %v6625, 2
        %v6627 = vmin.f32 %v6625, %v6626
        %v6628 = vrot.slane %v6627, 1
        %v6629 = vmin.f32 %v6627, %v6628
        %v6630 = vmin.f32 %v6397, %v6399
        %v6631 = vmin.f32 %v6630, %v6401
        %v6632 = vmin.f32 %v6631, %v6403
        %v6633 = vmin.f32 %v6632, %v6405
        %v6634 = vmin.f32 %v6633, %v6407
        %v6635 = vmin.f32 %v6634, %v6409
        %v6636 = vmin.f32 %v6635, %v6411
        %v6637 = vmin.f32 %v6636, %v6413
        %v6638 = vmin.f32 %v6637, %v6415
        %v6639 = vmin.f32 %v6638, %v6417
        %v6640 = vmin.f32 %v6639, %v6419
        %v6641 = vmin.f32 %v6640, %v6421
        %v6642 = vmin.f32 %v6641, %v6423
        %v6643 = vmin.f32 %v6642, %v6425
        %v6644 = vmin.f32 %v6643, %v6427
        %v6645 = vrot.slane %v6644, 4
        %v6646 = vmin.f32 %v6644, %v6645
        %v6647 = vrot.slane %v6646, 2
        %v6648 = vmin.f32 %v6646, %v6647
        %v6649 = vrot.slane %v6648, 1
        %v6650 = vmin.f32 %v6648, %v6649
        %v6651 = vmin.f32 %v6429, %v6431
        %v6652 = vmin.f32 %v6651, %v6433
        %v6653 = vmin.f32 %v6652, %v6435
        %v6654 = vmin.f32 %v6653, %v6437
        %v6655 = vmin.f32 %v6654, %v6439
        %v6656 = vmin.f32 %v6655, %v6441
        %v6657 = vmin.f32 %v6656, %v6443
        %v6658 = vmin.f32 %v6657, %v6445
        %v6659 = vmin.f32 %v6658, %v6447
        %v6660 = vmin.f32 %v6659, %v6449
        %v6661 = vmin.f32 %v6660, %v6451
        %v6662 = vmin.f32 %v6661, %v6453
        %v6663 = vmin.f32 %v6662, %v6455
        %v6664 = vmin.f32 %v6663, %v6457
        %v6665 = vmin.f32 %v6664, %v6459
        %v6666 = vrot.slane %v6665, 4
        %v6667 = vmin.f32 %v6665, %v6666
        %v6668 = vrot.slane %v6667, 2
        %v6669 = vmin.f32 %v6667, %v6668
        %v6670 = vrot.slane %v6669, 1
        %v6671 = vmin.f32 %v6669, %v6670
        %v6672 = vmin.f32 %v6461, %v6463
        %v6673 = vmin.f32 %v6672, %v6465
        %v6674 = vmin.f32 %v6673, %v6467
        %v6675 = vmin.f32 %v6674, %v6469
        %v6676 = vmin.f32 %v6675, %v6471
        %v6677 = vmin.f32 %v6676, %v6473
        %v6678 = vmin.f32 %v6677, %v6475
        %v6679 = vmin.f32 %v6678, %v6477
        %v6680 = vmin.f32 %v6679, %v6479
        %v6681 = vmin.f32 %v6680, %v6481
        %v6682 = vmin.f32 %v6681, %v6483
        %v6683 = vmin.f32 %v6682, %v6485
        %v6684 = vmin.f32 %v6683, %v6487
        %v6685 = vmin.f32 %v6684, %v6489
        %v6686 = vmin.f32 %v6685, %v6491
        %v6687 = vrot.slane %v6686, 4
        %v6688 = vmin.f32 %v6686, %v6687
        %v6689 = vrot.slane %v6688, 2
        %v6690 = vmin.f32 %v6688, %v6689
        %v6691 = vrot.slane %v6690, 1
        %v6692 = vmin.f32 %v6690, %v6691
        %v6693 = vmin.f32 %v6493, %v6495
        %v6694 = vmin.f32 %v6693, %v6497
        %v6695 = vmin.f32 %v6694, %v6499
        %v6696 = vmin.f32 %v6695, %v6501
        %v6697 = vmin.f32 %v6696, %v6503
        %v6698 = vmin.f32 %v6697, %v6505
        %v6699 = vmin.f32 %v6698, %v6507
        %v6700 = vmin.f32 %v6699, %v6509
        %v6701 = vmin.f32 %v6700, %v6511
        %v6702 = vmin.f32 %v6701, %v6513
        %v6703 = vmin.f32 %v6702, %v6515
        %v6704 = vmin.f32 %v6703, %v6517
        %v6705 = vmin.f32 %v6704, %v6519
        %v6706 = vmin.f32 %v6705, %v6521
        %v6707 = vmin.f32 %v6706, %v6523
        %v6708 = vrot.slane %v6707, 4
        %v6709 = vmin.f32 %v6707, %v6708
        %v6710 = vrot.slane %v6709, 2
        %v6711 = vmin.f32 %v6709, %v6710
        %v6712 = vrot.slane %v6711, 1
        %v6713 = vmin.f32 %v6711, %v6712
        %v6714 = vmin.f32 %v6525, %v6527
        %v6715 = vmin.f32 %v6714, %v6529
        %v6716 = vmin.f32 %v6715, %v6531
        %v6717 = vmin.f32 %v6716, %v6533
        %v6718 = vmin.f32 %v6717, %v6535
        %v6719 = vmin.f32 %v6718, %v6537
        %v6720 = vmin.f32 %v6719, %v6539
        %v6721 = vmin.f32 %v6720, %v6541
        %v6722 = vmin.f32 %v6721, %v6543
        %v6723 = vmin.f32 %v6722, %v6545
        %v6724 = vmin.f32 %v6723, %v6547
        %v6725 = vmin.f32 %v6724, %v6549
        %v6726 = vmin.f32 %v6725, %v6551
        %v6727 = vmin.f32 %v6726, %v6553
        %v6728 = vmin.f32 %v6727, %v6555
        %v6729 = vrot.slane %v6728, 4
        %v6730 = vmin.f32 %v6728, %v6729
        %v6731 = vrot.slane %v6730, 2
        %v6732 = vmin.f32 %v6730, %v6731
        %v6733 = vrot.slane %v6732, 1
        %v6734 = vmin.f32 %v6732, %v6733
        %v6735 = vmin.f32 %v6557, %v6559
        %v6736 = vmin.f32 %v6735, %v6561
        %v6737 = vmin.f32 %v6736, %v6563
        %v6738 = vmin.f32 %v6737, %v6565
        %v6739 = vmin.f32 %v6738, %v6567
        %v6740 = vmin.f32 %v6739, %v6569
        %v6741 = vmin.f32 %v6740, %v6571
        %v6742 = vmin.f32 %v6741, %v6573
        %v6743 = vmin.f32 %v6742, %v6575
        %v6744 = vmin.f32 %v6743, %v6577
        %v6745 = vmin.f32 %v6744, %v6579
        %v6746 = vmin.f32 %v6745, %v6581
        %v6747 = vmin.f32 %v6746, %v6583
        %v6748 = vmin.f32 %v6747, %v6585
        %v6749 = vmin.f32 %v6748, %v6587
        %v6750 = vrot.slane %v6749, 4
        %v6751 = vmin.f32 %v6749, %v6750
        %v6752 = vrot.slane %v6751, 2
        %v6753 = vmin.f32 %v6751, %v6752
        %v6754 = vrot.slane %v6753, 1
        %v6755 = vmin.f32 %v6753, %v6754
        %vm6756 = vcmp.eq.f32.partialorder %v387, %v6608
        %vm6757 = vcmp.eq.f32.partialorder %v388, %v6608
        %vm6758 = vcmp.eq.f32.partialorder %v389, %v6608
        %vm6759 = vcmp.eq.f32.partialorder %v390, %v6608
        %vm6760 = vcmp.eq.f32.partialorder %v391, %v6608
        %vm6761 = vcmp.eq.f32.partialorder %v392, %v6608
        %vm6762 = vcmp.eq.f32.partialorder %v393, %v6608
        %vm6763 = vcmp.eq.f32.partialorder %v394, %v6608
        %vm6764 = vcmp.eq.f32.partialorder %v395, %v6608
        %vm6765 = vcmp.eq.f32.partialorder %v396, %v6608
        %vm6766 = vcmp.eq.f32.partialorder %v397, %v6608
        %vm6767 = vcmp.eq.f32.partialorder %v398, %v6608
        %vm6768 = vcmp.eq.f32.partialorder %v399, %v6608
        %vm6769 = vcmp.eq.f32.partialorder %v400, %v6608
        %vm6770 = vcmp.eq.f32.partialorder %v401, %v6608
        %vm6771 = vcmp.eq.f32.partialorder %v402, %v6608
        %vm6772 = vcmp.eq.f32.partialorder %v387, %v6629
        %vm6773 = vcmp.eq.f32.partialorder %v388, %v6629
        %vm6774 = vcmp.eq.f32.partialorder %v389, %v6629
        %vm6775 = vcmp.eq.f32.partialorder %v390, %v6629
        %vm6776 = vcmp.eq.f32.partialorder %v391, %v6629
        %vm6777 = vcmp.eq.f32.partialorder %v392, %v6629
        %vm6778 = vcmp.eq.f32.partialorder %v393, %v6629
        %vm6779 = vcmp.eq.f32.partialorder %v394, %v6629
        %vm6780 = vcmp.eq.f32.partialorder %v395, %v6629
        %vm6781 = vcmp.eq.f32.partialorder %v396, %v6629
        %vm6782 = vcmp.eq.f32.partialorder %v397, %v6629
        %vm6783 = vcmp.eq.f32.partialorder %v398, %v6629
        %vm6784 = vcmp.eq.f32.partialorder %v399, %v6629
        %vm6785 = vcmp.eq.f32.partialorder %v400, %v6629
        %vm6786 = vcmp.eq.f32.partialorder %v401, %v6629
        %vm6787 = vcmp.eq.f32.partialorder %v402, %v6629
        %vm6788 = vcmp.eq.f32.partialorder %v387, %v6650
        %vm6789 = vcmp.eq.f32.partialorder %v388, %v6650
        %vm6790 = vcmp.eq.f32.partialorder %v389, %v6650
        %vm6791 = vcmp.eq.f32.partialorder %v390, %v6650
        %vm6792 = vcmp.eq.f32.partialorder %v391, %v6650
        %vm6793 = vcmp.eq.f32.partialorder %v392, %v6650
        %vm6794 = vcmp.eq.f32.partialorder %v393, %v6650
        %vm6795 = vcmp.eq.f32.partialorder %v394, %v6650
        %vm6796 = vcmp.eq.f32.partialorder %v395, %v6650
        %vm6797 = vcmp.eq.f32.partialorder %v396, %v6650
        %vm6798 = vcmp.eq.f32.partialorder %v397, %v6650
        %vm6799 = vcmp.eq.f32.partialorder %v398, %v6650
        %vm6800 = vcmp.eq.f32.partialorder %v399, %v6650
        %vm6801 = vcmp.eq.f32.partialorder %v400, %v6650
        %vm6802 = vcmp.eq.f32.partialorder %v401, %v6650
        %vm6803 = vcmp.eq.f32.partialorder %v402, %v6650
        %vm6804 = vcmp.eq.f32.partialorder %v387, %v6671
        %vm6805 = vcmp.eq.f32.partialorder %v388, %v6671
        %vm6806 = vcmp.eq.f32.partialorder %v389, %v6671
        %vm6807 = vcmp.eq.f32.partialorder %v390, %v6671
        %vm6808 = vcmp.eq.f32.partialorder %v391, %v6671
        %vm6809 = vcmp.eq.f32.partialorder %v392, %v6671
        %vm6810 = vcmp.eq.f32.partialorder %v393, %v6671
        %vm6811 = vcmp.eq.f32.partialorder %v394, %v6671
        %vm6812 = vcmp.eq.f32.partialorder %v395, %v6671
        %vm6813 = vcmp.eq.f32.partialorder %v396, %v6671
        %vm6814 = vcmp.eq.f32.partialorder %v397, %v6671
        %vm6815 = vcmp.eq.f32.partialorder %v398, %v6671
        %vm6816 = vcmp.eq.f32.partialorder %v399, %v6671
        %vm6817 = vcmp.eq.f32.partialorder %v400, %v6671
        %vm6818 = vcmp.eq.f32.partialorder %v401, %v6671
        %vm6819 = vcmp.eq.f32.partialorder %v402, %v6671
        %vm6820 = vcmp.eq.f32.partialorder %v387, %v6692
        %vm6821 = vcmp.eq.f32.partialorder %v388, %v6692
        %vm6822 = vcmp.eq.f32.partialorder %v389, %v6692
        %vm6823 = vcmp.eq.f32.partialorder %v390, %v6692
        %vm6824 = vcmp.eq.f32.partialorder %v391, %v6692
        %vm6825 = vcmp.eq.f32.partialorder %v392, %v6692
        %vm6826 = vcmp.eq.f32.partialorder %v393, %v6692
        %vm6827 = vcmp.eq.f32.partialorder %v394, %v6692
        %vm6828 = vcmp.eq.f32.partialorder %v395, %v6692
        %vm6829 = vcmp.eq.f32.partialorder %v396, %v6692
        %vm6830 = vcmp.eq.f32.partialorder %v397, %v6692
        %vm6831 = vcmp.eq.f32.partialorder %v398, %v6692
        %vm6832 = vcmp.eq.f32.partialorder %v399, %v6692
        %vm6833 = vcmp.eq.f32.partialorder %v400, %v6692
        %vm6834 = vcmp.eq.f32.partialorder %v401, %v6692
        %vm6835 = vcmp.eq.f32.partialorder %v402, %v6692
        %vm6836 = vcmp.eq.f32.partialorder %v387, %v6713
        %vm6837 = vcmp.eq.f32.partialorder %v388, %v6713
        %vm6838 = vcmp.eq.f32.partialorder %v389, %v6713
        %vm6839 = vcmp.eq.f32.partialorder %v390, %v6713
        %vm6840 = vcmp.eq.f32.partialorder %v391, %v6713
        %vm6841 = vcmp.eq.f32.partialorder %v392, %v6713
        %vm6842 = vcmp.eq.f32.partialorder %v393, %v6713
        %vm6843 = vcmp.eq.f32.partialorder %v394, %v6713
        %vm6844 = vcmp.eq.f32.partialorder %v395, %v6713
        %vm6845 = vcmp.eq.f32.partialorder %v396, %v6713
        %vm6846 = vcmp.eq.f32.partialorder %v397, %v6713
        %vm6847 = vcmp.eq.f32.partialorder %v398, %v6713
        %vm6848 = vcmp.eq.f32.partialorder %v399, %v6713
        %vm6849 = vcmp.eq.f32.partialorder %v400, %v6713
        %vm6850 = vcmp.eq.f32.partialorder %v401, %v6713
        %vm6851 = vcmp.eq.f32.partialorder %v402, %v6713
        %vm6852 = vcmp.eq.f32.partialorder %v387, %v6734
        %vm6853 = vcmp.eq.f32.partialorder %v388, %v6734
        %vm6854 = vcmp.eq.f32.partialorder %v389, %v6734
        %vm6855 = vcmp.eq.f32.partialorder %v390, %v6734
        %vm6856 = vcmp.eq.f32.partialorder %v391, %v6734
        %vm6857 = vcmp.eq.f32.partialorder %v392, %v6734
        %vm6858 = vcmp.eq.f32.partialorder %v393, %v6734
        %vm6859 = vcmp.eq.f32.partialorder %v394, %v6734
        %vm6860 = vcmp.eq.f32.partialorder %v395, %v6734
        %vm6861 = vcmp.eq.f32.partialorder %v396, %v6734
        %vm6862 = vcmp.eq.f32.partialorder %v397, %v6734
        %vm6863 = vcmp.eq.f32.partialorder %v398, %v6734
        %vm6864 = vcmp.eq.f32.partialorder %v399, %v6734
        %vm6865 = vcmp.eq.f32.partialorder %v400, %v6734
        %vm6866 = vcmp.eq.f32.partialorder %v401, %v6734
        %vm6867 = vcmp.eq.f32.partialorder %v402, %v6734
        %vm6868 = vcmp.eq.f32.partialorder %v387, %v6755
        %vm6869 = vcmp.eq.f32.partialorder %v388, %v6755
        %vm6870 = vcmp.eq.f32.partialorder %v389, %v6755
        %vm6871 = vcmp.eq.f32.partialorder %v390, %v6755
        %vm6872 = vcmp.eq.f32.partialorder %v391, %v6755
        %vm6873 = vcmp.eq.f32.partialorder %v392, %v6755
        %vm6874 = vcmp.eq.f32.partialorder %v393, %v6755
        %vm6875 = vcmp.eq.f32.partialorder %v394, %v6755
        %vm6876 = vcmp.eq.f32.partialorder %v395, %v6755
        %vm6877 = vcmp.eq.f32.partialorder %v396, %v6755
        %vm6878 = vcmp.eq.f32.partialorder %v397, %v6755
        %vm6879 = vcmp.eq.f32.partialorder %v398, %v6755
        %vm6880 = vcmp.eq.f32.partialorder %v399, %v6755
        %vm6881 = vcmp.eq.f32.partialorder %v400, %v6755
        %vm6882 = vcmp.eq.f32.partialorder %v401, %v6755
        %vm6883 = vcmp.eq.f32.partialorder %v402, %v6755
        %v6884 = vsel %vm6756, 1, 0
        %v6885 = vsel %vm6757, 1, 0
        %v6886 = vsel %vm6758, 1, 0
        %v6887 = vsel %vm6759, 1, 0
        %v6888 = vsel %vm6760, 1, 0
        %v6889 = vsel %vm6761, 1, 0
        %v6890 = vsel %vm6762, 1, 0
        %v6891 = vsel %vm6763, 1, 0
        %v6892 = vsel %vm6764, 1, 0
        %v6893 = vsel %vm6765, 1, 0
        %v6894 = vsel %vm6766, 1, 0
        %v6895 = vsel %vm6767, 1, 0
        %v6896 = vsel %vm6768, 1, 0
        %v6897 = vsel %vm6769, 1, 0
        %v6898 = vsel %vm6770, 1, 0
        %v6899 = vsel %vm6771, 1, 0
        %v6900 = vsel %vm6772, 1, 0
        %v6901 = vsel %vm6773, 1, 0
        %v6902 = vsel %vm6774, 1, 0
        %v6903 = vsel %vm6775, 1, 0
        %v6904 = vsel %vm6776, 1, 0
        %v6905 = vsel %vm6777, 1, 0
        %v6906 = vsel %vm6778, 1, 0
        %v6907 = vsel %vm6779, 1, 0
        %v6908 = vsel %vm6780, 1, 0
        %v6909 = vsel %vm6781, 1, 0
        %v6910 = vsel %vm6782, 1, 0
        %v6911 = vsel %vm6783, 1, 0
        %v6912 = vsel %vm6784, 1, 0
        %v6913 = vsel %vm6785, 1, 0
        %v6914 = vsel %vm6786, 1, 0
        %v6915 = vsel %vm6787, 1, 0
        %v6916 = vsel %vm6788, 1, 0
        %v6917 = vsel %vm6789, 1, 0
        %v6918 = vsel %vm6790, 1, 0
        %v6919 = vsel %vm6791, 1, 0
        %v6920 = vsel %vm6792, 1, 0
        %v6921 = vsel %vm6793, 1, 0
        %v6922 = vsel %vm6794, 1, 0
        %v6923 = vsel %vm6795, 1, 0
        %v6924 = vsel %vm6796, 1, 0
        %v6925 = vsel %vm6797, 1, 0
        %v6926 = vsel %vm6798, 1, 0
        %v6927 = vsel %vm6799, 1, 0
        %v6928 = vsel %vm6800, 1, 0
        %v6929 = vsel %vm6801, 1, 0
        %v6930 = vsel %vm6802, 1, 0
        %v6931 = vsel %vm6803, 1, 0
        %v6932 = vsel %vm6804, 1, 0
        %v6933 = vsel %vm6805, 1, 0
        %v6934 = vsel %vm6806, 1, 0
        %v6935 = vsel %vm6807, 1, 0
        %v6936 = vsel %vm6808, 1, 0
        %v6937 = vsel %vm6809, 1, 0
        %v6938 = vsel %vm6810, 1, 0
        %v6939 = vsel %vm6811, 1, 0
        %v6940 = vsel %vm6812, 1, 0
        %v6941 = vsel %vm6813, 1, 0
        %v6942 = vsel %vm6814, 1, 0
        %v6943 = vsel %vm6815, 1, 0
        %v6944 = vsel %vm6816, 1, 0
        %v6945 = vsel %vm6817, 1, 0
        %v6946 = vsel %vm6818, 1, 0
        %v6947 = vsel %vm6819, 1, 0
        %v6948 = vsel %vm6820, 1, 0
        %v6949 = vsel %vm6821, 1, 0
        %v6950 = vsel %vm6822, 1, 0
        %v6951 = vsel %vm6823, 1, 0
        %v6952 = vsel %vm6824, 1, 0
        %v6953 = vsel %vm6825, 1, 0
        %v6954 = vsel %vm6826, 1, 0
        %v6955 = vsel %vm6827, 1, 0
        %v6956 = vsel %vm6828, 1, 0
        %v6957 = vsel %vm6829, 1, 0
        %v6958 = vsel %vm6830, 1, 0
        %v6959 = vsel %vm6831, 1, 0
        %v6960 = vsel %vm6832, 1, 0
        %v6961 = vsel %vm6833, 1, 0
        %v6962 = vsel %vm6834, 1, 0
        %v6963 = vsel %vm6835, 1, 0
        %v6964 = vsel %vm6836, 1, 0
        %v6965 = vsel %vm6837, 1, 0
        %v6966 = vsel %vm6838, 1, 0
        %v6967 = vsel %vm6839, 1, 0
        %v6968 = vsel %vm6840, 1, 0
        %v6969 = vsel %vm6841, 1, 0
        %v6970 = vsel %vm6842, 1, 0
        %v6971 = vsel %vm6843, 1, 0
        %v6972 = vsel %vm6844, 1, 0
        %v6973 = vsel %vm6845, 1, 0
        %v6974 = vsel %vm6846, 1, 0
        %v6975 = vsel %vm6847, 1, 0
        %v6976 = vsel %vm6848, 1, 0
        %v6977 = vsel %vm6849, 1, 0
        %v6978 = vsel %vm6850, 1, 0
        %v6979 = vsel %vm6851, 1, 0
        %v6980 = vsel %vm6852, 1, 0
        %v6981 = vsel %vm6853, 1, 0
        %v6982 = vsel %vm6854, 1, 0
        %v6983 = vsel %vm6855, 1, 0
        %v6984 = vsel %vm6856, 1, 0
        %v6985 = vsel %vm6857, 1, 0
        %v6986 = vsel %vm6858, 1, 0
        %v6987 = vsel %vm6859, 1, 0
        %v6988 = vsel %vm6860, 1, 0
        %v6989 = vsel %vm6861, 1, 0
        %v6990 = vsel %vm6862, 1, 0
        %v6991 = vsel %vm6863, 1, 0
        %v6992 = vsel %vm6864, 1, 0
        %v6993 = vsel %vm6865, 1, 0
        %v6994 = vsel %vm6866, 1, 0
        %v6995 = vsel %vm6867, 1, 0
        %v6996 = vsel %vm6868, 1, 0
        %v6997 = vsel %vm6869, 1, 0
        %v6998 = vsel %vm6870, 1, 0
        %v6999 = vsel %vm6871, 1, 0
        %v7000 = vsel %vm6872, 1, 0
        %v7001 = vsel %vm6873, 1, 0
        %v7002 = vsel %vm6874, 1, 0
        %v7003 = vsel %vm6875, 1, 0
        %v7004 = vsel %vm6876, 1, 0
        %v7005 = vsel %vm6877, 1, 0
        %v7006 = vsel %vm6878, 1, 0
        %v7007 = vsel %vm6879, 1, 0
        %v7008 = vsel %vm6880, 1, 0
        %v7009 = vsel %vm6881, 1, 0
        %v7010 = vsel %vm6882, 1, 0
        %v7011 = vsel %vm6883, 1, 0
        %v7012 = vcvt.s32.f32 %v6884
        %v7013 = vcvt.s32.f32 %v6885
        %v7014 = vcvt.s32.f32 %v6886
        %v7015 = vcvt.s32.f32 %v6887
        %v7016 = vcvt.s32.f32 %v6888
        %v7017 = vcvt.s32.f32 %v6889
        %v7018 = vcvt.s32.f32 %v6890
        %v7019 = vcvt.s32.f32 %v6891
        %v7020 = vcvt.s32.f32 %v6892
        %v7021 = vcvt.s32.f32 %v6893
        %v7022 = vcvt.s32.f32 %v6894
        %v7023 = vcvt.s32.f32 %v6895
        %v7024 = vcvt.s32.f32 %v6896
        %v7025 = vcvt.s32.f32 %v6897
        %v7026 = vcvt.s32.f32 %v6898
        %v7027 = vcvt.s32.f32 %v6899
        %v7028 = vcvt.s32.f32 %v6900
        %v7029 = vcvt.s32.f32 %v6901
        %v7030 = vcvt.s32.f32 %v6902
        %v7031 = vcvt.s32.f32 %v6903
        %v7032 = vcvt.s32.f32 %v6904
        %v7033 = vcvt.s32.f32 %v6905
        %v7034 = vcvt.s32.f32 %v6906
        %v7035 = vcvt.s32.f32 %v6907
        %v7036 = vcvt.s32.f32 %v6908
        %v7037 = vcvt.s32.f32 %v6909
        %v7038 = vcvt.s32.f32 %v6910
        %v7039 = vcvt.s32.f32 %v6911
        %v7040 = vcvt.s32.f32 %v6912
        %v7041 = vcvt.s32.f32 %v6913
        %v7042 = vcvt.s32.f32 %v6914
        %v7043 = vcvt.s32.f32 %v6915
        %v7044 = vcvt.s32.f32 %v6916
        %v7045 = vcvt.s32.f32 %v6917
        %v7046 = vcvt.s32.f32 %v6918
        %v7047 = vcvt.s32.f32 %v6919
        %v7048 = vcvt.s32.f32 %v6920
        %v7049 = vcvt.s32.f32 %v6921
        %v7050 = vcvt.s32.f32 %v6922
        %v7051 = vcvt.s32.f32 %v6923
        %v7052 = vcvt.s32.f32 %v6924
        %v7053 = vcvt.s32.f32 %v6925
        %v7054 = vcvt.s32.f32 %v6926
        %v7055 = vcvt.s32.f32 %v6927
        %v7056 = vcvt.s32.f32 %v6928
        %v7057 = vcvt.s32.f32 %v6929
        %v7058 = vcvt.s32.f32 %v6930
        %v7059 = vcvt.s32.f32 %v6931
        %v7060 = vcvt.s32.f32 %v6932
        %v7061 = vcvt.s32.f32 %v6933
        %v7062 = vcvt.s32.f32 %v6934
        %v7063 = vcvt.s32.f32 %v6935
        %v7064 = vcvt.s32.f32 %v6936
        %v7065 = vcvt.s32.f32 %v6937
        %v7066 = vcvt.s32.f32 %v6938
        %v7067 = vcvt.s32.f32 %v6939
        %v7068 = vcvt.s32.f32 %v6940
        %v7069 = vcvt.s32.f32 %v6941
        %v7070 = vcvt.s32.f32 %v6942
        %v7071 = vcvt.s32.f32 %v6943
        %v7072 = vcvt.s32.f32 %v6944
        %v7073 = vcvt.s32.f32 %v6945
        %v7074 = vcvt.s32.f32 %v6946
        %v7075 = vcvt.s32.f32 %v6947
        %v7076 = vcvt.s32.f32 %v6948
        %v7077 = vcvt.s32.f32 %v6949
        %v7078 = vcvt.s32.f32 %v6950
        %v7079 = vcvt.s32.f32 %v6951
        %v7080 = vcvt.s32.f32 %v6952
        %v7081 = vcvt.s32.f32 %v6953
        %v7082 = vcvt.s32.f32 %v6954
        %v7083 = vcvt.s32.f32 %v6955
        %v7084 = vcvt.s32.f32 %v6956
        %v7085 = vcvt.s32.f32 %v6957
        %v7086 = vcvt.s32.f32 %v6958
        %v7087 = vcvt.s32.f32 %v6959
        %v7088 = vcvt.s32.f32 %v6960
        %v7089 = vcvt.s32.f32 %v6961
        %v7090 = vcvt.s32.f32 %v6962
        %v7091 = vcvt.s32.f32 %v6963
        %v7092 = vcvt.s32.f32 %v6964
        %v7093 = vcvt.s32.f32 %v6965
        %v7094 = vcvt.s32.f32 %v6966
        %v7095 = vcvt.s32.f32 %v6967
        %v7096 = vcvt.s32.f32 %v6968
        %v7097 = vcvt.s32.f32 %v6969
        %v7098 = vcvt.s32.f32 %v6970
        %v7099 = vcvt.s32.f32 %v6971
        %v7100 = vcvt.s32.f32 %v6972
        %v7101 = vcvt.s32.f32 %v6973
        %v7102 = vcvt.s32.f32 %v6974
        %v7103 = vcvt.s32.f32 %v6975
        %v7104 = vcvt.s32.f32 %v6976
        %v7105 = vcvt.s32.f32 %v6977
        %v7106 = vcvt.s32.f32 %v6978
        %v7107 = vcvt.s32.f32 %v6979
        %v7108 = vcvt.s32.f32 %v6980
        %v7109 = vcvt.s32.f32 %v6981
        %v7110 = vcvt.s32.f32 %v6982
        %v7111 = vcvt.s32.f32 %v6983
        %v7112 = vcvt.s32.f32 %v6984
        %v7113 = vcvt.s32.f32 %v6985
        %v7114 = vcvt.s32.f32 %v6986
        %v7115 = vcvt.s32.f32 %v6987
        %v7116 = vcvt.s32.f32 %v6988
        %v7117 = vcvt.s32.f32 %v6989
        %v7118 = vcvt.s32.f32 %v6990
        %v7119 = vcvt.s32.f32 %v6991
        %v7120 = vcvt.s32.f32 %v6992
        %v7121 = vcvt.s32.f32 %v6993
        %v7122 = vcvt.s32.f32 %v6994
        %v7123 = vcvt.s32.f32 %v6995
        %v7124 = vcvt.s32.f32 %v6996
        %v7125 = vcvt.s32.f32 %v6997
        %v7126 = vcvt.s32.f32 %v6998
        %v7127 = vcvt.s32.f32 %v6999
        %v7128 = vcvt.s32.f32 %v7000
        %v7129 = vcvt.s32.f32 %v7001
        %v7130 = vcvt.s32.f32 %v7002
        %v7131 = vcvt.s32.f32 %v7003
        %v7132 = vcvt.s32.f32 %v7004
        %v7133 = vcvt.s32.f32 %v7005
        %v7134 = vcvt.s32.f32 %v7006
        %v7135 = vcvt.s32.f32 %v7007
        %v7136 = vcvt.s32.f32 %v7008
        %v7137 = vcvt.s32.f32 %v7009
        %v7138 = vcvt.s32.f32 %v7010
        %v7139 = vcvt.s32.f32 %v7011
        %7140 = vadd.xlane.f32.xlu0 %v7012
        %v7141 = vpop.xlane.xlu0 %7140
        %7142 = vadd.xlane.f32.xlu0 %v7013
        %v7143 = vpop.xlane.xlu0 %7142
        %7144 = vadd.xlane.f32.xlu0 %v7014
        %v7145 = vpop.xlane.xlu0 %7144
        %7146 = vadd.xlane.f32.xlu0 %v7015
        %v7147 = vpop.xlane.xlu0 %7146
        %7148 = vadd.xlane.f32.xlu0 %v7016
        %v7149 = vpop.xlane.xlu0 %7148
        %7150 = vadd.xlane.f32.xlu0 %v7017
        %v7151 = vpop.xlane.xlu0 %7150
        %7152 = vadd.xlane.f32.xlu0 %v7018
        %v7153 = vpop.xlane.xlu0 %7152
        %7154 = vadd.xlane.f32.xlu0 %v7019
        %v7155 = vpop.xlane.xlu0 %7154
        %7156 = vadd.xlane.f32.xlu0 %v7020
        %v7157 = vpop.xlane.xlu0 %7156
        %7158 = vadd.xlane.f32.xlu0 %v7021
        %v7159 = vpop.xlane.xlu0 %7158
        %7160 = vadd.xlane.f32.xlu0 %v7022
        %v7161 = vpop.xlane.xlu0 %7160
        %7162 = vadd.xlane.f32.xlu0 %v7023
        %v7163 = vpop.xlane.xlu0 %7162
        %7164 = vadd.xlane.f32.xlu0 %v7024
        %v7165 = vpop.xlane.xlu0 %7164
        %7166 = vadd.xlane.f32.xlu0 %v7025
        %v7167 = vpop.xlane.xlu0 %7166
        %7168 = vadd.xlane.f32.xlu0 %v7026
        %v7169 = vpop.xlane.xlu0 %7168
        %7170 = vadd.xlane.f32.xlu0 %v7027
        %v7171 = vpop.xlane.xlu0 %7170
        %7172 = vadd.xlane.f32.xlu0 %v7028
        %v7173 = vpop.xlane.xlu0 %7172
        %7174 = vadd.xlane.f32.xlu0 %v7029
        %v7175 = vpop.xlane.xlu0 %7174
        %7176 = vadd.xlane.f32.xlu0 %v7030
        %v7177 = vpop.xlane.xlu0 %7176
        %7178 = vadd.xlane.f32.xlu0 %v7031
        %v7179 = vpop.xlane.xlu0 %7178
        %7180 = vadd.xlane.f32.xlu0 %v7032
        %v7181 = vpop.xlane.xlu0 %7180
        %7182 = vadd.xlane.f32.xlu0 %v7033
        %v7183 = vpop.xlane.xlu0 %7182
        %7184 = vadd.xlane.f32.xlu0 %v7034
        %v7185 = vpop.xlane.xlu0 %7184
        %7186 = vadd.xlane.f32.xlu0 %v7035
        %v7187 = vpop.xlane.xlu0 %7186
        %7188 = vadd.xlane.f32.xlu0 %v7036
        %v7189 = vpop.xlane.xlu0 %7188
        %7190 = vadd.xlane.f32.xlu0 %v7037
        %v7191 = vpop.xlane.xlu0 %7190
        %7192 = vadd.xlane.f32.xlu0 %v7038
        %v7193 = vpop.xlane.xlu0 %7192
        %7194 = vadd.xlane.f32.xlu0 %v7039
        %v7195 = vpop.xlane.xlu0 %7194
        %7196 = vadd.xlane.f32.xlu0 %v7040
        %v7197 = vpop.xlane.xlu0 %7196
        %7198 = vadd.xlane.f32.xlu0 %v7041
        %v7199 = vpop.xlane.xlu0 %7198
        %7200 = vadd.xlane.f32.xlu0 %v7042
        %v7201 = vpop.xlane.xlu0 %7200
        %7202 = vadd.xlane.f32.xlu0 %v7043
        %v7203 = vpop.xlane.xlu0 %7202
        %7204 = vadd.xlane.f32.xlu0 %v7044
        %v7205 = vpop.xlane.xlu0 %7204
        %7206 = vadd.xlane.f32.xlu0 %v7045
        %v7207 = vpop.xlane.xlu0 %7206
        %7208 = vadd.xlane.f32.xlu0 %v7046
        %v7209 = vpop.xlane.xlu0 %7208
        %7210 = vadd.xlane.f32.xlu0 %v7047
        %v7211 = vpop.xlane.xlu0 %7210
        %7212 = vadd.xlane.f32.xlu0 %v7048
        %v7213 = vpop.xlane.xlu0 %7212
        %7214 = vadd.xlane.f32.xlu0 %v7049
        %v7215 = vpop.xlane.xlu0 %7214
        %7216 = vadd.xlane.f32.xlu0 %v7050
        %v7217 = vpop.xlane.xlu0 %7216
        %7218 = vadd.xlane.f32.xlu0 %v7051
        %v7219 = vpop.xlane.xlu0 %7218
        %7220 = vadd.xlane.f32.xlu0 %v7052
        %v7221 = vpop.xlane.xlu0 %7220
        %7222 = vadd.xlane.f32.xlu0 %v7053
        %v7223 = vpop.xlane.xlu0 %7222
        %7224 = vadd.xlane.f32.xlu0 %v7054
        %v7225 = vpop.xlane.xlu0 %7224
        %7226 = vadd.xlane.f32.xlu0 %v7055
        %v7227 = vpop.xlane.xlu0 %7226
        %7228 = vadd.xlane.f32.xlu0 %v7056
        %v7229 = vpop.xlane.xlu0 %7228
        %7230 = vadd.xlane.f32.xlu0 %v7057
        %v7231 = vpop.xlane.xlu0 %7230
        %7232 = vadd.xlane.f32.xlu0 %v7058
        %v7233 = vpop.xlane.xlu0 %7232
        %7234 = vadd.xlane.f32.xlu0 %v7059
        %v7235 = vpop.xlane.xlu0 %7234
        %7236 = vadd.xlane.f32.xlu0 %v7060
        %v7237 = vpop.xlane.xlu0 %7236
        %7238 = vadd.xlane.f32.xlu0 %v7061
        %v7239 = vpop.xlane.xlu0 %7238
        %7240 = vadd.xlane.f32.xlu0 %v7062
        %v7241 = vpop.xlane.xlu0 %7240
        %7242 = vadd.xlane.f32.xlu0 %v7063
        %v7243 = vpop.xlane.xlu0 %7242
        %7244 = vadd.xlane.f32.xlu0 %v7064
        %v7245 = vpop.xlane.xlu0 %7244
        %7246 = vadd.xlane.f32.xlu0 %v7065
        %v7247 = vpop.xlane.xlu0 %7246
        %7248 = vadd.xlane.f32.xlu0 %v7066
        %v7249 = vpop.xlane.xlu0 %7248
        %7250 = vadd.xlane.f32.xlu0 %v7067
        %v7251 = vpop.xlane.xlu0 %7250
        %7252 = vadd.xlane.f32.xlu0 %v7068
        %v7253 = vpop.xlane.xlu0 %7252
        %7254 = vadd.xlane.f32.xlu0 %v7069
        %v7255 = vpop.xlane.xlu0 %7254
        %7256 = vadd.xlane.f32.xlu0 %v7070
        %v7257 = vpop.xlane.xlu0 %7256
        %7258 = vadd.xlane.f32.xlu0 %v7071
        %v7259 = vpop.xlane.xlu0 %7258
        %7260 = vadd.xlane.f32.xlu0 %v7072
        %v7261 = vpop.xlane.xlu0 %7260
        %7262 = vadd.xlane.f32.xlu0 %v7073
        %v7263 = vpop.xlane.xlu0 %7262
        %7264 = vadd.xlane.f32.xlu0 %v7074
        %v7265 = vpop.xlane.xlu0 %7264
        %7266 = vadd.xlane.f32.xlu0 %v7075
        %v7267 = vpop.xlane.xlu0 %7266
        %7268 = vadd.xlane.f32.xlu0 %v7076
        %v7269 = vpop.xlane.xlu0 %7268
        %7270 = vadd.xlane.f32.xlu0 %v7077
        %v7271 = vpop.xlane.xlu0 %7270
        %7272 = vadd.xlane.f32.xlu0 %v7078
        %v7273 = vpop.xlane.xlu0 %7272
        %7274 = vadd.xlane.f32.xlu0 %v7079
        %v7275 = vpop.xlane.xlu0 %7274
        %7276 = vadd.xlane.f32.xlu0 %v7080
        %v7277 = vpop.xlane.xlu0 %7276
        %7278 = vadd.xlane.f32.xlu0 %v7081
        %v7279 = vpop.xlane.xlu0 %7278
        %7280 = vadd.xlane.f32.xlu0 %v7082
        %v7281 = vpop.xlane.xlu0 %7280
        %7282 = vadd.xlane.f32.xlu0 %v7083
        %v7283 = vpop.xlane.xlu0 %7282
        %7284 = vadd.xlane.f32.xlu0 %v7084
        %v7285 = vpop.xlane.xlu0 %7284
        %7286 = vadd.xlane.f32.xlu0 %v7085
        %v7287 = vpop.xlane.xlu0 %7286
        %7288 = vadd.xlane.f32.xlu0 %v7086
        %v7289 = vpop.xlane.xlu0 %7288
        %7290 = vadd.xlane.f32.xlu0 %v7087
        %v7291 = vpop.xlane.xlu0 %7290
        %7292 = vadd.xlane.f32.xlu0 %v7088
        %v7293 = vpop.xlane.xlu0 %7292
        %7294 = vadd.xlane.f32.xlu0 %v7089
        %v7295 = vpop.xlane.xlu0 %7294
        %7296 = vadd.xlane.f32.xlu0 %v7090
        %v7297 = vpop.xlane.xlu0 %7296
        %7298 = vadd.xlane.f32.xlu0 %v7091
        %v7299 = vpop.xlane.xlu0 %7298
        %7300 = vadd.xlane.f32.xlu0 %v7092
        %v7301 = vpop.xlane.xlu0 %7300
        %7302 = vadd.xlane.f32.xlu0 %v7093
        %v7303 = vpop.xlane.xlu0 %7302
        %7304 = vadd.xlane.f32.xlu0 %v7094
        %v7305 = vpop.xlane.xlu0 %7304
        %7306 = vadd.xlane.f32.xlu0 %v7095
        %v7307 = vpop.xlane.xlu0 %7306
        %7308 = vadd.xlane.f32.xlu0 %v7096
        %v7309 = vpop.xlane.xlu0 %7308
        %7310 = vadd.xlane.f32.xlu0 %v7097
        %v7311 = vpop.xlane.xlu0 %7310
        %7312 = vadd.xlane.f32.xlu0 %v7098
        %v7313 = vpop.xlane.xlu0 %7312
        %7314 = vadd.xlane.f32.xlu0 %v7099
        %v7315 = vpop.xlane.xlu0 %7314
        %7316 = vadd.xlane.f32.xlu0 %v7100
        %v7317 = vpop.xlane.xlu0 %7316
        %7318 = vadd.xlane.f32.xlu0 %v7101
        %v7319 = vpop.xlane.xlu0 %7318
        %7320 = vadd.xlane.f32.xlu0 %v7102
        %v7321 = vpop.xlane.xlu0 %7320
        %7322 = vadd.xlane.f32.xlu0 %v7103
        %v7323 = vpop.xlane.xlu0 %7322
        %7324 = vadd.xlane.f32.xlu0 %v7104
        %v7325 = vpop.xlane.xlu0 %7324
        %7326 = vadd.xlane.f32.xlu0 %v7105
        %v7327 = vpop.xlane.xlu0 %7326
        %7328 = vadd.xlane.f32.xlu0 %v7106
        %v7329 = vpop.xlane.xlu0 %7328
        %7330 = vadd.xlane.f32.xlu0 %v7107
        %v7331 = vpop.xlane.xlu0 %7330
        %7332 = vadd.xlane.f32.xlu0 %v7108
        %v7333 = vpop.xlane.xlu0 %7332
        %7334 = vadd.xlane.f32.xlu0 %v7109
        %v7335 = vpop.xlane.xlu0 %7334
        %7336 = vadd.xlane.f32.xlu0 %v7110
        %v7337 = vpop.xlane.xlu0 %7336
        %7338 = vadd.xlane.f32.xlu0 %v7111
        %v7339 = vpop.xlane.xlu0 %7338
        %7340 = vadd.xlane.f32.xlu0 %v7112
        %v7341 = vpop.xlane.xlu0 %7340
        %7342 = vadd.xlane.f32.xlu0 %v7113
        %v7343 = vpop.xlane.xlu0 %7342
        %7344 = vadd.xlane.f32.xlu0 %v7114
        %v7345 = vpop.xlane.xlu0 %7344
        %7346 = vadd.xlane.f32.xlu0 %v7115
        %v7347 = vpop.xlane.xlu0 %7346
        %7348 = vadd.xlane.f32.xlu0 %v7116
        %v7349 = vpop.xlane.xlu0 %7348
        %7350 = vadd.xlane.f32.xlu0 %v7117
        %v7351 = vpop.xlane.xlu0 %7350
        %7352 = vadd.xlane.f32.xlu0 %v7118
        %v7353 = vpop.xlane.xlu0 %7352
        %7354 = vadd.xlane.f32.xlu0 %v7119
        %v7355 = vpop.xlane.xlu0 %7354
        %7356 = vadd.xlane.f32.xlu0 %v7120
        %v7357 = vpop.xlane.xlu0 %7356
        %7358 = vadd.xlane.f32.xlu0 %v7121
        %v7359 = vpop.xlane.xlu0 %7358
        %7360 = vadd.xlane.f32.xlu0 %v7122
        %v7361 = vpop.xlane.xlu0 %7360
        %7362 = vadd.xlane.f32.xlu0 %v7123
        %v7363 = vpop.xlane.xlu0 %7362
        %7364 = vadd.xlane.f32.xlu0 %v7124
        %v7365 = vpop.xlane.xlu0 %7364
        %7366 = vadd.xlane.f32.xlu0 %v7125
        %v7367 = vpop.xlane.xlu0 %7366
        %7368 = vadd.xlane.f32.xlu0 %v7126
        %v7369 = vpop.xlane.xlu0 %7368
        %7370 = vadd.xlane.f32.xlu0 %v7127
        %v7371 = vpop.xlane.xlu0 %7370
        %7372 = vadd.xlane.f32.xlu0 %v7128
        %v7373 = vpop.xlane.xlu0 %7372
        %7374 = vadd.xlane.f32.xlu0 %v7129
        %v7375 = vpop.xlane.xlu0 %7374
        %7376 = vadd.xlane.f32.xlu0 %v7130
        %v7377 = vpop.xlane.xlu0 %7376
        %7378 = vadd.xlane.f32.xlu0 %v7131
        %v7379 = vpop.xlane.xlu0 %7378
        %7380 = vadd.xlane.f32.xlu0 %v7132
        %v7381 = vpop.xlane.xlu0 %7380
        %7382 = vadd.xlane.f32.xlu0 %v7133
        %v7383 = vpop.xlane.xlu0 %7382
        %7384 = vadd.xlane.f32.xlu0 %v7134
        %v7385 = vpop.xlane.xlu0 %7384
        %7386 = vadd.xlane.f32.xlu0 %v7135
        %v7387 = vpop.xlane.xlu0 %7386
        %7388 = vadd.xlane.f32.xlu0 %v7136
        %v7389 = vpop.xlane.xlu0 %7388
        %7390 = vadd.xlane.f32.xlu0 %v7137
        %v7391 = vpop.xlane.xlu0 %7390
        %7392 = vadd.xlane.f32.xlu0 %v7138
        %v7393 = vpop.xlane.xlu0 %7392
        %7394 = vadd.xlane.f32.xlu0 %v7139
        %v7395 = vpop.xlane.xlu0 %7394
        %v7396 = vadd.f32 %v7012, %v7013
        %v7397 = vadd.f32 %v7396, %v7014
        %v7398 = vadd.f32 %v7397, %v7015
        %v7399 = vadd.f32 %v7398, %v7016
        %v7400 = vadd.f32 %v7399, %v7017
        %v7401 = vadd.f32 %v7400, %v7018
        %v7402 = vadd.f32 %v7401, %v7019
        %v7403 = vadd.f32 %v7402, %v7020
        %v7404 = vadd.f32 %v7403, %v7021
        %v7405 = vadd.f32 %v7404, %v7022
        %v7406 = vadd.f32 %v7405, %v7023
        %v7407 = vadd.f32 %v7406, %v7024
        %v7408 = vadd.f32 %v7407, %v7025
        %v7409 = vadd.f32 %v7408, %v7026
        %v7410 = vadd.f32 %v7409, %v7027
        %v7411 = vrot.slane %v7410, 4
        %v7412 = vadd.f32 %v7410, %v7411
        %v7413 = vrot.slane %v7412, 2
        %v7414 = vadd.f32 %v7412, %v7413
        %v7415 = vrot.slane %v7414, 1
        %v7416 = vadd.f32 %v7414, %v7415
        %v7417 = vadd.f32 %v7028, %v7029
        %v7418 = vadd.f32 %v7417, %v7030
        %v7419 = vadd.f32 %v7418, %v7031
        %v7420 = vadd.f32 %v7419, %v7032
        %v7421 = vadd.f32 %v7420, %v7033
        %v7422 = vadd.f32 %v7421, %v7034
        %v7423 = vadd.f32 %v7422, %v7035
        %v7424 = vadd.f32 %v7423, %v7036
        %v7425 = vadd.f32 %v7424, %v7037
        %v7426 = vadd.f32 %v7425, %v7038
        %v7427 = vadd.f32 %v7426, %v7039
        %v7428 = vadd.f32 %v7427, %v7040
        %v7429 = vadd.f32 %v7428, %v7041
        %v7430 = vadd.f32 %v7429, %v7042
        %v7431 = vadd.f32 %v7430, %v7043
        %v7432 = vrot.slane %v7431, 4
        %v7433 = vadd.f32 %v7431, %v7432
        %v7434 = vrot.slane %v7433, 2
        %v7435 = vadd.f32 %v7433, %v7434
        %v7436 = vrot.slane %v7435, 1
        %v7437 = vadd.f32 %v7435, %v7436
        %v7438 = vadd.f32 %v7044, %v7045
        %v7439 = vadd.f32 %v7438, %v7046
        %v7440 = vadd.f32 %v7439, %v7047
        %v7441 = vadd.f32 %v7440, %v7048
        %v7442 = vadd.f32 %v7441, %v7049
        %v7443 = vadd.f32 %v7442, %v7050
        %v7444 = vadd.f32 %v7443, %v7051
        %v7445 = vadd.f32 %v7444, %v7052
        %v7446 = vadd.f32 %v7445, %v7053
        %v7447 = vadd.f32 %v7446, %v7054
        %v7448 = vadd.f32 %v7447, %v7055
        %v7449 = vadd.f32 %v7448, %v7056
        %v7450 = vadd.f32 %v7449, %v7057
        %v7451 = vadd.f32 %v7450, %v7058
        %v7452 = vadd.f32 %v7451, %v7059
        %v7453 = vrot.slane %v7452, 4
        %v7454 = vadd.f32 %v7452, %v7453
        %v7455 = vrot.slane %v7454, 2
        %v7456 = vadd.f32 %v7454, %v7455
        %v7457 = vrot.slane %v7456, 1
        %v7458 = vadd.f32 %v7456, %v7457
        %v7459 = vadd.f32 %v7060, %v7061
        %v7460 = vadd.f32 %v7459, %v7062
        %v7461 = vadd.f32 %v7460, %v7063
        %v7462 = vadd.f32 %v7461, %v7064
        %v7463 = vadd.f32 %v7462, %v7065
        %v7464 = vadd.f32 %v7463, %v7066
        %v7465 = vadd.f32 %v7464, %v7067
        %v7466 = vadd.f32 %v7465, %v7068
        %v7467 = vadd.f32 %v7466, %v7069
        %v7468 = vadd.f32 %v7467, %v7070
        %v7469 = vadd.f32 %v7468, %v7071
        %v7470 = vadd.f32 %v7469, %v7072
        %v7471 = vadd.f32 %v7470, %v7073
        %v7472 = vadd.f32 %v7471, %v7074
        %v7473 = vadd.f32 %v7472, %v7075
        %v7474 = vrot.slane %v7473, 4
        %v7475 = vadd.f32 %v7473, %v7474
        %v7476 = vrot.slane %v7475, 2
        %v7477 = vadd.f32 %v7475, %v7476
        %v7478 = vrot.slane %v7477, 1
        %v7479 = vadd.f32 %v7477, %v7478
        %v7480 = vadd.f32 %v7076, %v7077
        %v7481 = vadd.f32 %v7480, %v7078
        %v7482 = vadd.f32 %v7481, %v7079
        %v7483 = vadd.f32 %v7482, %v7080
        %v7484 = vadd.f32 %v7483, %v7081
        %v7485 = vadd.f32 %v7484, %v7082
        %v7486 = vadd.f32 %v7485, %v7083
        %v7487 = vadd.f32 %v7486, %v7084
        %v7488 = vadd.f32 %v7487, %v7085
        %v7489 = vadd.f32 %v7488, %v7086
        %v7490 = vadd.f32 %v7489, %v7087
        %v7491 = vadd.f32 %v7490, %v7088
        %v7492 = vadd.f32 %v7491, %v7089
        %v7493 = vadd.f32 %v7492, %v7090
        %v7494 = vadd.f32 %v7493, %v7091
        %v7495 = vrot.slane %v7494, 4
        %v7496 = vadd.f32 %v7494, %v7495
        %v7497 = vrot.slane %v7496, 2
        %v7498 = vadd.f32 %v7496, %v7497
        %v7499 = vrot.slane %v7498, 1
        %v7500 = vadd.f32 %v7498, %v7499
        %v7501 = vadd.f32 %v7092, %v7093
        %v7502 = vadd.f32 %v7501, %v7094
        %v7503 = vadd.f32 %v7502, %v7095
        %v7504 = vadd.f32 %v7503, %v7096
        %v7505 = vadd.f32 %v7504, %v7097
        %v7506 = vadd.f32 %v7505, %v7098
        %v7507 = vadd.f32 %v7506, %v7099
        %v7508 = vadd.f32 %v7507, %v7100
        %v7509 = vadd.f32 %v7508, %v7101
        %v7510 = vadd.f32 %v7509, %v7102
        %v7511 = vadd.f32 %v7510, %v7103
        %v7512 = vadd.f32 %v7511, %v7104
        %v7513 = vadd.f32 %v7512, %v7105
        %v7514 = vadd.f32 %v7513, %v7106
        %v7515 = vadd.f32 %v7514, %v7107
        %v7516 = vrot.slane %v7515, 4
        %v7517 = vadd.f32 %v7515, %v7516
        %v7518 = vrot.slane %v7517, 2
        %v7519 = vadd.f32 %v7517, %v7518
        %v7520 = vrot.slane %v7519, 1
        %v7521 = vadd.f32 %v7519, %v7520
        %v7522 = vadd.f32 %v7108, %v7109
        %v7523 = vadd.f32 %v7522, %v7110
        %v7524 = vadd.f32 %v7523, %v7111
        %v7525 = vadd.f32 %v7524, %v7112
        %v7526 = vadd.f32 %v7525, %v7113
        %v7527 = vadd.f32 %v7526, %v7114
        %v7528 = vadd.f32 %v7527, %v7115
        %v7529 = vadd.f32 %v7528, %v7116
        %v7530 = vadd.f32 %v7529, %v7117
        %v7531 = vadd.f32 %v7530, %v7118
        %v7532 = vadd.f32 %v7531, %v7119
        %v7533 = vadd.f32 %v7532, %v7120
        %v7534 = vadd.f32 %v7533, %v7121
        %v7535 = vadd.f32 %v7534, %v7122
        %v7536 = vadd.f32 %v7535, %v7123
        %v7537 = vrot.slane %v7536, 4
        %v7538 = vadd.f32 %v7536, %v7537
        %v7539 = vrot.slane %v7538, 2
        %v7540 = vadd.f32 %v7538, %v7539
        %v7541 = vrot.slane %v7540, 1
        %v7542 = vadd.f32 %v7540, %v7541
        %v7543 = vadd.f32 %v7124, %v7125
        %v7544 = vadd.f32 %v7543, %v7126
        %v7545 = vadd.f32 %v7544, %v7127
        %v7546 = vadd.f32 %v7545, %v7128
        %v7547 = vadd.f32 %v7546, %v7129
        %v7548 = vadd.f32 %v7547, %v7130
        %v7549 = vadd.f32 %v7548, %v7131
        %v7550 = vadd.f32 %v7549, %v7132
        %v7551 = vadd.f32 %v7550, %v7133
        %v7552 = vadd.f32 %v7551, %v7134
        %v7553 = vadd.f32 %v7552, %v7135
        %v7554 = vadd.f32 %v7553, %v7136
        %v7555 = vadd.f32 %v7554, %v7137
        %v7556 = vadd.f32 %v7555, %v7138
        %v7557 = vadd.f32 %v7556, %v7139
        %v7558 = vrot.slane %v7557, 4
        %v7559 = vadd.f32 %v7557, %v7558
        %v7560 = vrot.slane %v7559, 2
        %v7561 = vadd.f32 %v7559, %v7560
        %v7562 = vrot.slane %v7561, 1
        %v7563 = vadd.f32 %v7561, %v7562
        %v7564 = vmul.f32 %v7141, %v3774
        %v7565 = vmul.f32 %v7143, %v3775
        %v7566 = vmul.f32 %v7145, %v3776
        %v7567 = vmul.f32 %v7147, %v3777
        %v7568 = vmul.f32 %v7149, %v3778
        %v7569 = vmul.f32 %v7151, %v3779
        %v7570 = vmul.f32 %v7153, %v3780
        %v7571 = vmul.f32 %v7155, %v3781
        %v7572 = vmul.f32 %v7157, %v3782
        %v7573 = vmul.f32 %v7159, %v3783
        %v7574 = vmul.f32 %v7161, %v3784
        %v7575 = vmul.f32 %v7163, %v3785
        %v7576 = vmul.f32 %v7165, %v3786
        %v7577 = vmul.f32 %v7167, %v3787
        %v7578 = vmul.f32 %v7169, %v3788
        %v7579 = vmul.f32 %v7171, %v3789
        %v7580 = vmul.f32 %v7173, %v3790
        %v7581 = vmul.f32 %v7175, %v3791
        %v7582 = vmul.f32 %v7177, %v3792
        %v7583 = vmul.f32 %v7179, %v3793
        %v7584 = vmul.f32 %v7181, %v3794
        %v7585 = vmul.f32 %v7183, %v3795
        %v7586 = vmul.f32 %v7185, %v3796
        %v7587 = vmul.f32 %v7187, %v3797
        %v7588 = vmul.f32 %v7189, %v3798
        %v7589 = vmul.f32 %v7191, %v3799
        %v7590 = vmul.f32 %v7193, %v3800
        %v7591 = vmul.f32 %v7195, %v3801
        %v7592 = vmul.f32 %v7197, %v3802
        %v7593 = vmul.f32 %v7199, %v3803
        %v7594 = vmul.f32 %v7201, %v3804
        %v7595 = vmul.f32 %v7203, %v3805
        %v7596 = vmul.f32 %v7205, %v3806
        %v7597 = vmul.f32 %v7207, %v3807
        %v7598 = vmul.f32 %v7209, %v3808
        %v7599 = vmul.f32 %v7211, %v3809
        %v7600 = vmul.f32 %v7213, %v3810
        %v7601 = vmul.f32 %v7215, %v3811
        %v7602 = vmul.f32 %v7217, %v3812
        %v7603 = vmul.f32 %v7219, %v3813
        %v7604 = vmul.f32 %v7221, %v3814
        %v7605 = vmul.f32 %v7223, %v3815
        %v7606 = vmul.f32 %v7225, %v3816
        %v7607 = vmul.f32 %v7227, %v3817
        %v7608 = vmul.f32 %v7229, %v3818
        %v7609 = vmul.f32 %v7231, %v3819
        %v7610 = vmul.f32 %v7233, %v3820
        %v7611 = vmul.f32 %v7235, %v3821
        %v7612 = vmul.f32 %v7237, %v3822
        %v7613 = vmul.f32 %v7239, %v3823
        %v7614 = vmul.f32 %v7241, %v3824
        %v7615 = vmul.f32 %v7243, %v3825
        %v7616 = vmul.f32 %v7245, %v3826
        %v7617 = vmul.f32 %v7247, %v3827
        %v7618 = vmul.f32 %v7249, %v3828
        %v7619 = vmul.f32 %v7251, %v3829
        %v7620 = vmul.f32 %v7253, %v3830
        %v7621 = vmul.f32 %v7255, %v3831
        %v7622 = vmul.f32 %v7257, %v3832
        %v7623 = vmul.f32 %v7259, %v3833
        %v7624 = vmul.f32 %v7261, %v3834
        %v7625 = vmul.f32 %v7263, %v3835
        %v7626 = vmul.f32 %v7265, %v3836
        %v7627 = vmul.f32 %v7267, %v3837
        %v7628 = vmul.f32 %v7269, %v3838
        %v7629 = vmul.f32 %v7271, %v3839
        %v7630 = vmul.f32 %v7273, %v3840
        %v7631 = vmul.f32 %v7275, %v3841
        %v7632 = vmul.f32 %v7277, %v3842
        %v7633 = vmul.f32 %v7279, %v3843
        %v7634 = vmul.f32 %v7281, %v3844
        %v7635 = vmul.f32 %v7283, %v3845
        %v7636 = vmul.f32 %v7285, %v3846
        %v7637 = vmul.f32 %v7287, %v3847
        %v7638 = vmul.f32 %v7289, %v3848
        %v7639 = vmul.f32 %v7291, %v3849
        %v7640 = vmul.f32 %v7293, %v3850
        %v7641 = vmul.f32 %v7295, %v3851
        %v7642 = vmul.f32 %v7297, %v3852
        %v7643 = vmul.f32 %v7299, %v3853
        %v7644 = vmul.f32 %v7301, %v3854
        %v7645 = vmul.f32 %v7303, %v3855
        %v7646 = vmul.f32 %v7305, %v3856
        %v7647 = vmul.f32 %v7307, %v3857
        %v7648 = vmul.f32 %v7309, %v3858
        %v7649 = vmul.f32 %v7311, %v3859
        %v7650 = vmul.f32 %v7313, %v3860
        %v7651 = vmul.f32 %v7315, %v3861
        %v7652 = vmul.f32 %v7317, %v3862
        %v7653 = vmul.f32 %v7319, %v3863
        %v7654 = vmul.f32 %v7321, %v3864
        %v7655 = vmul.f32 %v7323, %v3865
        %v7656 = vmul.f32 %v7325, %v3866
        %v7657 = vmul.f32 %v7327, %v3867
        %v7658 = vmul.f32 %v7329, %v3868
        %v7659 = vmul.f32 %v7331, %v3869
        %v7660 = vmul.f32 %v7333, %v3870
        %v7661 = vmul.f32 %v7335, %v3871
        %v7662 = vmul.f32 %v7337, %v3872
        %v7663 = vmul.f32 %v7339, %v3873
        %v7664 = vmul.f32 %v7341, %v3874
        %v7665 = vmul.f32 %v7343, %v3875
        %v7666 = vmul.f32 %v7345, %v3876
        %v7667 = vmul.f32 %v7347, %v3877
        %v7668 = vmul.f32 %v7349, %v3878
        %v7669 = vmul.f32 %v7351, %v3879
        %v7670 = vmul.f32 %v7353, %v3880
        %v7671 = vmul.f32 %v7355, %v3881
        %v7672 = vmul.f32 %v7357, %v3882
        %v7673 = vmul.f32 %v7359, %v3883
        %v7674 = vmul.f32 %v7361, %v3884
        %v7675 = vmul.f32 %v7363, %v3885
        %v7676 = vmul.f32 %v7365, %v3886
        %v7677 = vmul.f32 %v7367, %v3887
        %v7678 = vmul.f32 %v7369, %v3888
        %v7679 = vmul.f32 %v7371, %v3889
        %v7680 = vmul.f32 %v7373, %v3890
        %v7681 = vmul.f32 %v7375, %v3891
        %v7682 = vmul.f32 %v7377, %v3892
        %v7683 = vmul.f32 %v7379, %v3893
        %v7684 = vmul.f32 %v7381, %v3894
        %v7685 = vmul.f32 %v7383, %v3895
        %v7686 = vmul.f32 %v7385, %v3896
        %v7687 = vmul.f32 %v7387, %v3897
        %v7688 = vmul.f32 %v7389, %v3898
        %v7689 = vmul.f32 %v7391, %v3899
        %v7690 = vmul.f32 %v7393, %v3900
        %v7691 = vmul.f32 %v7395, %v3901
        %v7692 = vsel %vm420, %v7564, 0.0
        %v7693 = vsel %vm420, %v7565, 0.0
        %v7694 = vadd.f32 %v7692, %v7693
        %v7695 = vsel %vm420, %v7566, 0.0
        %v7696 = vadd.f32 %v7694, %v7695
        %v7697 = vsel %vm420, %v7567, 0.0
        %v7698 = vadd.f32 %v7696, %v7697
        %v7699 = vsel %vm420, %v7568, 0.0
        %v7700 = vadd.f32 %v7698, %v7699
        %v7701 = vsel %vm420, %v7569, 0.0
        %v7702 = vadd.f32 %v7700, %v7701
        %v7703 = vsel %vm420, %v7570, 0.0
        %v7704 = vadd.f32 %v7702, %v7703
        %v7705 = vsel %vm420, %v7571, 0.0
        %v7706 = vadd.f32 %v7704, %v7705
        %v7707 = vsel %vm420, %v7572, 0.0
        %v7708 = vadd.f32 %v7706, %v7707
        %v7709 = vsel %vm420, %v7573, 0.0
        %v7710 = vadd.f32 %v7708, %v7709
        %v7711 = vsel %vm420, %v7574, 0.0
        %v7712 = vadd.f32 %v7710, %v7711
        %v7713 = vsel %vm420, %v7575, 0.0
        %v7714 = vadd.f32 %v7712, %v7713
        %v7715 = vsel %vm420, %v7576, 0.0
        %v7716 = vadd.f32 %v7714, %v7715
        %v7717 = vsel %vm420, %v7577, 0.0
        %v7718 = vadd.f32 %v7716, %v7717
        %v7719 = vsel %vm420, %v7578, 0.0
        %v7720 = vadd.f32 %v7718, %v7719
        %v7721 = vsel %vm420, %v7579, 0.0
        %v7722 = vadd.f32 %v7720, %v7721
        %v7723 = vrot.slane %v7722, 4
        %v7724 = vadd.f32 %v7722, %v7723
        %v7725 = vrot.slane %v7724, 2
        %v7726 = vadd.f32 %v7724, %v7725
        %v7727 = vrot.slane %v7726, 1
        %v7728 = vadd.f32 %v7726, %v7727
        %v7729 = vsel %vm420, %v7580, 0.0
        %v7730 = vsel %vm420, %v7581, 0.0
        %v7731 = vadd.f32 %v7729, %v7730
        %v7732 = vsel %vm420, %v7582, 0.0
        %v7733 = vadd.f32 %v7731, %v7732
        %v7734 = vsel %vm420, %v7583, 0.0
        %v7735 = vadd.f32 %v7733, %v7734
        %v7736 = vsel %vm420, %v7584, 0.0
        %v7737 = vadd.f32 %v7735, %v7736
        %v7738 = vsel %vm420, %v7585, 0.0
        %v7739 = vadd.f32 %v7737, %v7738
        %v7740 = vsel %vm420, %v7586, 0.0
        %v7741 = vadd.f32 %v7739, %v7740
        %v7742 = vsel %vm420, %v7587, 0.0
        %v7743 = vadd.f32 %v7741, %v7742
        %v7744 = vsel %vm420, %v7588, 0.0
        %v7745 = vadd.f32 %v7743, %v7744
        %v7746 = vsel %vm420, %v7589, 0.0
        %v7747 = vadd.f32 %v7745, %v7746
        %v7748 = vsel %vm420, %v7590, 0.0
        %v7749 = vadd.f32 %v7747, %v7748
        %v7750 = vsel %vm420, %v7591, 0.0
        %v7751 = vadd.f32 %v7749, %v7750
        %v7752 = vsel %vm420, %v7592, 0.0
        %v7753 = vadd.f32 %v7751, %v7752
        %v7754 = vsel %vm420, %v7593, 0.0
        %v7755 = vadd.f32 %v7753, %v7754
        %v7756 = vsel %vm420, %v7594, 0.0
        %v7757 = vadd.f32 %v7755, %v7756
        %v7758 = vsel %vm420, %v7595, 0.0
        %v7759 = vadd.f32 %v7757, %v7758
        %v7760 = vrot.slane %v7759, 4
        %v7761 = vadd.f32 %v7759, %v7760
        %v7762 = vrot.slane %v7761, 2
        %v7763 = vadd.f32 %v7761, %v7762
        %v7764 = vrot.slane %v7763, 1
        %v7765 = vadd.f32 %v7763, %v7764
        %v7766 = vsel %vm420, %v7596, 0.0
        %v7767 = vsel %vm420, %v7597, 0.0
        %v7768 = vadd.f32 %v7766, %v7767
        %v7769 = vsel %vm420, %v7598, 0.0
        %v7770 = vadd.f32 %v7768, %v7769
        %v7771 = vsel %vm420, %v7599, 0.0
        %v7772 = vadd.f32 %v7770, %v7771
        %v7773 = vsel %vm420, %v7600, 0.0
        %v7774 = vadd.f32 %v7772, %v7773
        %v7775 = vsel %vm420, %v7601, 0.0
        %v7776 = vadd.f32 %v7774, %v7775
        %v7777 = vsel %vm420, %v7602, 0.0
        %v7778 = vadd.f32 %v7776, %v7777
        %v7779 = vsel %vm420, %v7603, 0.0
        %v7780 = vadd.f32 %v7778, %v7779
        %v7781 = vsel %vm420, %v7604, 0.0
        %v7782 = vadd.f32 %v7780, %v7781
        %v7783 = vsel %vm420, %v7605, 0.0
        %v7784 = vadd.f32 %v7782, %v7783
        %v7785 = vsel %vm420, %v7606, 0.0
        %v7786 = vadd.f32 %v7784, %v7785
        %v7787 = vsel %vm420, %v7607, 0.0
        %v7788 = vadd.f32 %v7786, %v7787
        %v7789 = vsel %vm420, %v7608, 0.0
        %v7790 = vadd.f32 %v7788, %v7789
        %v7791 = vsel %vm420, %v7609, 0.0
        %v7792 = vadd.f32 %v7790, %v7791
        %v7793 = vsel %vm420, %v7610, 0.0
        %v7794 = vadd.f32 %v7792, %v7793
        %v7795 = vsel %vm420, %v7611, 0.0
        %v7796 = vadd.f32 %v7794, %v7795
        %v7797 = vrot.slane %v7796, 4
        %v7798 = vadd.f32 %v7796, %v7797
        %v7799 = vrot.slane %v7798, 2
        %v7800 = vadd.f32 %v7798, %v7799
        %v7801 = vrot.slane %v7800, 1
        %v7802 = vadd.f32 %v7800, %v7801
        %v7803 = vsel %vm420, %v7612, 0.0
        %v7804 = vsel %vm420, %v7613, 0.0
        %v7805 = vadd.f32 %v7803, %v7804
        %v7806 = vsel %vm420, %v7614, 0.0
        %v7807 = vadd.f32 %v7805, %v7806
        %v7808 = vsel %vm420, %v7615, 0.0
        %v7809 = vadd.f32 %v7807, %v7808
        %v7810 = vsel %vm420, %v7616, 0.0
        %v7811 = vadd.f32 %v7809, %v7810
        %v7812 = vsel %vm420, %v7617, 0.0
        %v7813 = vadd.f32 %v7811, %v7812
        %v7814 = vsel %vm420, %v7618, 0.0
        %v7815 = vadd.f32 %v7813, %v7814
        %v7816 = vsel %vm420, %v7619, 0.0
        %v7817 = vadd.f32 %v7815, %v7816
        %v7818 = vsel %vm420, %v7620, 0.0
        %v7819 = vadd.f32 %v7817, %v7818
        %v7820 = vsel %vm420, %v7621, 0.0
        %v7821 = vadd.f32 %v7819, %v7820
        %v7822 = vsel %vm420, %v7622, 0.0
        %v7823 = vadd.f32 %v7821, %v7822
        %v7824 = vsel %vm420, %v7623, 0.0
        %v7825 = vadd.f32 %v7823, %v7824
        %v7826 = vsel %vm420, %v7624, 0.0
        %v7827 = vadd.f32 %v7825, %v7826
        %v7828 = vsel %vm420, %v7625, 0.0
        %v7829 = vadd.f32 %v7827, %v7828
        %v7830 = vsel %vm420, %v7626, 0.0
        %v7831 = vadd.f32 %v7829, %v7830
        %v7832 = vsel %vm420, %v7627, 0.0
        %v7833 = vadd.f32 %v7831, %v7832
        %v7834 = vrot.slane %v7833, 4
        %v7835 = vadd.f32 %v7833, %v7834
        %v7836 = vrot.slane %v7835, 2
        %v7837 = vadd.f32 %v7835, %v7836
        %v7838 = vrot.slane %v7837, 1
        %v7839 = vadd.f32 %v7837, %v7838
        %v7840 = vsel %vm420, %v7628, 0.0
        %v7841 = vsel %vm420, %v7629, 0.0
        %v7842 = vadd.f32 %v7840, %v7841
        %v7843 = vsel %vm420, %v7630, 0.0
        %v7844 = vadd.f32 %v7842, %v7843
        %v7845 = vsel %vm420, %v7631, 0.0
        %v7846 = vadd.f32 %v7844, %v7845
        %v7847 = vsel %vm420, %v7632, 0.0
        %v7848 = vadd.f32 %v7846, %v7847
        %v7849 = vsel %vm420, %v7633, 0.0
        %v7850 = vadd.f32 %v7848, %v7849
        %v7851 = vsel %vm420, %v7634, 0.0
        %v7852 = vadd.f32 %v7850, %v7851
        %v7853 = vsel %vm420, %v7635, 0.0
        %v7854 = vadd.f32 %v7852, %v7853
        %v7855 = vsel %vm420, %v7636, 0.0
        %v7856 = vadd.f32 %v7854, %v7855
        %v7857 = vsel %vm420, %v7637, 0.0
        %v7858 = vadd.f32 %v7856, %v7857
        %v7859 = vsel %vm420, %v7638, 0.0
        %v7860 = vadd.f32 %v7858, %v7859
        %v7861 = vsel %vm420, %v7639, 0.0
        %v7862 = vadd.f32 %v7860, %v7861
        %v7863 = vsel %vm420, %v7640, 0.0
        %v7864 = vadd.f32 %v7862, %v7863
        %v7865 = vsel %vm420, %v7641, 0.0
        %v7866 = vadd.f32 %v7864, %v7865
        %v7867 = vsel %vm420, %v7642, 0.0
        %v7868 = vadd.f32 %v7866, %v7867
        %v7869 = vsel %vm420, %v7643, 0.0
        %v7870 = vadd.f32 %v7868, %v7869
        %v7871 = vrot.slane %v7870, 4
        %v7872 = vadd.f32 %v7870, %v7871
        %v7873 = vrot.slane %v7872, 2
        %v7874 = vadd.f32 %v7872, %v7873
        %v7875 = vrot.slane %v7874, 1
        %v7876 = vadd.f32 %v7874, %v7875
        %v7877 = vsel %vm420, %v7644, 0.0
        %v7878 = vsel %vm420, %v7645, 0.0
        %v7879 = vadd.f32 %v7877, %v7878
        %v7880 = vsel %vm420, %v7646, 0.0
        %v7881 = vadd.f32 %v7879, %v7880
        %v7882 = vsel %vm420, %v7647, 0.0
        %v7883 = vadd.f32 %v7881, %v7882
        %v7884 = vsel %vm420, %v7648, 0.0
        %v7885 = vadd.f32 %v7883, %v7884
        %v7886 = vsel %vm420, %v7649, 0.0
        %v7887 = vadd.f32 %v7885, %v7886
        %v7888 = vsel %vm420, %v7650, 0.0
        %v7889 = vadd.f32 %v7887, %v7888
        %v7890 = vsel %vm420, %v7651, 0.0
        %v7891 = vadd.f32 %v7889, %v7890
        %v7892 = vsel %vm420, %v7652, 0.0
        %v7893 = vadd.f32 %v7891, %v7892
        %v7894 = vsel %vm420, %v7653, 0.0
        %v7895 = vadd.f32 %v7893, %v7894
        %v7896 = vsel %vm420, %v7654, 0.0
        %v7897 = vadd.f32 %v7895, %v7896
        %v7898 = vsel %vm420, %v7655, 0.0
        %v7899 = vadd.f32 %v7897, %v7898
        %v7900 = vsel %vm420, %v7656, 0.0
        %v7901 = vadd.f32 %v7899, %v7900
        %v7902 = vsel %vm420, %v7657, 0.0
        %v7903 = vadd.f32 %v7901, %v7902
        %v7904 = vsel %vm420, %v7658, 0.0
        %v7905 = vadd.f32 %v7903, %v7904
        %v7906 = vsel %vm420, %v7659, 0.0
        %v7907 = vadd.f32 %v7905, %v7906
        %v7908 = vrot.slane %v7907, 4
        %v7909 = vadd.f32 %v7907, %v7908
        %v7910 = vrot.slane %v7909, 2
        %v7911 = vadd.f32 %v7909, %v7910
        %v7912 = vrot.slane %v7911, 1
        %v7913 = vadd.f32 %v7911, %v7912
        %v7914 = vsel %vm420, %v7660, 0.0
        %v7915 = vsel %vm420, %v7661, 0.0
        %v7916 = vadd.f32 %v7914, %v7915
        %v7917 = vsel %vm420, %v7662, 0.0
        %v7918 = vadd.f32 %v7916, %v7917
        %v7919 = vsel %vm420, %v7663, 0.0
        %v7920 = vadd.f32 %v7918, %v7919
        %v7921 = vsel %vm420, %v7664, 0.0
        %v7922 = vadd.f32 %v7920, %v7921
        %v7923 = vsel %vm420, %v7665, 0.0
        %v7924 = vadd.f32 %v7922, %v7923
        %v7925 = vsel %vm420, %v7666, 0.0
        %v7926 = vadd.f32 %v7924, %v7925
        %v7927 = vsel %vm420, %v7667, 0.0
        %v7928 = vadd.f32 %v7926, %v7927
        %v7929 = vsel %vm420, %v7668, 0.0
        %v7930 = vadd.f32 %v7928, %v7929
        %v7931 = vsel %vm420, %v7669, 0.0
        %v7932 = vadd.f32 %v7930, %v7931
        %v7933 = vsel %vm420, %v7670, 0.0
        %v7934 = vadd.f32 %v7932, %v7933
        %v7935 = vsel %vm420, %v7671, 0.0
        %v7936 = vadd.f32 %v7934, %v7935
        %v7937 = vsel %vm420, %v7672, 0.0
        %v7938 = vadd.f32 %v7936, %v7937
        %v7939 = vsel %vm420, %v7673, 0.0
        %v7940 = vadd.f32 %v7938, %v7939
        %v7941 = vsel %vm420, %v7674, 0.0
        %v7942 = vadd.f32 %v7940, %v7941
        %v7943 = vsel %vm420, %v7675, 0.0
        %v7944 = vadd.f32 %v7942, %v7943
        %v7945 = vrot.slane %v7944, 4
        %v7946 = vadd.f32 %v7944, %v7945
        %v7947 = vrot.slane %v7946, 2
        %v7948 = vadd.f32 %v7946, %v7947
        %v7949 = vrot.slane %v7948, 1
        %v7950 = vadd.f32 %v7948, %v7949
        %v7951 = vsel %vm420, %v7676, 0.0
        %v7952 = vsel %vm420, %v7677, 0.0
        %v7953 = vadd.f32 %v7951, %v7952
        %v7954 = vsel %vm420, %v7678, 0.0
        %v7955 = vadd.f32 %v7953, %v7954
        %v7956 = vsel %vm420, %v7679, 0.0
        %v7957 = vadd.f32 %v7955, %v7956
        %v7958 = vsel %vm420, %v7680, 0.0
        %v7959 = vadd.f32 %v7957, %v7958
        %v7960 = vsel %vm420, %v7681, 0.0
        %v7961 = vadd.f32 %v7959, %v7960
        %v7962 = vsel %vm420, %v7682, 0.0
        %v7963 = vadd.f32 %v7961, %v7962
        %v7964 = vsel %vm420, %v7683, 0.0
        %v7965 = vadd.f32 %v7963, %v7964
        %v7966 = vsel %vm420, %v7684, 0.0
        %v7967 = vadd.f32 %v7965, %v7966
        %v7968 = vsel %vm420, %v7685, 0.0
        %v7969 = vadd.f32 %v7967, %v7968
        %v7970 = vsel %vm420, %v7686, 0.0
        %v7971 = vadd.f32 %v7969, %v7970
        %v7972 = vsel %vm420, %v7687, 0.0
        %v7973 = vadd.f32 %v7971, %v7972
        %v7974 = vsel %vm420, %v7688, 0.0
        %v7975 = vadd.f32 %v7973, %v7974
        %v7976 = vsel %vm420, %v7689, 0.0
        %v7977 = vadd.f32 %v7975, %v7976
        %v7978 = vsel %vm420, %v7690, 0.0
        %v7979 = vadd.f32 %v7977, %v7978
        %v7980 = vsel %vm420, %v7691, 0.0
        %v7981 = vadd.f32 %v7979, %v7980
        %v7982 = vrot.slane %v7981, 4
        %v7983 = vadd.f32 %v7981, %v7982
        %v7984 = vrot.slane %v7983, 2
        %v7985 = vadd.f32 %v7983, %v7984
        %v7986 = vrot.slane %v7985, 1
        %v7987 = vadd.f32 %v7985, %v7986
        %vm7996 = vcmask 1041409
        %v7997 = vsel %vm7996, %v7437, %v7416
        %vm7998 = vcmask 1042434
        %v7999 = vsel %vm7998, %v7458, %v7997
        %vm8000 = vcmask 1043459
        %v8001 = vsel %vm8000, %v7479, %v7999
        %vm8002 = vcmask 1044484
        %v8003 = vsel %vm8002, %v7500, %v8001
        %vm8004 = vcmask 1045509
        %v8005 = vsel %vm8004, %v7521, %v8003
        %vm8006 = vcmask 1046534
        %v8007 = vsel %vm8006, %v7542, %v8005
        %vm8008 = vcmask 1047559
        %v8009 = vsel %vm8008, %v7563, %v8007
        %8011 = vmatpush.msra.mxu0 %v3918
        %8012 = vmatpush.msra.mxu0 %v3917
        %8013 = vmatpush.msra.mxu0 %v3916
        %8014 = vmatpush.msra.mxu0 %v3915
        %8015 = vmatpush.msra.mxu0 %v3914
        %8016 = vmatpush.msra.mxu0 %v3913
        %8017 = vmatpush.msra.mxu0 %v3912
        %8018 = vmatpush.msra.mxu0 %v3911
        %8019 = vmatpush.msra.mxu0 %v3910
        %8020 = vmatpush.msra.mxu0 %v3909
        %8021 = vmatpush.msra.mxu0 %v3908
        %8022 = vmatpush.msra.mxu0 %v3907
        %8023 = vmatpush.msra.mxu0 %v3906
        %8024 = vmatpush.msra.mxu0 %v3905
        %8025 = vmatpush.msra.mxu0 %v3904
        %8026 = vmatpush.msra.mxu0 %v3903
        %8027 = vmatmul.f32.gmra.mxu0 %v8009
        %v8028 = vpop.f32.mrf.mxu0
        %v8029 = vadd.f32 0.0, %v8028
        %8030 = vdwg.mxu0
        %v8032 = vrot.slane %v8029, 1
        %v8033 = vrot.slane %v8029, 2
        %v8034 = vrot.slane %v8029, 3
        %v8035 = vrot.slane %v8029, 4
        %v8036 = vrot.slane %v8029, 5
        %v8037 = vrot.slane %v8029, 6
        %v8038 = vrot.slane %v8029, 7
        %v8047 = vsub.f32 %v7728, %v8029
        %v8048 = vsub.f32 %v7765, %v8032
        %v8049 = vsub.f32 %v7802, %v8033
        %v8050 = vsub.f32 %v7839, %v8034
        %v8051 = vsub.f32 %v7876, %v8035
        %v8052 = vsub.f32 %v7913, %v8036
        %v8053 = vsub.f32 %v7950, %v8037
        %v8054 = vsub.f32 %v7987, %v8038
        %v8063 = vrot.slane %v8048, 7
        %v8064 = vsel %vm7996, %v8063, %v8047
        %v8065 = vrot.slane %v8049, 6
        %v8066 = vsel %vm7998, %v8065, %v8064
        %v8067 = vrot.slane %v8050, 5
        %v8068 = vsel %vm8000, %v8067, %v8066
        %v8069 = vrot.slane %v8051, 4
        %v8070 = vsel %vm8002, %v8069, %v8068
        %v8071 = vrot.slane %v8052, 3
        %v8072 = vsel %vm8004, %v8071, %v8070
        %v8073 = vrot.slane %v8053, 2
        %v8074 = vsel %vm8006, %v8073, %v8072
        %v8075 = vrot.slane %v8054, 1
        %v8076 = vsel %vm8008, %v8075, %v8074
        %8078 = vst.msk [vmem:[%s161] sm:$0xff] %vm420, %v8076
        %s8079 = sand.u32 %s93, 1
        %s8080 = scalar_lea.sflag [#allocation3], %s8079
        %s8081 = sand.u32 %s93, 1
        %s8082 = smul.addr %s8081, 8
        %s8083 = scalar_lea.vmem [#allocation2], %s8082
        // Predicated region
        $region33: #{viterbi_vq_residual.1} parent=31 // pred_check
          %p8084 = pneg %p103
        $region34: #{viterbi_vq_residual.1} parent=31 // pred_check_branch
          %8086 = sbr.rel (%p8084) target = $region36
        $region35: #{viterbi_vq_residual.1} parent=31 // pred_region
          %8088 = vsyncadd %s8080, 0
          %s8089 = smul.addr %s17, 8
          %s8090 = scalar_lea.hbm %s3, %s8089
          %s8092 = sshll.u32 %s8083, 4
          %s8093 = int_to_ptr.vmem [resolvable:$true] %s8092
          %s8094 = sshll.u32 %s8090, 4
          %s8095 = int_to_ptr.hbm [resolvable:$true] %s8094
          %8097 = dma.vmem_to_hbm [thread:$0]  %s8093, 128, %s8095, %s8080
        $region36: #{viterbi_vq_residual.1} parent=31 // pred_fallthru
          _
      $region32: #{viterbi_vq_residual.1} parent=5 // pred_fallthru
        _
      %p8098 = scmp.le.s32.totalorder 2, %s12
      // Predicated region
      $region37: #{viterbi_vq_residual.1} parent=5 // pred_check
        %p8099 = pneg %p8098
      $region38: #{viterbi_vq_residual.1} parent=5 // pred_check_branch
        %8101 = sbr.rel (%p8099) target = $region40
      $region39: #{viterbi_vq_residual.1} parent=5 // pred_region
        %s8102 = ssub.s32 %s12, 2
        // Predicated region
        $region41: #{viterbi_vq_residual.1} parent=39 // pred_check
          %p8103 = pneg %p109
        $region42: #{viterbi_vq_residual.1} parent=39 // pred_check_branch
          %8105 = sbr.rel (%p8103) target = $region44
        $region43: #{viterbi_vq_residual.1} parent=39 // pred_region
          %s8106 = sand.u32 %s94, 1
          %s8107 = scalar_lea.sflag [#allocation3], %s8106
          %s8108 = sand.u32 %s94, 1
          %s8109 = smul.addr %s8108, 8
          %s8110 = scalar_lea.vmem [#allocation2], %s8109
          %8112 = dma.done %s8107, 128
        $region44: #{viterbi_vq_residual.1} parent=39 // pred_fallthru
          _
      $region40: #{viterbi_vq_residual.1} parent=5 // pred_fallthru
        _
    $region6: #{viterbi_vq_residual.1} parent=1 // loop_footer
      %s16 = sadd.s32 1, %s12
    $region7: #{viterbi_vq_residual.1} parent=1 // loop_footer_branch
      %11 = sbr.rel target = $region3
    $region8: #{viterbi_vq_residual.1} parent=1 // loop_exit
      _
    %8113 = vsyncpa [#allocation3], 1
    %s8114 = scalar_lea.sflag [#allocation3], 1
    %8115 = vsyncpa %s8114, 1

</llo_original>
